<compile_context>
chip_gen: v7x
topology: tpu7x:2x2x1
jax: 0.10.0
libtpu: 0.0.40
codegen_flags: <defaults>
</compile_context>

<pallas_src>
import jax
import jax.numpy as jnp
from jax.experimental import pallas as pl
from jax.experimental.pallas import tpu as pltpu

NOISE_DIM = 100
NUM_LABELS = 2
EMB_DIM = 10
IN_DIM = NOISE_DIM + EMB_DIM          # 110
H1, H2, H3 = 256, 512, 1024
IMG_C, IMG_H, IMG_W = 3, 384, 384
OUT_DIM = IMG_C * IMG_H * IMG_W       # 442368

K_PAD = 128                           # pad 110 -> 128 (lane alignment)

TN = 8192                             # lane-dense output tile (8 MiB int8 slab / step)
NT = OUT_DIM // TN                    # 54 grid steps (even -> clean 2-TC split on v7x)
KC = 256                              # in-kernel dequant chunk along the K=1024 dim
NKC = H3 // KC                        # 4
assert OUT_DIM % TN == 0 and NT % 2 == 0
assert H3 % KC == 0


def _leaky_relu(x, slope=0.2):
    return jnp.where(x > 0, x, slope * x)


def _round_up(x, m):
    return ((x + m - 1) // m) * m


# ---------------------------------------------------------------------------
# Kernel 1: fused 3-layer MLP head (110->256->512->1024, LeakyReLU(0.2)).
# Everything fits in VMEM, so no grid.  Output emitted in bf16 for the MXU.
# ---------------------------------------------------------------------------
def mlp_head_kernel(x_ref, w1_ref, b1_ref, w2_ref, b2_ref, w3_ref, b3_ref, o_ref):
    h = jnp.dot(x_ref[...], w1_ref[...], preferred_element_type=jnp.float32) + b1_ref[...]
    h = _leaky_relu(h)
    h = jnp.dot(h, w2_ref[...], preferred_element_type=jnp.float32) + b2_ref[...]
    h = _leaky_relu(h)
    h = jnp.dot(h, w3_ref[...], preferred_element_type=jnp.float32) + b3_ref[...]
    o_ref[...] = _leaky_relu(h).astype(o_ref.dtype)


# ---------------------------------------------------------------------------
# Kernel 2: final linear 1024 -> 442368 (int8 weights) with Tanh, tiled along
# the output dim.
#   x_ref: (NKC, B_PAD, KC) bf16  -- resident activations, K pre-chunked
#   w_ref: (NKC, KC, TN)    int8  -- one contiguous ~8 MiB pre-tiled slab / step
#   s_ref: (1, TN) f32            -- per-output-column dequant scale
#   b_ref: (1, TN) f32            -- bias
#   o_ref: (B_PAD, TN) f32
# ---------------------------------------------------------------------------
def final_layer_kernel(x_ref, w_ref, s_ref, b_ref, o_ref):
    b_pad = o_ref.shape[0]

    def body(c, acc):
        # int8 -> bf16 dequant (exact; only elementary conversions so it lowers
        # on every TPU generation).  Done per K-chunk so the i32/f32 conversion
        # temporaries stay bounded in VMEM.
        w8 = w_ref[c]                                                  # (KC, TN) int8
        w = w8.astype(jnp.int32).astype(jnp.float32).astype(jnp.bfloat16)
        return acc + jnp.dot(x_ref[c], w, preferred_element_type=jnp.float32)

    acc = jax.lax.fori_loop(0, NKC, body, jnp.zeros((b_pad, TN), jnp.float32))
    # Per-column scale applied once on the small f32 accumulator (not on the
    # 1024xTN weight slab) -- mathematically identical, far cheaper.
    o_ref[...] = jnp.tanh(acc * s_ref[...] + b_ref[...])


# ---------------------------------------------------------------------------
# Wrapper
# ---------------------------------------------------------------------------
@jax.jit
def conditional_generator_forward(noise, labels, params):
    """noise: (B, 100) f32, labels: (B, 1) int32 in [0, 2)."""
    B = noise.shape[0]
    b_pad = max(8, _round_up(B, 8))          # batch padding adapts to B (no hard limit)

    # Embedding lookup + concat (glue, plain JAX). Mirrors:
    #   label_embeddings = embedder(labels).squeeze(1); cat((noise, emb), 1)
    emb = params["emb"][labels[:, 0]]                                # (B, 10)
    x = jnp.concatenate([noise.astype(jnp.float32), emb], axis=1)    # (B, 110)

    # Pad batch -> b_pad and features -> K_PAD with zeros (zero rows of w1 make
    # the padding a mathematical no-op).
    x_p = jnp.zeros((b_pad, K_PAD), jnp.float32).at[:B, :IN_DIM].set(x)

    # --- fused small MLP head (single VMEM-resident pallas_call) -----------
    h = pl.pallas_call(
        mlp_head_kernel,
        out_shape=jax.ShapeDtypeStruct((b_pad, H3), jnp.bfloat16),
    )(x_p, params["w1"], params["b1"],
      params["w2"], params["b2"],
      params["w3"], params["b3"])

    # Pre-chunk the activations along K for the K-chunked dequant matmul.
    x3 = h.reshape(b_pad, NKC, KC).transpose(1, 0, 2)                # (NKC, b_pad, KC)

    # --- big final linear, tiled over the 442368-wide output dim -----------
    cost = pl.CostEstimate(
        flops=2 * b_pad * H3 * OUT_DIM,
        transcendentals=b_pad * OUT_DIM,
        bytes_accessed=(H3 * OUT_DIM              # int8 weight stream (dominant)
                        + b_pad * OUT_DIM * 4     # f32 output
                        + OUT_DIM * 8             # f32 bias + scale
                        + b_pad * H3 * 2),        # bf16 activations
    )

    out_flat = pl.pallas_call(
        final_layer_kernel,
        out_shape=jax.ShapeDtypeStruct((b_pad, OUT_DIM), jnp.float32),
        grid_spec=pltpu.PrefetchScalarGridSpec(
            num_scalar_prefetch=0,
            grid=(NT,),
            in_specs=[
                # activations: resident across all grid steps (tiny)
                pl.BlockSpec((NKC, b_pad, KC), lambda j: (0, 0, 0)),
                # pre-tiled int8 weight: one contiguous (NKC, KC, TN) ~8 MiB slab
                # per step; double-buffered (keeps VMEM < 48 MiB, safe on v7x).
                pl.BlockSpec((None, NKC, KC, TN), lambda j: (j, 0, 0, 0),
                             pipeline_mode=pl.Buffered(2)),
                # per-column dequant scale tile
                pl.BlockSpec((1, TN), lambda j: (0, j)),
                # bias tile
                pl.BlockSpec((1, TN), lambda j: (0, j)),
            ],
            out_specs=pl.BlockSpec((b_pad, TN), lambda j: (0, j)),
        ),
        compiler_params=pltpu.CompilerParams(
            dimension_semantics=("parallel",),    # even NT=54 -> clean 2-TC split on v7x
            vmem_limit_bytes=48 << 20,            # safe on v7x's 64 MiB physical VMEM
        ),
        cost_estimate=cost,
    )(x3, params["w4t"], params["w4_scale"], params["b4"])

    # Drop batch padding, reshape to NCHW exactly like .view(-1, 3, 384, 384)
    return out_flat[:B].reshape(B, IMG_C, IMG_H, IMG_W)


# ---------------------------------------------------------------------------
# Deterministic parameter init (PyTorch nn.Linear-style uniform, nn.Embedding
# normal).  w4 is quantized to int8 with per-output-column scales and stored
# pre-tiled as (NT, NKC, KC, TN).  The fp32 w4 is also returned (for the
# unquantized reference in the self-test only).
# ---------------------------------------------------------------------------
def init_params(key):
    ks = jax.random.split(key, 9)

    def linear(kw, kb, fan_in, fan_out):
        bound = float(fan_in) ** -0.5
        w = jax.random.uniform(kw, (fan_in, fan_out), jnp.float32, -bound, bound)
        b = jax.random.uniform(kb, (1, fan_out), jnp.float32, -bound, bound)
        return w, b

    w1, b1 = linear(ks[0], ks[1], IN_DIM, H1)
    # zero-pad the 110-row weight to 128 rows so the padded input lanes contribute 0
    w1 = jnp.zeros((K_PAD, H1), jnp.float32).at[:IN_DIM, :].set(w1)
    w2, b2 = linear(ks[2], ks[3], H1, H2)
    w3, b3 = linear(ks[4], ks[5], H2, H3)
    w4, b4 = linear(ks[6], ks[7], H3, OUT_DIM)                     # (1024, 442368) f32

    # symmetric per-output-column int8 quantization
    absmax = jnp.max(jnp.abs(w4), axis=0, keepdims=True)           # (1, OUT_DIM)
    scale = jnp.maximum(absmax, 1e-12) / 127.0                     # (1, OUT_DIM) f32
    w4_q = jnp.clip(jnp.round(w4 / scale), -127.0, 127.0).astype(jnp.int8)
    # pre-tile: (H3, OUT_DIM) -> (NKC, KC, NT, TN) -> (NT, NKC, KC, TN)
    w4t = w4_q.reshape(NKC, KC, NT, TN).transpose(2, 0, 1, 3)

    emb = jax.random.normal(ks[8], (NUM_LABELS, EMB_DIM), jnp.float32)
    params = dict(w1=w1, b1=b1, w2=w2, b2=b2, w3=w3, b3=b3,
                  w4t=w4t, w4_scale=scale, b4=b4, emb=emb)
    return params, w4


# ---------------------------------------------------------------------------
# References
# ---------------------------------------------------------------------------
def _head_f32(noise, labels, params):
    emb = params["emb"][labels[:, 0]]
    x = jnp.concatenate([noise.astype(jnp.float32), emb], axis=1)
    h = _leaky_relu(x @ params["w1"][:IN_DIM] + params["b1"])
    h = _leaky_relu(h @ params["w2"] + params["b2"])
    h = _leaky_relu(h @ params["w3"] + params["b3"])
    return h


def reference_forward_quantized(noise, labels, params):
    """Matches the kernel numerics (bf16 activations, int8 weight, f32 accum)."""
    B = noise.shape[0]
    h = _head_f32(noise, labels, params).astype(jnp.bfloat16)
    h3 = h.reshape(B, NKC, KC)
    w = params["w4t"].astype(jnp.bfloat16)              # exact (|int8| fits in bf16)
    y = jnp.einsum("bck,nckt->bnt", h3, w, preferred_element_type=jnp.float32)
    y = y.reshape(B, OUT_DIM) * params["w4_scale"] + params["b4"]
    return jnp.tanh(y).reshape(B, IMG_C, IMG_H, IMG_W)


def reference_forward_f32(noise, labels, params, w4_f32):
    """Unquantized fp32 reference mirroring the original PyTorch module."""
    B = noise.shape[0]
    h = _head_f32(noise, labels, params)
    y = h @ w4_f32 + params["b4"]
    return jnp.tanh(y).reshape(B, IMG_C, IMG_H, IMG_W)


if __name__ == "__main__":
    key = jax.random.PRNGKey(0)
    k_noise, k_lab, k_param = jax.random.split(key, 3)

    B = 2
    noise = jax.random.normal(k_noise, (B, NOISE_DIM), jnp.float32)
    labels = jax.random.randint(k_lab, (B, 1), 0, NUM_LABELS, dtype=jnp.int32)
    params, w4_f32 = init_params(k_param)

    out = conditional_generator_forward(noise, labels, params)
    out = jax.block_until_ready(out)

    assert out.shape == (B, IMG_C, IMG_H, IMG_W), out.shape
    assert out.dtype == jnp.float32
    assert bool(jnp.all(jnp.abs(out) <= 1.0))            # tanh range sanity check

    # Tight check: reference with identical int8/bf16 quantization.
    ref_q = jax.block_until_ready(reference_forward_quantized(noise, labels, params))
    err_q = float(jnp.max(jnp.abs(out - ref_q)))
    assert err_q < 1e-2, f"quantized-reference max_err={err_q}"

    # Loose check: unquantized fp32 module -> bounds int8 + bf16 drift.
    ref_f = jax.block_until_ready(reference_forward_f32(noise, labels, params, w4_f32))
    err_f = float(jnp.max(jnp.abs(out - ref_f)))
    assert err_f < 3e-2, f"fp32-reference max_err={err_f}"

    print("KERNEL_OK")
</pallas_src>

<mosaic_0001>
module attributes {stable_mosaic.version = 11 : i64} {
  func.func @final_layer_kernel(%arg0: i32, %arg1: memref<4x8x256xbf16, #tpu.memory_space<vmem>>, %arg2: memref<1x4x256x8192xi8, #tpu.memory_space<vmem>>, %arg3: memref<1x8192xf32, #tpu.memory_space<vmem>>, %arg4: memref<1x8192xf32, #tpu.memory_space<vmem>>, %arg5: memref<8x8192xf32, #tpu.memory_space<vmem>>) attributes {dimension_semantics = [#tpu.dimension_semantics<parallel>], iteration_bounds = array<i64: 54>, scalar_prefetch = 0 : i64, scratch_operands = 0 : i64, tpu.core_type = #tpu.core_type<tc>, window_params = [{pipeline_mode = #tpu.pipeline_mode<synchronous>, transform_indices = @transform_0, window_bounds = array<i64: 4, 8, 256>}, {pipeline_mode = #tpu.pipeline_mode<double_buffered>, transform_indices = @transform_1, window_bounds = array<i64: 1, 4, 256, 8192>}, {transform_indices = @transform_2, window_bounds = array<i64: 1, 8192>}, {transform_indices = @transform_3, window_bounds = array<i64: 1, 8192>}, {transform_indices = @transform_4, window_bounds = array<i64: 8, 8192>}]} {
    %cst = arith.constant 0.000000e+00 : f32
    %0 = vector.broadcast %cst : f32 to vector<8x8192xf32>
    %c0_i32 = arith.constant 0 : i32
    %c4_i32 = arith.constant 4 : i32
    %1 = arith.addi %c0_i32, %c4_i32 : i32
    %c1_i32 = arith.constant 1 : i32
    %2 = scf.for %arg6 = %c0_i32 to %1 step %c1_i32 iter_args(%arg7 = %0) -> (vector<8x8192xf32>)  : i32 {
      %c0_6 = arith.constant 0 : index
      %11 = arith.index_cast %arg6 : i32 to index
      %c0_7 = arith.constant 0 : index
      %c0_8 = arith.constant 0 : index
      %12 = vector.load %arg2[%c0_6, %11, %c0_7, %c0_8] : memref<1x4x256x8192xi8, #tpu.memory_space<vmem>>, vector<1x1x256x8192xi8>
      %13 = vector.shape_cast %12 : vector<1x1x256x8192xi8> to vector<256x8192xi8>
      %14 = arith.extsi %13 : vector<256x8192xi8> to vector<256x8192xi32>
      %15 = arith.sitofp %14 : vector<256x8192xi32> to vector<256x8192xf32>
      %16 = arith.truncf %15 : vector<256x8192xf32> to vector<256x8192xbf16>
      %17 = arith.index_cast %arg6 : i32 to index
      %c0_9 = arith.constant 0 : index
      %c0_10 = arith.constant 0 : index
      %18 = vector.load %arg1[%17, %c0_9, %c0_10] : memref<4x8x256xbf16, #tpu.memory_space<vmem>>, vector<1x8x256xbf16>
      %19 = vector.shape_cast %18 : vector<1x8x256xbf16> to vector<8x256xbf16>
      %cst_11 = arith.constant dense<0.000000e+00> : vector<8x8192xf32>
      %20 = tpu.matmul %19, %16, %cst_11 {dimension_numbers = #tpu.dot_dimension_numbers<[1], [0], [0], [1], [0, 0, 1, 1], [], []>} : vector<8x256xbf16>, vector<256x8192xbf16>, vector<8x8192xf32> -> vector<8x8192xf32>
      %21 = arith.addf %arg7, %20 : vector<8x8192xf32>
      scf.yield %21 : vector<8x8192xf32>
    }
    %c4_i32_0 = arith.constant 4 : i32
    %c0 = arith.constant 0 : index
    %c0_1 = arith.constant 0 : index
    %3 = vector.load %arg3[%c0, %c0_1] : memref<1x8192xf32, #tpu.memory_space<vmem>>, vector<1x8192xf32>
    %4 = vector.broadcast %3 : vector<1x8192xf32> to vector<8x8192xf32>
    %5 = arith.mulf %2, %4 : vector<8x8192xf32>
    %c0_2 = arith.constant 0 : index
    %c0_3 = arith.constant 0 : index
    %6 = vector.load %arg4[%c0_2, %c0_3] : memref<1x8192xf32, #tpu.memory_space<vmem>>, vector<1x8192xf32>
    %7 = vector.broadcast %6 : vector<1x8192xf32> to vector<8x8192xf32>
    %8 = arith.addf %5, %7 : vector<8x8192xf32>
    %9 = math.tanh %8 : vector<8x8192xf32>
    %c0_4 = arith.constant 0 : index
    %c0_5 = arith.constant 0 : index
    %10 = vector.load %arg5[%c0_4, %c0_5] : memref<8x8192xf32, #tpu.memory_space<vmem>>, vector<8x8192xf32>
    tpu.vector_store %arg5[%c0_4, %c0_5], %9 {strides = array<i32>} : memref<8x8192xf32, #tpu.memory_space<vmem>>, vector<8x8192xf32>,
    return
  }
  func.func @transform_0(%arg0: i32) -> (i32, i32, i32) {
    %c0_i32 = arith.constant 0 : i32
    %c0_i32_0 = arith.constant 0 : i32
    %c0_i32_1 = arith.constant 0 : i32
    %c0_i32_2 = arith.constant 0 : i32
    return %c0_i32, %c0_i32_0, %c0_i32_1 : i32, i32, i32
  }
  func.func @transform_1(%arg0: i32) -> (i32, i32, i32, i32) {
    %c0_i32 = arith.constant 0 : i32
    %c0_i32_0 = arith.constant 0 : i32
    %c0_i32_1 = arith.constant 0 : i32
    %c0_i32_2 = arith.constant 0 : i32
    return %arg0, %c0_i32, %c0_i32_0, %c0_i32_1 : i32, i32, i32, i32
  }
  func.func @transform_2(%arg0: i32) -> (i32, i32) {
    %c0_i32 = arith.constant 0 : i32
    %c0_i32_0 = arith.constant 0 : i32
    return %c0_i32, %arg0 : i32, i32
  }
  func.func @transform_3(%arg0: i32) -> (i32, i32) {
    %c0_i32 = arith.constant 0 : i32
    %c0_i32_0 = arith.constant 0 : i32
    return %c0_i32, %arg0 : i32, i32
  }
  func.func @transform_4(%arg0: i32) -> (i32, i32) {
    %c0_i32 = arith.constant 0 : i32
    %c0_i32_0 = arith.constant 0 : i32
    return %c0_i32, %arg0 : i32, i32
  }
}

module attributes {stable_mosaic.version = 11 : i64} {
  func.func @mlp_head_kernel(%arg0: memref<8x128xf32, #tpu.memory_space<vmem>>, %arg1: memref<128x256xf32, #tpu.memory_space<vmem>>, %arg2: memref<1x256xf32, #tpu.memory_space<vmem>>, %arg3: memref<256x512xf32, #tpu.memory_space<vmem>>, %arg4: memref<1x512xf32, #tpu.memory_space<vmem>>, %arg5: memref<512x1024xf32, #tpu.memory_space<vmem>>, %arg6: memref<1x1024xf32, #tpu.memory_space<vmem>>, %arg7: memref<8x1024xbf16, #tpu.memory_space<vmem>>) attributes {dimension_semantics = [], scalar_prefetch = 0 : i64, scratch_operands = 0 : i64, tpu.core_type = #tpu.core_type<tc>} {
    %c0 = arith.constant 0 : index
    %c0_0 = arith.constant 0 : index
    %0 = vector.load %arg0[%c0, %c0_0] : memref<8x128xf32, #tpu.memory_space<vmem>>, vector<8x128xf32>
    %c0_1 = arith.constant 0 : index
    %c0_2 = arith.constant 0 : index
    %1 = vector.load %arg1[%c0_1, %c0_2] : memref<128x256xf32, #tpu.memory_space<vmem>>, vector<128x256xf32>
    %cst = arith.constant dense<0.000000e+00> : vector<8x256xf32>
    %2 = tpu.matmul %0, %1, %cst {dimension_numbers = #tpu.dot_dimension_numbers<[1], [0], [0], [1], [0, 0, 1, 1], [], []>} : vector<8x128xf32>, vector<128x256xf32>, vector<8x256xf32> -> vector<8x256xf32>
    %c0_3 = arith.constant 0 : index
    %c0_4 = arith.constant 0 : index
    %3 = vector.load %arg2[%c0_3, %c0_4] : memref<1x256xf32, #tpu.memory_space<vmem>>, vector<1x256xf32>
    %4 = vector.broadcast %3 : vector<1x256xf32> to vector<8x256xf32>
    %5 = arith.addf %2, %4 : vector<8x256xf32>
    %cst_5 = arith.constant 0.000000e+00 : f32
    %6 = vector.broadcast %cst_5 : f32 to vector<8x256xf32>
    %7 = arith.cmpf ogt, %5, %6 : vector<8x256xf32>
    %cst_6 = arith.constant 2.000000e-01 : f32
    %8 = vector.broadcast %cst_6 : f32 to vector<8x256xf32>
    %9 = arith.mulf %8, %5 : vector<8x256xf32>
    %10 = arith.select %7, %5, %9 : vector<8x256xi1>, vector<8x256xf32>
    %c0_7 = arith.constant 0 : index
    %c0_8 = arith.constant 0 : index
    %11 = vector.load %arg3[%c0_7, %c0_8] : memref<256x512xf32, #tpu.memory_space<vmem>>, vector<256x512xf32>
    %cst_9 = arith.constant dense<0.000000e+00> : vector<8x512xf32>
    %12 = tpu.matmul %10, %11, %cst_9 {dimension_numbers = #tpu.dot_dimension_numbers<[1], [0], [0], [1], [0, 0, 1, 1], [], []>} : vector<8x256xf32>, vector<256x512xf32>, vector<8x512xf32> -> vector<8x512xf32>
    %c0_10 = arith.constant 0 : index
    %c0_11 = arith.constant 0 : index
    %13 = vector.load %arg4[%c0_10, %c0_11] : memref<1x512xf32, #tpu.memory_space<vmem>>, vector<1x512xf32>
    %14 = vector.broadcast %13 : vector<1x512xf32> to vector<8x512xf32>
    %15 = arith.addf %12, %14 : vector<8x512xf32>
    %cst_12 = arith.constant 0.000000e+00 : f32
    %16 = vector.broadcast %cst_12 : f32 to vector<8x512xf32>
    %17 = arith.cmpf ogt, %15, %16 : vector<8x512xf32>
    %cst_13 = arith.constant 2.000000e-01 : f32
    %18 = vector.broadcast %cst_13 : f32 to vector<8x512xf32>
    %19 = arith.mulf %18, %15 : vector<8x512xf32>
    %20 = arith.select %17, %15, %19 : vector<8x512xi1>, vector<8x512xf32>
    %c0_14 = arith.constant 0 : index
    %c0_15 = arith.constant 0 : index
    %21 = vector.load %arg5[%c0_14, %c0_15] : memref<512x1024xf32, #tpu.memory_space<vmem>>, vector<512x1024xf32>
    %cst_16 = arith.constant dense<0.000000e+00> : vector<8x1024xf32>
    %22 = tpu.matmul %20, %21, %cst_16 {dimension_numbers = #tpu.dot_dimension_numbers<[1], [0], [0], [1], [0, 0, 1, 1], [], []>} : vector<8x512xf32>, vector<512x1024xf32>, vector<8x1024xf32> -> vector<8x1024xf32>
    %c0_17 = arith.constant 0 : index
    %c0_18 = arith.constant 0 : index
    %23 = vector.load %arg6[%c0_17, %c0_18] : memref<1x1024xf32, #tpu.memory_space<vmem>>, vector<1x1024xf32>
    %24 = vector.broadcast %23 : vector<1x1024xf32> to vector<8x1024xf32>
    %25 = arith.addf %22, %24 : vector<8x1024xf32>
    %cst_19 = arith.constant 0.000000e+00 : f32
    %26 = vector.broadcast %cst_19 : f32 to vector<8x1024xf32>
    %27 = arith.cmpf ogt, %25, %26 : vector<8x1024xf32>
    %cst_20 = arith.constant 2.000000e-01 : f32
    %28 = vector.broadcast %cst_20 : f32 to vector<8x1024xf32>
    %29 = arith.mulf %28, %25 : vector<8x1024xf32>
    %30 = arith.select %27, %25, %29 : vector<8x1024xi1>, vector<8x1024xf32>
    %31 = arith.truncf %30 : vector<8x1024xf32> to vector<8x1024xbf16>
    %c0_21 = arith.constant 0 : index
    %c0_22 = arith.constant 0 : index
    %32 = vector.load %arg7[%c0_21, %c0_22] : memref<8x1024xbf16, #tpu.memory_space<vmem>>, vector<8x1024xbf16>
    tpu.vector_store %arg7[%c0_21, %c0_22], %31 {strides = array<i32>} : memref<8x1024xbf16, #tpu.memory_space<vmem>>, vector<8x1024xbf16>,
    return
  }
}

</mosaic_0001>

<llo_original>
// kernel: conditional_generator_forward.2
$region0: #{conditional_generator_forward.2}
  #allocation0 [shape = 'u32[]', space=smem, size = 0x4, offset = 0x4, fixed_abs, tag = 'smem constant byte address 0x4 - core index']
  #allocation1 [shape = 'u32[144,128]{1,0:T(1,128)}', space=vmem, size = 0x12000, scoped, tag = 'internal scratch']
  %s0 = inlined_call_operand.vmem [shape: f32[8,128], index: 0, kind: input, shape index: {}]
  %s1 = inlined_call_operand.hbm [shape: f32[128,256], index: 1, kind: input, shape index: {}]
  %s2 = inlined_call_operand.hbm [shape: f32[1,256], index: 2, kind: input, shape index: {}]
  %s3 = inlined_call_operand.hbm [shape: f32[256,512], index: 3, kind: input, shape index: {}]
  %s4 = inlined_call_operand.hbm [shape: f32[1,512], index: 4, kind: input, shape index: {}]
  %s5 = inlined_call_operand.hbm [shape: f32[512,1024], index: 5, kind: input, shape index: {}]
  %s6 = inlined_call_operand.hbm [shape: f32[1,1024], index: 6, kind: input, shape index: {}]
  %s7 = inlined_call_operand.vmem [shape: bf16[8,1024], index: 7, kind: output, shape index: {}]
  %s8 = sld [smem:[#allocation0]]
  $region62: #{conditional_generator_forward.2} parent=0
    _
  %s10 = ssub.s32 1, %s8
  %s11 = scalar_select 0, %s10, %s8
  $region1: #{conditional_generator_forward.2} parent=0
    #allocation2 [shape = 'u8[131072]{0}', space=vmem, size = 0x20000, scoped, tag = 'input window, operand 1, single buffered']
    #allocation3 [shape = 's32[1]{0}', space=sflag, size = 0x4, scoped, tag = 'scoped memory for conditional_generator_forward.2']
    #allocation4 [shape = 'u8[1024]{0}', space=vmem, size = 0x400, scoped, tag = 'input window, operand 2, single buffered']
    #allocation5 [shape = 's32[1]{0}', space=sflag, size = 0x4, scoped, tag = 'scoped memory for conditional_generator_forward.2']
    #allocation6 [shape = 'u8[524288]{0}', space=vmem, size = 0x80000, scoped, tag = 'input window, operand 3, single buffered']
    #allocation7 [shape = 'u8[2048]{0}', space=vmem, size = 0x800, scoped, tag = 'input window, operand 4, single buffered']
    #allocation8 [shape = 's32[1]{0}', space=sflag, size = 0x4, scoped, tag = 'scoped memory for conditional_generator_forward.2']
    #allocation9 [shape = 'u8[2097152]{0}', space=vmem, size = 0x200000, scoped, tag = 'input window, operand 5, single buffered']
    #allocation10 [shape = 'u8[4096]{0}', space=vmem, size = 0x1000, scoped, tag = 'input window, operand 6, single buffered']
    #allocation11 [shape = 's32[1]{0}', space=sflag, size = 0x4, scoped, tag = 'scoped memory for conditional_generator_forward.2']
    %12 = vsyncpa [#allocation3], 0
    %13 = vsyncpa [#allocation5], 0
    %14 = vsyncpa [#allocation8], 0
    %15 = vsyncpa [#allocation11], 0
    // Predicated region
    $region2: #{conditional_generator_forward.2} parent=1 // pred_check
      _
    $region3: #{conditional_generator_forward.2} parent=1 // pred_check_branch
      %17 = sbr.rel (0) target = $region5
    $region4: #{conditional_generator_forward.2} parent=1 // pred_region
      _
    $region5: #{conditional_generator_forward.2} parent=1 // pred_fallthru
      _
    // Predicated region
    $region6: #{conditional_generator_forward.2} parent=1 // pred_check
      _
    $region7: #{conditional_generator_forward.2} parent=1 // pred_check_branch
      %19 = sbr.rel (0) target = $region9
    $region8: #{conditional_generator_forward.2} parent=1 // pred_region
      %s21 = ssub.s32 4096, 4096
      %22 = vsyncadd [#allocation3], %s21
      %s23 = sshll.u32 [#allocation2], 4
      %s24 = int_to_ptr.vmem [resolvable:$true] %s23
      %29 = dma.hbm_to_vmem [thread:$0]  %s1, 4096, %s24, [#allocation3], 256, 256, 16
    $region9: #{conditional_generator_forward.2} parent=1 // pred_fallthru
      _
    // Predicated region
    $region10: #{conditional_generator_forward.2} parent=1 // pred_check
      _
    $region11: #{conditional_generator_forward.2} parent=1 // pred_check_branch
      %31 = sbr.rel (0) target = $region13
    $region12: #{conditional_generator_forward.2} parent=1 // pred_region
      %s33 = ssub.s32 32, 32
      %34 = vsyncadd [#allocation5], %s33
      %s36 = sshll.u32 [#allocation4], 4
      %s37 = int_to_ptr.vmem [resolvable:$true] %s36
      %39 = dma.hbm_to_vmem [thread:$0]  %s2, 32, %s37, [#allocation5]
    $region13: #{conditional_generator_forward.2} parent=1 // pred_fallthru
      _
    // Predicated region
    $region14: #{conditional_generator_forward.2} parent=1 // pred_check
      _
    $region15: #{conditional_generator_forward.2} parent=1 // pred_check_branch
      %41 = sbr.rel (0) target = $region17
    $region16: #{conditional_generator_forward.2} parent=1 // pred_region
      %s43 = ssub.s32 16384, 16384
      %44 = vsyncadd [#allocation5], %s43
      %s45 = sshll.u32 [#allocation6], 4
      %s46 = int_to_ptr.vmem [resolvable:$true] %s45
      %51 = dma.hbm_to_vmem [thread:$0]  %s3, 16384, %s46, [#allocation5], 512, 512, 32
    $region17: #{conditional_generator_forward.2} parent=1 // pred_fallthru
      _
    // Predicated region
    $region18: #{conditional_generator_forward.2} parent=1 // pred_check
      _
    $region19: #{conditional_generator_forward.2} parent=1 // pred_check_branch
      %53 = sbr.rel (0) target = $region21
    $region20: #{conditional_generator_forward.2} parent=1 // pred_region
      %s55 = ssub.s32 64, 64
      %56 = vsyncadd [#allocation8], %s55
      %s58 = sshll.u32 [#allocation7], 4
      %s59 = int_to_ptr.vmem [resolvable:$true] %s58
      %61 = dma.hbm_to_vmem [thread:$0]  %s4, 64, %s59, [#allocation8]
    $region21: #{conditional_generator_forward.2} parent=1 // pred_fallthru
      _
    // Predicated region
    $region22: #{conditional_generator_forward.2} parent=1 // pred_check
      _
    $region23: #{conditional_generator_forward.2} parent=1 // pred_check_branch
      %63 = sbr.rel (0) target = $region25
    $region24: #{conditional_generator_forward.2} parent=1 // pred_region
      %s65 = ssub.s32 65536, 65536
      %66 = vsyncadd [#allocation8], %s65
      %s67 = sshll.u32 [#allocation9], 4
      %s68 = int_to_ptr.vmem [resolvable:$true] %s67
      %73 = dma.hbm_to_vmem [thread:$0]  %s5, 65536, %s68, [#allocation8], 1024, 1024, 64
    $region25: #{conditional_generator_forward.2} parent=1 // pred_fallthru
      _
    // Predicated region
    $region26: #{conditional_generator_forward.2} parent=1 // pred_check
      _
    $region27: #{conditional_generator_forward.2} parent=1 // pred_check_branch
      %75 = sbr.rel (0) target = $region29
    $region28: #{conditional_generator_forward.2} parent=1 // pred_region
      %s77 = ssub.s32 128, 128
      %78 = vsyncadd [#allocation11], %s77
      %s80 = sshll.u32 [#allocation10], 4
      %s81 = int_to_ptr.vmem [resolvable:$true] %s80
      %83 = dma.hbm_to_vmem [thread:$0]  %s6, 128, %s81, [#allocation11]
    $region29: #{conditional_generator_forward.2} parent=1 // pred_fallthru
      _
    // Predicated region
    $region30: #{conditional_generator_forward.2} parent=1 // pred_check
      _
    $region31: #{conditional_generator_forward.2} parent=1 // pred_check_branch
      %85 = sbr.rel (0) target = $region33
    $region32: #{conditional_generator_forward.2} parent=1 // pred_region
      %86 = dma.done [#allocation3], 4096
    $region33: #{conditional_generator_forward.2} parent=1 // pred_fallthru
      _
    // Predicated region
    $region34: #{conditional_generator_forward.2} parent=1 // pred_check
      _
    $region35: #{conditional_generator_forward.2} parent=1 // pred_check_branch
      %88 = sbr.rel (0) target = $region37
    $region36: #{conditional_generator_forward.2} parent=1 // pred_region
      %89 = dma.done [#allocation5], 32
    $region37: #{conditional_generator_forward.2} parent=1 // pred_fallthru
      _
    // Predicated region
    $region38: #{conditional_generator_forward.2} parent=1 // pred_check
      _
    $region39: #{conditional_generator_forward.2} parent=1 // pred_check_branch
      %91 = sbr.rel (0) target = $region41
    $region40: #{conditional_generator_forward.2} parent=1 // pred_region
      %92 = dma.done [#allocation5], 16384
    $region41: #{conditional_generator_forward.2} parent=1 // pred_fallthru
      _
    // Predicated region
    $region42: #{conditional_generator_forward.2} parent=1 // pred_check
      _
    $region43: #{conditional_generator_forward.2} parent=1 // pred_check_branch
      %94 = sbr.rel (0) target = $region45
    $region44: #{conditional_generator_forward.2} parent=1 // pred_region
      %95 = dma.done [#allocation8], 64
    $region45: #{conditional_generator_forward.2} parent=1 // pred_fallthru
      _
    // Predicated region
    $region46: #{conditional_generator_forward.2} parent=1 // pred_check
      _
    $region47: #{conditional_generator_forward.2} parent=1 // pred_check_branch
      %97 = sbr.rel (0) target = $region49
    $region48: #{conditional_generator_forward.2} parent=1 // pred_region
      %98 = dma.done [#allocation8], 65536
    $region49: #{conditional_generator_forward.2} parent=1 // pred_fallthru
      _
    // Predicated region
    $region50: #{conditional_generator_forward.2} parent=1 // pred_check
      _
    $region51: #{conditional_generator_forward.2} parent=1 // pred_check_branch
      %100 = sbr.rel (0) target = $region53
    $region52: #{conditional_generator_forward.2} parent=1 // pred_region
      %101 = dma.done [#allocation11], 128
    $region53: #{conditional_generator_forward.2} parent=1 // pred_fallthru
      _
    %v102 = vld [vmem:[%s0] sm:$0xff]
    %v103 = vld [vmem:[#allocation2] sm:$0xff]
    %v104 = vld [vmem:[#allocation2 + $0x8] sm:$0xff]
    %v105 = vld [vmem:[#allocation2 + $0x10] sm:$0xff]
    %v106 = vld [vmem:[#allocation2 + $0x18] sm:$0xff]
    %v107 = vld [vmem:[#allocation2 + $0x20] sm:$0xff]
    %v108 = vld [vmem:[#allocation2 + $0x28] sm:$0xff]
    %v109 = vld [vmem:[#allocation2 + $0x30] sm:$0xff]
    %v110 = vld [vmem:[#allocation2 + $0x38] sm:$0xff]
    %v111 = vld [vmem:[#allocation2 + $0x40] sm:$0xff]
    %v112 = vld [vmem:[#allocation2 + $0x48] sm:$0xff]
    %v113 = vld [vmem:[#allocation2 + $0x50] sm:$0xff]
    %v114 = vld [vmem:[#allocation2 + $0x58] sm:$0xff]
    %v115 = vld [vmem:[#allocation2 + $0x60] sm:$0xff]
    %v116 = vld [vmem:[#allocation2 + $0x68] sm:$0xff]
    %v117 = vld [vmem:[#allocation2 + $0x70] sm:$0xff]
    %v118 = vld [vmem:[#allocation2 + $0x78] sm:$0xff]
    %v119 = vld [vmem:[#allocation2 + $0x80] sm:$0xff]
    %v120 = vld [vmem:[#allocation2 + $0x88] sm:$0xff]
    %v121 = vld [vmem:[#allocation2 + $0x90] sm:$0xff]
    %v122 = vld [vmem:[#allocation2 + $0x98] sm:$0xff]
    %v123 = vld [vmem:[#allocation2 + $0xa0] sm:$0xff]
    %v124 = vld [vmem:[#allocation2 + $0xa8] sm:$0xff]
    %v125 = vld [vmem:[#allocation2 + $0xb0] sm:$0xff]
    %v126 = vld [vmem:[#allocation2 + $0xb8] sm:$0xff]
    %v127 = vld [vmem:[#allocation2 + $0xc0] sm:$0xff]
    %v128 = vld [vmem:[#allocation2 + $0xc8] sm:$0xff]
    %v129 = vld [vmem:[#allocation2 + $0xd0] sm:$0xff]
    %v130 = vld [vmem:[#allocation2 + $0xd8] sm:$0xff]
    %v131 = vld [vmem:[#allocation2 + $0xe0] sm:$0xff]
    %v132 = vld [vmem:[#allocation2 + $0xe8] sm:$0xff]
    %v133 = vld [vmem:[#allocation2 + $0xf0] sm:$0xff]
    %v134 = vld [vmem:[#allocation2 + $0xf8] sm:$0xff]
    %v135 = vld [vmem:[#allocation4] sm:$0x3]
    %v137 = vlaneseq
    %v138 = vshrl.u32 %v137, 7
    %v139 = vsub.s32 0, %v138
    %v140 = vrot.slane %v135, %v139
    %v141 = vlaneseq
    %v142 = vshrl.u32 %v141, 7
    %v143 = vsub.s32 1, %v142
    %v144 = vrot.slane %v135, %v143
    %147 = vmatprep.subr.mxu0 %v104
    %148 = vmatpush1.msra.mxu0 %v103
    %149 = vmatprep.subr.mxu0 %v106
    %150 = vmatpush1.msra.mxu0 %v105
    %151 = vmatprep.subr.mxu0 %v108
    %152 = vmatpush1.msra.mxu0 %v107
    %153 = vmatprep.subr.mxu0 %v110
    %154 = vmatpush1.msra.mxu0 %v109
    %155 = vmatprep.subr.mxu0 %v112
    %156 = vmatpush1.msra.mxu0 %v111
    %157 = vmatprep.subr.mxu0 %v114
    %158 = vmatpush1.msra.mxu0 %v113
    %159 = vmatprep.subr.mxu0 %v116
    %160 = vmatpush1.msra.mxu0 %v115
    %161 = vmatprep.subr.mxu0 %v118
    %162 = vmatpush1.msra.mxu0 %v117
    %163 = vmatprep.subr.mxu0 %v120
    %164 = vmatpush1.msra.mxu0 %v119
    %165 = vmatprep.subr.mxu0 %v122
    %166 = vmatpush1.msra.mxu0 %v121
    %167 = vmatprep.subr.mxu0 %v124
    %168 = vmatpush1.msra.mxu0 %v123
    %169 = vmatprep.subr.mxu0 %v126
    %170 = vmatpush1.msra.mxu0 %v125
    %171 = vmatprep.subr.mxu0 %v128
    %172 = vmatpush1.msra.mxu0 %v127
    %173 = vmatprep.subr.mxu0 %v130
    %174 = vmatpush1.msra.mxu0 %v129
    %175 = vmatprep.subr.mxu0 %v132
    %176 = vmatpush1.msra.mxu0 %v131
    %177 = vmatprep.subr.mxu0 %v134
    %178 = vmatpush1.msra.mxu0 %v133
    %179 = vmatprep.subr.mxu0 0.0
    %180 = vmatpush1.msra.mxu0 0.0
    %181 = vmatprep.subr.mxu0 0.0
    %182 = vmatpush1.msra.mxu0 0.0
    %183 = vmatprep.subr.mxu0 0.0
    %184 = vmatpush1.msra.mxu0 0.0
    %185 = vmatprep.subr.mxu0 0.0
    %186 = vmatpush1.msra.mxu0 0.0
    %187 = vmatprep.subr.mxu0 0.0
    %188 = vmatpush1.msra.mxu0 0.0
    %189 = vmatprep.subr.mxu0 0.0
    %190 = vmatpush1.msra.mxu0 0.0
    %191 = vmatprep.subr.mxu0 0.0
    %192 = vmatpush1.msra.mxu0 0.0
    %193 = vmatprep.subr.mxu0 0.0
    %194 = vmatpush1.msra.mxu0 0.0
    %195 = vmatprep.subr.mxu0 0.0
    %196 = vmatpush1.msra.mxu0 0.0
    %197 = vmatprep.subr.mxu0 0.0
    %198 = vmatpush1.msra.mxu0 0.0
    %199 = vmatprep.subr.mxu0 0.0
    %200 = vmatpush1.msra.mxu0 0.0
    %201 = vmatprep.subr.mxu0 0.0
    %202 = vmatpush1.msra.mxu0 0.0
    %203 = vmatprep.subr.mxu0 0.0
    %204 = vmatpush1.msra.mxu0 0.0
    %205 = vmatprep.subr.mxu0 0.0
    %206 = vmatpush1.msra.mxu0 0.0
    %207 = vmatprep.subr.mxu0 0.0
    %208 = vmatpush1.msra.mxu0 0.0
    %209 = vmatprep.subr.mxu0 0.0
    %210 = vmatpush1.msra.mxu0 0.0
    %211 = vmatprep.mubr.f32.mxu0 0.0
    %212 = vmatmul.mubr.f32.gmra.mrb[0].mxu0 %v102
    %v213 = vpop.f32.mrb[0].mxu0
    %v214 = vadd.f32 %v140, %v213
    %v215 = vpop.f32.mrb[0].mxu0
    %v216 = vadd.f32 %v144, %v215
    %217 = vdwg.mxu0
    %vm218 = vcmp.gt.f32.partialorder %v214, 0.0
    %vm219 = vcmp.gt.f32.partialorder %v216, 0.0
    %v220 = vmul.f32 %v214, 0.2
    %v221 = vmul.f32 %v216, 0.2
    %v222 = vsel %vm218, %v214, %v220
    %v223 = vsel %vm219, %v216, %v221
    %v224 = vld [vmem:[#allocation6] sm:$0xff]
    %v225 = vld [vmem:[#allocation6 + $0x8] sm:$0xff]
    %v226 = vld [vmem:[#allocation6 + $0x10] sm:$0xff]
    %v227 = vld [vmem:[#allocation6 + $0x18] sm:$0xff]
    %v228 = vld [vmem:[#allocation6 + $0x20] sm:$0xff]
    %v229 = vld [vmem:[#allocation6 + $0x28] sm:$0xff]
    %v230 = vld [vmem:[#allocation6 + $0x30] sm:$0xff]
    %v231 = vld [vmem:[#allocation6 + $0x38] sm:$0xff]
    %v232 = vld [vmem:[#allocation6 + $0x40] sm:$0xff]
    %v233 = vld [vmem:[#allocation6 + $0x48] sm:$0xff]
    %v234 = vld [vmem:[#allocation6 + $0x50] sm:$0xff]
    %v235 = vld [vmem:[#allocation6 + $0x58] sm:$0xff]
    %v236 = vld [vmem:[#allocation6 + $0x60] sm:$0xff]
    %v237 = vld [vmem:[#allocation6 + $0x68] sm:$0xff]
    %v238 = vld [vmem:[#allocation6 + $0x70] sm:$0xff]
    %v239 = vld [vmem:[#allocation6 + $0x78] sm:$0xff]
    %v240 = vld [vmem:[#allocation6 + $0x80] sm:$0xff]
    %v241 = vld [vmem:[#allocation6 + $0x88] sm:$0xff]
    %v242 = vld [vmem:[#allocation6 + $0x90] sm:$0xff]
    %v243 = vld [vmem:[#allocation6 + $0x98] sm:$0xff]
    %v244 = vld [vmem:[#allocation6 + $0xa0] sm:$0xff]
    %v245 = vld [vmem:[#allocation6 + $0xa8] sm:$0xff]
    %v246 = vld [vmem:[#allocation6 + $0xb0] sm:$0xff]
    %v247 = vld [vmem:[#allocation6 + $0xb8] sm:$0xff]
    %v248 = vld [vmem:[#allocation6 + $0xc0] sm:$0xff]
    %v249 = vld [vmem:[#allocation6 + $0xc8] sm:$0xff]
    %v250 = vld [vmem:[#allocation6 + $0xd0] sm:$0xff]
    %v251 = vld [vmem:[#allocation6 + $0xd8] sm:$0xff]
    %v252 = vld [vmem:[#allocation6 + $0xe0] sm:$0xff]
    %v253 = vld [vmem:[#allocation6 + $0xe8] sm:$0xff]
    %v254 = vld [vmem:[#allocation6 + $0xf0] sm:$0xff]
    %v255 = vld [vmem:[#allocation6 + $0xf8] sm:$0xff]
    %v256 = vld [vmem:[#allocation6 + $0x100] sm:$0xff]
    %v257 = vld [vmem:[#allocation6 + $0x108] sm:$0xff]
    %v258 = vld [vmem:[#allocation6 + $0x110] sm:$0xff]
    %v259 = vld [vmem:[#allocation6 + $0x118] sm:$0xff]
    %v260 = vld [vmem:[#allocation6 + $0x120] sm:$0xff]
    %v261 = vld [vmem:[#allocation6 + $0x128] sm:$0xff]
    %v262 = vld [vmem:[#allocation6 + $0x130] sm:$0xff]
    %v263 = vld [vmem:[#allocation6 + $0x138] sm:$0xff]
    %v264 = vld [vmem:[#allocation6 + $0x140] sm:$0xff]
    %v265 = vld [vmem:[#allocation6 + $0x148] sm:$0xff]
    %v266 = vld [vmem:[#allocation6 + $0x150] sm:$0xff]
    %v267 = vld [vmem:[#allocation6 + $0x158] sm:$0xff]
    %v268 = vld [vmem:[#allocation6 + $0x160] sm:$0xff]
    %v269 = vld [vmem:[#allocation6 + $0x168] sm:$0xff]
    %v270 = vld [vmem:[#allocation6 + $0x170] sm:$0xff]
    %v271 = vld [vmem:[#allocation6 + $0x178] sm:$0xff]
    %v272 = vld [vmem:[#allocation6 + $0x180] sm:$0xff]
    %v273 = vld [vmem:[#allocation6 + $0x188] sm:$0xff]
    %v274 = vld [vmem:[#allocation6 + $0x190] sm:$0xff]
    %v275 = vld [vmem:[#allocation6 + $0x198] sm:$0xff]
    %v276 = vld [vmem:[#allocation6 + $0x1a0] sm:$0xff]
    %v277 = vld [vmem:[#allocation6 + $0x1a8] sm:$0xff]
    %v278 = vld [vmem:[#allocation6 + $0x1b0] sm:$0xff]
    %v279 = vld [vmem:[#allocation6 + $0x1b8] sm:$0xff]
    %v280 = vld [vmem:[#allocation6 + $0x1c0] sm:$0xff]
    %v281 = vld [vmem:[#allocation6 + $0x1c8] sm:$0xff]
    %v282 = vld [vmem:[#allocation6 + $0x1d0] sm:$0xff]
    %v283 = vld [vmem:[#allocation6 + $0x1d8] sm:$0xff]
    %v284 = vld [vmem:[#allocation6 + $0x1e0] sm:$0xff]
    %v285 = vld [vmem:[#allocation6 + $0x1e8] sm:$0xff]
    %v286 = vld [vmem:[#allocation6 + $0x1f0] sm:$0xff]
    %v287 = vld [vmem:[#allocation6 + $0x1f8] sm:$0xff]
    %v288 = vld [vmem:[#allocation6 + $0x200] sm:$0xff]
    %v289 = vld [vmem:[#allocation6 + $0x208] sm:$0xff]
    %v290 = vld [vmem:[#allocation6 + $0x210] sm:$0xff]
    %v291 = vld [vmem:[#allocation6 + $0x218] sm:$0xff]
    %v292 = vld [vmem:[#allocation6 + $0x220] sm:$0xff]
    %v293 = vld [vmem:[#allocation6 + $0x228] sm:$0xff]
    %v294 = vld [vmem:[#allocation6 + $0x230] sm:$0xff]
    %v295 = vld [vmem:[#allocation6 + $0x238] sm:$0xff]
    %v296 = vld [vmem:[#allocation6 + $0x240] sm:$0xff]
    %v297 = vld [vmem:[#allocation6 + $0x248] sm:$0xff]
    %v298 = vld [vmem:[#allocation6 + $0x250] sm:$0xff]
    %v299 = vld [vmem:[#allocation6 + $0x258] sm:$0xff]
    %v300 = vld [vmem:[#allocation6 + $0x260] sm:$0xff]
    %v301 = vld [vmem:[#allocation6 + $0x268] sm:$0xff]
    %v302 = vld [vmem:[#allocation6 + $0x270] sm:$0xff]
    %v303 = vld [vmem:[#allocation6 + $0x278] sm:$0xff]
    %v304 = vld [vmem:[#allocation6 + $0x280] sm:$0xff]
    %v305 = vld [vmem:[#allocation6 + $0x288] sm:$0xff]
    %v306 = vld [vmem:[#allocation6 + $0x290] sm:$0xff]
    %v307 = vld [vmem:[#allocation6 + $0x298] sm:$0xff]
    %v308 = vld [vmem:[#allocation6 + $0x2a0] sm:$0xff]
    %v309 = vld [vmem:[#allocation6 + $0x2a8] sm:$0xff]
    %v310 = vld [vmem:[#allocation6 + $0x2b0] sm:$0xff]
    %v311 = vld [vmem:[#allocation6 + $0x2b8] sm:$0xff]
    %v312 = vld [vmem:[#allocation6 + $0x2c0] sm:$0xff]
    %v313 = vld [vmem:[#allocation6 + $0x2c8] sm:$0xff]
    %v314 = vld [vmem:[#allocation6 + $0x2d0] sm:$0xff]
    %v315 = vld [vmem:[#allocation6 + $0x2d8] sm:$0xff]
    %v316 = vld [vmem:[#allocation6 + $0x2e0] sm:$0xff]
    %v317 = vld [vmem:[#allocation6 + $0x2e8] sm:$0xff]
    %v318 = vld [vmem:[#allocation6 + $0x2f0] sm:$0xff]
    %v319 = vld [vmem:[#allocation6 + $0x2f8] sm:$0xff]
    %v320 = vld [vmem:[#allocation6 + $0x300] sm:$0xff]
    %v321 = vld [vmem:[#allocation6 + $0x308] sm:$0xff]
    %v322 = vld [vmem:[#allocation6 + $0x310] sm:$0xff]
    %v323 = vld [vmem:[#allocation6 + $0x318] sm:$0xff]
    %v324 = vld [vmem:[#allocation6 + $0x320] sm:$0xff]
    %v325 = vld [vmem:[#allocation6 + $0x328] sm:$0xff]
    %v326 = vld [vmem:[#allocation6 + $0x330] sm:$0xff]
    %v327 = vld [vmem:[#allocation6 + $0x338] sm:$0xff]
    %v328 = vld [vmem:[#allocation6 + $0x340] sm:$0xff]
    %v329 = vld [vmem:[#allocation6 + $0x348] sm:$0xff]
    %v330 = vld [vmem:[#allocation6 + $0x350] sm:$0xff]
    %v331 = vld [vmem:[#allocation6 + $0x358] sm:$0xff]
    %v332 = vld [vmem:[#allocation6 + $0x360] sm:$0xff]
    %v333 = vld [vmem:[#allocation6 + $0x368] sm:$0xff]
    %v334 = vld [vmem:[#allocation6 + $0x370] sm:$0xff]
    %v335 = vld [vmem:[#allocation6 + $0x378] sm:$0xff]
    %v336 = vld [vmem:[#allocation6 + $0x380] sm:$0xff]
    %v337 = vld [vmem:[#allocation6 + $0x388] sm:$0xff]
    %v338 = vld [vmem:[#allocation6 + $0x390] sm:$0xff]
    %v339 = vld [vmem:[#allocation6 + $0x398] sm:$0xff]
    %v340 = vld [vmem:[#allocation6 + $0x3a0] sm:$0xff]
    %v341 = vld [vmem:[#allocation6 + $0x3a8] sm:$0xff]
    %v342 = vld [vmem:[#allocation6 + $0x3b0] sm:$0xff]
    %v343 = vld [vmem:[#allocation6 + $0x3b8] sm:$0xff]
    %v344 = vld [vmem:[#allocation6 + $0x3c0] sm:$0xff]
    %v345 = vld [vmem:[#allocation6 + $0x3c8] sm:$0xff]
    %v346 = vld [vmem:[#allocation6 + $0x3d0] sm:$0xff]
    %v347 = vld [vmem:[#allocation6 + $0x3d8] sm:$0xff]
    %v348 = vld [vmem:[#allocation6 + $0x3e0] sm:$0xff]
    %v349 = vld [vmem:[#allocation6 + $0x3e8] sm:$0xff]
    %v350 = vld [vmem:[#allocation6 + $0x3f0] sm:$0xff]
    %v351 = vld [vmem:[#allocation6 + $0x3f8] sm:$0xff]
    %v352 = vld [vmem:[#allocation7] sm:$0xf]
    %v354 = vlaneseq
    %v355 = vshrl.u32 %v354, 7
    %v356 = vsub.s32 0, %v355
    %v357 = vrot.slane %v352, %v356
    %v358 = vlaneseq
    %v359 = vshrl.u32 %v358, 7
    %v360 = vsub.s32 1, %v359
    %v361 = vrot.slane %v352, %v360
    %v362 = vlaneseq
    %v363 = vshrl.u32 %v362, 7
    %v364 = vsub.s32 2, %v363
    %v365 = vrot.slane %v352, %v364
    %v366 = vlaneseq
    %v367 = vshrl.u32 %v366, 7
    %v368 = vsub.s32 3, %v367
    %v369 = vrot.slane %v352, %v368
    %374 = vmatprep.subr.mxu0 %v225
    %375 = vmatpush1.msra.mxu0 %v224
    %376 = vmatprep.subr.mxu0 %v229
    %377 = vmatpush1.msra.mxu0 %v228
    %378 = vmatprep.subr.mxu0 %v233
    %379 = vmatpush1.msra.mxu0 %v232
    %380 = vmatprep.subr.mxu0 %v237
    %381 = vmatpush1.msra.mxu0 %v236
    %382 = vmatprep.subr.mxu0 %v241
    %383 = vmatpush1.msra.mxu0 %v240
    %384 = vmatprep.subr.mxu0 %v245
    %385 = vmatpush1.msra.mxu0 %v244
    %386 = vmatprep.subr.mxu0 %v249
    %387 = vmatpush1.msra.mxu0 %v248
    %388 = vmatprep.subr.mxu0 %v253
    %389 = vmatpush1.msra.mxu0 %v252
    %390 = vmatprep.subr.mxu0 %v257
    %391 = vmatpush1.msra.mxu0 %v256
    %392 = vmatprep.subr.mxu0 %v261
    %393 = vmatpush1.msra.mxu0 %v260
    %394 = vmatprep.subr.mxu0 %v265
    %395 = vmatpush1.msra.mxu0 %v264
    %396 = vmatprep.subr.mxu0 %v269
    %397 = vmatpush1.msra.mxu0 %v268
    %398 = vmatprep.subr.mxu0 %v273
    %399 = vmatpush1.msra.mxu0 %v272
    %400 = vmatprep.subr.mxu0 %v277
    %401 = vmatpush1.msra.mxu0 %v276
    %402 = vmatprep.subr.mxu0 %v281
    %403 = vmatpush1.msra.mxu0 %v280
    %404 = vmatprep.subr.mxu0 %v285
    %405 = vmatpush1.msra.mxu0 %v284
    %406 = vmatprep.subr.mxu0 %v289
    %407 = vmatpush1.msra.mxu0 %v288
    %408 = vmatprep.subr.mxu0 %v293
    %409 = vmatpush1.msra.mxu0 %v292
    %410 = vmatprep.subr.mxu0 %v297
    %411 = vmatpush1.msra.mxu0 %v296
    %412 = vmatprep.subr.mxu0 %v301
    %413 = vmatpush1.msra.mxu0 %v300
    %414 = vmatprep.subr.mxu0 %v305
    %415 = vmatpush1.msra.mxu0 %v304
    %416 = vmatprep.subr.mxu0 %v309
    %417 = vmatpush1.msra.mxu0 %v308
    %418 = vmatprep.subr.mxu0 %v313
    %419 = vmatpush1.msra.mxu0 %v312
    %420 = vmatprep.subr.mxu0 %v317
    %421 = vmatpush1.msra.mxu0 %v316
    %422 = vmatprep.subr.mxu0 %v321
    %423 = vmatpush1.msra.mxu0 %v320
    %424 = vmatprep.subr.mxu0 %v325
    %425 = vmatpush1.msra.mxu0 %v324
    %426 = vmatprep.subr.mxu0 %v329
    %427 = vmatpush1.msra.mxu0 %v328
    %428 = vmatprep.subr.mxu0 %v333
    %429 = vmatpush1.msra.mxu0 %v332
    %430 = vmatprep.subr.mxu0 %v337
    %431 = vmatpush1.msra.mxu0 %v336
    %432 = vmatprep.subr.mxu0 %v341
    %433 = vmatpush1.msra.mxu0 %v340
    %434 = vmatprep.subr.mxu0 %v345
    %435 = vmatpush1.msra.mxu0 %v344
    %436 = vmatprep.subr.mxu0 %v349
    %437 = vmatpush1.msra.mxu0 %v348
    %438 = vmatprep.mubr.f32.mxu0 %v223
    %439 = vmatmul.mubr.f32.gmra.mrb[0].mxu0 %v222
    %v440 = vpop.f32.mrb[0].mxu0
    %v441 = vadd.f32 %v357, %v440
    %v442 = vpop.f32.mrb[0].mxu0
    %v443 = vadd.f32 %v361, %v442
    %444 = vdwg.mxu0
    %445 = vmatprep.subr.mxu0 %v227
    %446 = vmatpush1.msra.mxu0 %v226
    %447 = vmatprep.subr.mxu0 %v231
    %448 = vmatpush1.msra.mxu0 %v230
    %449 = vmatprep.subr.mxu0 %v235
    %450 = vmatpush1.msra.mxu0 %v234
    %451 = vmatprep.subr.mxu0 %v239
    %452 = vmatpush1.msra.mxu0 %v238
    %453 = vmatprep.subr.mxu0 %v243
    %454 = vmatpush1.msra.mxu0 %v242
    %455 = vmatprep.subr.mxu0 %v247
    %456 = vmatpush1.msra.mxu0 %v246
    %457 = vmatprep.subr.mxu0 %v251
    %458 = vmatpush1.msra.mxu0 %v250
    %459 = vmatprep.subr.mxu0 %v255
    %460 = vmatpush1.msra.mxu0 %v254
    %461 = vmatprep.subr.mxu0 %v259
    %462 = vmatpush1.msra.mxu0 %v258
    %463 = vmatprep.subr.mxu0 %v263
    %464 = vmatpush1.msra.mxu0 %v262
    %465 = vmatprep.subr.mxu0 %v267
    %466 = vmatpush1.msra.mxu0 %v266
    %467 = vmatprep.subr.mxu0 %v271
    %468 = vmatpush1.msra.mxu0 %v270
    %469 = vmatprep.subr.mxu0 %v275
    %470 = vmatpush1.msra.mxu0 %v274
    %471 = vmatprep.subr.mxu0 %v279
    %472 = vmatpush1.msra.mxu0 %v278
    %473 = vmatprep.subr.mxu0 %v283
    %474 = vmatpush1.msra.mxu0 %v282
    %475 = vmatprep.subr.mxu0 %v287
    %476 = vmatpush1.msra.mxu0 %v286
    %477 = vmatprep.subr.mxu0 %v291
    %478 = vmatpush1.msra.mxu0 %v290
    %479 = vmatprep.subr.mxu0 %v295
    %480 = vmatpush1.msra.mxu0 %v294
    %481 = vmatprep.subr.mxu0 %v299
    %482 = vmatpush1.msra.mxu0 %v298
    %483 = vmatprep.subr.mxu0 %v303
    %484 = vmatpush1.msra.mxu0 %v302
    %485 = vmatprep.subr.mxu0 %v307
    %486 = vmatpush1.msra.mxu0 %v306
    %487 = vmatprep.subr.mxu0 %v311
    %488 = vmatpush1.msra.mxu0 %v310
    %489 = vmatprep.subr.mxu0 %v315
    %490 = vmatpush1.msra.mxu0 %v314
    %491 = vmatprep.subr.mxu0 %v319
    %492 = vmatpush1.msra.mxu0 %v318
    %493 = vmatprep.subr.mxu0 %v323
    %494 = vmatpush1.msra.mxu0 %v322
    %495 = vmatprep.subr.mxu0 %v327
    %496 = vmatpush1.msra.mxu0 %v326
    %497 = vmatprep.subr.mxu0 %v331
    %498 = vmatpush1.msra.mxu0 %v330
    %499 = vmatprep.subr.mxu0 %v335
    %500 = vmatpush1.msra.mxu0 %v334
    %501 = vmatprep.subr.mxu0 %v339
    %502 = vmatpush1.msra.mxu0 %v338
    %503 = vmatprep.subr.mxu0 %v343
    %504 = vmatpush1.msra.mxu0 %v342
    %505 = vmatprep.subr.mxu0 %v347
    %506 = vmatpush1.msra.mxu0 %v346
    %507 = vmatprep.subr.mxu0 %v351
    %508 = vmatpush1.msra.mxu0 %v350
    %509 = vmatprep.mubr.f32.mxu0 %v223
    %510 = vmatmul.mubr.f32.gmra.mrb[0].mxu0 %v222
    %v511 = vpop.f32.mrb[0].mxu0
    %v512 = vadd.f32 %v365, %v511
    %v513 = vpop.f32.mrb[0].mxu0
    %v514 = vadd.f32 %v369, %v513
    %515 = vdwg.mxu0
    %vm516 = vcmp.gt.f32.partialorder %v441, 0.0
    %vm517 = vcmp.gt.f32.partialorder %v443, 0.0
    %vm518 = vcmp.gt.f32.partialorder %v512, 0.0
    %vm519 = vcmp.gt.f32.partialorder %v514, 0.0
    %v520 = vmul.f32 %v441, 0.2
    %v521 = vmul.f32 %v443, 0.2
    %v522 = vmul.f32 %v512, 0.2
    %v523 = vmul.f32 %v514, 0.2
    %v524 = vsel %vm516, %v441, %v520
    %v525 = vsel %vm517, %v443, %v521
    %v526 = vsel %vm518, %v512, %v522
    %v527 = vsel %vm519, %v514, %v523
    %v528 = vld [vmem:[#allocation9] sm:$0xff]
    %v529 = vld [vmem:[#allocation9 + $0x8] sm:$0xff]
    %v530 = vld [vmem:[#allocation9 + $0x10] sm:$0xff]
    %v531 = vld [vmem:[#allocation9 + $0x18] sm:$0xff]
    %v532 = vld [vmem:[#allocation9 + $0x20] sm:$0xff]
    %v533 = vld [vmem:[#allocation9 + $0x28] sm:$0xff]
    %v534 = vld [vmem:[#allocation9 + $0x30] sm:$0xff]
    %v535 = vld [vmem:[#allocation9 + $0x38] sm:$0xff]
    %v536 = vld [vmem:[#allocation9 + $0x40] sm:$0xff]
    %v537 = vld [vmem:[#allocation9 + $0x48] sm:$0xff]
    %v538 = vld [vmem:[#allocation9 + $0x50] sm:$0xff]
    %v539 = vld [vmem:[#allocation9 + $0x58] sm:$0xff]
    %v540 = vld [vmem:[#allocation9 + $0x60] sm:$0xff]
    %v541 = vld [vmem:[#allocation9 + $0x68] sm:$0xff]
    %v542 = vld [vmem:[#allocation9 + $0x70] sm:$0xff]
    %v543 = vld [vmem:[#allocation9 + $0x78] sm:$0xff]
    %v544 = vld [vmem:[#allocation9 + $0x80] sm:$0xff]
    %v545 = vld [vmem:[#allocation9 + $0x88] sm:$0xff]
    %v546 = vld [vmem:[#allocation9 + $0x90] sm:$0xff]
    %v547 = vld [vmem:[#allocation9 + $0x98] sm:$0xff]
    %v548 = vld [vmem:[#allocation9 + $0xa0] sm:$0xff]
    %v549 = vld [vmem:[#allocation9 + $0xa8] sm:$0xff]
    %v550 = vld [vmem:[#allocation9 + $0xb0] sm:$0xff]
    %v551 = vld [vmem:[#allocation9 + $0xb8] sm:$0xff]
    %v552 = vld [vmem:[#allocation9 + $0xc0] sm:$0xff]
    %v553 = vld [vmem:[#allocation9 + $0xc8] sm:$0xff]
    %v554 = vld [vmem:[#allocation9 + $0xd0] sm:$0xff]
    %v555 = vld [vmem:[#allocation9 + $0xd8] sm:$0xff]
    %v556 = vld [vmem:[#allocation9 + $0xe0] sm:$0xff]
    %v557 = vld [vmem:[#allocation9 + $0xe8] sm:$0xff]
    %v558 = vld [vmem:[#allocation9 + $0xf0] sm:$0xff]
    %v559 = vld [vmem:[#allocation9 + $0xf8] sm:$0xff]
    %v560 = vld [vmem:[#allocation9 + $0x100] sm:$0xff]
    %v561 = vld [vmem:[#allocation9 + $0x108] sm:$0xff]
    %v562 = vld [vmem:[#allocation9 + $0x110] sm:$0xff]
    %v563 = vld [vmem:[#allocation9 + $0x118] sm:$0xff]
    %v564 = vld [vmem:[#allocation9 + $0x120] sm:$0xff]
    %v565 = vld [vmem:[#allocation9 + $0x128] sm:$0xff]
    %v566 = vld [vmem:[#allocation9 + $0x130] sm:$0xff]
    %v567 = vld [vmem:[#allocation9 + $0x138] sm:$0xff]
    %v568 = vld [vmem:[#allocation9 + $0x140] sm:$0xff]
    %v569 = vld [vmem:[#allocation9 + $0x148] sm:$0xff]
    %v570 = vld [vmem:[#allocation9 + $0x150] sm:$0xff]
    %v571 = vld [vmem:[#allocation9 + $0x158] sm:$0xff]
    %v572 = vld [vmem:[#allocation9 + $0x160] sm:$0xff]
    %v573 = vld [vmem:[#allocation9 + $0x168] sm:$0xff]
    %v574 = vld [vmem:[#allocation9 + $0x170] sm:$0xff]
    %v575 = vld [vmem:[#allocation9 + $0x178] sm:$0xff]
    %v576 = vld [vmem:[#allocation9 + $0x180] sm:$0xff]
    %v577 = vld [vmem:[#allocation9 + $0x188] sm:$0xff]
    %v578 = vld [vmem:[#allocation9 + $0x190] sm:$0xff]
    %v579 = vld [vmem:[#allocation9 + $0x198] sm:$0xff]
    %v580 = vld [vmem:[#allocation9 + $0x1a0] sm:$0xff]
    %v581 = vld [vmem:[#allocation9 + $0x1a8] sm:$0xff]
    %v582 = vld [vmem:[#allocation9 + $0x1b0] sm:$0xff]
    %v583 = vld [vmem:[#allocation9 + $0x1b8] sm:$0xff]
    %v584 = vld [vmem:[#allocation9 + $0x1c0] sm:$0xff]
    %v585 = vld [vmem:[#allocation9 + $0x1c8] sm:$0xff]
    %v586 = vld [vmem:[#allocation9 + $0x1d0] sm:$0xff]
    %v587 = vld [vmem:[#allocation9 + $0x1d8] sm:$0xff]
    %v588 = vld [vmem:[#allocation9 + $0x1e0] sm:$0xff]
    %v589 = vld [vmem:[#allocation9 + $0x1e8] sm:$0xff]
    %v590 = vld [vmem:[#allocation9 + $0x1f0] sm:$0xff]
    %v591 = vld [vmem:[#allocation9 + $0x1f8] sm:$0xff]
    %v592 = vld [vmem:[#allocation9 + $0x200] sm:$0xff]
    %v593 = vld [vmem:[#allocation9 + $0x208] sm:$0xff]
    %v594 = vld [vmem:[#allocation9 + $0x210] sm:$0xff]
    %v595 = vld [vmem:[#allocation9 + $0x218] sm:$0xff]
    %v596 = vld [vmem:[#allocation9 + $0x220] sm:$0xff]
    %v597 = vld [vmem:[#allocation9 + $0x228] sm:$0xff]
    %v598 = vld [vmem:[#allocation9 + $0x230] sm:$0xff]
    %v599 = vld [vmem:[#allocation9 + $0x238] sm:$0xff]
    %v600 = vld [vmem:[#allocation9 + $0x240] sm:$0xff]
    %v601 = vld [vmem:[#allocation9 + $0x248] sm:$0xff]
    %v602 = vld [vmem:[#allocation9 + $0x250] sm:$0xff]
    %v603 = vld [vmem:[#allocation9 + $0x258] sm:$0xff]
    %v604 = vld [vmem:[#allocation9 + $0x260] sm:$0xff]
    %v605 = vld [vmem:[#allocation9 + $0x268] sm:$0xff]
    %v606 = vld [vmem:[#allocation9 + $0x270] sm:$0xff]
    %v607 = vld [vmem:[#allocation9 + $0x278] sm:$0xff]
    %v608 = vld [vmem:[#allocation9 + $0x280] sm:$0xff]
    %v609 = vld [vmem:[#allocation9 + $0x288] sm:$0xff]
    %v610 = vld [vmem:[#allocation9 + $0x290] sm:$0xff]
    %v611 = vld [vmem:[#allocation9 + $0x298] sm:$0xff]
    %v612 = vld [vmem:[#allocation9 + $0x2a0] sm:$0xff]
    %v613 = vld [vmem:[#allocation9 + $0x2a8] sm:$0xff]
    %v614 = vld [vmem:[#allocation9 + $0x2b0] sm:$0xff]
    %v615 = vld [vmem:[#allocation9 + $0x2b8] sm:$0xff]
    %v616 = vld [vmem:[#allocation9 + $0x2c0] sm:$0xff]
    %v617 = vld [vmem:[#allocation9 + $0x2c8] sm:$0xff]
    %v618 = vld [vmem:[#allocation9 + $0x2d0] sm:$0xff]
    %v619 = vld [vmem:[#allocation9 + $0x2d8] sm:$0xff]
    %v620 = vld [vmem:[#allocation9 + $0x2e0] sm:$0xff]
    %v621 = vld [vmem:[#allocation9 + $0x2e8] sm:$0xff]
    %v622 = vld [vmem:[#allocation9 + $0x2f0] sm:$0xff]
    %v623 = vld [vmem:[#allocation9 + $0x2f8] sm:$0xff]
    %v624 = vld [vmem:[#allocation9 + $0x300] sm:$0xff]
    %v625 = vld [vmem:[#allocation9 + $0x308] sm:$0xff]
    %v626 = vld [vmem:[#allocation9 + $0x310] sm:$0xff]
    %v627 = vld [vmem:[#allocation9 + $0x318] sm:$0xff]
    %v628 = vld [vmem:[#allocation9 + $0x320] sm:$0xff]
    %v629 = vld [vmem:[#allocation9 + $0x328] sm:$0xff]
    %v630 = vld [vmem:[#allocation9 + $0x330] sm:$0xff]
    %v631 = vld [vmem:[#allocation9 + $0x338] sm:$0xff]
    %v632 = vld [vmem:[#allocation9 + $0x340] sm:$0xff]
    %v633 = vld [vmem:[#allocation9 + $0x348] sm:$0xff]
    %v634 = vld [vmem:[#allocation9 + $0x350] sm:$0xff]
    %v635 = vld [vmem:[#allocation9 + $0x358] sm:$0xff]
    %v636 = vld [vmem:[#allocation9 + $0x360] sm:$0xff]
    %v637 = vld [vmem:[#allocation9 + $0x368] sm:$0xff]
    %v638 = vld [vmem:[#allocation9 + $0x370] sm:$0xff]
    %v639 = vld [vmem:[#allocation9 + $0x378] sm:$0xff]
    %v640 = vld [vmem:[#allocation9 + $0x380] sm:$0xff]
    %v641 = vld [vmem:[#allocation9 + $0x388] sm:$0xff]
    %v642 = vld [vmem:[#allocation9 + $0x390] sm:$0xff]
    %v643 = vld [vmem:[#allocation9 + $0x398] sm:$0xff]
    %v644 = vld [vmem:[#allocation9 + $0x3a0] sm:$0xff]
    %v645 = vld [vmem:[#allocation9 + $0x3a8] sm:$0xff]
    %v646 = vld [vmem:[#allocation9 + $0x3b0] sm:$0xff]
    %v647 = vld [vmem:[#allocation9 + $0x3b8] sm:$0xff]
    %v648 = vld [vmem:[#allocation9 + $0x3c0] sm:$0xff]
    %v649 = vld [vmem:[#allocation9 + $0x3c8] sm:$0xff]
    %v650 = vld [vmem:[#allocation9 + $0x3d0] sm:$0xff]
    %v651 = vld [vmem:[#allocation9 + $0x3d8] sm:$0xff]
    %v652 = vld [vmem:[#allocation9 + $0x3e0] sm:$0xff]
    %v653 = vld [vmem:[#allocation9 + $0x3e8] sm:$0xff]
    %v654 = vld [vmem:[#allocation9 + $0x3f0] sm:$0xff]
    %v655 = vld [vmem:[#allocation9 + $0x3f8] sm:$0xff]
    %v656 = vld [vmem:[#allocation9 + $0x400] sm:$0xff]
    %v657 = vld [vmem:[#allocation9 + $0x408] sm:$0xff]
    %v658 = vld [vmem:[#allocation9 + $0x410] sm:$0xff]
    %v659 = vld [vmem:[#allocation9 + $0x418] sm:$0xff]
    %v660 = vld [vmem:[#allocation9 + $0x420] sm:$0xff]
    %v661 = vld [vmem:[#allocation9 + $0x428] sm:$0xff]
    %v662 = vld [vmem:[#allocation9 + $0x430] sm:$0xff]
    %v663 = vld [vmem:[#allocation9 + $0x438] sm:$0xff]
    %v664 = vld [vmem:[#allocation9 + $0x440] sm:$0xff]
    %v665 = vld [vmem:[#allocation9 + $0x448] sm:$0xff]
    %v666 = vld [vmem:[#allocation9 + $0x450] sm:$0xff]
    %v667 = vld [vmem:[#allocation9 + $0x458] sm:$0xff]
    %v668 = vld [vmem:[#allocation9 + $0x460] sm:$0xff]
    %v669 = vld [vmem:[#allocation9 + $0x468] sm:$0xff]
    %v670 = vld [vmem:[#allocation9 + $0x470] sm:$0xff]
    %v671 = vld [vmem:[#allocation9 + $0x478] sm:$0xff]
    %v672 = vld [vmem:[#allocation9 + $0x480] sm:$0xff]
    %v673 = vld [vmem:[#allocation9 + $0x488] sm:$0xff]
    %v674 = vld [vmem:[#allocation9 + $0x490] sm:$0xff]
    %v675 = vld [vmem:[#allocation9 + $0x498] sm:$0xff]
    %v676 = vld [vmem:[#allocation9 + $0x4a0] sm:$0xff]
    %v677 = vld [vmem:[#allocation9 + $0x4a8] sm:$0xff]
    %v678 = vld [vmem:[#allocation9 + $0x4b0] sm:$0xff]
    %v679 = vld [vmem:[#allocation9 + $0x4b8] sm:$0xff]
    %v680 = vld [vmem:[#allocation9 + $0x4c0] sm:$0xff]
    %v681 = vld [vmem:[#allocation9 + $0x4c8] sm:$0xff]
    %v682 = vld [vmem:[#allocation9 + $0x4d0] sm:$0xff]
    %v683 = vld [vmem:[#allocation9 + $0x4d8] sm:$0xff]
    %v684 = vld [vmem:[#allocation9 + $0x4e0] sm:$0xff]
    %v685 = vld [vmem:[#allocation9 + $0x4e8] sm:$0xff]
    %v686 = vld [vmem:[#allocation9 + $0x4f0] sm:$0xff]
    %v687 = vld [vmem:[#allocation9 + $0x4f8] sm:$0xff]
    %v688 = vld [vmem:[#allocation9 + $0x500] sm:$0xff]
    %v689 = vld [vmem:[#allocation9 + $0x508] sm:$0xff]
    %v690 = vld [vmem:[#allocation9 + $0x510] sm:$0xff]
    %v691 = vld [vmem:[#allocation9 + $0x518] sm:$0xff]
    %v692 = vld [vmem:[#allocation9 + $0x520] sm:$0xff]
    %v693 = vld [vmem:[#allocation9 + $0x528] sm:$0xff]
    %v694 = vld [vmem:[#allocation9 + $0x530] sm:$0xff]
    %v695 = vld [vmem:[#allocation9 + $0x538] sm:$0xff]
    %v696 = vld [vmem:[#allocation9 + $0x540] sm:$0xff]
    %v697 = vld [vmem:[#allocation9 + $0x548] sm:$0xff]
    %v698 = vld [vmem:[#allocation9 + $0x550] sm:$0xff]
    %v699 = vld [vmem:[#allocation9 + $0x558] sm:$0xff]
    %v700 = vld [vmem:[#allocation9 + $0x560] sm:$0xff]
    %v701 = vld [vmem:[#allocation9 + $0x568] sm:$0xff]
    %v702 = vld [vmem:[#allocation9 + $0x570] sm:$0xff]
    %v703 = vld [vmem:[#allocation9 + $0x578] sm:$0xff]
    %v704 = vld [vmem:[#allocation9 + $0x580] sm:$0xff]
    %v705 = vld [vmem:[#allocation9 + $0x588] sm:$0xff]
    %v706 = vld [vmem:[#allocation9 + $0x590] sm:$0xff]
    %v707 = vld [vmem:[#allocation9 + $0x598] sm:$0xff]
    %v708 = vld [vmem:[#allocation9 + $0x5a0] sm:$0xff]
    %v709 = vld [vmem:[#allocation9 + $0x5a8] sm:$0xff]
    %v710 = vld [vmem:[#allocation9 + $0x5b0] sm:$0xff]
    %v711 = vld [vmem:[#allocation9 + $0x5b8] sm:$0xff]
    %v712 = vld [vmem:[#allocation9 + $0x5c0] sm:$0xff]
    %v713 = vld [vmem:[#allocation9 + $0x5c8] sm:$0xff]
    %v714 = vld [vmem:[#allocation9 + $0x5d0] sm:$0xff]
    %v715 = vld [vmem:[#allocation9 + $0x5d8] sm:$0xff]
    %v716 = vld [vmem:[#allocation9 + $0x5e0] sm:$0xff]
    %v717 = vld [vmem:[#allocation9 + $0x5e8] sm:$0xff]
    %v718 = vld [vmem:[#allocation9 + $0x5f0] sm:$0xff]
    %v719 = vld [vmem:[#allocation9 + $0x5f8] sm:$0xff]
    %v720 = vld [vmem:[#allocation9 + $0x600] sm:$0xff]
    %v721 = vld [vmem:[#allocation9 + $0x608] sm:$0xff]
    %v722 = vld [vmem:[#allocation9 + $0x610] sm:$0xff]
    %v723 = vld [vmem:[#allocation9 + $0x618] sm:$0xff]
    %v724 = vld [vmem:[#allocation9 + $0x620] sm:$0xff]
    %v725 = vld [vmem:[#allocation9 + $0x628] sm:$0xff]
    %v726 = vld [vmem:[#allocation9 + $0x630] sm:$0xff]
    %v727 = vld [vmem:[#allocation9 + $0x638] sm:$0xff]
    %v728 = vld [vmem:[#allocation9 + $0x640] sm:$0xff]
    %v729 = vld [vmem:[#allocation9 + $0x648] sm:$0xff]
    %v730 = vld [vmem:[#allocation9 + $0x650] sm:$0xff]
    %v731 = vld [vmem:[#allocation9 + $0x658] sm:$0xff]
    %v732 = vld [vmem:[#allocation9 + $0x660] sm:$0xff]
    %v733 = vld [vmem:[#allocation9 + $0x668] sm:$0xff]
    %v734 = vld [vmem:[#allocation9 + $0x670] sm:$0xff]
    %v735 = vld [vmem:[#allocation9 + $0x678] sm:$0xff]
    %v736 = vld [vmem:[#allocation9 + $0x680] sm:$0xff]
    %v737 = vld [vmem:[#allocation9 + $0x688] sm:$0xff]
    %v738 = vld [vmem:[#allocation9 + $0x690] sm:$0xff]
    %v739 = vld [vmem:[#allocation9 + $0x698] sm:$0xff]
    %v740 = vld [vmem:[#allocation9 + $0x6a0] sm:$0xff]
    %v741 = vld [vmem:[#allocation9 + $0x6a8] sm:$0xff]
    %v742 = vld [vmem:[#allocation9 + $0x6b0] sm:$0xff]
    %v743 = vld [vmem:[#allocation9 + $0x6b8] sm:$0xff]
    %v744 = vld [vmem:[#allocation9 + $0x6c0] sm:$0xff]
    %v745 = vld [vmem:[#allocation9 + $0x6c8] sm:$0xff]
    %v746 = vld [vmem:[#allocation9 + $0x6d0] sm:$0xff]
    %v747 = vld [vmem:[#allocation9 + $0x6d8] sm:$0xff]
    %v748 = vld [vmem:[#allocation9 + $0x6e0] sm:$0xff]
    %v749 = vld [vmem:[#allocation9 + $0x6e8] sm:$0xff]
    %v750 = vld [vmem:[#allocation9 + $0x6f0] sm:$0xff]
    %v751 = vld [vmem:[#allocation9 + $0x6f8] sm:$0xff]
    %v752 = vld [vmem:[#allocation9 + $0x700] sm:$0xff]
    %v753 = vld [vmem:[#allocation9 + $0x708] sm:$0xff]
    %v754 = vld [vmem:[#allocation9 + $0x710] sm:$0xff]
    %v755 = vld [vmem:[#allocation9 + $0x718] sm:$0xff]
    %v756 = vld [vmem:[#allocation9 + $0x720] sm:$0xff]
    %v757 = vld [vmem:[#allocation9 + $0x728] sm:$0xff]
    %v758 = vld [vmem:[#allocation9 + $0x730] sm:$0xff]
    %v759 = vld [vmem:[#allocation9 + $0x738] sm:$0xff]
    %v760 = vld [vmem:[#allocation9 + $0x740] sm:$0xff]
    %v761 = vld [vmem:[#allocation9 + $0x748] sm:$0xff]
    %v762 = vld [vmem:[#allocation9 + $0x750] sm:$0xff]
    %v763 = vld [vmem:[#allocation9 + $0x758] sm:$0xff]
    %v764 = vld [vmem:[#allocation9 + $0x760] sm:$0xff]
    %v765 = vld [vmem:[#allocation9 + $0x768] sm:$0xff]
    %v766 = vld [vmem:[#allocation9 + $0x770] sm:$0xff]
    %v767 = vld [vmem:[#allocation9 + $0x778] sm:$0xff]
    %v768 = vld [vmem:[#allocation9 + $0x780] sm:$0xff]
    %v769 = vld [vmem:[#allocation9 + $0x788] sm:$0xff]
    %v770 = vld [vmem:[#allocation9 + $0x790] sm:$0xff]
    %v771 = vld [vmem:[#allocation9 + $0x798] sm:$0xff]
    %v772 = vld [vmem:[#allocation9 + $0x7a0] sm:$0xff]
    %v773 = vld [vmem:[#allocation9 + $0x7a8] sm:$0xff]
    %v774 = vld [vmem:[#allocation9 + $0x7b0] sm:$0xff]
    %v775 = vld [vmem:[#allocation9 + $0x7b8] sm:$0xff]
    %v776 = vld [vmem:[#allocation9 + $0x7c0] sm:$0xff]
    %v777 = vld [vmem:[#allocation9 + $0x7c8] sm:$0xff]
    %v778 = vld [vmem:[#allocation9 + $0x7d0] sm:$0xff]
    %v779 = vld [vmem:[#allocation9 + $0x7d8] sm:$0xff]
    %v780 = vld [vmem:[#allocation9 + $0x7e0] sm:$0xff]
    %v781 = vld [vmem:[#allocation9 + $0x7e8] sm:$0xff]
    %v782 = vld [vmem:[#allocation9 + $0x7f0] sm:$0xff]
    %v783 = vld [vmem:[#allocation9 + $0x7f8] sm:$0xff]
    %v784 = vld [vmem:[#allocation9 + $0x800] sm:$0xff]
    %v785 = vld [vmem:[#allocation9 + $0x808] sm:$0xff]
    %v786 = vld [vmem:[#allocation9 + $0x810] sm:$0xff]
    %v787 = vld [vmem:[#allocation9 + $0x818] sm:$0xff]
    %v788 = vld [vmem:[#allocation9 + $0x820] sm:$0xff]
    %v789 = vld [vmem:[#allocation9 + $0x828] sm:$0xff]
    %v790 = vld [vmem:[#allocation9 + $0x830] sm:$0xff]
    %v791 = vld [vmem:[#allocation9 + $0x838] sm:$0xff]
    %v792 = vld [vmem:[#allocation9 + $0x840] sm:$0xff]
    %v793 = vld [vmem:[#allocation9 + $0x848] sm:$0xff]
    %v794 = vld [vmem:[#allocation9 + $0x850] sm:$0xff]
    %v795 = vld [vmem:[#allocation9 + $0x858] sm:$0xff]
    %v796 = vld [vmem:[#allocation9 + $0x860] sm:$0xff]
    %v797 = vld [vmem:[#allocation9 + $0x868] sm:$0xff]
    %v798 = vld [vmem:[#allocation9 + $0x870] sm:$0xff]
    %v799 = vld [vmem:[#allocation9 + $0x878] sm:$0xff]
    %v800 = vld [vmem:[#allocation9 + $0x880] sm:$0xff]
    %v801 = vld [vmem:[#allocation9 + $0x888] sm:$0xff]
    %v802 = vld [vmem:[#allocation9 + $0x890] sm:$0xff]
    %v803 = vld [vmem:[#allocation9 + $0x898] sm:$0xff]
    %v804 = vld [vmem:[#allocation9 + $0x8a0] sm:$0xff]
    %v805 = vld [vmem:[#allocation9 + $0x8a8] sm:$0xff]
    %v806 = vld [vmem:[#allocation9 + $0x8b0] sm:$0xff]
    %v807 = vld [vmem:[#allocation9 + $0x8b8] sm:$0xff]
    %v808 = vld [vmem:[#allocation9 + $0x8c0] sm:$0xff]
    %v809 = vld [vmem:[#allocation9 + $0x8c8] sm:$0xff]
    %v810 = vld [vmem:[#allocation9 + $0x8d0] sm:$0xff]
    %v811 = vld [vmem:[#allocation9 + $0x8d8] sm:$0xff]
    %v812 = vld [vmem:[#allocation9 + $0x8e0] sm:$0xff]
    %v813 = vld [vmem:[#allocation9 + $0x8e8] sm:$0xff]
    %v814 = vld [vmem:[#allocation9 + $0x8f0] sm:$0xff]
    %v815 = vld [vmem:[#allocation9 + $0x8f8] sm:$0xff]
    %v816 = vld [vmem:[#allocation9 + $0x900] sm:$0xff]
    %v817 = vld [vmem:[#allocation9 + $0x908] sm:$0xff]
    %v818 = vld [vmem:[#allocation9 + $0x910] sm:$0xff]
    %v819 = vld [vmem:[#allocation9 + $0x918] sm:$0xff]
    %v820 = vld [vmem:[#allocation9 + $0x920] sm:$0xff]
    %v821 = vld [vmem:[#allocation9 + $0x928] sm:$0xff]
    %v822 = vld [vmem:[#allocation9 + $0x930] sm:$0xff]
    %v823 = vld [vmem:[#allocation9 + $0x938] sm:$0xff]
    %v824 = vld [vmem:[#allocation9 + $0x940] sm:$0xff]
    %v825 = vld [vmem:[#allocation9 + $0x948] sm:$0xff]
    %v826 = vld [vmem:[#allocation9 + $0x950] sm:$0xff]
    %v827 = vld [vmem:[#allocation9 + $0x958] sm:$0xff]
    %v828 = vld [vmem:[#allocation9 + $0x960] sm:$0xff]
    %v829 = vld [vmem:[#allocation9 + $0x968] sm:$0xff]
    %v830 = vld [vmem:[#allocation9 + $0x970] sm:$0xff]
    %v831 = vld [vmem:[#allocation9 + $0x978] sm:$0xff]
    %v832 = vld [vmem:[#allocation9 + $0x980] sm:$0xff]
    %v833 = vld [vmem:[#allocation9 + $0x988] sm:$0xff]
    %v834 = vld [vmem:[#allocation9 + $0x990] sm:$0xff]
    %v835 = vld [vmem:[#allocation9 + $0x998] sm:$0xff]
    %v836 = vld [vmem:[#allocation9 + $0x9a0] sm:$0xff]
    %v837 = vld [vmem:[#allocation9 + $0x9a8] sm:$0xff]
    %v838 = vld [vmem:[#allocation9 + $0x9b0] sm:$0xff]
    %v839 = vld [vmem:[#allocation9 + $0x9b8] sm:$0xff]
    %v840 = vld [vmem:[#allocation9 + $0x9c0] sm:$0xff]
    %v841 = vld [vmem:[#allocation9 + $0x9c8] sm:$0xff]
    %v842 = vld [vmem:[#allocation9 + $0x9d0] sm:$0xff]
    %v843 = vld [vmem:[#allocation9 + $0x9d8] sm:$0xff]
    %v844 = vld [vmem:[#allocation9 + $0x9e0] sm:$0xff]
    %v845 = vld [vmem:[#allocation9 + $0x9e8] sm:$0xff]
    %v846 = vld [vmem:[#allocation9 + $0x9f0] sm:$0xff]
    %v847 = vld [vmem:[#allocation9 + $0x9f8] sm:$0xff]
    %v848 = vld [vmem:[#allocation9 + $0xa00] sm:$0xff]
    %v849 = vld [vmem:[#allocation9 + $0xa08] sm:$0xff]
    %v850 = vld [vmem:[#allocation9 + $0xa10] sm:$0xff]
    %v851 = vld [vmem:[#allocation9 + $0xa18] sm:$0xff]
    %v852 = vld [vmem:[#allocation9 + $0xa20] sm:$0xff]
    %v853 = vld [vmem:[#allocation9 + $0xa28] sm:$0xff]
    %v854 = vld [vmem:[#allocation9 + $0xa30] sm:$0xff]
    %v855 = vld [vmem:[#allocation9 + $0xa38] sm:$0xff]
    %v856 = vld [vmem:[#allocation9 + $0xa40] sm:$0xff]
    %v857 = vld [vmem:[#allocation9 + $0xa48] sm:$0xff]
    %v858 = vld [vmem:[#allocation9 + $0xa50] sm:$0xff]
    %v859 = vld [vmem:[#allocation9 + $0xa58] sm:$0xff]
    %v860 = vld [vmem:[#allocation9 + $0xa60] sm:$0xff]
    %v861 = vld [vmem:[#allocation9 + $0xa68] sm:$0xff]
    %v862 = vld [vmem:[#allocation9 + $0xa70] sm:$0xff]
    %v863 = vld [vmem:[#allocation9 + $0xa78] sm:$0xff]
    %v864 = vld [vmem:[#allocation9 + $0xa80] sm:$0xff]
    %v865 = vld [vmem:[#allocation9 + $0xa88] sm:$0xff]
    %v866 = vld [vmem:[#allocation9 + $0xa90] sm:$0xff]
    %v867 = vld [vmem:[#allocation9 + $0xa98] sm:$0xff]
    %v868 = vld [vmem:[#allocation9 + $0xaa0] sm:$0xff]
    %v869 = vld [vmem:[#allocation9 + $0xaa8] sm:$0xff]
    %v870 = vld [vmem:[#allocation9 + $0xab0] sm:$0xff]
    %v871 = vld [vmem:[#allocation9 + $0xab8] sm:$0xff]
    %v872 = vld [vmem:[#allocation9 + $0xac0] sm:$0xff]
    %v873 = vld [vmem:[#allocation9 + $0xac8] sm:$0xff]
    %v874 = vld [vmem:[#allocation9 + $0xad0] sm:$0xff]
    %v875 = vld [vmem:[#allocation9 + $0xad8] sm:$0xff]
    %v876 = vld [vmem:[#allocation9 + $0xae0] sm:$0xff]
    %v877 = vld [vmem:[#allocation9 + $0xae8] sm:$0xff]
    %v878 = vld [vmem:[#allocation9 + $0xaf0] sm:$0xff]
    %v879 = vld [vmem:[#allocation9 + $0xaf8] sm:$0xff]
    %v880 = vld [vmem:[#allocation9 + $0xb00] sm:$0xff]
    %v881 = vld [vmem:[#allocation9 + $0xb08] sm:$0xff]
    %v882 = vld [vmem:[#allocation9 + $0xb10] sm:$0xff]
    %v883 = vld [vmem:[#allocation9 + $0xb18] sm:$0xff]
    %v884 = vld [vmem:[#allocation9 + $0xb20] sm:$0xff]
    %v885 = vld [vmem:[#allocation9 + $0xb28] sm:$0xff]
    %v886 = vld [vmem:[#allocation9 + $0xb30] sm:$0xff]
    %v887 = vld [vmem:[#allocation9 + $0xb38] sm:$0xff]
    %v888 = vld [vmem:[#allocation9 + $0xb40] sm:$0xff]
    %v889 = vld [vmem:[#allocation9 + $0xb48] sm:$0xff]
    %v890 = vld [vmem:[#allocation9 + $0xb50] sm:$0xff]
    %v891 = vld [vmem:[#allocation9 + $0xb58] sm:$0xff]
    %v892 = vld [vmem:[#allocation9 + $0xb60] sm:$0xff]
    %v893 = vld [vmem:[#allocation9 + $0xb68] sm:$0xff]
    %v894 = vld [vmem:[#allocation9 + $0xb70] sm:$0xff]
    %v895 = vld [vmem:[#allocation9 + $0xb78] sm:$0xff]
    %v896 = vld [vmem:[#allocation9 + $0xb80] sm:$0xff]
    %v897 = vld [vmem:[#allocation9 + $0xb88] sm:$0xff]
    %v898 = vld [vmem:[#allocation9 + $0xb90] sm:$0xff]
    %v899 = vld [vmem:[#allocation9 + $0xb98] sm:$0xff]
    %v900 = vld [vmem:[#allocation9 + $0xba0] sm:$0xff]
    %v901 = vld [vmem:[#allocation9 + $0xba8] sm:$0xff]
    %v902 = vld [vmem:[#allocation9 + $0xbb0] sm:$0xff]
    %v903 = vld [vmem:[#allocation9 + $0xbb8] sm:$0xff]
    %v904 = vld [vmem:[#allocation9 + $0xbc0] sm:$0xff]
    %v905 = vld [vmem:[#allocation9 + $0xbc8] sm:$0xff]
    %v906 = vld [vmem:[#allocation9 + $0xbd0] sm:$0xff]
    %v907 = vld [vmem:[#allocation9 + $0xbd8] sm:$0xff]
    %v908 = vld [vmem:[#allocation9 + $0xbe0] sm:$0xff]
    %v909 = vld [vmem:[#allocation9 + $0xbe8] sm:$0xff]
    %v910 = vld [vmem:[#allocation9 + $0xbf0] sm:$0xff]
    %v911 = vld [vmem:[#allocation9 + $0xbf8] sm:$0xff]
    %v912 = vld [vmem:[#allocation9 + $0xc00] sm:$0xff]
    %v913 = vld [vmem:[#allocation9 + $0xc08] sm:$0xff]
    %v914 = vld [vmem:[#allocation9 + $0xc10] sm:$0xff]
    %v915 = vld [vmem:[#allocation9 + $0xc18] sm:$0xff]
    %v916 = vld [vmem:[#allocation9 + $0xc20] sm:$0xff]
    %v917 = vld [vmem:[#allocation9 + $0xc28] sm:$0xff]
    %v918 = vld [vmem:[#allocation9 + $0xc30] sm:$0xff]
    %v919 = vld [vmem:[#allocation9 + $0xc38] sm:$0xff]
    %v920 = vld [vmem:[#allocation9 + $0xc40] sm:$0xff]
    %v921 = vld [vmem:[#allocation9 + $0xc48] sm:$0xff]
    %v922 = vld [vmem:[#allocation9 + $0xc50] sm:$0xff]
    %v923 = vld [vmem:[#allocation9 + $0xc58] sm:$0xff]
    %v924 = vld [vmem:[#allocation9 + $0xc60] sm:$0xff]
    %v925 = vld [vmem:[#allocation9 + $0xc68] sm:$0xff]
    %v926 = vld [vmem:[#allocation9 + $0xc70] sm:$0xff]
    %v927 = vld [vmem:[#allocation9 + $0xc78] sm:$0xff]
    %v928 = vld [vmem:[#allocation9 + $0xc80] sm:$0xff]
    %v929 = vld [vmem:[#allocation9 + $0xc88] sm:$0xff]
    %v930 = vld [vmem:[#allocation9 + $0xc90] sm:$0xff]
    %v931 = vld [vmem:[#allocation9 + $0xc98] sm:$0xff]
    %v932 = vld [vmem:[#allocation9 + $0xca0] sm:$0xff]
    %v933 = vld [vmem:[#allocation9 + $0xca8] sm:$0xff]
    %v934 = vld [vmem:[#allocation9 + $0xcb0] sm:$0xff]
    %v935 = vld [vmem:[#allocation9 + $0xcb8] sm:$0xff]
    %v936 = vld [vmem:[#allocation9 + $0xcc0] sm:$0xff]
    %v937 = vld [vmem:[#allocation9 + $0xcc8] sm:$0xff]
    %v938 = vld [vmem:[#allocation9 + $0xcd0] sm:$0xff]
    %v939 = vld [vmem:[#allocation9 + $0xcd8] sm:$0xff]
    %v940 = vld [vmem:[#allocation9 + $0xce0] sm:$0xff]
    %v941 = vld [vmem:[#allocation9 + $0xce8] sm:$0xff]
    %v942 = vld [vmem:[#allocation9 + $0xcf0] sm:$0xff]
    %v943 = vld [vmem:[#allocation9 + $0xcf8] sm:$0xff]
    %v944 = vld [vmem:[#allocation9 + $0xd00] sm:$0xff]
    %v945 = vld [vmem:[#allocation9 + $0xd08] sm:$0xff]
    %v946 = vld [vmem:[#allocation9 + $0xd10] sm:$0xff]
    %v947 = vld [vmem:[#allocation9 + $0xd18] sm:$0xff]
    %v948 = vld [vmem:[#allocation9 + $0xd20] sm:$0xff]
    %v949 = vld [vmem:[#allocation9 + $0xd28] sm:$0xff]
    %v950 = vld [vmem:[#allocation9 + $0xd30] sm:$0xff]
    %v951 = vld [vmem:[#allocation9 + $0xd38] sm:$0xff]
    %v952 = vld [vmem:[#allocation9 + $0xd40] sm:$0xff]
    %v953 = vld [vmem:[#allocation9 + $0xd48] sm:$0xff]
    %v954 = vld [vmem:[#allocation9 + $0xd50] sm:$0xff]
    %v955 = vld [vmem:[#allocation9 + $0xd58] sm:$0xff]
    %v956 = vld [vmem:[#allocation9 + $0xd60] sm:$0xff]
    %v957 = vld [vmem:[#allocation9 + $0xd68] sm:$0xff]
    %v958 = vld [vmem:[#allocation9 + $0xd70] sm:$0xff]
    %v959 = vld [vmem:[#allocation9 + $0xd78] sm:$0xff]
    %v960 = vld [vmem:[#allocation9 + $0xd80] sm:$0xff]
    %v961 = vld [vmem:[#allocation9 + $0xd88] sm:$0xff]
    %v962 = vld [vmem:[#allocation9 + $0xd90] sm:$0xff]
    %v963 = vld [vmem:[#allocation9 + $0xd98] sm:$0xff]
    %v964 = vld [vmem:[#allocation9 + $0xda0] sm:$0xff]
    %v965 = vld [vmem:[#allocation9 + $0xda8] sm:$0xff]
    %v966 = vld [vmem:[#allocation9 + $0xdb0] sm:$0xff]
    %v967 = vld [vmem:[#allocation9 + $0xdb8] sm:$0xff]
    %v968 = vld [vmem:[#allocation9 + $0xdc0] sm:$0xff]
    %v969 = vld [vmem:[#allocation9 + $0xdc8] sm:$0xff]
    %v970 = vld [vmem:[#allocation9 + $0xdd0] sm:$0xff]
    %v971 = vld [vmem:[#allocation9 + $0xdd8] sm:$0xff]
    %v972 = vld [vmem:[#allocation9 + $0xde0] sm:$0xff]
    %v973 = vld [vmem:[#allocation9 + $0xde8] sm:$0xff]
    %v974 = vld [vmem:[#allocation9 + $0xdf0] sm:$0xff]
    %v975 = vld [vmem:[#allocation9 + $0xdf8] sm:$0xff]
    %v976 = vld [vmem:[#allocation9 + $0xe00] sm:$0xff]
    %v977 = vld [vmem:[#allocation9 + $0xe08] sm:$0xff]
    %v978 = vld [vmem:[#allocation9 + $0xe10] sm:$0xff]
    %v979 = vld [vmem:[#allocation9 + $0xe18] sm:$0xff]
    %v980 = vld [vmem:[#allocation9 + $0xe20] sm:$0xff]
    %v981 = vld [vmem:[#allocation9 + $0xe28] sm:$0xff]
    %v982 = vld [vmem:[#allocation9 + $0xe30] sm:$0xff]
    %v983 = vld [vmem:[#allocation9 + $0xe38] sm:$0xff]
    %v984 = vld [vmem:[#allocation9 + $0xe40] sm:$0xff]
    %v985 = vld [vmem:[#allocation9 + $0xe48] sm:$0xff]
    %v986 = vld [vmem:[#allocation9 + $0xe50] sm:$0xff]
    %v987 = vld [vmem:[#allocation9 + $0xe58] sm:$0xff]
    %v988 = vld [vmem:[#allocation9 + $0xe60] sm:$0xff]
    %v989 = vld [vmem:[#allocation9 + $0xe68] sm:$0xff]
    %v990 = vld [vmem:[#allocation9 + $0xe70] sm:$0xff]
    %v991 = vld [vmem:[#allocation9 + $0xe78] sm:$0xff]
    %v992 = vld [vmem:[#allocation9 + $0xe80] sm:$0xff]
    %v993 = vld [vmem:[#allocation9 + $0xe88] sm:$0xff]
    %v994 = vld [vmem:[#allocation9 + $0xe90] sm:$0xff]
    %v995 = vld [vmem:[#allocation9 + $0xe98] sm:$0xff]
    %v996 = vld [vmem:[#allocation9 + $0xea0] sm:$0xff]
    %v997 = vld [vmem:[#allocation9 + $0xea8] sm:$0xff]
    %v998 = vld [vmem:[#allocation9 + $0xeb0] sm:$0xff]
    %v999 = vld [vmem:[#allocation9 + $0xeb8] sm:$0xff]
    %v1000 = vld [vmem:[#allocation9 + $0xec0] sm:$0xff]
    %v1001 = vld [vmem:[#allocation9 + $0xec8] sm:$0xff]
    %v1002 = vld [vmem:[#allocation9 + $0xed0] sm:$0xff]
    %v1003 = vld [vmem:[#allocation9 + $0xed8] sm:$0xff]
    %v1004 = vld [vmem:[#allocation9 + $0xee0] sm:$0xff]
    %v1005 = vld [vmem:[#allocation9 + $0xee8] sm:$0xff]
    %v1006 = vld [vmem:[#allocation9 + $0xef0] sm:$0xff]
    %v1007 = vld [vmem:[#allocation9 + $0xef8] sm:$0xff]
    %v1008 = vld [vmem:[#allocation9 + $0xf00] sm:$0xff]
    %v1009 = vld [vmem:[#allocation9 + $0xf08] sm:$0xff]
    %v1010 = vld [vmem:[#allocation9 + $0xf10] sm:$0xff]
    %v1011 = vld [vmem:[#allocation9 + $0xf18] sm:$0xff]
    %v1012 = vld [vmem:[#allocation9 + $0xf20] sm:$0xff]
    %v1013 = vld [vmem:[#allocation9 + $0xf28] sm:$0xff]
    %v1014 = vld [vmem:[#allocation9 + $0xf30] sm:$0xff]
    %v1015 = vld [vmem:[#allocation9 + $0xf38] sm:$0xff]
    %v1016 = vld [vmem:[#allocation9 + $0xf40] sm:$0xff]
    %v1017 = vld [vmem:[#allocation9 + $0xf48] sm:$0xff]
    %v1018 = vld [vmem:[#allocation9 + $0xf50] sm:$0xff]
    %v1019 = vld [vmem:[#allocation9 + $0xf58] sm:$0xff]
    %v1020 = vld [vmem:[#allocation9 + $0xf60] sm:$0xff]
    %v1021 = vld [vmem:[#allocation9 + $0xf68] sm:$0xff]
    %v1022 = vld [vmem:[#allocation9 + $0xf70] sm:$0xff]
    %v1023 = vld [vmem:[#allocation9 + $0xf78] sm:$0xff]
    %v1024 = vld [vmem:[#allocation9 + $0xf80] sm:$0xff]
    %v1025 = vld [vmem:[#allocation9 + $0xf88] sm:$0xff]
    %v1026 = vld [vmem:[#allocation9 + $0xf90] sm:$0xff]
    %v1027 = vld [vmem:[#allocation9 + $0xf98] sm:$0xff]
    %v1028 = vld [vmem:[#allocation9 + $0xfa0] sm:$0xff]
    %v1029 = vld [vmem:[#allocation9 + $0xfa8] sm:$0xff]
    %v1030 = vld [vmem:[#allocation9 + $0xfb0] sm:$0xff]
    %v1031 = vld [vmem:[#allocation9 + $0xfb8] sm:$0xff]
    %v1032 = vld [vmem:[#allocation9 + $0xfc0] sm:$0xff]
    %v1033 = vld [vmem:[#allocation9 + $0xfc8] sm:$0xff]
    %v1034 = vld [vmem:[#allocation9 + $0xfd0] sm:$0xff]
    %v1035 = vld [vmem:[#allocation9 + $0xfd8] sm:$0xff]
    %v1036 = vld [vmem:[#allocation9 + $0xfe0] sm:$0xff]
    %v1037 = vld [vmem:[#allocation9 + $0xfe8] sm:$0xff]
    %v1038 = vld [vmem:[#allocation9 + $0xff0] sm:$0xff]
    %v1039 = vld [vmem:[#allocation9 + $0xff8] sm:$0xff]
    %v1040 = vld [vmem:[#allocation10] sm:$0xff]
    %v1042 = vlaneseq
    %v1043 = vshrl.u32 %v1042, 7
    %v1044 = vsub.s32 0, %v1043
    %v1045 = vrot.slane %v1040, %v1044
    %v1046 = vlaneseq
    %v1047 = vshrl.u32 %v1046, 7
    %v1048 = vsub.s32 1, %v1047
    %v1049 = vrot.slane %v1040, %v1048
    %v1050 = vlaneseq
    %v1051 = vshrl.u32 %v1050, 7
    %v1052 = vsub.s32 2, %v1051
    %v1053 = vrot.slane %v1040, %v1052
    %v1054 = vlaneseq
    %v1055 = vshrl.u32 %v1054, 7
    %v1056 = vsub.s32 3, %v1055
    %v1057 = vrot.slane %v1040, %v1056
    %v1058 = vlaneseq
    %v1059 = vshrl.u32 %v1058, 7
    %v1060 = vsub.s32 4, %v1059
    %v1061 = vrot.slane %v1040, %v1060
    %v1062 = vlaneseq
    %v1063 = vshrl.u32 %v1062, 7
    %v1064 = vsub.s32 5, %v1063
    %v1065 = vrot.slane %v1040, %v1064
    %v1066 = vlaneseq
    %v1067 = vshrl.u32 %v1066, 7
    %v1068 = vsub.s32 6, %v1067
    %v1069 = vrot.slane %v1040, %v1068
    %v1070 = vlaneseq
    %v1071 = vshrl.u32 %v1070, 7
    %v1072 = vsub.s32 7, %v1071
    %v1073 = vrot.slane %v1040, %v1072
    %1082 = vmatprep.subr.mxu0 %v529
    %1083 = vmatpush1.msra.mxu0 %v528
    %1084 = vmatprep.subr.mxu0 %v537
    %1085 = vmatpush1.msra.mxu0 %v536
    %1086 = vmatprep.subr.mxu0 %v545
    %1087 = vmatpush1.msra.mxu0 %v544
    %1088 = vmatprep.subr.mxu0 %v553
    %1089 = vmatpush1.msra.mxu0 %v552
    %1090 = vmatprep.subr.mxu0 %v561
    %1091 = vmatpush1.msra.mxu0 %v560
    %1092 = vmatprep.subr.mxu0 %v569
    %1093 = vmatpush1.msra.mxu0 %v568
    %1094 = vmatprep.subr.mxu0 %v577
    %1095 = vmatpush1.msra.mxu0 %v576
    %1096 = vmatprep.subr.mxu0 %v585
    %1097 = vmatpush1.msra.mxu0 %v584
    %1098 = vmatprep.subr.mxu0 %v593
    %1099 = vmatpush1.msra.mxu0 %v592
    %1100 = vmatprep.subr.mxu0 %v601
    %1101 = vmatpush1.msra.mxu0 %v600
    %1102 = vmatprep.subr.mxu0 %v609
    %1103 = vmatpush1.msra.mxu0 %v608
    %1104 = vmatprep.subr.mxu0 %v617
    %1105 = vmatpush1.msra.mxu0 %v616
    %1106 = vmatprep.subr.mxu0 %v625
    %1107 = vmatpush1.msra.mxu0 %v624
    %1108 = vmatprep.subr.mxu0 %v633
    %1109 = vmatpush1.msra.mxu0 %v632
    %1110 = vmatprep.subr.mxu0 %v641
    %1111 = vmatpush1.msra.mxu0 %v640
    %1112 = vmatprep.subr.mxu0 %v649
    %1113 = vmatpush1.msra.mxu0 %v648
    %1114 = vmatprep.subr.mxu0 %v657
    %1115 = vmatpush1.msra.mxu0 %v656
    %1116 = vmatprep.subr.mxu0 %v665
    %1117 = vmatpush1.msra.mxu0 %v664
    %1118 = vmatprep.subr.mxu0 %v673
    %1119 = vmatpush1.msra.mxu0 %v672
    %1120 = vmatprep.subr.mxu0 %v681
    %1121 = vmatpush1.msra.mxu0 %v680
    %1122 = vmatprep.subr.mxu0 %v689
    %1123 = vmatpush1.msra.mxu0 %v688
    %1124 = vmatprep.subr.mxu0 %v697
    %1125 = vmatpush1.msra.mxu0 %v696
    %1126 = vmatprep.subr.mxu0 %v705
    %1127 = vmatpush1.msra.mxu0 %v704
    %1128 = vmatprep.subr.mxu0 %v713
    %1129 = vmatpush1.msra.mxu0 %v712
    %1130 = vmatprep.subr.mxu0 %v721
    %1131 = vmatpush1.msra.mxu0 %v720
    %1132 = vmatprep.subr.mxu0 %v729
    %1133 = vmatpush1.msra.mxu0 %v728
    %1134 = vmatprep.subr.mxu0 %v737
    %1135 = vmatpush1.msra.mxu0 %v736
    %1136 = vmatprep.subr.mxu0 %v745
    %1137 = vmatpush1.msra.mxu0 %v744
    %1138 = vmatprep.subr.mxu0 %v753
    %1139 = vmatpush1.msra.mxu0 %v752
    %1140 = vmatprep.subr.mxu0 %v761
    %1141 = vmatpush1.msra.mxu0 %v760
    %1142 = vmatprep.subr.mxu0 %v769
    %1143 = vmatpush1.msra.mxu0 %v768
    %1144 = vmatprep.subr.mxu0 %v777
    %1145 = vmatpush1.msra.mxu0 %v776
    %1146 = vmatprep.mubr.f32.mxu0 %v525
    %1147 = vmatmul.mubr.f32.gmra.mrb[0].mxu0 %v524
    %v1148 = vpop.f32.mrb[0].mxu0
    %v1149 = vadd.f32 %v1045, %v1148
    %v1150 = vpop.f32.mrb[0].mxu0
    %v1151 = vadd.f32 %v1049, %v1150
    %1152 = vdwg.mxu0
    %1153 = vmatprep.subr.mxu0 %v785
    %1154 = vmatpush1.msra.mxu0 %v784
    %1155 = vmatprep.subr.mxu0 %v793
    %1156 = vmatpush1.msra.mxu0 %v792
    %1157 = vmatprep.subr.mxu0 %v801
    %1158 = vmatpush1.msra.mxu0 %v800
    %1159 = vmatprep.subr.mxu0 %v809
    %1160 = vmatpush1.msra.mxu0 %v808
    %1161 = vmatprep.subr.mxu0 %v817
    %1162 = vmatpush1.msra.mxu0 %v816
    %1163 = vmatprep.subr.mxu0 %v825
    %1164 = vmatpush1.msra.mxu0 %v824
    %1165 = vmatprep.subr.mxu0 %v833
    %1166 = vmatpush1.msra.mxu0 %v832
    %1167 = vmatprep.subr.mxu0 %v841
    %1168 = vmatpush1.msra.mxu0 %v840
    %1169 = vmatprep.subr.mxu0 %v849
    %1170 = vmatpush1.msra.mxu0 %v848
    %1171 = vmatprep.subr.mxu0 %v857
    %1172 = vmatpush1.msra.mxu0 %v856
    %1173 = vmatprep.subr.mxu0 %v865
    %1174 = vmatpush1.msra.mxu0 %v864
    %1175 = vmatprep.subr.mxu0 %v873
    %1176 = vmatpush1.msra.mxu0 %v872
    %1177 = vmatprep.subr.mxu0 %v881
    %1178 = vmatpush1.msra.mxu0 %v880
    %1179 = vmatprep.subr.mxu0 %v889
    %1180 = vmatpush1.msra.mxu0 %v888
    %1181 = vmatprep.subr.mxu0 %v897
    %1182 = vmatpush1.msra.mxu0 %v896
    %1183 = vmatprep.subr.mxu0 %v905
    %1184 = vmatpush1.msra.mxu0 %v904
    %1185 = vmatprep.subr.mxu0 %v913
    %1186 = vmatpush1.msra.mxu0 %v912
    %1187 = vmatprep.subr.mxu0 %v921
    %1188 = vmatpush1.msra.mxu0 %v920
    %1189 = vmatprep.subr.mxu0 %v929
    %1190 = vmatpush1.msra.mxu0 %v928
    %1191 = vmatprep.subr.mxu0 %v937
    %1192 = vmatpush1.msra.mxu0 %v936
    %1193 = vmatprep.subr.mxu0 %v945
    %1194 = vmatpush1.msra.mxu0 %v944
    %1195 = vmatprep.subr.mxu0 %v953
    %1196 = vmatpush1.msra.mxu0 %v952
    %1197 = vmatprep.subr.mxu0 %v961
    %1198 = vmatpush1.msra.mxu0 %v960
    %1199 = vmatprep.subr.mxu0 %v969
    %1200 = vmatpush1.msra.mxu0 %v968
    %1201 = vmatprep.subr.mxu0 %v977
    %1202 = vmatpush1.msra.mxu0 %v976
    %1203 = vmatprep.subr.mxu0 %v985
    %1204 = vmatpush1.msra.mxu0 %v984
    %1205 = vmatprep.subr.mxu0 %v993
    %1206 = vmatpush1.msra.mxu0 %v992
    %1207 = vmatprep.subr.mxu0 %v1001
    %1208 = vmatpush1.msra.mxu0 %v1000
    %1209 = vmatprep.subr.mxu0 %v1009
    %1210 = vmatpush1.msra.mxu0 %v1008
    %1211 = vmatprep.subr.mxu0 %v1017
    %1212 = vmatpush1.msra.mxu0 %v1016
    %1213 = vmatprep.subr.mxu0 %v1025
    %1214 = vmatpush1.msra.mxu0 %v1024
    %1215 = vmatprep.subr.mxu0 %v1033
    %1216 = vmatpush1.msra.mxu0 %v1032
    %1217 = vmatprep.mubr.f32.mxu0 %v527
    %1218 = vmatmul.mubr.f32.gmra.mrb[0].mxu0 %v526
    %v1219 = vpop.f32.mrb[0].mxu0
    %v1220 = vadd.f32 %v1149, %v1219
    %v1221 = vpop.f32.mrb[0].mxu0
    %v1222 = vadd.f32 %v1151, %v1221
    %1223 = vdwg.mxu0
    %1224 = vmatprep.subr.mxu0 %v531
    %1225 = vmatpush1.msra.mxu0 %v530
    %1226 = vmatprep.subr.mxu0 %v539
    %1227 = vmatpush1.msra.mxu0 %v538
    %1228 = vmatprep.subr.mxu0 %v547
    %1229 = vmatpush1.msra.mxu0 %v546
    %1230 = vmatprep.subr.mxu0 %v555
    %1231 = vmatpush1.msra.mxu0 %v554
    %1232 = vmatprep.subr.mxu0 %v563
    %1233 = vmatpush1.msra.mxu0 %v562
    %1234 = vmatprep.subr.mxu0 %v571
    %1235 = vmatpush1.msra.mxu0 %v570
    %1236 = vmatprep.subr.mxu0 %v579
    %1237 = vmatpush1.msra.mxu0 %v578
    %1238 = vmatprep.subr.mxu0 %v587
    %1239 = vmatpush1.msra.mxu0 %v586
    %1240 = vmatprep.subr.mxu0 %v595
    %1241 = vmatpush1.msra.mxu0 %v594
    %1242 = vmatprep.subr.mxu0 %v603
    %1243 = vmatpush1.msra.mxu0 %v602
    %1244 = vmatprep.subr.mxu0 %v611
    %1245 = vmatpush1.msra.mxu0 %v610
    %1246 = vmatprep.subr.mxu0 %v619
    %1247 = vmatpush1.msra.mxu0 %v618
    %1248 = vmatprep.subr.mxu0 %v627
    %1249 = vmatpush1.msra.mxu0 %v626
    %1250 = vmatprep.subr.mxu0 %v635
    %1251 = vmatpush1.msra.mxu0 %v634
    %1252 = vmatprep.subr.mxu0 %v643
    %1253 = vmatpush1.msra.mxu0 %v642
    %1254 = vmatprep.subr.mxu0 %v651
    %1255 = vmatpush1.msra.mxu0 %v650
    %1256 = vmatprep.subr.mxu0 %v659
    %1257 = vmatpush1.msra.mxu0 %v658
    %1258 = vmatprep.subr.mxu0 %v667
    %1259 = vmatpush1.msra.mxu0 %v666
    %1260 = vmatprep.subr.mxu0 %v675
    %1261 = vmatpush1.msra.mxu0 %v674
    %1262 = vmatprep.subr.mxu0 %v683
    %1263 = vmatpush1.msra.mxu0 %v682
    %1264 = vmatprep.subr.mxu0 %v691
    %1265 = vmatpush1.msra.mxu0 %v690
    %1266 = vmatprep.subr.mxu0 %v699
    %1267 = vmatpush1.msra.mxu0 %v698
    %1268 = vmatprep.subr.mxu0 %v707
    %1269 = vmatpush1.msra.mxu0 %v706
    %1270 = vmatprep.subr.mxu0 %v715
    %1271 = vmatpush1.msra.mxu0 %v714
    %1272 = vmatprep.subr.mxu0 %v723
    %1273 = vmatpush1.msra.mxu0 %v722
    %1274 = vmatprep.subr.mxu0 %v731
    %1275 = vmatpush1.msra.mxu0 %v730
    %1276 = vmatprep.subr.mxu0 %v739
    %1277 = vmatpush1.msra.mxu0 %v738
    %1278 = vmatprep.subr.mxu0 %v747
    %1279 = vmatpush1.msra.mxu0 %v746
    %1280 = vmatprep.subr.mxu0 %v755
    %1281 = vmatpush1.msra.mxu0 %v754
    %1282 = vmatprep.subr.mxu0 %v763
    %1283 = vmatpush1.msra.mxu0 %v762
    %1284 = vmatprep.subr.mxu0 %v771
    %1285 = vmatpush1.msra.mxu0 %v770
    %1286 = vmatprep.subr.mxu0 %v779
    %1287 = vmatpush1.msra.mxu0 %v778
    %1288 = vmatprep.mubr.f32.mxu0 %v525
    %1289 = vmatmul.mubr.f32.gmra.mrb[0].mxu0 %v524
    %v1290 = vpop.f32.mrb[0].mxu0
    %v1291 = vadd.f32 %v1053, %v1290
    %v1292 = vpop.f32.mrb[0].mxu0
    %v1293 = vadd.f32 %v1057, %v1292
    %1294 = vdwg.mxu0
    %1295 = vmatprep.subr.mxu0 %v787
    %1296 = vmatpush1.msra.mxu0 %v786
    %1297 = vmatprep.subr.mxu0 %v795
    %1298 = vmatpush1.msra.mxu0 %v794
    %1299 = vmatprep.subr.mxu0 %v803
    %1300 = vmatpush1.msra.mxu0 %v802
    %1301 = vmatprep.subr.mxu0 %v811
    %1302 = vmatpush1.msra.mxu0 %v810
    %1303 = vmatprep.subr.mxu0 %v819
    %1304 = vmatpush1.msra.mxu0 %v818
    %1305 = vmatprep.subr.mxu0 %v827
    %1306 = vmatpush1.msra.mxu0 %v826
    %1307 = vmatprep.subr.mxu0 %v835
    %1308 = vmatpush1.msra.mxu0 %v834
    %1309 = vmatprep.subr.mxu0 %v843
    %1310 = vmatpush1.msra.mxu0 %v842
    %1311 = vmatprep.subr.mxu0 %v851
    %1312 = vmatpush1.msra.mxu0 %v850
    %1313 = vmatprep.subr.mxu0 %v859
    %1314 = vmatpush1.msra.mxu0 %v858
    %1315 = vmatprep.subr.mxu0 %v867
    %1316 = vmatpush1.msra.mxu0 %v866
    %1317 = vmatprep.subr.mxu0 %v875
    %1318 = vmatpush1.msra.mxu0 %v874
    %1319 = vmatprep.subr.mxu0 %v883
    %1320 = vmatpush1.msra.mxu0 %v882
    %1321 = vmatprep.subr.mxu0 %v891
    %1322 = vmatpush1.msra.mxu0 %v890
    %1323 = vmatprep.subr.mxu0 %v899
    %1324 = vmatpush1.msra.mxu0 %v898
    %1325 = vmatprep.subr.mxu0 %v907
    %1326 = vmatpush1.msra.mxu0 %v906
    %1327 = vmatprep.subr.mxu0 %v915
    %1328 = vmatpush1.msra.mxu0 %v914
    %1329 = vmatprep.subr.mxu0 %v923
    %1330 = vmatpush1.msra.mxu0 %v922
    %1331 = vmatprep.subr.mxu0 %v931
    %1332 = vmatpush1.msra.mxu0 %v930
    %1333 = vmatprep.subr.mxu0 %v939
    %1334 = vmatpush1.msra.mxu0 %v938
    %1335 = vmatprep.subr.mxu0 %v947
    %1336 = vmatpush1.msra.mxu0 %v946
    %1337 = vmatprep.subr.mxu0 %v955
    %1338 = vmatpush1.msra.mxu0 %v954
    %1339 = vmatprep.subr.mxu0 %v963
    %1340 = vmatpush1.msra.mxu0 %v962
    %1341 = vmatprep.subr.mxu0 %v971
    %1342 = vmatpush1.msra.mxu0 %v970
    %1343 = vmatprep.subr.mxu0 %v979
    %1344 = vmatpush1.msra.mxu0 %v978
    %1345 = vmatprep.subr.mxu0 %v987
    %1346 = vmatpush1.msra.mxu0 %v986
    %1347 = vmatprep.subr.mxu0 %v995
    %1348 = vmatpush1.msra.mxu0 %v994
    %1349 = vmatprep.subr.mxu0 %v1003
    %1350 = vmatpush1.msra.mxu0 %v1002
    %1351 = vmatprep.subr.mxu0 %v1011
    %1352 = vmatpush1.msra.mxu0 %v1010
    %1353 = vmatprep.subr.mxu0 %v1019
    %1354 = vmatpush1.msra.mxu0 %v1018
    %1355 = vmatprep.subr.mxu0 %v1027
    %1356 = vmatpush1.msra.mxu0 %v1026
    %1357 = vmatprep.subr.mxu0 %v1035
    %1358 = vmatpush1.msra.mxu0 %v1034
    %1359 = vmatprep.mubr.f32.mxu0 %v527
    %1360 = vmatmul.mubr.f32.gmra.mrb[0].mxu0 %v526
    %v1361 = vpop.f32.mrb[0].mxu0
    %v1362 = vadd.f32 %v1291, %v1361
    %v1363 = vpop.f32.mrb[0].mxu0
    %v1364 = vadd.f32 %v1293, %v1363
    %1365 = vdwg.mxu0
    %1366 = vmatprep.subr.mxu0 %v533
    %1367 = vmatpush1.msra.mxu0 %v532
    %1368 = vmatprep.subr.mxu0 %v541
    %1369 = vmatpush1.msra.mxu0 %v540
    %1370 = vmatprep.subr.mxu0 %v549
    %1371 = vmatpush1.msra.mxu0 %v548
    %1372 = vmatprep.subr.mxu0 %v557
    %1373 = vmatpush1.msra.mxu0 %v556
    %1374 = vmatprep.subr.mxu0 %v565
    %1375 = vmatpush1.msra.mxu0 %v564
    %1376 = vmatprep.subr.mxu0 %v573
    %1377 = vmatpush1.msra.mxu0 %v572
    %1378 = vmatprep.subr.mxu0 %v581
    %1379 = vmatpush1.msra.mxu0 %v580
    %1380 = vmatprep.subr.mxu0 %v589
    %1381 = vmatpush1.msra.mxu0 %v588
    %1382 = vmatprep.subr.mxu0 %v597
    %1383 = vmatpush1.msra.mxu0 %v596
    %1384 = vmatprep.subr.mxu0 %v605
    %1385 = vmatpush1.msra.mxu0 %v604
    %1386 = vmatprep.subr.mxu0 %v613
    %1387 = vmatpush1.msra.mxu0 %v612
    %1388 = vmatprep.subr.mxu0 %v621
    %1389 = vmatpush1.msra.mxu0 %v620
    %1390 = vmatprep.subr.mxu0 %v629
    %1391 = vmatpush1.msra.mxu0 %v628
    %1392 = vmatprep.subr.mxu0 %v637
    %1393 = vmatpush1.msra.mxu0 %v636
    %1394 = vmatprep.subr.mxu0 %v645
    %1395 = vmatpush1.msra.mxu0 %v644
    %1396 = vmatprep.subr.mxu0 %v653
    %1397 = vmatpush1.msra.mxu0 %v652
    %1398 = vmatprep.subr.mxu0 %v661
    %1399 = vmatpush1.msra.mxu0 %v660
    %1400 = vmatprep.subr.mxu0 %v669
    %1401 = vmatpush1.msra.mxu0 %v668
    %1402 = vmatprep.subr.mxu0 %v677
    %1403 = vmatpush1.msra.mxu0 %v676
    %1404 = vmatprep.subr.mxu0 %v685
    %1405 = vmatpush1.msra.mxu0 %v684
    %1406 = vmatprep.subr.mxu0 %v693
    %1407 = vmatpush1.msra.mxu0 %v692
    %1408 = vmatprep.subr.mxu0 %v701
    %1409 = vmatpush1.msra.mxu0 %v700
    %1410 = vmatprep.subr.mxu0 %v709
    %1411 = vmatpush1.msra.mxu0 %v708
    %1412 = vmatprep.subr.mxu0 %v717
    %1413 = vmatpush1.msra.mxu0 %v716
    %1414 = vmatprep.subr.mxu0 %v725
    %1415 = vmatpush1.msra.mxu0 %v724
    %1416 = vmatprep.subr.mxu0 %v733
    %1417 = vmatpush1.msra.mxu0 %v732
    %1418 = vmatprep.subr.mxu0 %v741
    %1419 = vmatpush1.msra.mxu0 %v740
    %1420 = vmatprep.subr.mxu0 %v749
    %1421 = vmatpush1.msra.mxu0 %v748
    %1422 = vmatprep.subr.mxu0 %v757
    %1423 = vmatpush1.msra.mxu0 %v756
    %1424 = vmatprep.subr.mxu0 %v765
    %1425 = vmatpush1.msra.mxu0 %v764
    %1426 = vmatprep.subr.mxu0 %v773
    %1427 = vmatpush1.msra.mxu0 %v772
    %1428 = vmatprep.subr.mxu0 %v781
    %1429 = vmatpush1.msra.mxu0 %v780
    %1430 = vmatprep.mubr.f32.mxu0 %v525
    %1431 = vmatmul.mubr.f32.gmra.mrb[0].mxu0 %v524
    %v1432 = vpop.f32.mrb[0].mxu0
    %v1433 = vadd.f32 %v1061, %v1432
    %v1434 = vpop.f32.mrb[0].mxu0
    %v1435 = vadd.f32 %v1065, %v1434
    %1436 = vdwg.mxu0
    %1437 = vmatprep.subr.mxu0 %v789
    %1438 = vmatpush1.msra.mxu0 %v788
    %1439 = vmatprep.subr.mxu0 %v797
    %1440 = vmatpush1.msra.mxu0 %v796
    %1441 = vmatprep.subr.mxu0 %v805
    %1442 = vmatpush1.msra.mxu0 %v804
    %1443 = vmatprep.subr.mxu0 %v813
    %1444 = vmatpush1.msra.mxu0 %v812
    %1445 = vmatprep.subr.mxu0 %v821
    %1446 = vmatpush1.msra.mxu0 %v820
    %1447 = vmatprep.subr.mxu0 %v829
    %1448 = vmatpush1.msra.mxu0 %v828
    %1449 = vmatprep.subr.mxu0 %v837
    %1450 = vmatpush1.msra.mxu0 %v836
    %1451 = vmatprep.subr.mxu0 %v845
    %1452 = vmatpush1.msra.mxu0 %v844
    %1453 = vmatprep.subr.mxu0 %v853
    %1454 = vmatpush1.msra.mxu0 %v852
    %1455 = vmatprep.subr.mxu0 %v861
    %1456 = vmatpush1.msra.mxu0 %v860
    %1457 = vmatprep.subr.mxu0 %v869
    %1458 = vmatpush1.msra.mxu0 %v868
    %1459 = vmatprep.subr.mxu0 %v877
    %1460 = vmatpush1.msra.mxu0 %v876
    %1461 = vmatprep.subr.mxu0 %v885
    %1462 = vmatpush1.msra.mxu0 %v884
    %1463 = vmatprep.subr.mxu0 %v893
    %1464 = vmatpush1.msra.mxu0 %v892
    %1465 = vmatprep.subr.mxu0 %v901
    %1466 = vmatpush1.msra.mxu0 %v900
    %1467 = vmatprep.subr.mxu0 %v909
    %1468 = vmatpush1.msra.mxu0 %v908
    %1469 = vmatprep.subr.mxu0 %v917
    %1470 = vmatpush1.msra.mxu0 %v916
    %1471 = vmatprep.subr.mxu0 %v925
    %1472 = vmatpush1.msra.mxu0 %v924
    %1473 = vmatprep.subr.mxu0 %v933
    %1474 = vmatpush1.msra.mxu0 %v932
    %1475 = vmatprep.subr.mxu0 %v941
    %1476 = vmatpush1.msra.mxu0 %v940
    %1477 = vmatprep.subr.mxu0 %v949
    %1478 = vmatpush1.msra.mxu0 %v948
    %1479 = vmatprep.subr.mxu0 %v957
    %1480 = vmatpush1.msra.mxu0 %v956
    %1481 = vmatprep.subr.mxu0 %v965
    %1482 = vmatpush1.msra.mxu0 %v964
    %1483 = vmatprep.subr.mxu0 %v973
    %1484 = vmatpush1.msra.mxu0 %v972
    %1485 = vmatprep.subr.mxu0 %v981
    %1486 = vmatpush1.msra.mxu0 %v980
    %1487 = vmatprep.subr.mxu0 %v989
    %1488 = vmatpush1.msra.mxu0 %v988
    %1489 = vmatprep.subr.mxu0 %v997
    %1490 = vmatpush1.msra.mxu0 %v996
    %1491 = vmatprep.subr.mxu0 %v1005
    %1492 = vmatpush1.msra.mxu0 %v1004
    %1493 = vmatprep.subr.mxu0 %v1013
    %1494 = vmatpush1.msra.mxu0 %v1012
    %1495 = vmatprep.subr.mxu0 %v1021
    %1496 = vmatpush1.msra.mxu0 %v1020
    %1497 = vmatprep.subr.mxu0 %v1029
    %1498 = vmatpush1.msra.mxu0 %v1028
    %1499 = vmatprep.subr.mxu0 %v1037
    %1500 = vmatpush1.msra.mxu0 %v1036
    %1501 = vmatprep.mubr.f32.mxu0 %v527
    %1502 = vmatmul.mubr.f32.gmra.mrb[0].mxu0 %v526
    %v1503 = vpop.f32.mrb[0].mxu0
    %v1504 = vadd.f32 %v1433, %v1503
    %v1505 = vpop.f32.mrb[0].mxu0
    %v1506 = vadd.f32 %v1435, %v1505
    %1507 = vdwg.mxu0
    %1508 = vmatprep.subr.mxu0 %v535
    %1509 = vmatpush1.msra.mxu0 %v534
    %1510 = vmatprep.subr.mxu0 %v543
    %1511 = vmatpush1.msra.mxu0 %v542
    %1512 = vmatprep.subr.mxu0 %v551
    %1513 = vmatpush1.msra.mxu0 %v550
    %1514 = vmatprep.subr.mxu0 %v559
    %1515 = vmatpush1.msra.mxu0 %v558
    %1516 = vmatprep.subr.mxu0 %v567
    %1517 = vmatpush1.msra.mxu0 %v566
    %1518 = vmatprep.subr.mxu0 %v575
    %1519 = vmatpush1.msra.mxu0 %v574
    %1520 = vmatprep.subr.mxu0 %v583
    %1521 = vmatpush1.msra.mxu0 %v582
    %1522 = vmatprep.subr.mxu0 %v591
    %1523 = vmatpush1.msra.mxu0 %v590
    %1524 = vmatprep.subr.mxu0 %v599
    %1525 = vmatpush1.msra.mxu0 %v598
    %1526 = vmatprep.subr.mxu0 %v607
    %1527 = vmatpush1.msra.mxu0 %v606
    %1528 = vmatprep.subr.mxu0 %v615
    %1529 = vmatpush1.msra.mxu0 %v614
    %1530 = vmatprep.subr.mxu0 %v623
    %1531 = vmatpush1.msra.mxu0 %v622
    %1532 = vmatprep.subr.mxu0 %v631
    %1533 = vmatpush1.msra.mxu0 %v630
    %1534 = vmatprep.subr.mxu0 %v639
    %1535 = vmatpush1.msra.mxu0 %v638
    %1536 = vmatprep.subr.mxu0 %v647
    %1537 = vmatpush1.msra.mxu0 %v646
    %1538 = vmatprep.subr.mxu0 %v655
    %1539 = vmatpush1.msra.mxu0 %v654
    %1540 = vmatprep.subr.mxu0 %v663
    %1541 = vmatpush1.msra.mxu0 %v662
    %1542 = vmatprep.subr.mxu0 %v671
    %1543 = vmatpush1.msra.mxu0 %v670
    %1544 = vmatprep.subr.mxu0 %v679
    %1545 = vmatpush1.msra.mxu0 %v678
    %1546 = vmatprep.subr.mxu0 %v687
    %1547 = vmatpush1.msra.mxu0 %v686
    %1548 = vmatprep.subr.mxu0 %v695
    %1549 = vmatpush1.msra.mxu0 %v694
    %1550 = vmatprep.subr.mxu0 %v703
    %1551 = vmatpush1.msra.mxu0 %v702
    %1552 = vmatprep.subr.mxu0 %v711
    %1553 = vmatpush1.msra.mxu0 %v710
    %1554 = vmatprep.subr.mxu0 %v719
    %1555 = vmatpush1.msra.mxu0 %v718
    %1556 = vmatprep.subr.mxu0 %v727
    %1557 = vmatpush1.msra.mxu0 %v726
    %1558 = vmatprep.subr.mxu0 %v735
    %1559 = vmatpush1.msra.mxu0 %v734
    %1560 = vmatprep.subr.mxu0 %v743
    %1561 = vmatpush1.msra.mxu0 %v742
    %1562 = vmatprep.subr.mxu0 %v751
    %1563 = vmatpush1.msra.mxu0 %v750
    %1564 = vmatprep.subr.mxu0 %v759
    %1565 = vmatpush1.msra.mxu0 %v758
    %1566 = vmatprep.subr.mxu0 %v767
    %1567 = vmatpush1.msra.mxu0 %v766
    %1568 = vmatprep.subr.mxu0 %v775
    %1569 = vmatpush1.msra.mxu0 %v774
    %1570 = vmatprep.subr.mxu0 %v783
    %1571 = vmatpush1.msra.mxu0 %v782
    %1572 = vmatprep.mubr.f32.mxu0 %v525
    %1573 = vmatmul.mubr.f32.gmra.mrb[0].mxu0 %v524
    %v1574 = vpop.f32.mrb[0].mxu0
    %v1575 = vadd.f32 %v1069, %v1574
    %v1576 = vpop.f32.mrb[0].mxu0
    %v1577 = vadd.f32 %v1073, %v1576
    %1578 = vdwg.mxu0
    %1579 = vmatprep.subr.mxu0 %v791
    %1580 = vmatpush1.msra.mxu0 %v790
    %1581 = vmatprep.subr.mxu0 %v799
    %1582 = vmatpush1.msra.mxu0 %v798
    %1583 = vmatprep.subr.mxu0 %v807
    %1584 = vmatpush1.msra.mxu0 %v806
    %1585 = vmatprep.subr.mxu0 %v815
    %1586 = vmatpush1.msra.mxu0 %v814
    %1587 = vmatprep.subr.mxu0 %v823
    %1588 = vmatpush1.msra.mxu0 %v822
    %1589 = vmatprep.subr.mxu0 %v831
    %1590 = vmatpush1.msra.mxu0 %v830
    %1591 = vmatprep.subr.mxu0 %v839
    %1592 = vmatpush1.msra.mxu0 %v838
    %1593 = vmatprep.subr.mxu0 %v847
    %1594 = vmatpush1.msra.mxu0 %v846
    %1595 = vmatprep.subr.mxu0 %v855
    %1596 = vmatpush1.msra.mxu0 %v854
    %1597 = vmatprep.subr.mxu0 %v863
    %1598 = vmatpush1.msra.mxu0 %v862
    %1599 = vmatprep.subr.mxu0 %v871
    %1600 = vmatpush1.msra.mxu0 %v870
    %1601 = vmatprep.subr.mxu0 %v879
    %1602 = vmatpush1.msra.mxu0 %v878
    %1603 = vmatprep.subr.mxu0 %v887
    %1604 = vmatpush1.msra.mxu0 %v886
    %1605 = vmatprep.subr.mxu0 %v895
    %1606 = vmatpush1.msra.mxu0 %v894
    %1607 = vmatprep.subr.mxu0 %v903
    %1608 = vmatpush1.msra.mxu0 %v902
    %1609 = vmatprep.subr.mxu0 %v911
    %1610 = vmatpush1.msra.mxu0 %v910
    %1611 = vmatprep.subr.mxu0 %v919
    %1612 = vmatpush1.msra.mxu0 %v918
    %1613 = vmatprep.subr.mxu0 %v927
    %1614 = vmatpush1.msra.mxu0 %v926
    %1615 = vmatprep.subr.mxu0 %v935
    %1616 = vmatpush1.msra.mxu0 %v934
    %1617 = vmatprep.subr.mxu0 %v943
    %1618 = vmatpush1.msra.mxu0 %v942
    %1619 = vmatprep.subr.mxu0 %v951
    %1620 = vmatpush1.msra.mxu0 %v950
    %1621 = vmatprep.subr.mxu0 %v959
    %1622 = vmatpush1.msra.mxu0 %v958
    %1623 = vmatprep.subr.mxu0 %v967
    %1624 = vmatpush1.msra.mxu0 %v966
    %1625 = vmatprep.subr.mxu0 %v975
    %1626 = vmatpush1.msra.mxu0 %v974
    %1627 = vmatprep.subr.mxu0 %v983
    %1628 = vmatpush1.msra.mxu0 %v982
    %1629 = vmatprep.subr.mxu0 %v991
    %1630 = vmatpush1.msra.mxu0 %v990
    %1631 = vmatprep.subr.mxu0 %v999
    %1632 = vmatpush1.msra.mxu0 %v998
    %1633 = vmatprep.subr.mxu0 %v1007
    %1634 = vmatpush1.msra.mxu0 %v1006
    %1635 = vmatprep.subr.mxu0 %v1015
    %1636 = vmatpush1.msra.mxu0 %v1014
    %1637 = vmatprep.subr.mxu0 %v1023
    %1638 = vmatpush1.msra.mxu0 %v1022
    %1639 = vmatprep.subr.mxu0 %v1031
    %1640 = vmatpush1.msra.mxu0 %v1030
    %1641 = vmatprep.subr.mxu0 %v1039
    %1642 = vmatpush1.msra.mxu0 %v1038
    %1643 = vmatprep.mubr.f32.mxu0 %v527
    %1644 = vmatmul.mubr.f32.gmra.mrb[0].mxu0 %v526
    %v1645 = vpop.f32.mrb[0].mxu0
    %v1646 = vadd.f32 %v1575, %v1645
    %v1647 = vpop.f32.mrb[0].mxu0
    %v1648 = vadd.f32 %v1577, %v1647
    %1649 = vdwg.mxu0
    %vm1650 = vcmp.gt.f32.partialorder %v1220, 0.0
    %vm1651 = vcmp.gt.f32.partialorder %v1222, 0.0
    %vm1652 = vcmp.gt.f32.partialorder %v1362, 0.0
    %vm1653 = vcmp.gt.f32.partialorder %v1364, 0.0
    %vm1654 = vcmp.gt.f32.partialorder %v1504, 0.0
    %vm1655 = vcmp.gt.f32.partialorder %v1506, 0.0
    %vm1656 = vcmp.gt.f32.partialorder %v1646, 0.0
    %vm1657 = vcmp.gt.f32.partialorder %v1648, 0.0
    %v1658 = vmul.f32 %v1220, 0.2
    %v1659 = vmul.f32 %v1222, 0.2
    %v1660 = vmul.f32 %v1362, 0.2
    %v1661 = vmul.f32 %v1364, 0.2
    %v1662 = vmul.f32 %v1504, 0.2
    %v1663 = vmul.f32 %v1506, 0.2
    %v1664 = vmul.f32 %v1646, 0.2
    %v1665 = vmul.f32 %v1648, 0.2
    %v1666 = vsel %vm1650, %v1220, %v1658
    %v1667 = vsel %vm1651, %v1222, %v1659
    %v1668 = vsel %vm1652, %v1362, %v1660
    %v1669 = vsel %vm1653, %v1364, %v1661
    %v1670 = vsel %vm1654, %v1504, %v1662
    %v1671 = vsel %vm1655, %v1506, %v1663
    %v1672 = vsel %vm1656, %v1646, %v1664
    %v1673 = vsel %vm1657, %v1648, %v1665
    %v1674 = vpack.c.bf16 %v1666, %v1666
    %v1675 = vpack.c.bf16 %v1667, %v1667
    %v1676 = vpack.c.bf16 %v1668, %v1668
    %v1677 = vpack.c.bf16 %v1669, %v1669
    %v1678 = vpack.c.bf16 %v1670, %v1670
    %v1679 = vpack.c.bf16 %v1671, %v1671
    %v1680 = vpack.c.bf16 %v1672, %v1672
    %v1681 = vpack.c.bf16 %v1673, %v1673
    %v1690 = vunpack.c.l.b16 %v1674
    %v1691 = vunpack.c.l.b16 %v1675
    %v1692 = vunpack.c.l.b16 %v1676
    %v1693 = vunpack.c.l.b16 %v1677
    %v1694 = vunpack.c.l.b16 %v1678
    %v1695 = vunpack.c.l.b16 %v1679
    %v1696 = vunpack.c.l.b16 %v1680
    %v1697 = vunpack.c.l.b16 %v1681
    %v1698 = vpack.c.b16 %v1691, %v1690
    %v1699 = vpack.c.b16 %v1693, %v1692
    %v1700 = vpack.c.b16 %v1695, %v1694
    %v1701 = vpack.c.b16 %v1697, %v1696
    %1706 = vst [vmem:[%s7] sm:$0xff] %v1698
    %1707 = vst [vmem:[%s7 + $0x8] sm:$0xff] %v1699
    %1708 = vst [vmem:[%s7 + $0x10] sm:$0xff] %v1700
    %1709 = vst [vmem:[%s7 + $0x18] sm:$0xff] %v1701
    // Predicated region
    $region54: #{conditional_generator_forward.2} parent=1 // pred_check
      _
    $region55: #{conditional_generator_forward.2} parent=1 // pred_check_branch
      %1711 = sbr.rel (0) target = $region57
    $region56: #{conditional_generator_forward.2} parent=1 // pred_region
      _
    $region57: #{conditional_generator_forward.2} parent=1 // pred_fallthru
      _
    // Predicated region
    $region58: #{conditional_generator_forward.2} parent=1 // pred_check
      _
    $region59: #{conditional_generator_forward.2} parent=1 // pred_check_branch
      %1713 = sbr.rel (0) target = $region61
    $region60: #{conditional_generator_forward.2} parent=1 // pred_region
      _
    $region61: #{conditional_generator_forward.2} parent=1 // pred_fallthru
      _
    %1714 = vsyncpa [#allocation3], 1
    %1715 = vsyncpa [#allocation5], 1
    %1716 = vsyncpa [#allocation8], 1
    %1717 = vsyncpa [#allocation11], 1

// kernel: conditional_generator_forward.3
$region0: #{conditional_generator_forward.3}
  #allocation0 [shape = 'u32[]', space=smem, size = 0x4, offset = 0x4, fixed_abs, tag = 'smem constant byte address 0x4 - core index']
  #allocation1 [shape = 'u32[144,128]{1,0:T(1,128)}', space=vmem, size = 0x12000, scoped, tag = 'internal scratch']
  %s0 = inlined_call_operand.vmem [shape: bf16[4,8,256], index: 0, kind: input, shape index: {}]
  %s1 = inlined_call_operand.hbm [shape: s8[54,4,256,8192], index: 1, kind: input, shape index: {}]
  %s2 = inlined_call_operand.vmem [shape: f32[1,442368], index: 2, kind: input, shape index: {}]
  %s3 = inlined_call_operand.hbm [shape: f32[1,442368], index: 3, kind: input, shape index: {}]
  %s4 = inlined_call_operand.vmem [shape: f32[8,442368], index: 4, kind: output, shape index: {}]
  %s5 = sld [smem:[#allocation0]]
  $region64: #{conditional_generator_forward.3} parent=0
    _
  %s7 = ssub.s32 1, %s5
  %s8 = scalar_select 0, %s7, %s5
  $region1: #{conditional_generator_forward.3} parent=0
    #allocation2 [shape = 'u8[16777216]{0}', space=vmem, size = 0x1000000, scoped, tag = 'input window, operand 1']
    #allocation3 [shape = 's32[2]{0}', space=sflag, size = 0x8, scoped, tag = 'scoped memory for conditional_generator_forward.3']
    #allocation4 [shape = 'u8[65536]{0}', space=vmem, size = 0x10000, scoped, tag = 'input window, operand 3']
    #allocation5 [shape = 's32[2]{0}', space=sflag, size = 0x8, scoped, tag = 'scoped memory for conditional_generator_forward.3']
    %9 = vsyncpa [#allocation3], 0
    %s10 = scalar_lea.sflag [#allocation3], 1
    %11 = vsyncpa %s10, 0
    %12 = vsyncpa [#allocation5], 0
    %s13 = scalar_lea.sflag [#allocation5], 1
    %14 = vsyncpa %s13, 0
    loop: start=0, step=1, limit=56
    $region2: #{conditional_generator_forward.3} parent=1 // loop_pre_header
      _
    $region3: #{conditional_generator_forward.3} parent=1 // loop_header
      %s16 = sphi 0, %s20
      %p17 = scmp.ge.s32.totalorder %s16, 56
      %s24 = sphi 0, %s24
      %s26 = sphi 0, %s24
      %s27 = sphi 0, %s26
      %s41 = sphi 0, %s27
      %s47 = sphi 0, %s49
      %s50 = sphi 0, %s47
      %s51 = sphi 0, %s50
      %s67 = sphi 0, %s51
      %s73 = sphi 0, %s75
      %s76 = sphi 0, %s73
      %s77 = sphi 0, %s76
      %s93 = sphi 0, %s77
      %s99 = sphi 0, %s101
      %s102 = sphi 0, %s99
      %s103 = sphi 0, %s102
      %s119 = sphi 0, %s103
      %s125 = sphi 0, %s127
      %s128 = sphi 0, %s125
      %s129 = sphi 0, %s128
      %s145 = sphi 0, %s129
    $region4: #{conditional_generator_forward.3} parent=1 // loop_header_branch
      %19 = sbr.rel (%p17) target = $region8
    $region5: #{conditional_generator_forward.3} parent=1 // loop_body
      %s21 = ssub.s32 %s16, 1
      %s22 = ssub.s32 %s16, 2
      %s23 = sadd.s32 %s16, 1
      %s25 = sadd.s32 %s24, 1
      %p28 = scmp.eq.s32.totalorder %s16, 53
      %p29 = scmp.ne.s32.totalorder %s24, %s26
      %p30 = scmp.eq.s32.totalorder %s16, 0
      %p31 = por %p29, %p30
      %p32 = scmp.ne.s32.totalorder %s24, %s26
      %p33 = scmp.eq.s32.totalorder %s21, 53
      %p34 = por %p32, %p33
      %p35 = scmp.ne.s32.totalorder %s26, %s27
      %p36 = scmp.eq.s32.totalorder %s21, 0
      %p37 = por %p35, %p36
      %p38 = scmp.ne.s32.totalorder %s26, %s27
      %p39 = scmp.eq.s32.totalorder %s22, 53
      %p40 = por %p38, %p39
      %p42 = scmp.ne.s32.totalorder %s27, %s41
      %p43 = scmp.eq.s32.totalorder %s22, 0
      %p44 = por %p42, %p43
      %s45 = ssub.s32 %s16, %s23
      %p46 = scmp.eq.s32.totalorder %s45, 0
      %s48 = sadd.s32 %s47, 1
      %s49 = scalar_select %p46, %s47, %s48
      %p52 = pneg %p46
      %p53 = scmp.eq.s32.totalorder %s16, 53
      %p54 = por %p52, %p53
      %p55 = scmp.ne.s32.totalorder %s47, %s50
      %p56 = scmp.eq.s32.totalorder %s16, 0
      %p57 = por %p55, %p56
      %p58 = scmp.ne.s32.totalorder %s47, %s50
      %p59 = scmp.eq.s32.totalorder %s21, 53
      %p60 = por %p58, %p59
      %p61 = scmp.ne.s32.totalorder %s50, %s51
      %p62 = scmp.eq.s32.totalorder %s21, 0
      %p63 = por %p61, %p62
      %p64 = scmp.ne.s32.totalorder %s50, %s51
      %p65 = scmp.eq.s32.totalorder %s22, 53
      %p66 = por %p64, %p65
      %p68 = scmp.ne.s32.totalorder %s51, %s67
      %p69 = scmp.eq.s32.totalorder %s22, 0
      %p70 = por %p68, %p69
      %s71 = ssub.s32 %s16, %s23
      %p72 = scmp.eq.s32.totalorder %s71, 0
      %s74 = sadd.s32 %s73, 1
      %s75 = scalar_select %p72, %s73, %s74
      %p78 = pneg %p72
      %p79 = scmp.eq.s32.totalorder %s16, 53
      %p80 = por %p78, %p79
      %p81 = scmp.ne.s32.totalorder %s73, %s76
      %p82 = scmp.eq.s32.totalorder %s16, 0
      %p83 = por %p81, %p82
      %p84 = scmp.ne.s32.totalorder %s73, %s76
      %p85 = scmp.eq.s32.totalorder %s21, 53
      %p86 = por %p84, %p85
      %p87 = scmp.ne.s32.totalorder %s76, %s77
      %p88 = scmp.eq.s32.totalorder %s21, 0
      %p89 = por %p87, %p88
      %p90 = scmp.ne.s32.totalorder %s76, %s77
      %p91 = scmp.eq.s32.totalorder %s22, 53
      %p92 = por %p90, %p91
      %p94 = scmp.ne.s32.totalorder %s77, %s93
      %p95 = scmp.eq.s32.totalorder %s22, 0
      %p96 = por %p94, %p95
      %s97 = ssub.s32 %s16, %s23
      %p98 = scmp.eq.s32.totalorder %s97, 0
      %s100 = sadd.s32 %s99, 1
      %s101 = scalar_select %p98, %s99, %s100
      %p104 = pneg %p98
      %p105 = scmp.eq.s32.totalorder %s16, 53
      %p106 = por %p104, %p105
      %p107 = scmp.ne.s32.totalorder %s99, %s102
      %p108 = scmp.eq.s32.totalorder %s16, 0
      %p109 = por %p107, %p108
      %p110 = scmp.ne.s32.totalorder %s99, %s102
      %p111 = scmp.eq.s32.totalorder %s21, 53
      %p112 = por %p110, %p111
      %p113 = scmp.ne.s32.totalorder %s102, %s103
      %p114 = scmp.eq.s32.totalorder %s21, 0
      %p115 = por %p113, %p114
      %p116 = scmp.ne.s32.totalorder %s102, %s103
      %p117 = scmp.eq.s32.totalorder %s22, 53
      %p118 = por %p116, %p117
      %p120 = scmp.ne.s32.totalorder %s103, %s119
      %p121 = scmp.eq.s32.totalorder %s22, 0
      %p122 = por %p120, %p121
      %s123 = ssub.s32 %s16, %s23
      %p124 = scmp.eq.s32.totalorder %s123, 0
      %s126 = sadd.s32 %s125, 1
      %s127 = scalar_select %p124, %s125, %s126
      %p130 = pneg %p124
      %p131 = scmp.eq.s32.totalorder %s16, 53
      %p132 = por %p130, %p131
      %p133 = scmp.ne.s32.totalorder %s125, %s128
      %p134 = scmp.eq.s32.totalorder %s16, 0
      %p135 = por %p133, %p134
      %p136 = scmp.ne.s32.totalorder %s125, %s128
      %p137 = scmp.eq.s32.totalorder %s21, 53
      %p138 = por %p136, %p137
      %p139 = scmp.ne.s32.totalorder %s128, %s129
      %p140 = scmp.eq.s32.totalorder %s21, 0
      %p141 = por %p139, %p140
      %p142 = scmp.ne.s32.totalorder %s128, %s129
      %p143 = scmp.eq.s32.totalorder %s22, 53
      %p144 = por %p142, %p143
      %p146 = scmp.ne.s32.totalorder %s129, %s145
      %p147 = scmp.eq.s32.totalorder %s22, 0
      %p148 = por %p146, %p147
      %p149 = scmp.le.s32.totalorder 1, %s16
      %p150 = scmp.lt.s32.totalorder %s16, 55
      %p151 = pnand %p149, %p150
      %p152 = pneg %p151
      // Predicated region
      $region9: #{conditional_generator_forward.3} parent=5 // pred_check
        _
      $region10: #{conditional_generator_forward.3} parent=5 // pred_check_branch
        %154 = sbr.rel (%p151) target = $region12
      $region11: #{conditional_generator_forward.3} parent=5 // pred_region
        %s155 = ssub.s32 %s16, 1
        // Predicated region
        $region13: #{conditional_generator_forward.3} parent=11 // pred_check
          %p156 = pneg %p37
        $region14: #{conditional_generator_forward.3} parent=11 // pred_check_branch
          %158 = sbr.rel (%p156) target = $region16
        $region15: #{conditional_generator_forward.3} parent=11 // pred_region
          _
        $region16: #{conditional_generator_forward.3} parent=11 // pred_fallthru
          _
      $region12: #{conditional_generator_forward.3} parent=5 // pred_fallthru
        _
      %p159 = scmp.lt.s32.totalorder %s16, 54
      // Predicated region
      $region17: #{conditional_generator_forward.3} parent=5 // pred_check
        %p160 = pneg %p159
      $region18: #{conditional_generator_forward.3} parent=5 // pred_check_branch
        %162 = sbr.rel (%p160) target = $region20
      $region19: #{conditional_generator_forward.3} parent=5 // pred_region
        // Predicated region
        $region21: #{conditional_generator_forward.3} parent=19 // pred_check
          %p163 = pneg %p57
        $region22: #{conditional_generator_forward.3} parent=19 // pred_check_branch
          %165 = sbr.rel (%p163) target = $region24
        $region23: #{conditional_generator_forward.3} parent=19 // pred_region
          %s166 = sand.u32 %s47, 1
          %s167 = scalar_lea.sflag [#allocation3], %s166
          %s168 = sand.u32 %s47, 1
          %s169 = smul.addr %s168, 16384
          %s170 = scalar_lea.vmem [#allocation2], %s169
          %s172 = ssub.s32 262144, 262144
          %173 = vsyncadd %s167, %s172
          %s174 = smul.addr %s16, 2048
          %s175 = smul.addr %s174, 128
          %s176 = scalar_lea.hbm %s1, %s175
          %s177 = sshll.u32 %s170, 4
          %s178 = int_to_ptr.vmem [resolvable:$true] %s177
          %183 = dma.hbm_to_vmem [thread:$0]  %s176, 262144, %s178, %s167, 8192, 8192, 512
        $region24: #{conditional_generator_forward.3} parent=19 // pred_fallthru
          _
        // Predicated region
        $region25: #{conditional_generator_forward.3} parent=19 // pred_check
          %p184 = pneg %p83
        $region26: #{conditional_generator_forward.3} parent=19 // pred_check_branch
          %186 = sbr.rel (%p184) target = $region28
        $region27: #{conditional_generator_forward.3} parent=19 // pred_region
          %s187 = smul.u32 64, %s16
          %p188 = scmp.lt.s32.totalorder %s187, 3455
          %s189 = scalar_select %p188, %s187, 3455
          %s190 = scalar_lea.vmem %s2, %s189
          %s191 = smul.u32 64, %s16
        $region28: #{conditional_generator_forward.3} parent=19 // pred_fallthru
          _
        // Predicated region
        $region29: #{conditional_generator_forward.3} parent=19 // pred_check
          %p192 = pneg %p109
        $region30: #{conditional_generator_forward.3} parent=19 // pred_check_branch
          %194 = sbr.rel (%p192) target = $region32
        $region31: #{conditional_generator_forward.3} parent=19 // pred_region
          %s195 = sand.u32 %s99, 1
          %s196 = scalar_lea.sflag [#allocation5], %s195
          %s197 = sand.u32 %s99, 1
          %s198 = smul.addr %s197, 64
          %s199 = scalar_lea.vmem [#allocation4], %s198
          %s200 = smul.u32 64, %s16
          %s202 = ssub.s32 1024, 1024
          %203 = vsyncadd %s196, %s202
          %s204 = smul.addr %s200, 16
          %s205 = scalar_lea.hbm %s3, %s204
          %s207 = sshll.u32 %s199, 4
          %s208 = int_to_ptr.vmem [resolvable:$true] %s207
          %210 = dma.hbm_to_vmem [thread:$0]  %s205, 1024, %s208, %s196
        $region32: #{conditional_generator_forward.3} parent=19 // pred_fallthru
          _
      $region20: #{conditional_generator_forward.3} parent=5 // pred_fallthru
        _
      %p211 = scmp.le.s32.totalorder 1, %s16
      %p212 = scmp.lt.s32.totalorder %s16, 55
      %p213 = pnand %p211, %p212
      %p214 = pneg %p213
      // Predicated region
      $region33: #{conditional_generator_forward.3} parent=5 // pred_check
        _
      $region34: #{conditional_generator_forward.3} parent=5 // pred_check_branch
        %216 = sbr.rel (%p213) target = $region36
      $region35: #{conditional_generator_forward.3} parent=5 // pred_region
        %s217 = ssub.s32 %s16, 1
        %s218 = sand.u32 %s50, 1
        %s219 = scalar_lea.sflag [#allocation3], %s218
        %s220 = sand.u32 %s50, 1
        %s221 = smul.addr %s220, 16384
        %s222 = scalar_lea.vmem [#allocation2], %s221
        // Predicated region
        $region37: #{conditional_generator_forward.3} parent=35 // pred_check
          %p223 = pneg %p63
        $region38: #{conditional_generator_forward.3} parent=35 // pred_check_branch
          %225 = sbr.rel (%p223) target = $region40
        $region39: #{conditional_generator_forward.3} parent=35 // pred_region
          %226 = dma.done %s219, 262144
        $region40: #{conditional_generator_forward.3} parent=35 // pred_fallthru
          _
        %s227 = sand.u32 %s102, 1
        %s228 = scalar_lea.sflag [#allocation5], %s227
        %s229 = sand.u32 %s102, 1
        %s230 = smul.addr %s229, 64
        %s231 = scalar_lea.vmem [#allocation4], %s230
        // Predicated region
        $region41: #{conditional_generator_forward.3} parent=35 // pred_check
          %p232 = pneg %p115
        $region42: #{conditional_generator_forward.3} parent=35 // pred_check_branch
          %234 = sbr.rel (%p232) target = $region44
        $region43: #{conditional_generator_forward.3} parent=35 // pred_region
          %235 = dma.done %s228, 1024
        $region44: #{conditional_generator_forward.3} parent=35 // pred_fallthru
          _
        %p236 = pneg %p37
        %p237 = pneg %p34
        %s238 = sand.u32 %s50, 1
        %s239 = scalar_lea.sflag [#allocation3], %s238
        %s240 = sand.u32 %s50, 1
        %s241 = smul.addr %s240, 16384
        %s242 = scalar_lea.vmem [#allocation2], %s241
        %p243 = pneg %p63
        %p244 = pneg %p60
        %s245 = smul.u32 64, %s21
        %p246 = scmp.lt.s32.totalorder %s245, 3455
        %s247 = scalar_select %p246, %s245, 3455
        %s248 = scalar_lea.vmem %s2, %s247
        %p249 = pneg %p89
        %p250 = pneg %p86
        %s251 = sand.u32 %s102, 1
        %s252 = scalar_lea.sflag [#allocation5], %s251
        %s253 = sand.u32 %s102, 1
        %s254 = smul.addr %s253, 64
        %s255 = scalar_lea.vmem [#allocation4], %s254
        %p256 = pneg %p115
        %p257 = pneg %p112
        %p258 = pneg %p141
        %p259 = pneg %p138
        %s260 = smul.u32 64, %s21
        %p261 = scmp.lt.s32.totalorder %s260, 3455
        %s262 = scalar_select %p261, %s260, 3455
        %s263 = smul.addr %s262, 8
        %s264 = scalar_lea.vmem %s4, %s263
        %s265 = smul.u32 64, %s21
        %p266 = scmp.lt.s32.totalorder %s265, 3455
        %s267 = scalar_select %p266, %s265, 3455
        %s268 = scalar_lea.vmem %s2, %s267
        %s269 = smul.u32 64, %s21
        %s270 = smul.u32 64, %s21
        %s271 = smul.u32 64, %s21
        %p272 = scmp.lt.s32.totalorder %s271, 3455
        %s273 = scalar_select %p272, %s271, 3455
        %s274 = smul.addr %s273, 8
        %s275 = scalar_lea.vmem %s4, %s274
        %s276 = smul.u32 64, %s21
        loop: start=0, step=1, limit=4
        $region45: #{conditional_generator_forward.3} parent=35 // loop_pre_header
          _
        $region46: #{conditional_generator_forward.3} parent=35 // loop_header
          %s278 = sphi 0, %s282
          %p279 = scmp.ge.s32.totalorder %s278, 4
          %v283 = vphi 0.0, %v3209
          %v284 = vphi 0.0, %v3210
          %v285 = vphi 0.0, %v3211
          %v286 = vphi 0.0, %v3212
          %v287 = vphi 0.0, %v3213
          %v288 = vphi 0.0, %v3214
          %v289 = vphi 0.0, %v3215
          %v290 = vphi 0.0, %v3216
          %v291 = vphi 0.0, %v3217
          %v292 = vphi 0.0, %v3218
          %v293 = vphi 0.0, %v3219
          %v294 = vphi 0.0, %v3220
          %v295 = vphi 0.0, %v3221
          %v296 = vphi 0.0, %v3222
          %v297 = vphi 0.0, %v3223
          %v298 = vphi 0.0, %v3224
          %v299 = vphi 0.0, %v3225
          %v300 = vphi 0.0, %v3226
          %v301 = vphi 0.0, %v3227
          %v302 = vphi 0.0, %v3228
          %v303 = vphi 0.0, %v3229
          %v304 = vphi 0.0, %v3230
          %v305 = vphi 0.0, %v3231
          %v306 = vphi 0.0, %v3232
          %v307 = vphi 0.0, %v3233
          %v308 = vphi 0.0, %v3234
          %v309 = vphi 0.0, %v3235
          %v310 = vphi 0.0, %v3236
          %v311 = vphi 0.0, %v3237
          %v312 = vphi 0.0, %v3238
          %v313 = vphi 0.0, %v3239
          %v314 = vphi 0.0, %v3240
          %v315 = vphi 0.0, %v3241
          %v316 = vphi 0.0, %v3242
          %v317 = vphi 0.0, %v3243
          %v318 = vphi 0.0, %v3244
          %v319 = vphi 0.0, %v3245
          %v320 = vphi 0.0, %v3246
          %v321 = vphi 0.0, %v3247
          %v322 = vphi 0.0, %v3248
          %v323 = vphi 0.0, %v3249
          %v324 = vphi 0.0, %v3250
          %v325 = vphi 0.0, %v3251
          %v326 = vphi 0.0, %v3252
          %v327 = vphi 0.0, %v3253
          %v328 = vphi 0.0, %v3254
          %v329 = vphi 0.0, %v3255
          %v330 = vphi 0.0, %v3256
          %v331 = vphi 0.0, %v3257
          %v332 = vphi 0.0, %v3258
          %v333 = vphi 0.0, %v3259
          %v334 = vphi 0.0, %v3260
          %v335 = vphi 0.0, %v3261
          %v336 = vphi 0.0, %v3262
          %v337 = vphi 0.0, %v3263
          %v338 = vphi 0.0, %v3264
          %v339 = vphi 0.0, %v3265
          %v340 = vphi 0.0, %v3266
          %v341 = vphi 0.0, %v3267
          %v342 = vphi 0.0, %v3268
          %v343 = vphi 0.0, %v3269
          %v344 = vphi 0.0, %v3270
          %v345 = vphi 0.0, %v3271
          %v346 = vphi 0.0, %v3272
        $region47: #{conditional_generator_forward.3} parent=35 // loop_header_branch
          %281 = sbr.rel (%p279) target = $region51
        $region48: #{conditional_generator_forward.3} parent=35 // loop_body
          %s347 = smul.u32 %s278, 512
          %s348 = smul.addr %s347, 8
          %s349 = scalar_lea.vmem %s222, %s348 [#allocation2]
          %v350 = vld [vmem:[%s349] sm:$0xff]
          %v351 = vld [vmem:[%s349 + $0x8] sm:$0xff]
          %v352 = vld [vmem:[%s349 + $0x10] sm:$0xff]
          %v353 = vld [vmem:[%s349 + $0x18] sm:$0xff]
          %v354 = vld [vmem:[%s349 + $0x20] sm:$0xff]
          %v355 = vld [vmem:[%s349 + $0x28] sm:$0xff]
          %v356 = vld [vmem:[%s349 + $0x30] sm:$0xff]
          %v357 = vld [vmem:[%s349 + $0x38] sm:$0xff]
          %v358 = vld [vmem:[%s349 + $0x40] sm:$0xff]
          %v359 = vld [vmem:[%s349 + $0x48] sm:$0xff]
          %v360 = vld [vmem:[%s349 + $0x50] sm:$0xff]
          %v361 = vld [vmem:[%s349 + $0x58] sm:$0xff]
          %v362 = vld [vmem:[%s349 + $0x60] sm:$0xff]
          %v363 = vld [vmem:[%s349 + $0x68] sm:$0xff]
          %v364 = vld [vmem:[%s349 + $0x70] sm:$0xff]
          %v365 = vld [vmem:[%s349 + $0x78] sm:$0xff]
          %v366 = vld [vmem:[%s349 + $0x80] sm:$0xff]
          %v367 = vld [vmem:[%s349 + $0x88] sm:$0xff]
          %v368 = vld [vmem:[%s349 + $0x90] sm:$0xff]
          %v369 = vld [vmem:[%s349 + $0x98] sm:$0xff]
          %v370 = vld [vmem:[%s349 + $0xa0] sm:$0xff]
          %v371 = vld [vmem:[%s349 + $0xa8] sm:$0xff]
          %v372 = vld [vmem:[%s349 + $0xb0] sm:$0xff]
          %v373 = vld [vmem:[%s349 + $0xb8] sm:$0xff]
          %v374 = vld [vmem:[%s349 + $0xc0] sm:$0xff]
          %v375 = vld [vmem:[%s349 + $0xc8] sm:$0xff]
          %v376 = vld [vmem:[%s349 + $0xd0] sm:$0xff]
          %v377 = vld [vmem:[%s349 + $0xd8] sm:$0xff]
          %v378 = vld [vmem:[%s349 + $0xe0] sm:$0xff]
          %v379 = vld [vmem:[%s349 + $0xe8] sm:$0xff]
          %v380 = vld [vmem:[%s349 + $0xf0] sm:$0xff]
          %v381 = vld [vmem:[%s349 + $0xf8] sm:$0xff]
          %v382 = vld [vmem:[%s349 + $0x100] sm:$0xff]
          %v383 = vld [vmem:[%s349 + $0x108] sm:$0xff]
          %v384 = vld [vmem:[%s349 + $0x110] sm:$0xff]
          %v385 = vld [vmem:[%s349 + $0x118] sm:$0xff]
          %v386 = vld [vmem:[%s349 + $0x120] sm:$0xff]
          %v387 = vld [vmem:[%s349 + $0x128] sm:$0xff]
          %v388 = vld [vmem:[%s349 + $0x130] sm:$0xff]
          %v389 = vld [vmem:[%s349 + $0x138] sm:$0xff]
          %v390 = vld [vmem:[%s349 + $0x140] sm:$0xff]
          %v391 = vld [vmem:[%s349 + $0x148] sm:$0xff]
          %v392 = vld [vmem:[%s349 + $0x150] sm:$0xff]
          %v393 = vld [vmem:[%s349 + $0x158] sm:$0xff]
          %v394 = vld [vmem:[%s349 + $0x160] sm:$0xff]
          %v395 = vld [vmem:[%s349 + $0x168] sm:$0xff]
          %v396 = vld [vmem:[%s349 + $0x170] sm:$0xff]
          %v397 = vld [vmem:[%s349 + $0x178] sm:$0xff]
          %v398 = vld [vmem:[%s349 + $0x180] sm:$0xff]
          %v399 = vld [vmem:[%s349 + $0x188] sm:$0xff]
          %v400 = vld [vmem:[%s349 + $0x190] sm:$0xff]
          %v401 = vld [vmem:[%s349 + $0x198] sm:$0xff]
          %v402 = vld [vmem:[%s349 + $0x1a0] sm:$0xff]
          %v403 = vld [vmem:[%s349 + $0x1a8] sm:$0xff]
          %v404 = vld [vmem:[%s349 + $0x1b0] sm:$0xff]
          %v405 = vld [vmem:[%s349 + $0x1b8] sm:$0xff]
          %v406 = vld [vmem:[%s349 + $0x1c0] sm:$0xff]
          %v407 = vld [vmem:[%s349 + $0x1c8] sm:$0xff]
          %v408 = vld [vmem:[%s349 + $0x1d0] sm:$0xff]
          %v409 = vld [vmem:[%s349 + $0x1d8] sm:$0xff]
          %v410 = vld [vmem:[%s349 + $0x1e0] sm:$0xff]
          %v411 = vld [vmem:[%s349 + $0x1e8] sm:$0xff]
          %v412 = vld [vmem:[%s349 + $0x1f0] sm:$0xff]
          %v413 = vld [vmem:[%s349 + $0x1f8] sm:$0xff]
          %v414 = vld [vmem:[%s349 + $0x200] sm:$0xff]
          %v415 = vld [vmem:[%s349 + $0x208] sm:$0xff]
          %v416 = vld [vmem:[%s349 + $0x210] sm:$0xff]
          %v417 = vld [vmem:[%s349 + $0x218] sm:$0xff]
          %v418 = vld [vmem:[%s349 + $0x220] sm:$0xff]
          %v419 = vld [vmem:[%s349 + $0x228] sm:$0xff]
          %v420 = vld [vmem:[%s349 + $0x230] sm:$0xff]
          %v421 = vld [vmem:[%s349 + $0x238] sm:$0xff]
          %v422 = vld [vmem:[%s349 + $0x240] sm:$0xff]
          %v423 = vld [vmem:[%s349 + $0x248] sm:$0xff]
          %v424 = vld [vmem:[%s349 + $0x250] sm:$0xff]
          %v425 = vld [vmem:[%s349 + $0x258] sm:$0xff]
          %v426 = vld [vmem:[%s349 + $0x260] sm:$0xff]
          %v427 = vld [vmem:[%s349 + $0x268] sm:$0xff]
          %v428 = vld [vmem:[%s349 + $0x270] sm:$0xff]
          %v429 = vld [vmem:[%s349 + $0x278] sm:$0xff]
          %v430 = vld [vmem:[%s349 + $0x280] sm:$0xff]
          %v431 = vld [vmem:[%s349 + $0x288] sm:$0xff]
          %v432 = vld [vmem:[%s349 + $0x290] sm:$0xff]
          %v433 = vld [vmem:[%s349 + $0x298] sm:$0xff]
          %v434 = vld [vmem:[%s349 + $0x2a0] sm:$0xff]
          %v435 = vld [vmem:[%s349 + $0x2a8] sm:$0xff]
          %v436 = vld [vmem:[%s349 + $0x2b0] sm:$0xff]
          %v437 = vld [vmem:[%s349 + $0x2b8] sm:$0xff]
          %v438 = vld [vmem:[%s349 + $0x2c0] sm:$0xff]
          %v439 = vld [vmem:[%s349 + $0x2c8] sm:$0xff]
          %v440 = vld [vmem:[%s349 + $0x2d0] sm:$0xff]
          %v441 = vld [vmem:[%s349 + $0x2d8] sm:$0xff]
          %v442 = vld [vmem:[%s349 + $0x2e0] sm:$0xff]
          %v443 = vld [vmem:[%s349 + $0x2e8] sm:$0xff]
          %v444 = vld [vmem:[%s349 + $0x2f0] sm:$0xff]
          %v445 = vld [vmem:[%s349 + $0x2f8] sm:$0xff]
          %v446 = vld [vmem:[%s349 + $0x300] sm:$0xff]
          %v447 = vld [vmem:[%s349 + $0x308] sm:$0xff]
          %v448 = vld [vmem:[%s349 + $0x310] sm:$0xff]
          %v449 = vld [vmem:[%s349 + $0x318] sm:$0xff]
          %v450 = vld [vmem:[%s349 + $0x320] sm:$0xff]
          %v451 = vld [vmem:[%s349 + $0x328] sm:$0xff]
          %v452 = vld [vmem:[%s349 + $0x330] sm:$0xff]
          %v453 = vld [vmem:[%s349 + $0x338] sm:$0xff]
          %v454 = vld [vmem:[%s349 + $0x340] sm:$0xff]
          %v455 = vld [vmem:[%s349 + $0x348] sm:$0xff]
          %v456 = vld [vmem:[%s349 + $0x350] sm:$0xff]
          %v457 = vld [vmem:[%s349 + $0x358] sm:$0xff]
          %v458 = vld [vmem:[%s349 + $0x360] sm:$0xff]
          %v459 = vld [vmem:[%s349 + $0x368] sm:$0xff]
          %v460 = vld [vmem:[%s349 + $0x370] sm:$0xff]
          %v461 = vld [vmem:[%s349 + $0x378] sm:$0xff]
          %v462 = vld [vmem:[%s349 + $0x380] sm:$0xff]
          %v463 = vld [vmem:[%s349 + $0x388] sm:$0xff]
          %v464 = vld [vmem:[%s349 + $0x390] sm:$0xff]
          %v465 = vld [vmem:[%s349 + $0x398] sm:$0xff]
          %v466 = vld [vmem:[%s349 + $0x3a0] sm:$0xff]
          %v467 = vld [vmem:[%s349 + $0x3a8] sm:$0xff]
          %v468 = vld [vmem:[%s349 + $0x3b0] sm:$0xff]
          %v469 = vld [vmem:[%s349 + $0x3b8] sm:$0xff]
          %v470 = vld [vmem:[%s349 + $0x3c0] sm:$0xff]
          %v471 = vld [vmem:[%s349 + $0x3c8] sm:$0xff]
          %v472 = vld [vmem:[%s349 + $0x3d0] sm:$0xff]
          %v473 = vld [vmem:[%s349 + $0x3d8] sm:$0xff]
          %v474 = vld [vmem:[%s349 + $0x3e0] sm:$0xff]
          %v475 = vld [vmem:[%s349 + $0x3e8] sm:$0xff]
          %v476 = vld [vmem:[%s349 + $0x3f0] sm:$0xff]
          %v477 = vld [vmem:[%s349 + $0x3f8] sm:$0xff]
          %v478 = vld [vmem:[%s349 + $0x400] sm:$0xff]
          %v479 = vld [vmem:[%s349 + $0x408] sm:$0xff]
          %v480 = vld [vmem:[%s349 + $0x410] sm:$0xff]
          %v481 = vld [vmem:[%s349 + $0x418] sm:$0xff]
          %v482 = vld [vmem:[%s349 + $0x420] sm:$0xff]
          %v483 = vld [vmem:[%s349 + $0x428] sm:$0xff]
          %v484 = vld [vmem:[%s349 + $0x430] sm:$0xff]
          %v485 = vld [vmem:[%s349 + $0x438] sm:$0xff]
          %v486 = vld [vmem:[%s349 + $0x440] sm:$0xff]
          %v487 = vld [vmem:[%s349 + $0x448] sm:$0xff]
          %v488 = vld [vmem:[%s349 + $0x450] sm:$0xff]
          %v489 = vld [vmem:[%s349 + $0x458] sm:$0xff]
          %v490 = vld [vmem:[%s349 + $0x460] sm:$0xff]
          %v491 = vld [vmem:[%s349 + $0x468] sm:$0xff]
          %v492 = vld [vmem:[%s349 + $0x470] sm:$0xff]
          %v493 = vld [vmem:[%s349 + $0x478] sm:$0xff]
          %v494 = vld [vmem:[%s349 + $0x480] sm:$0xff]
          %v495 = vld [vmem:[%s349 + $0x488] sm:$0xff]
          %v496 = vld [vmem:[%s349 + $0x490] sm:$0xff]
          %v497 = vld [vmem:[%s349 + $0x498] sm:$0xff]
          %v498 = vld [vmem:[%s349 + $0x4a0] sm:$0xff]
          %v499 = vld [vmem:[%s349 + $0x4a8] sm:$0xff]
          %v500 = vld [vmem:[%s349 + $0x4b0] sm:$0xff]
          %v501 = vld [vmem:[%s349 + $0x4b8] sm:$0xff]
          %v502 = vld [vmem:[%s349 + $0x4c0] sm:$0xff]
          %v503 = vld [vmem:[%s349 + $0x4c8] sm:$0xff]
          %v504 = vld [vmem:[%s349 + $0x4d0] sm:$0xff]
          %v505 = vld [vmem:[%s349 + $0x4d8] sm:$0xff]
          %v506 = vld [vmem:[%s349 + $0x4e0] sm:$0xff]
          %v507 = vld [vmem:[%s349 + $0x4e8] sm:$0xff]
          %v508 = vld [vmem:[%s349 + $0x4f0] sm:$0xff]
          %v509 = vld [vmem:[%s349 + $0x4f8] sm:$0xff]
          %v510 = vld [vmem:[%s349 + $0x500] sm:$0xff]
          %v511 = vld [vmem:[%s349 + $0x508] sm:$0xff]
          %v512 = vld [vmem:[%s349 + $0x510] sm:$0xff]
          %v513 = vld [vmem:[%s349 + $0x518] sm:$0xff]
          %v514 = vld [vmem:[%s349 + $0x520] sm:$0xff]
          %v515 = vld [vmem:[%s349 + $0x528] sm:$0xff]
          %v516 = vld [vmem:[%s349 + $0x530] sm:$0xff]
          %v517 = vld [vmem:[%s349 + $0x538] sm:$0xff]
          %v518 = vld [vmem:[%s349 + $0x540] sm:$0xff]
          %v519 = vld [vmem:[%s349 + $0x548] sm:$0xff]
          %v520 = vld [vmem:[%s349 + $0x550] sm:$0xff]
          %v521 = vld [vmem:[%s349 + $0x558] sm:$0xff]
          %v522 = vld [vmem:[%s349 + $0x560] sm:$0xff]
          %v523 = vld [vmem:[%s349 + $0x568] sm:$0xff]
          %v524 = vld [vmem:[%s349 + $0x570] sm:$0xff]
          %v525 = vld [vmem:[%s349 + $0x578] sm:$0xff]
          %v526 = vld [vmem:[%s349 + $0x580] sm:$0xff]
          %v527 = vld [vmem:[%s349 + $0x588] sm:$0xff]
          %v528 = vld [vmem:[%s349 + $0x590] sm:$0xff]
          %v529 = vld [vmem:[%s349 + $0x598] sm:$0xff]
          %v530 = vld [vmem:[%s349 + $0x5a0] sm:$0xff]
          %v531 = vld [vmem:[%s349 + $0x5a8] sm:$0xff]
          %v532 = vld [vmem:[%s349 + $0x5b0] sm:$0xff]
          %v533 = vld [vmem:[%s349 + $0x5b8] sm:$0xff]
          %v534 = vld [vmem:[%s349 + $0x5c0] sm:$0xff]
          %v535 = vld [vmem:[%s349 + $0x5c8] sm:$0xff]
          %v536 = vld [vmem:[%s349 + $0x5d0] sm:$0xff]
          %v537 = vld [vmem:[%s349 + $0x5d8] sm:$0xff]
          %v538 = vld [vmem:[%s349 + $0x5e0] sm:$0xff]
          %v539 = vld [vmem:[%s349 + $0x5e8] sm:$0xff]
          %v540 = vld [vmem:[%s349 + $0x5f0] sm:$0xff]
          %v541 = vld [vmem:[%s349 + $0x5f8] sm:$0xff]
          %v542 = vld [vmem:[%s349 + $0x600] sm:$0xff]
          %v543 = vld [vmem:[%s349 + $0x608] sm:$0xff]
          %v544 = vld [vmem:[%s349 + $0x610] sm:$0xff]
          %v545 = vld [vmem:[%s349 + $0x618] sm:$0xff]
          %v546 = vld [vmem:[%s349 + $0x620] sm:$0xff]
          %v547 = vld [vmem:[%s349 + $0x628] sm:$0xff]
          %v548 = vld [vmem:[%s349 + $0x630] sm:$0xff]
          %v549 = vld [vmem:[%s349 + $0x638] sm:$0xff]
          %v550 = vld [vmem:[%s349 + $0x640] sm:$0xff]
          %v551 = vld [vmem:[%s349 + $0x648] sm:$0xff]
          %v552 = vld [vmem:[%s349 + $0x650] sm:$0xff]
          %v553 = vld [vmem:[%s349 + $0x658] sm:$0xff]
          %v554 = vld [vmem:[%s349 + $0x660] sm:$0xff]
          %v555 = vld [vmem:[%s349 + $0x668] sm:$0xff]
          %v556 = vld [vmem:[%s349 + $0x670] sm:$0xff]
          %v557 = vld [vmem:[%s349 + $0x678] sm:$0xff]
          %v558 = vld [vmem:[%s349 + $0x680] sm:$0xff]
          %v559 = vld [vmem:[%s349 + $0x688] sm:$0xff]
          %v560 = vld [vmem:[%s349 + $0x690] sm:$0xff]
          %v561 = vld [vmem:[%s349 + $0x698] sm:$0xff]
          %v562 = vld [vmem:[%s349 + $0x6a0] sm:$0xff]
          %v563 = vld [vmem:[%s349 + $0x6a8] sm:$0xff]
          %v564 = vld [vmem:[%s349 + $0x6b0] sm:$0xff]
          %v565 = vld [vmem:[%s349 + $0x6b8] sm:$0xff]
          %v566 = vld [vmem:[%s349 + $0x6c0] sm:$0xff]
          %v567 = vld [vmem:[%s349 + $0x6c8] sm:$0xff]
          %v568 = vld [vmem:[%s349 + $0x6d0] sm:$0xff]
          %v569 = vld [vmem:[%s349 + $0x6d8] sm:$0xff]
          %v570 = vld [vmem:[%s349 + $0x6e0] sm:$0xff]
          %v571 = vld [vmem:[%s349 + $0x6e8] sm:$0xff]
          %v572 = vld [vmem:[%s349 + $0x6f0] sm:$0xff]
          %v573 = vld [vmem:[%s349 + $0x6f8] sm:$0xff]
          %v574 = vld [vmem:[%s349 + $0x700] sm:$0xff]
          %v575 = vld [vmem:[%s349 + $0x708] sm:$0xff]
          %v576 = vld [vmem:[%s349 + $0x710] sm:$0xff]
          %v577 = vld [vmem:[%s349 + $0x718] sm:$0xff]
          %v578 = vld [vmem:[%s349 + $0x720] sm:$0xff]
          %v579 = vld [vmem:[%s349 + $0x728] sm:$0xff]
          %v580 = vld [vmem:[%s349 + $0x730] sm:$0xff]
          %v581 = vld [vmem:[%s349 + $0x738] sm:$0xff]
          %v582 = vld [vmem:[%s349 + $0x740] sm:$0xff]
          %v583 = vld [vmem:[%s349 + $0x748] sm:$0xff]
          %v584 = vld [vmem:[%s349 + $0x750] sm:$0xff]
          %v585 = vld [vmem:[%s349 + $0x758] sm:$0xff]
          %v586 = vld [vmem:[%s349 + $0x760] sm:$0xff]
          %v587 = vld [vmem:[%s349 + $0x768] sm:$0xff]
          %v588 = vld [vmem:[%s349 + $0x770] sm:$0xff]
          %v589 = vld [vmem:[%s349 + $0x778] sm:$0xff]
          %v590 = vld [vmem:[%s349 + $0x780] sm:$0xff]
          %v591 = vld [vmem:[%s349 + $0x788] sm:$0xff]
          %v592 = vld [vmem:[%s349 + $0x790] sm:$0xff]
          %v593 = vld [vmem:[%s349 + $0x798] sm:$0xff]
          %v594 = vld [vmem:[%s349 + $0x7a0] sm:$0xff]
          %v595 = vld [vmem:[%s349 + $0x7a8] sm:$0xff]
          %v596 = vld [vmem:[%s349 + $0x7b0] sm:$0xff]
          %v597 = vld [vmem:[%s349 + $0x7b8] sm:$0xff]
          %v598 = vld [vmem:[%s349 + $0x7c0] sm:$0xff]
          %v599 = vld [vmem:[%s349 + $0x7c8] sm:$0xff]
          %v600 = vld [vmem:[%s349 + $0x7d0] sm:$0xff]
          %v601 = vld [vmem:[%s349 + $0x7d8] sm:$0xff]
          %v602 = vld [vmem:[%s349 + $0x7e0] sm:$0xff]
          %v603 = vld [vmem:[%s349 + $0x7e8] sm:$0xff]
          %v604 = vld [vmem:[%s349 + $0x7f0] sm:$0xff]
          %v605 = vld [vmem:[%s349 + $0x7f8] sm:$0xff]
          %v606 = vld [vmem:[%s349 + $0x800] sm:$0xff]
          %v607 = vld [vmem:[%s349 + $0x808] sm:$0xff]
          %v608 = vld [vmem:[%s349 + $0x810] sm:$0xff]
          %v609 = vld [vmem:[%s349 + $0x818] sm:$0xff]
          %v610 = vld [vmem:[%s349 + $0x820] sm:$0xff]
          %v611 = vld [vmem:[%s349 + $0x828] sm:$0xff]
          %v612 = vld [vmem:[%s349 + $0x830] sm:$0xff]
          %v613 = vld [vmem:[%s349 + $0x838] sm:$0xff]
          %v614 = vld [vmem:[%s349 + $0x840] sm:$0xff]
          %v615 = vld [vmem:[%s349 + $0x848] sm:$0xff]
          %v616 = vld [vmem:[%s349 + $0x850] sm:$0xff]
          %v617 = vld [vmem:[%s349 + $0x858] sm:$0xff]
          %v618 = vld [vmem:[%s349 + $0x860] sm:$0xff]
          %v619 = vld [vmem:[%s349 + $0x868] sm:$0xff]
          %v620 = vld [vmem:[%s349 + $0x870] sm:$0xff]
          %v621 = vld [vmem:[%s349 + $0x878] sm:$0xff]
          %v622 = vld [vmem:[%s349 + $0x880] sm:$0xff]
          %v623 = vld [vmem:[%s349 + $0x888] sm:$0xff]
          %v624 = vld [vmem:[%s349 + $0x890] sm:$0xff]
          %v625 = vld [vmem:[%s349 + $0x898] sm:$0xff]
          %v626 = vld [vmem:[%s349 + $0x8a0] sm:$0xff]
          %v627 = vld [vmem:[%s349 + $0x8a8] sm:$0xff]
          %v628 = vld [vmem:[%s349 + $0x8b0] sm:$0xff]
          %v629 = vld [vmem:[%s349 + $0x8b8] sm:$0xff]
          %v630 = vld [vmem:[%s349 + $0x8c0] sm:$0xff]
          %v631 = vld [vmem:[%s349 + $0x8c8] sm:$0xff]
          %v632 = vld [vmem:[%s349 + $0x8d0] sm:$0xff]
          %v633 = vld [vmem:[%s349 + $0x8d8] sm:$0xff]
          %v634 = vld [vmem:[%s349 + $0x8e0] sm:$0xff]
          %v635 = vld [vmem:[%s349 + $0x8e8] sm:$0xff]
          %v636 = vld [vmem:[%s349 + $0x8f0] sm:$0xff]
          %v637 = vld [vmem:[%s349 + $0x8f8] sm:$0xff]
          %v638 = vld [vmem:[%s349 + $0x900] sm:$0xff]
          %v639 = vld [vmem:[%s349 + $0x908] sm:$0xff]
          %v640 = vld [vmem:[%s349 + $0x910] sm:$0xff]
          %v641 = vld [vmem:[%s349 + $0x918] sm:$0xff]
          %v642 = vld [vmem:[%s349 + $0x920] sm:$0xff]
          %v643 = vld [vmem:[%s349 + $0x928] sm:$0xff]
          %v644 = vld [vmem:[%s349 + $0x930] sm:$0xff]
          %v645 = vld [vmem:[%s349 + $0x938] sm:$0xff]
          %v646 = vld [vmem:[%s349 + $0x940] sm:$0xff]
          %v647 = vld [vmem:[%s349 + $0x948] sm:$0xff]
          %v648 = vld [vmem:[%s349 + $0x950] sm:$0xff]
          %v649 = vld [vmem:[%s349 + $0x958] sm:$0xff]
          %v650 = vld [vmem:[%s349 + $0x960] sm:$0xff]
          %v651 = vld [vmem:[%s349 + $0x968] sm:$0xff]
          %v652 = vld [vmem:[%s349 + $0x970] sm:$0xff]
          %v653 = vld [vmem:[%s349 + $0x978] sm:$0xff]
          %v654 = vld [vmem:[%s349 + $0x980] sm:$0xff]
          %v655 = vld [vmem:[%s349 + $0x988] sm:$0xff]
          %v656 = vld [vmem:[%s349 + $0x990] sm:$0xff]
          %v657 = vld [vmem:[%s349 + $0x998] sm:$0xff]
          %v658 = vld [vmem:[%s349 + $0x9a0] sm:$0xff]
          %v659 = vld [vmem:[%s349 + $0x9a8] sm:$0xff]
          %v660 = vld [vmem:[%s349 + $0x9b0] sm:$0xff]
          %v661 = vld [vmem:[%s349 + $0x9b8] sm:$0xff]
          %v662 = vld [vmem:[%s349 + $0x9c0] sm:$0xff]
          %v663 = vld [vmem:[%s349 + $0x9c8] sm:$0xff]
          %v664 = vld [vmem:[%s349 + $0x9d0] sm:$0xff]
          %v665 = vld [vmem:[%s349 + $0x9d8] sm:$0xff]
          %v666 = vld [vmem:[%s349 + $0x9e0] sm:$0xff]
          %v667 = vld [vmem:[%s349 + $0x9e8] sm:$0xff]
          %v668 = vld [vmem:[%s349 + $0x9f0] sm:$0xff]
          %v669 = vld [vmem:[%s349 + $0x9f8] sm:$0xff]
          %v670 = vld [vmem:[%s349 + $0xa00] sm:$0xff]
          %v671 = vld [vmem:[%s349 + $0xa08] sm:$0xff]
          %v672 = vld [vmem:[%s349 + $0xa10] sm:$0xff]
          %v673 = vld [vmem:[%s349 + $0xa18] sm:$0xff]
          %v674 = vld [vmem:[%s349 + $0xa20] sm:$0xff]
          %v675 = vld [vmem:[%s349 + $0xa28] sm:$0xff]
          %v676 = vld [vmem:[%s349 + $0xa30] sm:$0xff]
          %v677 = vld [vmem:[%s349 + $0xa38] sm:$0xff]
          %v678 = vld [vmem:[%s349 + $0xa40] sm:$0xff]
          %v679 = vld [vmem:[%s349 + $0xa48] sm:$0xff]
          %v680 = vld [vmem:[%s349 + $0xa50] sm:$0xff]
          %v681 = vld [vmem:[%s349 + $0xa58] sm:$0xff]
          %v682 = vld [vmem:[%s349 + $0xa60] sm:$0xff]
          %v683 = vld [vmem:[%s349 + $0xa68] sm:$0xff]
          %v684 = vld [vmem:[%s349 + $0xa70] sm:$0xff]
          %v685 = vld [vmem:[%s349 + $0xa78] sm:$0xff]
          %v686 = vld [vmem:[%s349 + $0xa80] sm:$0xff]
          %v687 = vld [vmem:[%s349 + $0xa88] sm:$0xff]
          %v688 = vld [vmem:[%s349 + $0xa90] sm:$0xff]
          %v689 = vld [vmem:[%s349 + $0xa98] sm:$0xff]
          %v690 = vld [vmem:[%s349 + $0xaa0] sm:$0xff]
          %v691 = vld [vmem:[%s349 + $0xaa8] sm:$0xff]
          %v692 = vld [vmem:[%s349 + $0xab0] sm:$0xff]
          %v693 = vld [vmem:[%s349 + $0xab8] sm:$0xff]
          %v694 = vld [vmem:[%s349 + $0xac0] sm:$0xff]
          %v695 = vld [vmem:[%s349 + $0xac8] sm:$0xff]
          %v696 = vld [vmem:[%s349 + $0xad0] sm:$0xff]
          %v697 = vld [vmem:[%s349 + $0xad8] sm:$0xff]
          %v698 = vld [vmem:[%s349 + $0xae0] sm:$0xff]
          %v699 = vld [vmem:[%s349 + $0xae8] sm:$0xff]
          %v700 = vld [vmem:[%s349 + $0xaf0] sm:$0xff]
          %v701 = vld [vmem:[%s349 + $0xaf8] sm:$0xff]
          %v702 = vld [vmem:[%s349 + $0xb00] sm:$0xff]
          %v703 = vld [vmem:[%s349 + $0xb08] sm:$0xff]
          %v704 = vld [vmem:[%s349 + $0xb10] sm:$0xff]
          %v705 = vld [vmem:[%s349 + $0xb18] sm:$0xff]
          %v706 = vld [vmem:[%s349 + $0xb20] sm:$0xff]
          %v707 = vld [vmem:[%s349 + $0xb28] sm:$0xff]
          %v708 = vld [vmem:[%s349 + $0xb30] sm:$0xff]
          %v709 = vld [vmem:[%s349 + $0xb38] sm:$0xff]
          %v710 = vld [vmem:[%s349 + $0xb40] sm:$0xff]
          %v711 = vld [vmem:[%s349 + $0xb48] sm:$0xff]
          %v712 = vld [vmem:[%s349 + $0xb50] sm:$0xff]
          %v713 = vld [vmem:[%s349 + $0xb58] sm:$0xff]
          %v714 = vld [vmem:[%s349 + $0xb60] sm:$0xff]
          %v715 = vld [vmem:[%s349 + $0xb68] sm:$0xff]
          %v716 = vld [vmem:[%s349 + $0xb70] sm:$0xff]
          %v717 = vld [vmem:[%s349 + $0xb78] sm:$0xff]
          %v718 = vld [vmem:[%s349 + $0xb80] sm:$0xff]
          %v719 = vld [vmem:[%s349 + $0xb88] sm:$0xff]
          %v720 = vld [vmem:[%s349 + $0xb90] sm:$0xff]
          %v721 = vld [vmem:[%s349 + $0xb98] sm:$0xff]
          %v722 = vld [vmem:[%s349 + $0xba0] sm:$0xff]
          %v723 = vld [vmem:[%s349 + $0xba8] sm:$0xff]
          %v724 = vld [vmem:[%s349 + $0xbb0] sm:$0xff]
          %v725 = vld [vmem:[%s349 + $0xbb8] sm:$0xff]
          %v726 = vld [vmem:[%s349 + $0xbc0] sm:$0xff]
          %v727 = vld [vmem:[%s349 + $0xbc8] sm:$0xff]
          %v728 = vld [vmem:[%s349 + $0xbd0] sm:$0xff]
          %v729 = vld [vmem:[%s349 + $0xbd8] sm:$0xff]
          %v730 = vld [vmem:[%s349 + $0xbe0] sm:$0xff]
          %v731 = vld [vmem:[%s349 + $0xbe8] sm:$0xff]
          %v732 = vld [vmem:[%s349 + $0xbf0] sm:$0xff]
          %v733 = vld [vmem:[%s349 + $0xbf8] sm:$0xff]
          %v734 = vld [vmem:[%s349 + $0xc00] sm:$0xff]
          %v735 = vld [vmem:[%s349 + $0xc08] sm:$0xff]
          %v736 = vld [vmem:[%s349 + $0xc10] sm:$0xff]
          %v737 = vld [vmem:[%s349 + $0xc18] sm:$0xff]
          %v738 = vld [vmem:[%s349 + $0xc20] sm:$0xff]
          %v739 = vld [vmem:[%s349 + $0xc28] sm:$0xff]
          %v740 = vld [vmem:[%s349 + $0xc30] sm:$0xff]
          %v741 = vld [vmem:[%s349 + $0xc38] sm:$0xff]
          %v742 = vld [vmem:[%s349 + $0xc40] sm:$0xff]
          %v743 = vld [vmem:[%s349 + $0xc48] sm:$0xff]
          %v744 = vld [vmem:[%s349 + $0xc50] sm:$0xff]
          %v745 = vld [vmem:[%s349 + $0xc58] sm:$0xff]
          %v746 = vld [vmem:[%s349 + $0xc60] sm:$0xff]
          %v747 = vld [vmem:[%s349 + $0xc68] sm:$0xff]
          %v748 = vld [vmem:[%s349 + $0xc70] sm:$0xff]
          %v749 = vld [vmem:[%s349 + $0xc78] sm:$0xff]
          %v750 = vld [vmem:[%s349 + $0xc80] sm:$0xff]
          %v751 = vld [vmem:[%s349 + $0xc88] sm:$0xff]
          %v752 = vld [vmem:[%s349 + $0xc90] sm:$0xff]
          %v753 = vld [vmem:[%s349 + $0xc98] sm:$0xff]
          %v754 = vld [vmem:[%s349 + $0xca0] sm:$0xff]
          %v755 = vld [vmem:[%s349 + $0xca8] sm:$0xff]
          %v756 = vld [vmem:[%s349 + $0xcb0] sm:$0xff]
          %v757 = vld [vmem:[%s349 + $0xcb8] sm:$0xff]
          %v758 = vld [vmem:[%s349 + $0xcc0] sm:$0xff]
          %v759 = vld [vmem:[%s349 + $0xcc8] sm:$0xff]
          %v760 = vld [vmem:[%s349 + $0xcd0] sm:$0xff]
          %v761 = vld [vmem:[%s349 + $0xcd8] sm:$0xff]
          %v762 = vld [vmem:[%s349 + $0xce0] sm:$0xff]
          %v763 = vld [vmem:[%s349 + $0xce8] sm:$0xff]
          %v764 = vld [vmem:[%s349 + $0xcf0] sm:$0xff]
          %v765 = vld [vmem:[%s349 + $0xcf8] sm:$0xff]
          %v766 = vld [vmem:[%s349 + $0xd00] sm:$0xff]
          %v767 = vld [vmem:[%s349 + $0xd08] sm:$0xff]
          %v768 = vld [vmem:[%s349 + $0xd10] sm:$0xff]
          %v769 = vld [vmem:[%s349 + $0xd18] sm:$0xff]
          %v770 = vld [vmem:[%s349 + $0xd20] sm:$0xff]
          %v771 = vld [vmem:[%s349 + $0xd28] sm:$0xff]
          %v772 = vld [vmem:[%s349 + $0xd30] sm:$0xff]
          %v773 = vld [vmem:[%s349 + $0xd38] sm:$0xff]
          %v774 = vld [vmem:[%s349 + $0xd40] sm:$0xff]
          %v775 = vld [vmem:[%s349 + $0xd48] sm:$0xff]
          %v776 = vld [vmem:[%s349 + $0xd50] sm:$0xff]
          %v777 = vld [vmem:[%s349 + $0xd58] sm:$0xff]
          %v778 = vld [vmem:[%s349 + $0xd60] sm:$0xff]
          %v779 = vld [vmem:[%s349 + $0xd68] sm:$0xff]
          %v780 = vld [vmem:[%s349 + $0xd70] sm:$0xff]
          %v781 = vld [vmem:[%s349 + $0xd78] sm:$0xff]
          %v782 = vld [vmem:[%s349 + $0xd80] sm:$0xff]
          %v783 = vld [vmem:[%s349 + $0xd88] sm:$0xff]
          %v784 = vld [vmem:[%s349 + $0xd90] sm:$0xff]
          %v785 = vld [vmem:[%s349 + $0xd98] sm:$0xff]
          %v786 = vld [vmem:[%s349 + $0xda0] sm:$0xff]
          %v787 = vld [vmem:[%s349 + $0xda8] sm:$0xff]
          %v788 = vld [vmem:[%s349 + $0xdb0] sm:$0xff]
          %v789 = vld [vmem:[%s349 + $0xdb8] sm:$0xff]
          %v790 = vld [vmem:[%s349 + $0xdc0] sm:$0xff]
          %v791 = vld [vmem:[%s349 + $0xdc8] sm:$0xff]
          %v792 = vld [vmem:[%s349 + $0xdd0] sm:$0xff]
          %v793 = vld [vmem:[%s349 + $0xdd8] sm:$0xff]
          %v794 = vld [vmem:[%s349 + $0xde0] sm:$0xff]
          %v795 = vld [vmem:[%s349 + $0xde8] sm:$0xff]
          %v796 = vld [vmem:[%s349 + $0xdf0] sm:$0xff]
          %v797 = vld [vmem:[%s349 + $0xdf8] sm:$0xff]
          %v798 = vld [vmem:[%s349 + $0xe00] sm:$0xff]
          %v799 = vld [vmem:[%s349 + $0xe08] sm:$0xff]
          %v800 = vld [vmem:[%s349 + $0xe10] sm:$0xff]
          %v801 = vld [vmem:[%s349 + $0xe18] sm:$0xff]
          %v802 = vld [vmem:[%s349 + $0xe20] sm:$0xff]
          %v803 = vld [vmem:[%s349 + $0xe28] sm:$0xff]
          %v804 = vld [vmem:[%s349 + $0xe30] sm:$0xff]
          %v805 = vld [vmem:[%s349 + $0xe38] sm:$0xff]
          %v806 = vld [vmem:[%s349 + $0xe40] sm:$0xff]
          %v807 = vld [vmem:[%s349 + $0xe48] sm:$0xff]
          %v808 = vld [vmem:[%s349 + $0xe50] sm:$0xff]
          %v809 = vld [vmem:[%s349 + $0xe58] sm:$0xff]
          %v810 = vld [vmem:[%s349 + $0xe60] sm:$0xff]
          %v811 = vld [vmem:[%s349 + $0xe68] sm:$0xff]
          %v812 = vld [vmem:[%s349 + $0xe70] sm:$0xff]
          %v813 = vld [vmem:[%s349 + $0xe78] sm:$0xff]
          %v814 = vld [vmem:[%s349 + $0xe80] sm:$0xff]
          %v815 = vld [vmem:[%s349 + $0xe88] sm:$0xff]
          %v816 = vld [vmem:[%s349 + $0xe90] sm:$0xff]
          %v817 = vld [vmem:[%s349 + $0xe98] sm:$0xff]
          %v818 = vld [vmem:[%s349 + $0xea0] sm:$0xff]
          %v819 = vld [vmem:[%s349 + $0xea8] sm:$0xff]
          %v820 = vld [vmem:[%s349 + $0xeb0] sm:$0xff]
          %v821 = vld [vmem:[%s349 + $0xeb8] sm:$0xff]
          %v822 = vld [vmem:[%s349 + $0xec0] sm:$0xff]
          %v823 = vld [vmem:[%s349 + $0xec8] sm:$0xff]
          %v824 = vld [vmem:[%s349 + $0xed0] sm:$0xff]
          %v825 = vld [vmem:[%s349 + $0xed8] sm:$0xff]
          %v826 = vld [vmem:[%s349 + $0xee0] sm:$0xff]
          %v827 = vld [vmem:[%s349 + $0xee8] sm:$0xff]
          %v828 = vld [vmem:[%s349 + $0xef0] sm:$0xff]
          %v829 = vld [vmem:[%s349 + $0xef8] sm:$0xff]
          %v830 = vld [vmem:[%s349 + $0xf00] sm:$0xff]
          %v831 = vld [vmem:[%s349 + $0xf08] sm:$0xff]
          %v832 = vld [vmem:[%s349 + $0xf10] sm:$0xff]
          %v833 = vld [vmem:[%s349 + $0xf18] sm:$0xff]
          %v834 = vld [vmem:[%s349 + $0xf20] sm:$0xff]
          %v835 = vld [vmem:[%s349 + $0xf28] sm:$0xff]
          %v836 = vld [vmem:[%s349 + $0xf30] sm:$0xff]
          %v837 = vld [vmem:[%s349 + $0xf38] sm:$0xff]
          %v838 = vld [vmem:[%s349 + $0xf40] sm:$0xff]
          %v839 = vld [vmem:[%s349 + $0xf48] sm:$0xff]
          %v840 = vld [vmem:[%s349 + $0xf50] sm:$0xff]
          %v841 = vld [vmem:[%s349 + $0xf58] sm:$0xff]
          %v842 = vld [vmem:[%s349 + $0xf60] sm:$0xff]
          %v843 = vld [vmem:[%s349 + $0xf68] sm:$0xff]
          %v844 = vld [vmem:[%s349 + $0xf70] sm:$0xff]
          %v845 = vld [vmem:[%s349 + $0xf78] sm:$0xff]
          %v846 = vld [vmem:[%s349 + $0xf80] sm:$0xff]
          %v847 = vld [vmem:[%s349 + $0xf88] sm:$0xff]
          %v848 = vld [vmem:[%s349 + $0xf90] sm:$0xff]
          %v849 = vld [vmem:[%s349 + $0xf98] sm:$0xff]
          %v850 = vld [vmem:[%s349 + $0xfa0] sm:$0xff]
          %v851 = vld [vmem:[%s349 + $0xfa8] sm:$0xff]
          %v852 = vld [vmem:[%s349 + $0xfb0] sm:$0xff]
          %v853 = vld [vmem:[%s349 + $0xfb8] sm:$0xff]
          %v854 = vld [vmem:[%s349 + $0xfc0] sm:$0xff]
          %v855 = vld [vmem:[%s349 + $0xfc8] sm:$0xff]
          %v856 = vld [vmem:[%s349 + $0xfd0] sm:$0xff]
          %v857 = vld [vmem:[%s349 + $0xfd8] sm:$0xff]
          %v858 = vld [vmem:[%s349 + $0xfe0] sm:$0xff]
          %v859 = vld [vmem:[%s349 + $0xfe8] sm:$0xff]
          %v860 = vld [vmem:[%s349 + $0xff0] sm:$0xff]
          %v861 = vld [vmem:[%s349 + $0xff8] sm:$0xff]
          %v862 = vunpack.c.l.s8.bf16 %v350
          %v863 = vunpack.c.l.s8.bf16 %v351
          %v864 = vunpack.c.l.s8.bf16 %v352
          %v865 = vunpack.c.l.s8.bf16 %v353
          %v866 = vunpack.c.l.s8.bf16 %v354
          %v867 = vunpack.c.l.s8.bf16 %v355
          %v868 = vunpack.c.l.s8.bf16 %v356
          %v869 = vunpack.c.l.s8.bf16 %v357
          %v870 = vunpack.c.l.s8.bf16 %v358
          %v871 = vunpack.c.l.s8.bf16 %v359
          %v872 = vunpack.c.l.s8.bf16 %v360
          %v873 = vunpack.c.l.s8.bf16 %v361
          %v874 = vunpack.c.l.s8.bf16 %v362
          %v875 = vunpack.c.l.s8.bf16 %v363
          %v876 = vunpack.c.l.s8.bf16 %v364
          %v877 = vunpack.c.l.s8.bf16 %v365
          %v878 = vunpack.c.l.s8.bf16 %v366
          %v879 = vunpack.c.l.s8.bf16 %v367
          %v880 = vunpack.c.l.s8.bf16 %v368
          %v881 = vunpack.c.l.s8.bf16 %v369
          %v882 = vunpack.c.l.s8.bf16 %v370
          %v883 = vunpack.c.l.s8.bf16 %v371
          %v884 = vunpack.c.l.s8.bf16 %v372
          %v885 = vunpack.c.l.s8.bf16 %v373
          %v886 = vunpack.c.l.s8.bf16 %v374
          %v887 = vunpack.c.l.s8.bf16 %v375
          %v888 = vunpack.c.l.s8.bf16 %v376
          %v889 = vunpack.c.l.s8.bf16 %v377
          %v890 = vunpack.c.l.s8.bf16 %v378
          %v891 = vunpack.c.l.s8.bf16 %v379
          %v892 = vunpack.c.l.s8.bf16 %v380
          %v893 = vunpack.c.l.s8.bf16 %v381
          %v894 = vunpack.c.l.s8.bf16 %v382
          %v895 = vunpack.c.l.s8.bf16 %v383
          %v896 = vunpack.c.l.s8.bf16 %v384
          %v897 = vunpack.c.l.s8.bf16 %v385
          %v898 = vunpack.c.l.s8.bf16 %v386
          %v899 = vunpack.c.l.s8.bf16 %v387
          %v900 = vunpack.c.l.s8.bf16 %v388
          %v901 = vunpack.c.l.s8.bf16 %v389
          %v902 = vunpack.c.l.s8.bf16 %v390
          %v903 = vunpack.c.l.s8.bf16 %v391
          %v904 = vunpack.c.l.s8.bf16 %v392
          %v905 = vunpack.c.l.s8.bf16 %v393
          %v906 = vunpack.c.l.s8.bf16 %v394
          %v907 = vunpack.c.l.s8.bf16 %v395
          %v908 = vunpack.c.l.s8.bf16 %v396
          %v909 = vunpack.c.l.s8.bf16 %v397
          %v910 = vunpack.c.l.s8.bf16 %v398
          %v911 = vunpack.c.l.s8.bf16 %v399
          %v912 = vunpack.c.l.s8.bf16 %v400
          %v913 = vunpack.c.l.s8.bf16 %v401
          %v914 = vunpack.c.l.s8.bf16 %v402
          %v915 = vunpack.c.l.s8.bf16 %v403
          %v916 = vunpack.c.l.s8.bf16 %v404
          %v917 = vunpack.c.l.s8.bf16 %v405
          %v918 = vunpack.c.l.s8.bf16 %v406
          %v919 = vunpack.c.l.s8.bf16 %v407
          %v920 = vunpack.c.l.s8.bf16 %v408
          %v921 = vunpack.c.l.s8.bf16 %v409
          %v922 = vunpack.c.l.s8.bf16 %v410
          %v923 = vunpack.c.l.s8.bf16 %v411
          %v924 = vunpack.c.l.s8.bf16 %v412
          %v925 = vunpack.c.l.s8.bf16 %v413
          %v926 = vunpack.c.h.s8.bf16 %v350
          %v927 = vunpack.c.h.s8.bf16 %v351
          %v928 = vunpack.c.h.s8.bf16 %v352
          %v929 = vunpack.c.h.s8.bf16 %v353
          %v930 = vunpack.c.h.s8.bf16 %v354
          %v931 = vunpack.c.h.s8.bf16 %v355
          %v932 = vunpack.c.h.s8.bf16 %v356
          %v933 = vunpack.c.h.s8.bf16 %v357
          %v934 = vunpack.c.h.s8.bf16 %v358
          %v935 = vunpack.c.h.s8.bf16 %v359
          %v936 = vunpack.c.h.s8.bf16 %v360
          %v937 = vunpack.c.h.s8.bf16 %v361
          %v938 = vunpack.c.h.s8.bf16 %v362
          %v939 = vunpack.c.h.s8.bf16 %v363
          %v940 = vunpack.c.h.s8.bf16 %v364
          %v941 = vunpack.c.h.s8.bf16 %v365
          %v942 = vunpack.c.h.s8.bf16 %v366
          %v943 = vunpack.c.h.s8.bf16 %v367
          %v944 = vunpack.c.h.s8.bf16 %v368
          %v945 = vunpack.c.h.s8.bf16 %v369
          %v946 = vunpack.c.h.s8.bf16 %v370
          %v947 = vunpack.c.h.s8.bf16 %v371
          %v948 = vunpack.c.h.s8.bf16 %v372
          %v949 = vunpack.c.h.s8.bf16 %v373
          %v950 = vunpack.c.h.s8.bf16 %v374
          %v951 = vunpack.c.h.s8.bf16 %v375
          %v952 = vunpack.c.h.s8.bf16 %v376
          %v953 = vunpack.c.h.s8.bf16 %v377
          %v954 = vunpack.c.h.s8.bf16 %v378
          %v955 = vunpack.c.h.s8.bf16 %v379
          %v956 = vunpack.c.h.s8.bf16 %v380
          %v957 = vunpack.c.h.s8.bf16 %v381
          %v958 = vunpack.c.h.s8.bf16 %v382
          %v959 = vunpack.c.h.s8.bf16 %v383
          %v960 = vunpack.c.h.s8.bf16 %v384
          %v961 = vunpack.c.h.s8.bf16 %v385
          %v962 = vunpack.c.h.s8.bf16 %v386
          %v963 = vunpack.c.h.s8.bf16 %v387
          %v964 = vunpack.c.h.s8.bf16 %v388
          %v965 = vunpack.c.h.s8.bf16 %v389
          %v966 = vunpack.c.h.s8.bf16 %v390
          %v967 = vunpack.c.h.s8.bf16 %v391
          %v968 = vunpack.c.h.s8.bf16 %v392
          %v969 = vunpack.c.h.s8.bf16 %v393
          %v970 = vunpack.c.h.s8.bf16 %v394
          %v971 = vunpack.c.h.s8.bf16 %v395
          %v972 = vunpack.c.h.s8.bf16 %v396
          %v973 = vunpack.c.h.s8.bf16 %v397
          %v974 = vunpack.c.h.s8.bf16 %v398
          %v975 = vunpack.c.h.s8.bf16 %v399
          %v976 = vunpack.c.h.s8.bf16 %v400
          %v977 = vunpack.c.h.s8.bf16 %v401
          %v978 = vunpack.c.h.s8.bf16 %v402
          %v979 = vunpack.c.h.s8.bf16 %v403
          %v980 = vunpack.c.h.s8.bf16 %v404
          %v981 = vunpack.c.h.s8.bf16 %v405
          %v982 = vunpack.c.h.s8.bf16 %v406
          %v983 = vunpack.c.h.s8.bf16 %v407
          %v984 = vunpack.c.h.s8.bf16 %v408
          %v985 = vunpack.c.h.s8.bf16 %v409
          %v986 = vunpack.c.h.s8.bf16 %v410
          %v987 = vunpack.c.h.s8.bf16 %v411
          %v988 = vunpack.c.h.s8.bf16 %v412
          %v989 = vunpack.c.h.s8.bf16 %v413
          %v990 = vunpack.c.l.s8.bf16 %v414
          %v991 = vunpack.c.l.s8.bf16 %v415
          %v992 = vunpack.c.l.s8.bf16 %v416
          %v993 = vunpack.c.l.s8.bf16 %v417
          %v994 = vunpack.c.l.s8.bf16 %v418
          %v995 = vunpack.c.l.s8.bf16 %v419
          %v996 = vunpack.c.l.s8.bf16 %v420
          %v997 = vunpack.c.l.s8.bf16 %v421
          %v998 = vunpack.c.l.s8.bf16 %v422
          %v999 = vunpack.c.l.s8.bf16 %v423
          %v1000 = vunpack.c.l.s8.bf16 %v424
          %v1001 = vunpack.c.l.s8.bf16 %v425
          %v1002 = vunpack.c.l.s8.bf16 %v426
          %v1003 = vunpack.c.l.s8.bf16 %v427
          %v1004 = vunpack.c.l.s8.bf16 %v428
          %v1005 = vunpack.c.l.s8.bf16 %v429
          %v1006 = vunpack.c.l.s8.bf16 %v430
          %v1007 = vunpack.c.l.s8.bf16 %v431
          %v1008 = vunpack.c.l.s8.bf16 %v432
          %v1009 = vunpack.c.l.s8.bf16 %v433
          %v1010 = vunpack.c.l.s8.bf16 %v434
          %v1011 = vunpack.c.l.s8.bf16 %v435
          %v1012 = vunpack.c.l.s8.bf16 %v436
          %v1013 = vunpack.c.l.s8.bf16 %v437
          %v1014 = vunpack.c.l.s8.bf16 %v438
          %v1015 = vunpack.c.l.s8.bf16 %v439
          %v1016 = vunpack.c.l.s8.bf16 %v440
          %v1017 = vunpack.c.l.s8.bf16 %v441
          %v1018 = vunpack.c.l.s8.bf16 %v442
          %v1019 = vunpack.c.l.s8.bf16 %v443
          %v1020 = vunpack.c.l.s8.bf16 %v444
          %v1021 = vunpack.c.l.s8.bf16 %v445
          %v1022 = vunpack.c.l.s8.bf16 %v446
          %v1023 = vunpack.c.l.s8.bf16 %v447
          %v1024 = vunpack.c.l.s8.bf16 %v448
          %v1025 = vunpack.c.l.s8.bf16 %v449
          %v1026 = vunpack.c.l.s8.bf16 %v450
          %v1027 = vunpack.c.l.s8.bf16 %v451
          %v1028 = vunpack.c.l.s8.bf16 %v452
          %v1029 = vunpack.c.l.s8.bf16 %v453
          %v1030 = vunpack.c.l.s8.bf16 %v454
          %v1031 = vunpack.c.l.s8.bf16 %v455
          %v1032 = vunpack.c.l.s8.bf16 %v456
          %v1033 = vunpack.c.l.s8.bf16 %v457
          %v1034 = vunpack.c.l.s8.bf16 %v458
          %v1035 = vunpack.c.l.s8.bf16 %v459
          %v1036 = vunpack.c.l.s8.bf16 %v460
          %v1037 = vunpack.c.l.s8.bf16 %v461
          %v1038 = vunpack.c.l.s8.bf16 %v462
          %v1039 = vunpack.c.l.s8.bf16 %v463
          %v1040 = vunpack.c.l.s8.bf16 %v464
          %v1041 = vunpack.c.l.s8.bf16 %v465
          %v1042 = vunpack.c.l.s8.bf16 %v466
          %v1043 = vunpack.c.l.s8.bf16 %v467
          %v1044 = vunpack.c.l.s8.bf16 %v468
          %v1045 = vunpack.c.l.s8.bf16 %v469
          %v1046 = vunpack.c.l.s8.bf16 %v470
          %v1047 = vunpack.c.l.s8.bf16 %v471
          %v1048 = vunpack.c.l.s8.bf16 %v472
          %v1049 = vunpack.c.l.s8.bf16 %v473
          %v1050 = vunpack.c.l.s8.bf16 %v474
          %v1051 = vunpack.c.l.s8.bf16 %v475
          %v1052 = vunpack.c.l.s8.bf16 %v476
          %v1053 = vunpack.c.l.s8.bf16 %v477
          %v1054 = vunpack.c.h.s8.bf16 %v414
          %v1055 = vunpack.c.h.s8.bf16 %v415
          %v1056 = vunpack.c.h.s8.bf16 %v416
          %v1057 = vunpack.c.h.s8.bf16 %v417
          %v1058 = vunpack.c.h.s8.bf16 %v418
          %v1059 = vunpack.c.h.s8.bf16 %v419
          %v1060 = vunpack.c.h.s8.bf16 %v420
          %v1061 = vunpack.c.h.s8.bf16 %v421
          %v1062 = vunpack.c.h.s8.bf16 %v422
          %v1063 = vunpack.c.h.s8.bf16 %v423
          %v1064 = vunpack.c.h.s8.bf16 %v424
          %v1065 = vunpack.c.h.s8.bf16 %v425
          %v1066 = vunpack.c.h.s8.bf16 %v426
          %v1067 = vunpack.c.h.s8.bf16 %v427
          %v1068 = vunpack.c.h.s8.bf16 %v428
          %v1069 = vunpack.c.h.s8.bf16 %v429
          %v1070 = vunpack.c.h.s8.bf16 %v430
          %v1071 = vunpack.c.h.s8.bf16 %v431
          %v1072 = vunpack.c.h.s8.bf16 %v432
          %v1073 = vunpack.c.h.s8.bf16 %v433
          %v1074 = vunpack.c.h.s8.bf16 %v434
          %v1075 = vunpack.c.h.s8.bf16 %v435
          %v1076 = vunpack.c.h.s8.bf16 %v436
          %v1077 = vunpack.c.h.s8.bf16 %v437
          %v1078 = vunpack.c.h.s8.bf16 %v438
          %v1079 = vunpack.c.h.s8.bf16 %v439
          %v1080 = vunpack.c.h.s8.bf16 %v440
          %v1081 = vunpack.c.h.s8.bf16 %v441
          %v1082 = vunpack.c.h.s8.bf16 %v442
          %v1083 = vunpack.c.h.s8.bf16 %v443
          %v1084 = vunpack.c.h.s8.bf16 %v444
          %v1085 = vunpack.c.h.s8.bf16 %v445
          %v1086 = vunpack.c.h.s8.bf16 %v446
          %v1087 = vunpack.c.h.s8.bf16 %v447
          %v1088 = vunpack.c.h.s8.bf16 %v448
          %v1089 = vunpack.c.h.s8.bf16 %v449
          %v1090 = vunpack.c.h.s8.bf16 %v450
          %v1091 = vunpack.c.h.s8.bf16 %v451
          %v1092 = vunpack.c.h.s8.bf16 %v452
          %v1093 = vunpack.c.h.s8.bf16 %v453
          %v1094 = vunpack.c.h.s8.bf16 %v454
          %v1095 = vunpack.c.h.s8.bf16 %v455
          %v1096 = vunpack.c.h.s8.bf16 %v456
          %v1097 = vunpack.c.h.s8.bf16 %v457
          %v1098 = vunpack.c.h.s8.bf16 %v458
          %v1099 = vunpack.c.h.s8.bf16 %v459
          %v1100 = vunpack.c.h.s8.bf16 %v460
          %v1101 = vunpack.c.h.s8.bf16 %v461
          %v1102 = vunpack.c.h.s8.bf16 %v462
          %v1103 = vunpack.c.h.s8.bf16 %v463
          %v1104 = vunpack.c.h.s8.bf16 %v464
          %v1105 = vunpack.c.h.s8.bf16 %v465
          %v1106 = vunpack.c.h.s8.bf16 %v466
          %v1107 = vunpack.c.h.s8.bf16 %v467
          %v1108 = vunpack.c.h.s8.bf16 %v468
          %v1109 = vunpack.c.h.s8.bf16 %v469
          %v1110 = vunpack.c.h.s8.bf16 %v470
          %v1111 = vunpack.c.h.s8.bf16 %v471
          %v1112 = vunpack.c.h.s8.bf16 %v472
          %v1113 = vunpack.c.h.s8.bf16 %v473
          %v1114 = vunpack.c.h.s8.bf16 %v474
          %v1115 = vunpack.c.h.s8.bf16 %v475
          %v1116 = vunpack.c.h.s8.bf16 %v476
          %v1117 = vunpack.c.h.s8.bf16 %v477
          %v1118 = vunpack.c.l.s8.bf16 %v478
          %v1119 = vunpack.c.l.s8.bf16 %v479
          %v1120 = vunpack.c.l.s8.bf16 %v480
          %v1121 = vunpack.c.l.s8.bf16 %v481
          %v1122 = vunpack.c.l.s8.bf16 %v482
          %v1123 = vunpack.c.l.s8.bf16 %v483
          %v1124 = vunpack.c.l.s8.bf16 %v484
          %v1125 = vunpack.c.l.s8.bf16 %v485
          %v1126 = vunpack.c.l.s8.bf16 %v486
          %v1127 = vunpack.c.l.s8.bf16 %v487
          %v1128 = vunpack.c.l.s8.bf16 %v488
          %v1129 = vunpack.c.l.s8.bf16 %v489
          %v1130 = vunpack.c.l.s8.bf16 %v490
          %v1131 = vunpack.c.l.s8.bf16 %v491
          %v1132 = vunpack.c.l.s8.bf16 %v492
          %v1133 = vunpack.c.l.s8.bf16 %v493
          %v1134 = vunpack.c.l.s8.bf16 %v494
          %v1135 = vunpack.c.l.s8.bf16 %v495
          %v1136 = vunpack.c.l.s8.bf16 %v496
          %v1137 = vunpack.c.l.s8.bf16 %v497
          %v1138 = vunpack.c.l.s8.bf16 %v498
          %v1139 = vunpack.c.l.s8.bf16 %v499
          %v1140 = vunpack.c.l.s8.bf16 %v500
          %v1141 = vunpack.c.l.s8.bf16 %v501
          %v1142 = vunpack.c.l.s8.bf16 %v502
          %v1143 = vunpack.c.l.s8.bf16 %v503
          %v1144 = vunpack.c.l.s8.bf16 %v504
          %v1145 = vunpack.c.l.s8.bf16 %v505
          %v1146 = vunpack.c.l.s8.bf16 %v506
          %v1147 = vunpack.c.l.s8.bf16 %v507
          %v1148 = vunpack.c.l.s8.bf16 %v508
          %v1149 = vunpack.c.l.s8.bf16 %v509
          %v1150 = vunpack.c.l.s8.bf16 %v510
          %v1151 = vunpack.c.l.s8.bf16 %v511
          %v1152 = vunpack.c.l.s8.bf16 %v512
          %v1153 = vunpack.c.l.s8.bf16 %v513
          %v1154 = vunpack.c.l.s8.bf16 %v514
          %v1155 = vunpack.c.l.s8.bf16 %v515
          %v1156 = vunpack.c.l.s8.bf16 %v516
          %v1157 = vunpack.c.l.s8.bf16 %v517
          %v1158 = vunpack.c.l.s8.bf16 %v518
          %v1159 = vunpack.c.l.s8.bf16 %v519
          %v1160 = vunpack.c.l.s8.bf16 %v520
          %v1161 = vunpack.c.l.s8.bf16 %v521
          %v1162 = vunpack.c.l.s8.bf16 %v522
          %v1163 = vunpack.c.l.s8.bf16 %v523
          %v1164 = vunpack.c.l.s8.bf16 %v524
          %v1165 = vunpack.c.l.s8.bf16 %v525
          %v1166 = vunpack.c.l.s8.bf16 %v526
          %v1167 = vunpack.c.l.s8.bf16 %v527
          %v1168 = vunpack.c.l.s8.bf16 %v528
          %v1169 = vunpack.c.l.s8.bf16 %v529
          %v1170 = vunpack.c.l.s8.bf16 %v530
          %v1171 = vunpack.c.l.s8.bf16 %v531
          %v1172 = vunpack.c.l.s8.bf16 %v532
          %v1173 = vunpack.c.l.s8.bf16 %v533
          %v1174 = vunpack.c.l.s8.bf16 %v534
          %v1175 = vunpack.c.l.s8.bf16 %v535
          %v1176 = vunpack.c.l.s8.bf16 %v536
          %v1177 = vunpack.c.l.s8.bf16 %v537
          %v1178 = vunpack.c.l.s8.bf16 %v538
          %v1179 = vunpack.c.l.s8.bf16 %v539
          %v1180 = vunpack.c.l.s8.bf16 %v540
          %v1181 = vunpack.c.l.s8.bf16 %v541
          %v1182 = vunpack.c.h.s8.bf16 %v478
          %v1183 = vunpack.c.h.s8.bf16 %v479
          %v1184 = vunpack.c.h.s8.bf16 %v480
          %v1185 = vunpack.c.h.s8.bf16 %v481
          %v1186 = vunpack.c.h.s8.bf16 %v482
          %v1187 = vunpack.c.h.s8.bf16 %v483
          %v1188 = vunpack.c.h.s8.bf16 %v484
          %v1189 = vunpack.c.h.s8.bf16 %v485
          %v1190 = vunpack.c.h.s8.bf16 %v486
          %v1191 = vunpack.c.h.s8.bf16 %v487
          %v1192 = vunpack.c.h.s8.bf16 %v488
          %v1193 = vunpack.c.h.s8.bf16 %v489
          %v1194 = vunpack.c.h.s8.bf16 %v490
          %v1195 = vunpack.c.h.s8.bf16 %v491
          %v1196 = vunpack.c.h.s8.bf16 %v492
          %v1197 = vunpack.c.h.s8.bf16 %v493
          %v1198 = vunpack.c.h.s8.bf16 %v494
          %v1199 = vunpack.c.h.s8.bf16 %v495
          %v1200 = vunpack.c.h.s8.bf16 %v496
          %v1201 = vunpack.c.h.s8.bf16 %v497
          %v1202 = vunpack.c.h.s8.bf16 %v498
          %v1203 = vunpack.c.h.s8.bf16 %v499
          %v1204 = vunpack.c.h.s8.bf16 %v500
          %v1205 = vunpack.c.h.s8.bf16 %v501
          %v1206 = vunpack.c.h.s8.bf16 %v502
          %v1207 = vunpack.c.h.s8.bf16 %v503
          %v1208 = vunpack.c.h.s8.bf16 %v504
          %v1209 = vunpack.c.h.s8.bf16 %v505
          %v1210 = vunpack.c.h.s8.bf16 %v506
          %v1211 = vunpack.c.h.s8.bf16 %v507
          %v1212 = vunpack.c.h.s8.bf16 %v508
          %v1213 = vunpack.c.h.s8.bf16 %v509
          %v1214 = vunpack.c.h.s8.bf16 %v510
          %v1215 = vunpack.c.h.s8.bf16 %v511
          %v1216 = vunpack.c.h.s8.bf16 %v512
          %v1217 = vunpack.c.h.s8.bf16 %v513
          %v1218 = vunpack.c.h.s8.bf16 %v514
          %v1219 = vunpack.c.h.s8.bf16 %v515
          %v1220 = vunpack.c.h.s8.bf16 %v516
          %v1221 = vunpack.c.h.s8.bf16 %v517
          %v1222 = vunpack.c.h.s8.bf16 %v518
          %v1223 = vunpack.c.h.s8.bf16 %v519
          %v1224 = vunpack.c.h.s8.bf16 %v520
          %v1225 = vunpack.c.h.s8.bf16 %v521
          %v1226 = vunpack.c.h.s8.bf16 %v522
          %v1227 = vunpack.c.h.s8.bf16 %v523
          %v1228 = vunpack.c.h.s8.bf16 %v524
          %v1229 = vunpack.c.h.s8.bf16 %v525
          %v1230 = vunpack.c.h.s8.bf16 %v526
          %v1231 = vunpack.c.h.s8.bf16 %v527
          %v1232 = vunpack.c.h.s8.bf16 %v528
          %v1233 = vunpack.c.h.s8.bf16 %v529
          %v1234 = vunpack.c.h.s8.bf16 %v530
          %v1235 = vunpack.c.h.s8.bf16 %v531
          %v1236 = vunpack.c.h.s8.bf16 %v532
          %v1237 = vunpack.c.h.s8.bf16 %v533
          %v1238 = vunpack.c.h.s8.bf16 %v534
          %v1239 = vunpack.c.h.s8.bf16 %v535
          %v1240 = vunpack.c.h.s8.bf16 %v536
          %v1241 = vunpack.c.h.s8.bf16 %v537
          %v1242 = vunpack.c.h.s8.bf16 %v538
          %v1243 = vunpack.c.h.s8.bf16 %v539
          %v1244 = vunpack.c.h.s8.bf16 %v540
          %v1245 = vunpack.c.h.s8.bf16 %v541
          %v1246 = vunpack.c.l.s8.bf16 %v542
          %v1247 = vunpack.c.l.s8.bf16 %v543
          %v1248 = vunpack.c.l.s8.bf16 %v544
          %v1249 = vunpack.c.l.s8.bf16 %v545
          %v1250 = vunpack.c.l.s8.bf16 %v546
          %v1251 = vunpack.c.l.s8.bf16 %v547
          %v1252 = vunpack.c.l.s8.bf16 %v548
          %v1253 = vunpack.c.l.s8.bf16 %v549
          %v1254 = vunpack.c.l.s8.bf16 %v550
          %v1255 = vunpack.c.l.s8.bf16 %v551
          %v1256 = vunpack.c.l.s8.bf16 %v552
          %v1257 = vunpack.c.l.s8.bf16 %v553
          %v1258 = vunpack.c.l.s8.bf16 %v554
          %v1259 = vunpack.c.l.s8.bf16 %v555
          %v1260 = vunpack.c.l.s8.bf16 %v556
          %v1261 = vunpack.c.l.s8.bf16 %v557
          %v1262 = vunpack.c.l.s8.bf16 %v558
          %v1263 = vunpack.c.l.s8.bf16 %v559
          %v1264 = vunpack.c.l.s8.bf16 %v560
          %v1265 = vunpack.c.l.s8.bf16 %v561
          %v1266 = vunpack.c.l.s8.bf16 %v562
          %v1267 = vunpack.c.l.s8.bf16 %v563
          %v1268 = vunpack.c.l.s8.bf16 %v564
          %v1269 = vunpack.c.l.s8.bf16 %v565
          %v1270 = vunpack.c.l.s8.bf16 %v566
          %v1271 = vunpack.c.l.s8.bf16 %v567
          %v1272 = vunpack.c.l.s8.bf16 %v568
          %v1273 = vunpack.c.l.s8.bf16 %v569
          %v1274 = vunpack.c.l.s8.bf16 %v570
          %v1275 = vunpack.c.l.s8.bf16 %v571
          %v1276 = vunpack.c.l.s8.bf16 %v572
          %v1277 = vunpack.c.l.s8.bf16 %v573
          %v1278 = vunpack.c.l.s8.bf16 %v574
          %v1279 = vunpack.c.l.s8.bf16 %v575
          %v1280 = vunpack.c.l.s8.bf16 %v576
          %v1281 = vunpack.c.l.s8.bf16 %v577
          %v1282 = vunpack.c.l.s8.bf16 %v578
          %v1283 = vunpack.c.l.s8.bf16 %v579
          %v1284 = vunpack.c.l.s8.bf16 %v580
          %v1285 = vunpack.c.l.s8.bf16 %v581
          %v1286 = vunpack.c.l.s8.bf16 %v582
          %v1287 = vunpack.c.l.s8.bf16 %v583
          %v1288 = vunpack.c.l.s8.bf16 %v584
          %v1289 = vunpack.c.l.s8.bf16 %v585
          %v1290 = vunpack.c.l.s8.bf16 %v586
          %v1291 = vunpack.c.l.s8.bf16 %v587
          %v1292 = vunpack.c.l.s8.bf16 %v588
          %v1293 = vunpack.c.l.s8.bf16 %v589
          %v1294 = vunpack.c.l.s8.bf16 %v590
          %v1295 = vunpack.c.l.s8.bf16 %v591
          %v1296 = vunpack.c.l.s8.bf16 %v592
          %v1297 = vunpack.c.l.s8.bf16 %v593
          %v1298 = vunpack.c.l.s8.bf16 %v594
          %v1299 = vunpack.c.l.s8.bf16 %v595
          %v1300 = vunpack.c.l.s8.bf16 %v596
          %v1301 = vunpack.c.l.s8.bf16 %v597
          %v1302 = vunpack.c.l.s8.bf16 %v598
          %v1303 = vunpack.c.l.s8.bf16 %v599
          %v1304 = vunpack.c.l.s8.bf16 %v600
          %v1305 = vunpack.c.l.s8.bf16 %v601
          %v1306 = vunpack.c.l.s8.bf16 %v602
          %v1307 = vunpack.c.l.s8.bf16 %v603
          %v1308 = vunpack.c.l.s8.bf16 %v604
          %v1309 = vunpack.c.l.s8.bf16 %v605
          %v1310 = vunpack.c.h.s8.bf16 %v542
          %v1311 = vunpack.c.h.s8.bf16 %v543
          %v1312 = vunpack.c.h.s8.bf16 %v544
          %v1313 = vunpack.c.h.s8.bf16 %v545
          %v1314 = vunpack.c.h.s8.bf16 %v546
          %v1315 = vunpack.c.h.s8.bf16 %v547
          %v1316 = vunpack.c.h.s8.bf16 %v548
          %v1317 = vunpack.c.h.s8.bf16 %v549
          %v1318 = vunpack.c.h.s8.bf16 %v550
          %v1319 = vunpack.c.h.s8.bf16 %v551
          %v1320 = vunpack.c.h.s8.bf16 %v552
          %v1321 = vunpack.c.h.s8.bf16 %v553
          %v1322 = vunpack.c.h.s8.bf16 %v554
          %v1323 = vunpack.c.h.s8.bf16 %v555
          %v1324 = vunpack.c.h.s8.bf16 %v556
          %v1325 = vunpack.c.h.s8.bf16 %v557
          %v1326 = vunpack.c.h.s8.bf16 %v558
          %v1327 = vunpack.c.h.s8.bf16 %v559
          %v1328 = vunpack.c.h.s8.bf16 %v560
          %v1329 = vunpack.c.h.s8.bf16 %v561
          %v1330 = vunpack.c.h.s8.bf16 %v562
          %v1331 = vunpack.c.h.s8.bf16 %v563
          %v1332 = vunpack.c.h.s8.bf16 %v564
          %v1333 = vunpack.c.h.s8.bf16 %v565
          %v1334 = vunpack.c.h.s8.bf16 %v566
          %v1335 = vunpack.c.h.s8.bf16 %v567
          %v1336 = vunpack.c.h.s8.bf16 %v568
          %v1337 = vunpack.c.h.s8.bf16 %v569
          %v1338 = vunpack.c.h.s8.bf16 %v570
          %v1339 = vunpack.c.h.s8.bf16 %v571
          %v1340 = vunpack.c.h.s8.bf16 %v572
          %v1341 = vunpack.c.h.s8.bf16 %v573
          %v1342 = vunpack.c.h.s8.bf16 %v574
          %v1343 = vunpack.c.h.s8.bf16 %v575
          %v1344 = vunpack.c.h.s8.bf16 %v576
          %v1345 = vunpack.c.h.s8.bf16 %v577
          %v1346 = vunpack.c.h.s8.bf16 %v578
          %v1347 = vunpack.c.h.s8.bf16 %v579
          %v1348 = vunpack.c.h.s8.bf16 %v580
          %v1349 = vunpack.c.h.s8.bf16 %v581
          %v1350 = vunpack.c.h.s8.bf16 %v582
          %v1351 = vunpack.c.h.s8.bf16 %v583
          %v1352 = vunpack.c.h.s8.bf16 %v584
          %v1353 = vunpack.c.h.s8.bf16 %v585
          %v1354 = vunpack.c.h.s8.bf16 %v586
          %v1355 = vunpack.c.h.s8.bf16 %v587
          %v1356 = vunpack.c.h.s8.bf16 %v588
          %v1357 = vunpack.c.h.s8.bf16 %v589
          %v1358 = vunpack.c.h.s8.bf16 %v590
          %v1359 = vunpack.c.h.s8.bf16 %v591
          %v1360 = vunpack.c.h.s8.bf16 %v592
          %v1361 = vunpack.c.h.s8.bf16 %v593
          %v1362 = vunpack.c.h.s8.bf16 %v594
          %v1363 = vunpack.c.h.s8.bf16 %v595
          %v1364 = vunpack.c.h.s8.bf16 %v596
          %v1365 = vunpack.c.h.s8.bf16 %v597
          %v1366 = vunpack.c.h.s8.bf16 %v598
          %v1367 = vunpack.c.h.s8.bf16 %v599
          %v1368 = vunpack.c.h.s8.bf16 %v600
          %v1369 = vunpack.c.h.s8.bf16 %v601
          %v1370 = vunpack.c.h.s8.bf16 %v602
          %v1371 = vunpack.c.h.s8.bf16 %v603
          %v1372 = vunpack.c.h.s8.bf16 %v604
          %v1373 = vunpack.c.h.s8.bf16 %v605
          %v1374 = vunpack.c.l.s8.bf16 %v606
          %v1375 = vunpack.c.l.s8.bf16 %v607
          %v1376 = vunpack.c.l.s8.bf16 %v608
          %v1377 = vunpack.c.l.s8.bf16 %v609
          %v1378 = vunpack.c.l.s8.bf16 %v610
          %v1379 = vunpack.c.l.s8.bf16 %v611
          %v1380 = vunpack.c.l.s8.bf16 %v612
          %v1381 = vunpack.c.l.s8.bf16 %v613
          %v1382 = vunpack.c.l.s8.bf16 %v614
          %v1383 = vunpack.c.l.s8.bf16 %v615
          %v1384 = vunpack.c.l.s8.bf16 %v616
          %v1385 = vunpack.c.l.s8.bf16 %v617
          %v1386 = vunpack.c.l.s8.bf16 %v618
          %v1387 = vunpack.c.l.s8.bf16 %v619
          %v1388 = vunpack.c.l.s8.bf16 %v620
          %v1389 = vunpack.c.l.s8.bf16 %v621
          %v1390 = vunpack.c.l.s8.bf16 %v622
          %v1391 = vunpack.c.l.s8.bf16 %v623
          %v1392 = vunpack.c.l.s8.bf16 %v624
          %v1393 = vunpack.c.l.s8.bf16 %v625
          %v1394 = vunpack.c.l.s8.bf16 %v626
          %v1395 = vunpack.c.l.s8.bf16 %v627
          %v1396 = vunpack.c.l.s8.bf16 %v628
          %v1397 = vunpack.c.l.s8.bf16 %v629
          %v1398 = vunpack.c.l.s8.bf16 %v630
          %v1399 = vunpack.c.l.s8.bf16 %v631
          %v1400 = vunpack.c.l.s8.bf16 %v632
          %v1401 = vunpack.c.l.s8.bf16 %v633
          %v1402 = vunpack.c.l.s8.bf16 %v634
          %v1403 = vunpack.c.l.s8.bf16 %v635
          %v1404 = vunpack.c.l.s8.bf16 %v636
          %v1405 = vunpack.c.l.s8.bf16 %v637
          %v1406 = vunpack.c.l.s8.bf16 %v638
          %v1407 = vunpack.c.l.s8.bf16 %v639
          %v1408 = vunpack.c.l.s8.bf16 %v640
          %v1409 = vunpack.c.l.s8.bf16 %v641
          %v1410 = vunpack.c.l.s8.bf16 %v642
          %v1411 = vunpack.c.l.s8.bf16 %v643
          %v1412 = vunpack.c.l.s8.bf16 %v644
          %v1413 = vunpack.c.l.s8.bf16 %v645
          %v1414 = vunpack.c.l.s8.bf16 %v646
          %v1415 = vunpack.c.l.s8.bf16 %v647
          %v1416 = vunpack.c.l.s8.bf16 %v648
          %v1417 = vunpack.c.l.s8.bf16 %v649
          %v1418 = vunpack.c.l.s8.bf16 %v650
          %v1419 = vunpack.c.l.s8.bf16 %v651
          %v1420 = vunpack.c.l.s8.bf16 %v652
          %v1421 = vunpack.c.l.s8.bf16 %v653
          %v1422 = vunpack.c.l.s8.bf16 %v654
          %v1423 = vunpack.c.l.s8.bf16 %v655
          %v1424 = vunpack.c.l.s8.bf16 %v656
          %v1425 = vunpack.c.l.s8.bf16 %v657
          %v1426 = vunpack.c.l.s8.bf16 %v658
          %v1427 = vunpack.c.l.s8.bf16 %v659
          %v1428 = vunpack.c.l.s8.bf16 %v660
          %v1429 = vunpack.c.l.s8.bf16 %v661
          %v1430 = vunpack.c.l.s8.bf16 %v662
          %v1431 = vunpack.c.l.s8.bf16 %v663
          %v1432 = vunpack.c.l.s8.bf16 %v664
          %v1433 = vunpack.c.l.s8.bf16 %v665
          %v1434 = vunpack.c.l.s8.bf16 %v666
          %v1435 = vunpack.c.l.s8.bf16 %v667
          %v1436 = vunpack.c.l.s8.bf16 %v668
          %v1437 = vunpack.c.l.s8.bf16 %v669
          %v1438 = vunpack.c.h.s8.bf16 %v606
          %v1439 = vunpack.c.h.s8.bf16 %v607
          %v1440 = vunpack.c.h.s8.bf16 %v608
          %v1441 = vunpack.c.h.s8.bf16 %v609
          %v1442 = vunpack.c.h.s8.bf16 %v610
          %v1443 = vunpack.c.h.s8.bf16 %v611
          %v1444 = vunpack.c.h.s8.bf16 %v612
          %v1445 = vunpack.c.h.s8.bf16 %v613
          %v1446 = vunpack.c.h.s8.bf16 %v614
          %v1447 = vunpack.c.h.s8.bf16 %v615
          %v1448 = vunpack.c.h.s8.bf16 %v616
          %v1449 = vunpack.c.h.s8.bf16 %v617
          %v1450 = vunpack.c.h.s8.bf16 %v618
          %v1451 = vunpack.c.h.s8.bf16 %v619
          %v1452 = vunpack.c.h.s8.bf16 %v620
          %v1453 = vunpack.c.h.s8.bf16 %v621
          %v1454 = vunpack.c.h.s8.bf16 %v622
          %v1455 = vunpack.c.h.s8.bf16 %v623
          %v1456 = vunpack.c.h.s8.bf16 %v624
          %v1457 = vunpack.c.h.s8.bf16 %v625
          %v1458 = vunpack.c.h.s8.bf16 %v626
          %v1459 = vunpack.c.h.s8.bf16 %v627
          %v1460 = vunpack.c.h.s8.bf16 %v628
          %v1461 = vunpack.c.h.s8.bf16 %v629
          %v1462 = vunpack.c.h.s8.bf16 %v630
          %v1463 = vunpack.c.h.s8.bf16 %v631
          %v1464 = vunpack.c.h.s8.bf16 %v632
          %v1465 = vunpack.c.h.s8.bf16 %v633
          %v1466 = vunpack.c.h.s8.bf16 %v634
          %v1467 = vunpack.c.h.s8.bf16 %v635
          %v1468 = vunpack.c.h.s8.bf16 %v636
          %v1469 = vunpack.c.h.s8.bf16 %v637
          %v1470 = vunpack.c.h.s8.bf16 %v638
          %v1471 = vunpack.c.h.s8.bf16 %v639
          %v1472 = vunpack.c.h.s8.bf16 %v640
          %v1473 = vunpack.c.h.s8.bf16 %v641
          %v1474 = vunpack.c.h.s8.bf16 %v642
          %v1475 = vunpack.c.h.s8.bf16 %v643
          %v1476 = vunpack.c.h.s8.bf16 %v644
          %v1477 = vunpack.c.h.s8.bf16 %v645
          %v1478 = vunpack.c.h.s8.bf16 %v646
          %v1479 = vunpack.c.h.s8.bf16 %v647
          %v1480 = vunpack.c.h.s8.bf16 %v648
          %v1481 = vunpack.c.h.s8.bf16 %v649
          %v1482 = vunpack.c.h.s8.bf16 %v650
          %v1483 = vunpack.c.h.s8.bf16 %v651
          %v1484 = vunpack.c.h.s8.bf16 %v652
          %v1485 = vunpack.c.h.s8.bf16 %v653
          %v1486 = vunpack.c.h.s8.bf16 %v654
          %v1487 = vunpack.c.h.s8.bf16 %v655
          %v1488 = vunpack.c.h.s8.bf16 %v656
          %v1489 = vunpack.c.h.s8.bf16 %v657
          %v1490 = vunpack.c.h.s8.bf16 %v658
          %v1491 = vunpack.c.h.s8.bf16 %v659
          %v1492 = vunpack.c.h.s8.bf16 %v660
          %v1493 = vunpack.c.h.s8.bf16 %v661
          %v1494 = vunpack.c.h.s8.bf16 %v662
          %v1495 = vunpack.c.h.s8.bf16 %v663
          %v1496 = vunpack.c.h.s8.bf16 %v664
          %v1497 = vunpack.c.h.s8.bf16 %v665
          %v1498 = vunpack.c.h.s8.bf16 %v666
          %v1499 = vunpack.c.h.s8.bf16 %v667
          %v1500 = vunpack.c.h.s8.bf16 %v668
          %v1501 = vunpack.c.h.s8.bf16 %v669
          %v1502 = vunpack.c.l.s8.bf16 %v670
          %v1503 = vunpack.c.l.s8.bf16 %v671
          %v1504 = vunpack.c.l.s8.bf16 %v672
          %v1505 = vunpack.c.l.s8.bf16 %v673
          %v1506 = vunpack.c.l.s8.bf16 %v674
          %v1507 = vunpack.c.l.s8.bf16 %v675
          %v1508 = vunpack.c.l.s8.bf16 %v676
          %v1509 = vunpack.c.l.s8.bf16 %v677
          %v1510 = vunpack.c.l.s8.bf16 %v678
          %v1511 = vunpack.c.l.s8.bf16 %v679
          %v1512 = vunpack.c.l.s8.bf16 %v680
          %v1513 = vunpack.c.l.s8.bf16 %v681
          %v1514 = vunpack.c.l.s8.bf16 %v682
          %v1515 = vunpack.c.l.s8.bf16 %v683
          %v1516 = vunpack.c.l.s8.bf16 %v684
          %v1517 = vunpack.c.l.s8.bf16 %v685
          %v1518 = vunpack.c.l.s8.bf16 %v686
          %v1519 = vunpack.c.l.s8.bf16 %v687
          %v1520 = vunpack.c.l.s8.bf16 %v688
          %v1521 = vunpack.c.l.s8.bf16 %v689
          %v1522 = vunpack.c.l.s8.bf16 %v690
          %v1523 = vunpack.c.l.s8.bf16 %v691
          %v1524 = vunpack.c.l.s8.bf16 %v692
          %v1525 = vunpack.c.l.s8.bf16 %v693
          %v1526 = vunpack.c.l.s8.bf16 %v694
          %v1527 = vunpack.c.l.s8.bf16 %v695
          %v1528 = vunpack.c.l.s8.bf16 %v696
          %v1529 = vunpack.c.l.s8.bf16 %v697
          %v1530 = vunpack.c.l.s8.bf16 %v698
          %v1531 = vunpack.c.l.s8.bf16 %v699
          %v1532 = vunpack.c.l.s8.bf16 %v700
          %v1533 = vunpack.c.l.s8.bf16 %v701
          %v1534 = vunpack.c.l.s8.bf16 %v702
          %v1535 = vunpack.c.l.s8.bf16 %v703
          %v1536 = vunpack.c.l.s8.bf16 %v704
          %v1537 = vunpack.c.l.s8.bf16 %v705
          %v1538 = vunpack.c.l.s8.bf16 %v706
          %v1539 = vunpack.c.l.s8.bf16 %v707
          %v1540 = vunpack.c.l.s8.bf16 %v708
          %v1541 = vunpack.c.l.s8.bf16 %v709
          %v1542 = vunpack.c.l.s8.bf16 %v710
          %v1543 = vunpack.c.l.s8.bf16 %v711
          %v1544 = vunpack.c.l.s8.bf16 %v712
          %v1545 = vunpack.c.l.s8.bf16 %v713
          %v1546 = vunpack.c.l.s8.bf16 %v714
          %v1547 = vunpack.c.l.s8.bf16 %v715
          %v1548 = vunpack.c.l.s8.bf16 %v716
          %v1549 = vunpack.c.l.s8.bf16 %v717
          %v1550 = vunpack.c.l.s8.bf16 %v718
          %v1551 = vunpack.c.l.s8.bf16 %v719
          %v1552 = vunpack.c.l.s8.bf16 %v720
          %v1553 = vunpack.c.l.s8.bf16 %v721
          %v1554 = vunpack.c.l.s8.bf16 %v722
          %v1555 = vunpack.c.l.s8.bf16 %v723
          %v1556 = vunpack.c.l.s8.bf16 %v724
          %v1557 = vunpack.c.l.s8.bf16 %v725
          %v1558 = vunpack.c.l.s8.bf16 %v726
          %v1559 = vunpack.c.l.s8.bf16 %v727
          %v1560 = vunpack.c.l.s8.bf16 %v728
          %v1561 = vunpack.c.l.s8.bf16 %v729
          %v1562 = vunpack.c.l.s8.bf16 %v730
          %v1563 = vunpack.c.l.s8.bf16 %v731
          %v1564 = vunpack.c.l.s8.bf16 %v732
          %v1565 = vunpack.c.l.s8.bf16 %v733
          %v1566 = vunpack.c.h.s8.bf16 %v670
          %v1567 = vunpack.c.h.s8.bf16 %v671
          %v1568 = vunpack.c.h.s8.bf16 %v672
          %v1569 = vunpack.c.h.s8.bf16 %v673
          %v1570 = vunpack.c.h.s8.bf16 %v674
          %v1571 = vunpack.c.h.s8.bf16 %v675
          %v1572 = vunpack.c.h.s8.bf16 %v676
          %v1573 = vunpack.c.h.s8.bf16 %v677
          %v1574 = vunpack.c.h.s8.bf16 %v678
          %v1575 = vunpack.c.h.s8.bf16 %v679
          %v1576 = vunpack.c.h.s8.bf16 %v680
          %v1577 = vunpack.c.h.s8.bf16 %v681
          %v1578 = vunpack.c.h.s8.bf16 %v682
          %v1579 = vunpack.c.h.s8.bf16 %v683
          %v1580 = vunpack.c.h.s8.bf16 %v684
          %v1581 = vunpack.c.h.s8.bf16 %v685
          %v1582 = vunpack.c.h.s8.bf16 %v686
          %v1583 = vunpack.c.h.s8.bf16 %v687
          %v1584 = vunpack.c.h.s8.bf16 %v688
          %v1585 = vunpack.c.h.s8.bf16 %v689
          %v1586 = vunpack.c.h.s8.bf16 %v690
          %v1587 = vunpack.c.h.s8.bf16 %v691
          %v1588 = vunpack.c.h.s8.bf16 %v692
          %v1589 = vunpack.c.h.s8.bf16 %v693
          %v1590 = vunpack.c.h.s8.bf16 %v694
          %v1591 = vunpack.c.h.s8.bf16 %v695
          %v1592 = vunpack.c.h.s8.bf16 %v696
          %v1593 = vunpack.c.h.s8.bf16 %v697
          %v1594 = vunpack.c.h.s8.bf16 %v698
          %v1595 = vunpack.c.h.s8.bf16 %v699
          %v1596 = vunpack.c.h.s8.bf16 %v700
          %v1597 = vunpack.c.h.s8.bf16 %v701
          %v1598 = vunpack.c.h.s8.bf16 %v702
          %v1599 = vunpack.c.h.s8.bf16 %v703
          %v1600 = vunpack.c.h.s8.bf16 %v704
          %v1601 = vunpack.c.h.s8.bf16 %v705
          %v1602 = vunpack.c.h.s8.bf16 %v706
          %v1603 = vunpack.c.h.s8.bf16 %v707
          %v1604 = vunpack.c.h.s8.bf16 %v708
          %v1605 = vunpack.c.h.s8.bf16 %v709
          %v1606 = vunpack.c.h.s8.bf16 %v710
          %v1607 = vunpack.c.h.s8.bf16 %v711
          %v1608 = vunpack.c.h.s8.bf16 %v712
          %v1609 = vunpack.c.h.s8.bf16 %v713
          %v1610 = vunpack.c.h.s8.bf16 %v714
          %v1611 = vunpack.c.h.s8.bf16 %v715
          %v1612 = vunpack.c.h.s8.bf16 %v716
          %v1613 = vunpack.c.h.s8.bf16 %v717
          %v1614 = vunpack.c.h.s8.bf16 %v718
          %v1615 = vunpack.c.h.s8.bf16 %v719
          %v1616 = vunpack.c.h.s8.bf16 %v720
          %v1617 = vunpack.c.h.s8.bf16 %v721
          %v1618 = vunpack.c.h.s8.bf16 %v722
          %v1619 = vunpack.c.h.s8.bf16 %v723
          %v1620 = vunpack.c.h.s8.bf16 %v724
          %v1621 = vunpack.c.h.s8.bf16 %v725
          %v1622 = vunpack.c.h.s8.bf16 %v726
          %v1623 = vunpack.c.h.s8.bf16 %v727
          %v1624 = vunpack.c.h.s8.bf16 %v728
          %v1625 = vunpack.c.h.s8.bf16 %v729
          %v1626 = vunpack.c.h.s8.bf16 %v730
          %v1627 = vunpack.c.h.s8.bf16 %v731
          %v1628 = vunpack.c.h.s8.bf16 %v732
          %v1629 = vunpack.c.h.s8.bf16 %v733
          %v1630 = vunpack.c.l.s8.bf16 %v734
          %v1631 = vunpack.c.l.s8.bf16 %v735
          %v1632 = vunpack.c.l.s8.bf16 %v736
          %v1633 = vunpack.c.l.s8.bf16 %v737
          %v1634 = vunpack.c.l.s8.bf16 %v738
          %v1635 = vunpack.c.l.s8.bf16 %v739
          %v1636 = vunpack.c.l.s8.bf16 %v740
          %v1637 = vunpack.c.l.s8.bf16 %v741
          %v1638 = vunpack.c.l.s8.bf16 %v742
          %v1639 = vunpack.c.l.s8.bf16 %v743
          %v1640 = vunpack.c.l.s8.bf16 %v744
          %v1641 = vunpack.c.l.s8.bf16 %v745
          %v1642 = vunpack.c.l.s8.bf16 %v746
          %v1643 = vunpack.c.l.s8.bf16 %v747
          %v1644 = vunpack.c.l.s8.bf16 %v748
          %v1645 = vunpack.c.l.s8.bf16 %v749
          %v1646 = vunpack.c.l.s8.bf16 %v750
          %v1647 = vunpack.c.l.s8.bf16 %v751
          %v1648 = vunpack.c.l.s8.bf16 %v752
          %v1649 = vunpack.c.l.s8.bf16 %v753
          %v1650 = vunpack.c.l.s8.bf16 %v754
          %v1651 = vunpack.c.l.s8.bf16 %v755
          %v1652 = vunpack.c.l.s8.bf16 %v756
          %v1653 = vunpack.c.l.s8.bf16 %v757
          %v1654 = vunpack.c.l.s8.bf16 %v758
          %v1655 = vunpack.c.l.s8.bf16 %v759
          %v1656 = vunpack.c.l.s8.bf16 %v760
          %v1657 = vunpack.c.l.s8.bf16 %v761
          %v1658 = vunpack.c.l.s8.bf16 %v762
          %v1659 = vunpack.c.l.s8.bf16 %v763
          %v1660 = vunpack.c.l.s8.bf16 %v764
          %v1661 = vunpack.c.l.s8.bf16 %v765
          %v1662 = vunpack.c.l.s8.bf16 %v766
          %v1663 = vunpack.c.l.s8.bf16 %v767
          %v1664 = vunpack.c.l.s8.bf16 %v768
          %v1665 = vunpack.c.l.s8.bf16 %v769
          %v1666 = vunpack.c.l.s8.bf16 %v770
          %v1667 = vunpack.c.l.s8.bf16 %v771
          %v1668 = vunpack.c.l.s8.bf16 %v772
          %v1669 = vunpack.c.l.s8.bf16 %v773
          %v1670 = vunpack.c.l.s8.bf16 %v774
          %v1671 = vunpack.c.l.s8.bf16 %v775
          %v1672 = vunpack.c.l.s8.bf16 %v776
          %v1673 = vunpack.c.l.s8.bf16 %v777
          %v1674 = vunpack.c.l.s8.bf16 %v778
          %v1675 = vunpack.c.l.s8.bf16 %v779
          %v1676 = vunpack.c.l.s8.bf16 %v780
          %v1677 = vunpack.c.l.s8.bf16 %v781
          %v1678 = vunpack.c.l.s8.bf16 %v782
          %v1679 = vunpack.c.l.s8.bf16 %v783
          %v1680 = vunpack.c.l.s8.bf16 %v784
          %v1681 = vunpack.c.l.s8.bf16 %v785
          %v1682 = vunpack.c.l.s8.bf16 %v786
          %v1683 = vunpack.c.l.s8.bf16 %v787
          %v1684 = vunpack.c.l.s8.bf16 %v788
          %v1685 = vunpack.c.l.s8.bf16 %v789
          %v1686 = vunpack.c.l.s8.bf16 %v790
          %v1687 = vunpack.c.l.s8.bf16 %v791
          %v1688 = vunpack.c.l.s8.bf16 %v792
          %v1689 = vunpack.c.l.s8.bf16 %v793
          %v1690 = vunpack.c.l.s8.bf16 %v794
          %v1691 = vunpack.c.l.s8.bf16 %v795
          %v1692 = vunpack.c.l.s8.bf16 %v796
          %v1693 = vunpack.c.l.s8.bf16 %v797
          %v1694 = vunpack.c.h.s8.bf16 %v734
          %v1695 = vunpack.c.h.s8.bf16 %v735
          %v1696 = vunpack.c.h.s8.bf16 %v736
          %v1697 = vunpack.c.h.s8.bf16 %v737
          %v1698 = vunpack.c.h.s8.bf16 %v738
          %v1699 = vunpack.c.h.s8.bf16 %v739
          %v1700 = vunpack.c.h.s8.bf16 %v740
          %v1701 = vunpack.c.h.s8.bf16 %v741
          %v1702 = vunpack.c.h.s8.bf16 %v742
          %v1703 = vunpack.c.h.s8.bf16 %v743
          %v1704 = vunpack.c.h.s8.bf16 %v744
          %v1705 = vunpack.c.h.s8.bf16 %v745
          %v1706 = vunpack.c.h.s8.bf16 %v746
          %v1707 = vunpack.c.h.s8.bf16 %v747
          %v1708 = vunpack.c.h.s8.bf16 %v748
          %v1709 = vunpack.c.h.s8.bf16 %v749
          %v1710 = vunpack.c.h.s8.bf16 %v750
          %v1711 = vunpack.c.h.s8.bf16 %v751
          %v1712 = vunpack.c.h.s8.bf16 %v752
          %v1713 = vunpack.c.h.s8.bf16 %v753
          %v1714 = vunpack.c.h.s8.bf16 %v754
          %v1715 = vunpack.c.h.s8.bf16 %v755
          %v1716 = vunpack.c.h.s8.bf16 %v756
          %v1717 = vunpack.c.h.s8.bf16 %v757
          %v1718 = vunpack.c.h.s8.bf16 %v758
          %v1719 = vunpack.c.h.s8.bf16 %v759
          %v1720 = vunpack.c.h.s8.bf16 %v760
          %v1721 = vunpack.c.h.s8.bf16 %v761
          %v1722 = vunpack.c.h.s8.bf16 %v762
          %v1723 = vunpack.c.h.s8.bf16 %v763
          %v1724 = vunpack.c.h.s8.bf16 %v764
          %v1725 = vunpack.c.h.s8.bf16 %v765
          %v1726 = vunpack.c.h.s8.bf16 %v766
          %v1727 = vunpack.c.h.s8.bf16 %v767
          %v1728 = vunpack.c.h.s8.bf16 %v768
          %v1729 = vunpack.c.h.s8.bf16 %v769
          %v1730 = vunpack.c.h.s8.bf16 %v770
          %v1731 = vunpack.c.h.s8.bf16 %v771
          %v1732 = vunpack.c.h.s8.bf16 %v772
          %v1733 = vunpack.c.h.s8.bf16 %v773
          %v1734 = vunpack.c.h.s8.bf16 %v774
          %v1735 = vunpack.c.h.s8.bf16 %v775
          %v1736 = vunpack.c.h.s8.bf16 %v776
          %v1737 = vunpack.c.h.s8.bf16 %v777
          %v1738 = vunpack.c.h.s8.bf16 %v778
          %v1739 = vunpack.c.h.s8.bf16 %v779
          %v1740 = vunpack.c.h.s8.bf16 %v780
          %v1741 = vunpack.c.h.s8.bf16 %v781
          %v1742 = vunpack.c.h.s8.bf16 %v782
          %v1743 = vunpack.c.h.s8.bf16 %v783
          %v1744 = vunpack.c.h.s8.bf16 %v784
          %v1745 = vunpack.c.h.s8.bf16 %v785
          %v1746 = vunpack.c.h.s8.bf16 %v786
          %v1747 = vunpack.c.h.s8.bf16 %v787
          %v1748 = vunpack.c.h.s8.bf16 %v788
          %v1749 = vunpack.c.h.s8.bf16 %v789
          %v1750 = vunpack.c.h.s8.bf16 %v790
          %v1751 = vunpack.c.h.s8.bf16 %v791
          %v1752 = vunpack.c.h.s8.bf16 %v792
          %v1753 = vunpack.c.h.s8.bf16 %v793
          %v1754 = vunpack.c.h.s8.bf16 %v794
          %v1755 = vunpack.c.h.s8.bf16 %v795
          %v1756 = vunpack.c.h.s8.bf16 %v796
          %v1757 = vunpack.c.h.s8.bf16 %v797
          %v1758 = vunpack.c.l.s8.bf16 %v798
          %v1759 = vunpack.c.l.s8.bf16 %v799
          %v1760 = vunpack.c.l.s8.bf16 %v800
          %v1761 = vunpack.c.l.s8.bf16 %v801
          %v1762 = vunpack.c.l.s8.bf16 %v802
          %v1763 = vunpack.c.l.s8.bf16 %v803
          %v1764 = vunpack.c.l.s8.bf16 %v804
          %v1765 = vunpack.c.l.s8.bf16 %v805
          %v1766 = vunpack.c.l.s8.bf16 %v806
          %v1767 = vunpack.c.l.s8.bf16 %v807
          %v1768 = vunpack.c.l.s8.bf16 %v808
          %v1769 = vunpack.c.l.s8.bf16 %v809
          %v1770 = vunpack.c.l.s8.bf16 %v810
          %v1771 = vunpack.c.l.s8.bf16 %v811
          %v1772 = vunpack.c.l.s8.bf16 %v812
          %v1773 = vunpack.c.l.s8.bf16 %v813
          %v1774 = vunpack.c.l.s8.bf16 %v814
          %v1775 = vunpack.c.l.s8.bf16 %v815
          %v1776 = vunpack.c.l.s8.bf16 %v816
          %v1777 = vunpack.c.l.s8.bf16 %v817
          %v1778 = vunpack.c.l.s8.bf16 %v818
          %v1779 = vunpack.c.l.s8.bf16 %v819
          %v1780 = vunpack.c.l.s8.bf16 %v820
          %v1781 = vunpack.c.l.s8.bf16 %v821
          %v1782 = vunpack.c.l.s8.bf16 %v822
          %v1783 = vunpack.c.l.s8.bf16 %v823
          %v1784 = vunpack.c.l.s8.bf16 %v824
          %v1785 = vunpack.c.l.s8.bf16 %v825
          %v1786 = vunpack.c.l.s8.bf16 %v826
          %v1787 = vunpack.c.l.s8.bf16 %v827
          %v1788 = vunpack.c.l.s8.bf16 %v828
          %v1789 = vunpack.c.l.s8.bf16 %v829
          %v1790 = vunpack.c.l.s8.bf16 %v830
          %v1791 = vunpack.c.l.s8.bf16 %v831
          %v1792 = vunpack.c.l.s8.bf16 %v832
          %v1793 = vunpack.c.l.s8.bf16 %v833
          %v1794 = vunpack.c.l.s8.bf16 %v834
          %v1795 = vunpack.c.l.s8.bf16 %v835
          %v1796 = vunpack.c.l.s8.bf16 %v836
          %v1797 = vunpack.c.l.s8.bf16 %v837
          %v1798 = vunpack.c.l.s8.bf16 %v838
          %v1799 = vunpack.c.l.s8.bf16 %v839
          %v1800 = vunpack.c.l.s8.bf16 %v840
          %v1801 = vunpack.c.l.s8.bf16 %v841
          %v1802 = vunpack.c.l.s8.bf16 %v842
          %v1803 = vunpack.c.l.s8.bf16 %v843
          %v1804 = vunpack.c.l.s8.bf16 %v844
          %v1805 = vunpack.c.l.s8.bf16 %v845
          %v1806 = vunpack.c.l.s8.bf16 %v846
          %v1807 = vunpack.c.l.s8.bf16 %v847
          %v1808 = vunpack.c.l.s8.bf16 %v848
          %v1809 = vunpack.c.l.s8.bf16 %v849
          %v1810 = vunpack.c.l.s8.bf16 %v850
          %v1811 = vunpack.c.l.s8.bf16 %v851
          %v1812 = vunpack.c.l.s8.bf16 %v852
          %v1813 = vunpack.c.l.s8.bf16 %v853
          %v1814 = vunpack.c.l.s8.bf16 %v854
          %v1815 = vunpack.c.l.s8.bf16 %v855
          %v1816 = vunpack.c.l.s8.bf16 %v856
          %v1817 = vunpack.c.l.s8.bf16 %v857
          %v1818 = vunpack.c.l.s8.bf16 %v858
          %v1819 = vunpack.c.l.s8.bf16 %v859
          %v1820 = vunpack.c.l.s8.bf16 %v860
          %v1821 = vunpack.c.l.s8.bf16 %v861
          %v1822 = vunpack.c.h.s8.bf16 %v798
          %v1823 = vunpack.c.h.s8.bf16 %v799
          %v1824 = vunpack.c.h.s8.bf16 %v800
          %v1825 = vunpack.c.h.s8.bf16 %v801
          %v1826 = vunpack.c.h.s8.bf16 %v802
          %v1827 = vunpack.c.h.s8.bf16 %v803
          %v1828 = vunpack.c.h.s8.bf16 %v804
          %v1829 = vunpack.c.h.s8.bf16 %v805
          %v1830 = vunpack.c.h.s8.bf16 %v806
          %v1831 = vunpack.c.h.s8.bf16 %v807
          %v1832 = vunpack.c.h.s8.bf16 %v808
          %v1833 = vunpack.c.h.s8.bf16 %v809
          %v1834 = vunpack.c.h.s8.bf16 %v810
          %v1835 = vunpack.c.h.s8.bf16 %v811
          %v1836 = vunpack.c.h.s8.bf16 %v812
          %v1837 = vunpack.c.h.s8.bf16 %v813
          %v1838 = vunpack.c.h.s8.bf16 %v814
          %v1839 = vunpack.c.h.s8.bf16 %v815
          %v1840 = vunpack.c.h.s8.bf16 %v816
          %v1841 = vunpack.c.h.s8.bf16 %v817
          %v1842 = vunpack.c.h.s8.bf16 %v818
          %v1843 = vunpack.c.h.s8.bf16 %v819
          %v1844 = vunpack.c.h.s8.bf16 %v820
          %v1845 = vunpack.c.h.s8.bf16 %v821
          %v1846 = vunpack.c.h.s8.bf16 %v822
          %v1847 = vunpack.c.h.s8.bf16 %v823
          %v1848 = vunpack.c.h.s8.bf16 %v824
          %v1849 = vunpack.c.h.s8.bf16 %v825
          %v1850 = vunpack.c.h.s8.bf16 %v826
          %v1851 = vunpack.c.h.s8.bf16 %v827
          %v1852 = vunpack.c.h.s8.bf16 %v828
          %v1853 = vunpack.c.h.s8.bf16 %v829
          %v1854 = vunpack.c.h.s8.bf16 %v830
          %v1855 = vunpack.c.h.s8.bf16 %v831
          %v1856 = vunpack.c.h.s8.bf16 %v832
          %v1857 = vunpack.c.h.s8.bf16 %v833
          %v1858 = vunpack.c.h.s8.bf16 %v834
          %v1859 = vunpack.c.h.s8.bf16 %v835
          %v1860 = vunpack.c.h.s8.bf16 %v836
          %v1861 = vunpack.c.h.s8.bf16 %v837
          %v1862 = vunpack.c.h.s8.bf16 %v838
          %v1863 = vunpack.c.h.s8.bf16 %v839
          %v1864 = vunpack.c.h.s8.bf16 %v840
          %v1865 = vunpack.c.h.s8.bf16 %v841
          %v1866 = vunpack.c.h.s8.bf16 %v842
          %v1867 = vunpack.c.h.s8.bf16 %v843
          %v1868 = vunpack.c.h.s8.bf16 %v844
          %v1869 = vunpack.c.h.s8.bf16 %v845
          %v1870 = vunpack.c.h.s8.bf16 %v846
          %v1871 = vunpack.c.h.s8.bf16 %v847
          %v1872 = vunpack.c.h.s8.bf16 %v848
          %v1873 = vunpack.c.h.s8.bf16 %v849
          %v1874 = vunpack.c.h.s8.bf16 %v850
          %v1875 = vunpack.c.h.s8.bf16 %v851
          %v1876 = vunpack.c.h.s8.bf16 %v852
          %v1877 = vunpack.c.h.s8.bf16 %v853
          %v1878 = vunpack.c.h.s8.bf16 %v854
          %v1879 = vunpack.c.h.s8.bf16 %v855
          %v1880 = vunpack.c.h.s8.bf16 %v856
          %v1881 = vunpack.c.h.s8.bf16 %v857
          %v1882 = vunpack.c.h.s8.bf16 %v858
          %v1883 = vunpack.c.h.s8.bf16 %v859
          %v1884 = vunpack.c.h.s8.bf16 %v860
          %v1885 = vunpack.c.h.s8.bf16 %v861
          %s1886 = smul.u32 %s278, 2
          %s1887 = smul.addr %s1886, 4
          %s1888 = scalar_lea.vmem %s0, %s1887
          %v1889 = vld [vmem:[%s1888] sm:$0xff]
          %v1891 = vunpack.c.l.b16 %v1889
          %v1892 = vunpack.c.h.b16 %v1889
          %v1893 = vpack.c.b16 %v1891, %v1891
          %v1894 = vpack.c.b16 %v1892, %v1892
          %1897 = vmatprep.subr.bf16.mxu0 %v863
          %1898 = vmatpush1.bf16.msra.mxu0 %v862
          %1899 = vmatprep.subr.bf16.mxu0 %v927
          %1900 = vmatpush1.bf16.msra.mxu0 %v926
          %1901 = vmatprep.subr.bf16.mxu0 %v991
          %1902 = vmatpush1.bf16.msra.mxu0 %v990
          %1903 = vmatprep.subr.bf16.mxu0 %v1055
          %1904 = vmatpush1.bf16.msra.mxu0 %v1054
          %1905 = vmatprep.subr.bf16.mxu0 %v1119
          %1906 = vmatpush1.bf16.msra.mxu0 %v1118
          %1907 = vmatprep.subr.bf16.mxu0 %v1183
          %1908 = vmatpush1.bf16.msra.mxu0 %v1182
          %1909 = vmatprep.subr.bf16.mxu0 %v1247
          %1910 = vmatpush1.bf16.msra.mxu0 %v1246
          %1911 = vmatprep.subr.bf16.mxu0 %v1311
          %1912 = vmatpush1.bf16.msra.mxu0 %v1310
          %1913 = vmatprep.subr.bf16.mxu0 %v1375
          %1914 = vmatpush1.bf16.msra.mxu0 %v1374
          %1915 = vmatprep.subr.bf16.mxu0 %v1439
          %1916 = vmatpush1.bf16.msra.mxu0 %v1438
          %1917 = vmatprep.subr.bf16.mxu0 %v1503
          %1918 = vmatpush1.bf16.msra.mxu0 %v1502
          %1919 = vmatprep.subr.bf16.mxu0 %v1567
          %1920 = vmatpush1.bf16.msra.mxu0 %v1566
          %1921 = vmatprep.subr.bf16.mxu0 %v1631
          %1922 = vmatpush1.bf16.msra.mxu0 %v1630
          %1923 = vmatprep.subr.bf16.mxu0 %v1695
          %1924 = vmatpush1.bf16.msra.mxu0 %v1694
          %1925 = vmatprep.subr.bf16.mxu0 %v1759
          %1926 = vmatpush1.bf16.msra.mxu0 %v1758
          %1927 = vmatprep.subr.bf16.mxu0 %v1823
          %1928 = vmatpush1.bf16.msra.mxu0 %v1822
          %1929 = vmatprep.mubr.bf16.mxu0 %v1894
          %1930 = vmatmul.mubr.bf16.gmra.mrb[0].mxu0 %v1893
          %v1931 = vpop.f32.mrb[0].mxu0
          %v1932 = vadd.f32 0.0, %v1931
          %v1933 = vpop.f32.mrb[0].mxu0
          %v1934 = vadd.f32 0.0, %v1933
          %v1935 = vpop.f32.mrb[0].mxu0
          %v1936 = vpop.f32.mrb[0].mxu0
          %1937 = vdwg.mxu0
          %1938 = vmatprep.subr.bf16.mxu0 %v865
          %1939 = vmatpush1.bf16.msra.mxu0 %v864
          %1940 = vmatprep.subr.bf16.mxu0 %v929
          %1941 = vmatpush1.bf16.msra.mxu0 %v928
          %1942 = vmatprep.subr.bf16.mxu0 %v993
          %1943 = vmatpush1.bf16.msra.mxu0 %v992
          %1944 = vmatprep.subr.bf16.mxu0 %v1057
          %1945 = vmatpush1.bf16.msra.mxu0 %v1056
          %1946 = vmatprep.subr.bf16.mxu0 %v1121
          %1947 = vmatpush1.bf16.msra.mxu0 %v1120
          %1948 = vmatprep.subr.bf16.mxu0 %v1185
          %1949 = vmatpush1.bf16.msra.mxu0 %v1184
          %1950 = vmatprep.subr.bf16.mxu0 %v1249
          %1951 = vmatpush1.bf16.msra.mxu0 %v1248
          %1952 = vmatprep.subr.bf16.mxu0 %v1313
          %1953 = vmatpush1.bf16.msra.mxu0 %v1312
          %1954 = vmatprep.subr.bf16.mxu0 %v1377
          %1955 = vmatpush1.bf16.msra.mxu0 %v1376
          %1956 = vmatprep.subr.bf16.mxu0 %v1441
          %1957 = vmatpush1.bf16.msra.mxu0 %v1440
          %1958 = vmatprep.subr.bf16.mxu0 %v1505
          %1959 = vmatpush1.bf16.msra.mxu0 %v1504
          %1960 = vmatprep.subr.bf16.mxu0 %v1569
          %1961 = vmatpush1.bf16.msra.mxu0 %v1568
          %1962 = vmatprep.subr.bf16.mxu0 %v1633
          %1963 = vmatpush1.bf16.msra.mxu0 %v1632
          %1964 = vmatprep.subr.bf16.mxu0 %v1697
          %1965 = vmatpush1.bf16.msra.mxu0 %v1696
          %1966 = vmatprep.subr.bf16.mxu0 %v1761
          %1967 = vmatpush1.bf16.msra.mxu0 %v1760
          %1968 = vmatprep.subr.bf16.mxu0 %v1825
          %1969 = vmatpush1.bf16.msra.mxu0 %v1824
          %1970 = vmatprep.mubr.bf16.mxu0 %v1894
          %1971 = vmatmul.mubr.bf16.gmra.mrb[0].mxu0 %v1893
          %v1972 = vpop.f32.mrb[0].mxu0
          %v1973 = vadd.f32 0.0, %v1972
          %v1974 = vpop.f32.mrb[0].mxu0
          %v1975 = vadd.f32 0.0, %v1974
          %v1976 = vpop.f32.mrb[0].mxu0
          %v1977 = vpop.f32.mrb[0].mxu0
          %1978 = vdwg.mxu0
          %1979 = vmatprep.subr.bf16.mxu0 %v867
          %1980 = vmatpush1.bf16.msra.mxu0 %v866
          %1981 = vmatprep.subr.bf16.mxu0 %v931
          %1982 = vmatpush1.bf16.msra.mxu0 %v930
          %1983 = vmatprep.subr.bf16.mxu0 %v995
          %1984 = vmatpush1.bf16.msra.mxu0 %v994
          %1985 = vmatprep.subr.bf16.mxu0 %v1059
          %1986 = vmatpush1.bf16.msra.mxu0 %v1058
          %1987 = vmatprep.subr.bf16.mxu0 %v1123
          %1988 = vmatpush1.bf16.msra.mxu0 %v1122
          %1989 = vmatprep.subr.bf16.mxu0 %v1187
          %1990 = vmatpush1.bf16.msra.mxu0 %v1186
          %1991 = vmatprep.subr.bf16.mxu0 %v1251
          %1992 = vmatpush1.bf16.msra.mxu0 %v1250
          %1993 = vmatprep.subr.bf16.mxu0 %v1315
          %1994 = vmatpush1.bf16.msra.mxu0 %v1314
          %1995 = vmatprep.subr.bf16.mxu0 %v1379
          %1996 = vmatpush1.bf16.msra.mxu0 %v1378
          %1997 = vmatprep.subr.bf16.mxu0 %v1443
          %1998 = vmatpush1.bf16.msra.mxu0 %v1442
          %1999 = vmatprep.subr.bf16.mxu0 %v1507
          %2000 = vmatpush1.bf16.msra.mxu0 %v1506
          %2001 = vmatprep.subr.bf16.mxu0 %v1571
          %2002 = vmatpush1.bf16.msra.mxu0 %v1570
          %2003 = vmatprep.subr.bf16.mxu0 %v1635
          %2004 = vmatpush1.bf16.msra.mxu0 %v1634
          %2005 = vmatprep.subr.bf16.mxu0 %v1699
          %2006 = vmatpush1.bf16.msra.mxu0 %v1698
          %2007 = vmatprep.subr.bf16.mxu0 %v1763
          %2008 = vmatpush1.bf16.msra.mxu0 %v1762
          %2009 = vmatprep.subr.bf16.mxu0 %v1827
          %2010 = vmatpush1.bf16.msra.mxu0 %v1826
          %2011 = vmatprep.mubr.bf16.mxu0 %v1894
          %2012 = vmatmul.mubr.bf16.gmra.mrb[0].mxu0 %v1893
          %v2013 = vpop.f32.mrb[0].mxu0
          %v2014 = vadd.f32 0.0, %v2013
          %v2015 = vpop.f32.mrb[0].mxu0
          %v2016 = vadd.f32 0.0, %v2015
          %v2017 = vpop.f32.mrb[0].mxu0
          %v2018 = vpop.f32.mrb[0].mxu0
          %2019 = vdwg.mxu0
          %2020 = vmatprep.subr.bf16.mxu0 %v869
          %2021 = vmatpush1.bf16.msra.mxu0 %v868
          %2022 = vmatprep.subr.bf16.mxu0 %v933
          %2023 = vmatpush1.bf16.msra.mxu0 %v932
          %2024 = vmatprep.subr.bf16.mxu0 %v997
          %2025 = vmatpush1.bf16.msra.mxu0 %v996
          %2026 = vmatprep.subr.bf16.mxu0 %v1061
          %2027 = vmatpush1.bf16.msra.mxu0 %v1060
          %2028 = vmatprep.subr.bf16.mxu0 %v1125
          %2029 = vmatpush1.bf16.msra.mxu0 %v1124
          %2030 = vmatprep.subr.bf16.mxu0 %v1189
          %2031 = vmatpush1.bf16.msra.mxu0 %v1188
          %2032 = vmatprep.subr.bf16.mxu0 %v1253
          %2033 = vmatpush1.bf16.msra.mxu0 %v1252
          %2034 = vmatprep.subr.bf16.mxu0 %v1317
          %2035 = vmatpush1.bf16.msra.mxu0 %v1316
          %2036 = vmatprep.subr.bf16.mxu0 %v1381
          %2037 = vmatpush1.bf16.msra.mxu0 %v1380
          %2038 = vmatprep.subr.bf16.mxu0 %v1445
          %2039 = vmatpush1.bf16.msra.mxu0 %v1444
          %2040 = vmatprep.subr.bf16.mxu0 %v1509
          %2041 = vmatpush1.bf16.msra.mxu0 %v1508
          %2042 = vmatprep.subr.bf16.mxu0 %v1573
          %2043 = vmatpush1.bf16.msra.mxu0 %v1572
          %2044 = vmatprep.subr.bf16.mxu0 %v1637
          %2045 = vmatpush1.bf16.msra.mxu0 %v1636
          %2046 = vmatprep.subr.bf16.mxu0 %v1701
          %2047 = vmatpush1.bf16.msra.mxu0 %v1700
          %2048 = vmatprep.subr.bf16.mxu0 %v1765
          %2049 = vmatpush1.bf16.msra.mxu0 %v1764
          %2050 = vmatprep.subr.bf16.mxu0 %v1829
          %2051 = vmatpush1.bf16.msra.mxu0 %v1828
          %2052 = vmatprep.mubr.bf16.mxu0 %v1894
          %2053 = vmatmul.mubr.bf16.gmra.mrb[0].mxu0 %v1893
          %v2054 = vpop.f32.mrb[0].mxu0
          %v2055 = vadd.f32 0.0, %v2054
          %v2056 = vpop.f32.mrb[0].mxu0
          %v2057 = vadd.f32 0.0, %v2056
          %v2058 = vpop.f32.mrb[0].mxu0
          %v2059 = vpop.f32.mrb[0].mxu0
          %2060 = vdwg.mxu0
          %2061 = vmatprep.subr.bf16.mxu0 %v871
          %2062 = vmatpush1.bf16.msra.mxu0 %v870
          %2063 = vmatprep.subr.bf16.mxu0 %v935
          %2064 = vmatpush1.bf16.msra.mxu0 %v934
          %2065 = vmatprep.subr.bf16.mxu0 %v999
          %2066 = vmatpush1.bf16.msra.mxu0 %v998
          %2067 = vmatprep.subr.bf16.mxu0 %v1063
          %2068 = vmatpush1.bf16.msra.mxu0 %v1062
          %2069 = vmatprep.subr.bf16.mxu0 %v1127
          %2070 = vmatpush1.bf16.msra.mxu0 %v1126
          %2071 = vmatprep.subr.bf16.mxu0 %v1191
          %2072 = vmatpush1.bf16.msra.mxu0 %v1190
          %2073 = vmatprep.subr.bf16.mxu0 %v1255
          %2074 = vmatpush1.bf16.msra.mxu0 %v1254
          %2075 = vmatprep.subr.bf16.mxu0 %v1319
          %2076 = vmatpush1.bf16.msra.mxu0 %v1318
          %2077 = vmatprep.subr.bf16.mxu0 %v1383
          %2078 = vmatpush1.bf16.msra.mxu0 %v1382
          %2079 = vmatprep.subr.bf16.mxu0 %v1447
          %2080 = vmatpush1.bf16.msra.mxu0 %v1446
          %2081 = vmatprep.subr.bf16.mxu0 %v1511
          %2082 = vmatpush1.bf16.msra.mxu0 %v1510
          %2083 = vmatprep.subr.bf16.mxu0 %v1575
          %2084 = vmatpush1.bf16.msra.mxu0 %v1574
          %2085 = vmatprep.subr.bf16.mxu0 %v1639
          %2086 = vmatpush1.bf16.msra.mxu0 %v1638
          %2087 = vmatprep.subr.bf16.mxu0 %v1703
          %2088 = vmatpush1.bf16.msra.mxu0 %v1702
          %2089 = vmatprep.subr.bf16.mxu0 %v1767
          %2090 = vmatpush1.bf16.msra.mxu0 %v1766
          %2091 = vmatprep.subr.bf16.mxu0 %v1831
          %2092 = vmatpush1.bf16.msra.mxu0 %v1830
          %2093 = vmatprep.mubr.bf16.mxu0 %v1894
          %2094 = vmatmul.mubr.bf16.gmra.mrb[0].mxu0 %v1893
          %v2095 = vpop.f32.mrb[0].mxu0
          %v2096 = vadd.f32 0.0, %v2095
          %v2097 = vpop.f32.mrb[0].mxu0
          %v2098 = vadd.f32 0.0, %v2097
          %v2099 = vpop.f32.mrb[0].mxu0
          %v2100 = vpop.f32.mrb[0].mxu0
          %2101 = vdwg.mxu0
          %2102 = vmatprep.subr.bf16.mxu0 %v873
          %2103 = vmatpush1.bf16.msra.mxu0 %v872
          %2104 = vmatprep.subr.bf16.mxu0 %v937
          %2105 = vmatpush1.bf16.msra.mxu0 %v936
          %2106 = vmatprep.subr.bf16.mxu0 %v1001
          %2107 = vmatpush1.bf16.msra.mxu0 %v1000
          %2108 = vmatprep.subr.bf16.mxu0 %v1065
          %2109 = vmatpush1.bf16.msra.mxu0 %v1064
          %2110 = vmatprep.subr.bf16.mxu0 %v1129
          %2111 = vmatpush1.bf16.msra.mxu0 %v1128
          %2112 = vmatprep.subr.bf16.mxu0 %v1193
          %2113 = vmatpush1.bf16.msra.mxu0 %v1192
          %2114 = vmatprep.subr.bf16.mxu0 %v1257
          %2115 = vmatpush1.bf16.msra.mxu0 %v1256
          %2116 = vmatprep.subr.bf16.mxu0 %v1321
          %2117 = vmatpush1.bf16.msra.mxu0 %v1320
          %2118 = vmatprep.subr.bf16.mxu0 %v1385
          %2119 = vmatpush1.bf16.msra.mxu0 %v1384
          %2120 = vmatprep.subr.bf16.mxu0 %v1449
          %2121 = vmatpush1.bf16.msra.mxu0 %v1448
          %2122 = vmatprep.subr.bf16.mxu0 %v1513
          %2123 = vmatpush1.bf16.msra.mxu0 %v1512
          %2124 = vmatprep.subr.bf16.mxu0 %v1577
          %2125 = vmatpush1.bf16.msra.mxu0 %v1576
          %2126 = vmatprep.subr.bf16.mxu0 %v1641
          %2127 = vmatpush1.bf16.msra.mxu0 %v1640
          %2128 = vmatprep.subr.bf16.mxu0 %v1705
          %2129 = vmatpush1.bf16.msra.mxu0 %v1704
          %2130 = vmatprep.subr.bf16.mxu0 %v1769
          %2131 = vmatpush1.bf16.msra.mxu0 %v1768
          %2132 = vmatprep.subr.bf16.mxu0 %v1833
          %2133 = vmatpush1.bf16.msra.mxu0 %v1832
          %2134 = vmatprep.mubr.bf16.mxu0 %v1894
          %2135 = vmatmul.mubr.bf16.gmra.mrb[0].mxu0 %v1893
          %v2136 = vpop.f32.mrb[0].mxu0
          %v2137 = vadd.f32 0.0, %v2136
          %v2138 = vpop.f32.mrb[0].mxu0
          %v2139 = vadd.f32 0.0, %v2138
          %v2140 = vpop.f32.mrb[0].mxu0
          %v2141 = vpop.f32.mrb[0].mxu0
          %2142 = vdwg.mxu0
          %2143 = vmatprep.subr.bf16.mxu0 %v875
          %2144 = vmatpush1.bf16.msra.mxu0 %v874
          %2145 = vmatprep.subr.bf16.mxu0 %v939
          %2146 = vmatpush1.bf16.msra.mxu0 %v938
          %2147 = vmatprep.subr.bf16.mxu0 %v1003
          %2148 = vmatpush1.bf16.msra.mxu0 %v1002
          %2149 = vmatprep.subr.bf16.mxu0 %v1067
          %2150 = vmatpush1.bf16.msra.mxu0 %v1066
          %2151 = vmatprep.subr.bf16.mxu0 %v1131
          %2152 = vmatpush1.bf16.msra.mxu0 %v1130
          %2153 = vmatprep.subr.bf16.mxu0 %v1195
          %2154 = vmatpush1.bf16.msra.mxu0 %v1194
          %2155 = vmatprep.subr.bf16.mxu0 %v1259
          %2156 = vmatpush1.bf16.msra.mxu0 %v1258
          %2157 = vmatprep.subr.bf16.mxu0 %v1323
          %2158 = vmatpush1.bf16.msra.mxu0 %v1322
          %2159 = vmatprep.subr.bf16.mxu0 %v1387
          %2160 = vmatpush1.bf16.msra.mxu0 %v1386
          %2161 = vmatprep.subr.bf16.mxu0 %v1451
          %2162 = vmatpush1.bf16.msra.mxu0 %v1450
          %2163 = vmatprep.subr.bf16.mxu0 %v1515
          %2164 = vmatpush1.bf16.msra.mxu0 %v1514
          %2165 = vmatprep.subr.bf16.mxu0 %v1579
          %2166 = vmatpush1.bf16.msra.mxu0 %v1578
          %2167 = vmatprep.subr.bf16.mxu0 %v1643
          %2168 = vmatpush1.bf16.msra.mxu0 %v1642
          %2169 = vmatprep.subr.bf16.mxu0 %v1707
          %2170 = vmatpush1.bf16.msra.mxu0 %v1706
          %2171 = vmatprep.subr.bf16.mxu0 %v1771
          %2172 = vmatpush1.bf16.msra.mxu0 %v1770
          %2173 = vmatprep.subr.bf16.mxu0 %v1835
          %2174 = vmatpush1.bf16.msra.mxu0 %v1834
          %2175 = vmatprep.mubr.bf16.mxu0 %v1894
          %2176 = vmatmul.mubr.bf16.gmra.mrb[0].mxu0 %v1893
          %v2177 = vpop.f32.mrb[0].mxu0
          %v2178 = vadd.f32 0.0, %v2177
          %v2179 = vpop.f32.mrb[0].mxu0
          %v2180 = vadd.f32 0.0, %v2179
          %v2181 = vpop.f32.mrb[0].mxu0
          %v2182 = vpop.f32.mrb[0].mxu0
          %2183 = vdwg.mxu0
          %2184 = vmatprep.subr.bf16.mxu0 %v877
          %2185 = vmatpush1.bf16.msra.mxu0 %v876
          %2186 = vmatprep.subr.bf16.mxu0 %v941
          %2187 = vmatpush1.bf16.msra.mxu0 %v940
          %2188 = vmatprep.subr.bf16.mxu0 %v1005
          %2189 = vmatpush1.bf16.msra.mxu0 %v1004
          %2190 = vmatprep.subr.bf16.mxu0 %v1069
          %2191 = vmatpush1.bf16.msra.mxu0 %v1068
          %2192 = vmatprep.subr.bf16.mxu0 %v1133
          %2193 = vmatpush1.bf16.msra.mxu0 %v1132
          %2194 = vmatprep.subr.bf16.mxu0 %v1197
          %2195 = vmatpush1.bf16.msra.mxu0 %v1196
          %2196 = vmatprep.subr.bf16.mxu0 %v1261
          %2197 = vmatpush1.bf16.msra.mxu0 %v1260
          %2198 = vmatprep.subr.bf16.mxu0 %v1325
          %2199 = vmatpush1.bf16.msra.mxu0 %v1324
          %2200 = vmatprep.subr.bf16.mxu0 %v1389
          %2201 = vmatpush1.bf16.msra.mxu0 %v1388
          %2202 = vmatprep.subr.bf16.mxu0 %v1453
          %2203 = vmatpush1.bf16.msra.mxu0 %v1452
          %2204 = vmatprep.subr.bf16.mxu0 %v1517
          %2205 = vmatpush1.bf16.msra.mxu0 %v1516
          %2206 = vmatprep.subr.bf16.mxu0 %v1581
          %2207 = vmatpush1.bf16.msra.mxu0 %v1580
          %2208 = vmatprep.subr.bf16.mxu0 %v1645
          %2209 = vmatpush1.bf16.msra.mxu0 %v1644
          %2210 = vmatprep.subr.bf16.mxu0 %v1709
          %2211 = vmatpush1.bf16.msra.mxu0 %v1708
          %2212 = vmatprep.subr.bf16.mxu0 %v1773
          %2213 = vmatpush1.bf16.msra.mxu0 %v1772
          %2214 = vmatprep.subr.bf16.mxu0 %v1837
          %2215 = vmatpush1.bf16.msra.mxu0 %v1836
          %2216 = vmatprep.mubr.bf16.mxu0 %v1894
          %2217 = vmatmul.mubr.bf16.gmra.mrb[0].mxu0 %v1893
          %v2218 = vpop.f32.mrb[0].mxu0
          %v2219 = vadd.f32 0.0, %v2218
          %v2220 = vpop.f32.mrb[0].mxu0
          %v2221 = vadd.f32 0.0, %v2220
          %v2222 = vpop.f32.mrb[0].mxu0
          %v2223 = vpop.f32.mrb[0].mxu0
          %2224 = vdwg.mxu0
          %2225 = vmatprep.subr.bf16.mxu0 %v879
          %2226 = vmatpush1.bf16.msra.mxu0 %v878
          %2227 = vmatprep.subr.bf16.mxu0 %v943
          %2228 = vmatpush1.bf16.msra.mxu0 %v942
          %2229 = vmatprep.subr.bf16.mxu0 %v1007
          %2230 = vmatpush1.bf16.msra.mxu0 %v1006
          %2231 = vmatprep.subr.bf16.mxu0 %v1071
          %2232 = vmatpush1.bf16.msra.mxu0 %v1070
          %2233 = vmatprep.subr.bf16.mxu0 %v1135
          %2234 = vmatpush1.bf16.msra.mxu0 %v1134
          %2235 = vmatprep.subr.bf16.mxu0 %v1199
          %2236 = vmatpush1.bf16.msra.mxu0 %v1198
          %2237 = vmatprep.subr.bf16.mxu0 %v1263
          %2238 = vmatpush1.bf16.msra.mxu0 %v1262
          %2239 = vmatprep.subr.bf16.mxu0 %v1327
          %2240 = vmatpush1.bf16.msra.mxu0 %v1326
          %2241 = vmatprep.subr.bf16.mxu0 %v1391
          %2242 = vmatpush1.bf16.msra.mxu0 %v1390
          %2243 = vmatprep.subr.bf16.mxu0 %v1455
          %2244 = vmatpush1.bf16.msra.mxu0 %v1454
          %2245 = vmatprep.subr.bf16.mxu0 %v1519
          %2246 = vmatpush1.bf16.msra.mxu0 %v1518
          %2247 = vmatprep.subr.bf16.mxu0 %v1583
          %2248 = vmatpush1.bf16.msra.mxu0 %v1582
          %2249 = vmatprep.subr.bf16.mxu0 %v1647
          %2250 = vmatpush1.bf16.msra.mxu0 %v1646
          %2251 = vmatprep.subr.bf16.mxu0 %v1711
          %2252 = vmatpush1.bf16.msra.mxu0 %v1710
          %2253 = vmatprep.subr.bf16.mxu0 %v1775
          %2254 = vmatpush1.bf16.msra.mxu0 %v1774
          %2255 = vmatprep.subr.bf16.mxu0 %v1839
          %2256 = vmatpush1.bf16.msra.mxu0 %v1838
          %2257 = vmatprep.mubr.bf16.mxu0 %v1894
          %2258 = vmatmul.mubr.bf16.gmra.mrb[0].mxu0 %v1893
          %v2259 = vpop.f32.mrb[0].mxu0
          %v2260 = vadd.f32 0.0, %v2259
          %v2261 = vpop.f32.mrb[0].mxu0
          %v2262 = vadd.f32 0.0, %v2261
          %v2263 = vpop.f32.mrb[0].mxu0
          %v2264 = vpop.f32.mrb[0].mxu0
          %2265 = vdwg.mxu0
          %2266 = vmatprep.subr.bf16.mxu0 %v881
          %2267 = vmatpush1.bf16.msra.mxu0 %v880
          %2268 = vmatprep.subr.bf16.mxu0 %v945
          %2269 = vmatpush1.bf16.msra.mxu0 %v944
          %2270 = vmatprep.subr.bf16.mxu0 %v1009
          %2271 = vmatpush1.bf16.msra.mxu0 %v1008
          %2272 = vmatprep.subr.bf16.mxu0 %v1073
          %2273 = vmatpush1.bf16.msra.mxu0 %v1072
          %2274 = vmatprep.subr.bf16.mxu0 %v1137
          %2275 = vmatpush1.bf16.msra.mxu0 %v1136
          %2276 = vmatprep.subr.bf16.mxu0 %v1201
          %2277 = vmatpush1.bf16.msra.mxu0 %v1200
          %2278 = vmatprep.subr.bf16.mxu0 %v1265
          %2279 = vmatpush1.bf16.msra.mxu0 %v1264
          %2280 = vmatprep.subr.bf16.mxu0 %v1329
          %2281 = vmatpush1.bf16.msra.mxu0 %v1328
          %2282 = vmatprep.subr.bf16.mxu0 %v1393
          %2283 = vmatpush1.bf16.msra.mxu0 %v1392
          %2284 = vmatprep.subr.bf16.mxu0 %v1457
          %2285 = vmatpush1.bf16.msra.mxu0 %v1456
          %2286 = vmatprep.subr.bf16.mxu0 %v1521
          %2287 = vmatpush1.bf16.msra.mxu0 %v1520
          %2288 = vmatprep.subr.bf16.mxu0 %v1585
          %2289 = vmatpush1.bf16.msra.mxu0 %v1584
          %2290 = vmatprep.subr.bf16.mxu0 %v1649
          %2291 = vmatpush1.bf16.msra.mxu0 %v1648
          %2292 = vmatprep.subr.bf16.mxu0 %v1713
          %2293 = vmatpush1.bf16.msra.mxu0 %v1712
          %2294 = vmatprep.subr.bf16.mxu0 %v1777
          %2295 = vmatpush1.bf16.msra.mxu0 %v1776
          %2296 = vmatprep.subr.bf16.mxu0 %v1841
          %2297 = vmatpush1.bf16.msra.mxu0 %v1840
          %2298 = vmatprep.mubr.bf16.mxu0 %v1894
          %2299 = vmatmul.mubr.bf16.gmra.mrb[0].mxu0 %v1893
          %v2300 = vpop.f32.mrb[0].mxu0
          %v2301 = vadd.f32 0.0, %v2300
          %v2302 = vpop.f32.mrb[0].mxu0
          %v2303 = vadd.f32 0.0, %v2302
          %v2304 = vpop.f32.mrb[0].mxu0
          %v2305 = vpop.f32.mrb[0].mxu0
          %2306 = vdwg.mxu0
          %2307 = vmatprep.subr.bf16.mxu0 %v883
          %2308 = vmatpush1.bf16.msra.mxu0 %v882
          %2309 = vmatprep.subr.bf16.mxu0 %v947
          %2310 = vmatpush1.bf16.msra.mxu0 %v946
          %2311 = vmatprep.subr.bf16.mxu0 %v1011
          %2312 = vmatpush1.bf16.msra.mxu0 %v1010
          %2313 = vmatprep.subr.bf16.mxu0 %v1075
          %2314 = vmatpush1.bf16.msra.mxu0 %v1074
          %2315 = vmatprep.subr.bf16.mxu0 %v1139
          %2316 = vmatpush1.bf16.msra.mxu0 %v1138
          %2317 = vmatprep.subr.bf16.mxu0 %v1203
          %2318 = vmatpush1.bf16.msra.mxu0 %v1202
          %2319 = vmatprep.subr.bf16.mxu0 %v1267
          %2320 = vmatpush1.bf16.msra.mxu0 %v1266
          %2321 = vmatprep.subr.bf16.mxu0 %v1331
          %2322 = vmatpush1.bf16.msra.mxu0 %v1330
          %2323 = vmatprep.subr.bf16.mxu0 %v1395
          %2324 = vmatpush1.bf16.msra.mxu0 %v1394
          %2325 = vmatprep.subr.bf16.mxu0 %v1459
          %2326 = vmatpush1.bf16.msra.mxu0 %v1458
          %2327 = vmatprep.subr.bf16.mxu0 %v1523
          %2328 = vmatpush1.bf16.msra.mxu0 %v1522
          %2329 = vmatprep.subr.bf16.mxu0 %v1587
          %2330 = vmatpush1.bf16.msra.mxu0 %v1586
          %2331 = vmatprep.subr.bf16.mxu0 %v1651
          %2332 = vmatpush1.bf16.msra.mxu0 %v1650
          %2333 = vmatprep.subr.bf16.mxu0 %v1715
          %2334 = vmatpush1.bf16.msra.mxu0 %v1714
          %2335 = vmatprep.subr.bf16.mxu0 %v1779
          %2336 = vmatpush1.bf16.msra.mxu0 %v1778
          %2337 = vmatprep.subr.bf16.mxu0 %v1843
          %2338 = vmatpush1.bf16.msra.mxu0 %v1842
          %2339 = vmatprep.mubr.bf16.mxu0 %v1894
          %2340 = vmatmul.mubr.bf16.gmra.mrb[0].mxu0 %v1893
          %v2341 = vpop.f32.mrb[0].mxu0
          %v2342 = vadd.f32 0.0, %v2341
          %v2343 = vpop.f32.mrb[0].mxu0
          %v2344 = vadd.f32 0.0, %v2343
          %v2345 = vpop.f32.mrb[0].mxu0
          %v2346 = vpop.f32.mrb[0].mxu0
          %2347 = vdwg.mxu0
          %2348 = vmatprep.subr.bf16.mxu0 %v885
          %2349 = vmatpush1.bf16.msra.mxu0 %v884
          %2350 = vmatprep.subr.bf16.mxu0 %v949
          %2351 = vmatpush1.bf16.msra.mxu0 %v948
          %2352 = vmatprep.subr.bf16.mxu0 %v1013
          %2353 = vmatpush1.bf16.msra.mxu0 %v1012
          %2354 = vmatprep.subr.bf16.mxu0 %v1077
          %2355 = vmatpush1.bf16.msra.mxu0 %v1076
          %2356 = vmatprep.subr.bf16.mxu0 %v1141
          %2357 = vmatpush1.bf16.msra.mxu0 %v1140
          %2358 = vmatprep.subr.bf16.mxu0 %v1205
          %2359 = vmatpush1.bf16.msra.mxu0 %v1204
          %2360 = vmatprep.subr.bf16.mxu0 %v1269
          %2361 = vmatpush1.bf16.msra.mxu0 %v1268
          %2362 = vmatprep.subr.bf16.mxu0 %v1333
          %2363 = vmatpush1.bf16.msra.mxu0 %v1332
          %2364 = vmatprep.subr.bf16.mxu0 %v1397
          %2365 = vmatpush1.bf16.msra.mxu0 %v1396
          %2366 = vmatprep.subr.bf16.mxu0 %v1461
          %2367 = vmatpush1.bf16.msra.mxu0 %v1460
          %2368 = vmatprep.subr.bf16.mxu0 %v1525
          %2369 = vmatpush1.bf16.msra.mxu0 %v1524
          %2370 = vmatprep.subr.bf16.mxu0 %v1589
          %2371 = vmatpush1.bf16.msra.mxu0 %v1588
          %2372 = vmatprep.subr.bf16.mxu0 %v1653
          %2373 = vmatpush1.bf16.msra.mxu0 %v1652
          %2374 = vmatprep.subr.bf16.mxu0 %v1717
          %2375 = vmatpush1.bf16.msra.mxu0 %v1716
          %2376 = vmatprep.subr.bf16.mxu0 %v1781
          %2377 = vmatpush1.bf16.msra.mxu0 %v1780
          %2378 = vmatprep.subr.bf16.mxu0 %v1845
          %2379 = vmatpush1.bf16.msra.mxu0 %v1844
          %2380 = vmatprep.mubr.bf16.mxu0 %v1894
          %2381 = vmatmul.mubr.bf16.gmra.mrb[0].mxu0 %v1893
          %v2382 = vpop.f32.mrb[0].mxu0
          %v2383 = vadd.f32 0.0, %v2382
          %v2384 = vpop.f32.mrb[0].mxu0
          %v2385 = vadd.f32 0.0, %v2384
          %v2386 = vpop.f32.mrb[0].mxu0
          %v2387 = vpop.f32.mrb[0].mxu0
          %2388 = vdwg.mxu0
          %2389 = vmatprep.subr.bf16.mxu0 %v887
          %2390 = vmatpush1.bf16.msra.mxu0 %v886
          %2391 = vmatprep.subr.bf16.mxu0 %v951
          %2392 = vmatpush1.bf16.msra.mxu0 %v950
          %2393 = vmatprep.subr.bf16.mxu0 %v1015
          %2394 = vmatpush1.bf16.msra.mxu0 %v1014
          %2395 = vmatprep.subr.bf16.mxu0 %v1079
          %2396 = vmatpush1.bf16.msra.mxu0 %v1078
          %2397 = vmatprep.subr.bf16.mxu0 %v1143
          %2398 = vmatpush1.bf16.msra.mxu0 %v1142
          %2399 = vmatprep.subr.bf16.mxu0 %v1207
          %2400 = vmatpush1.bf16.msra.mxu0 %v1206
          %2401 = vmatprep.subr.bf16.mxu0 %v1271
          %2402 = vmatpush1.bf16.msra.mxu0 %v1270
          %2403 = vmatprep.subr.bf16.mxu0 %v1335
          %2404 = vmatpush1.bf16.msra.mxu0 %v1334
          %2405 = vmatprep.subr.bf16.mxu0 %v1399
          %2406 = vmatpush1.bf16.msra.mxu0 %v1398
          %2407 = vmatprep.subr.bf16.mxu0 %v1463
          %2408 = vmatpush1.bf16.msra.mxu0 %v1462
          %2409 = vmatprep.subr.bf16.mxu0 %v1527
          %2410 = vmatpush1.bf16.msra.mxu0 %v1526
          %2411 = vmatprep.subr.bf16.mxu0 %v1591
          %2412 = vmatpush1.bf16.msra.mxu0 %v1590
          %2413 = vmatprep.subr.bf16.mxu0 %v1655
          %2414 = vmatpush1.bf16.msra.mxu0 %v1654
          %2415 = vmatprep.subr.bf16.mxu0 %v1719
          %2416 = vmatpush1.bf16.msra.mxu0 %v1718
          %2417 = vmatprep.subr.bf16.mxu0 %v1783
          %2418 = vmatpush1.bf16.msra.mxu0 %v1782
          %2419 = vmatprep.subr.bf16.mxu0 %v1847
          %2420 = vmatpush1.bf16.msra.mxu0 %v1846
          %2421 = vmatprep.mubr.bf16.mxu0 %v1894
          %2422 = vmatmul.mubr.bf16.gmra.mrb[0].mxu0 %v1893
          %v2423 = vpop.f32.mrb[0].mxu0
          %v2424 = vadd.f32 0.0, %v2423
          %v2425 = vpop.f32.mrb[0].mxu0
          %v2426 = vadd.f32 0.0, %v2425
          %v2427 = vpop.f32.mrb[0].mxu0
          %v2428 = vpop.f32.mrb[0].mxu0
          %2429 = vdwg.mxu0
          %2430 = vmatprep.subr.bf16.mxu0 %v889
          %2431 = vmatpush1.bf16.msra.mxu0 %v888
          %2432 = vmatprep.subr.bf16.mxu0 %v953
          %2433 = vmatpush1.bf16.msra.mxu0 %v952
          %2434 = vmatprep.subr.bf16.mxu0 %v1017
          %2435 = vmatpush1.bf16.msra.mxu0 %v1016
          %2436 = vmatprep.subr.bf16.mxu0 %v1081
          %2437 = vmatpush1.bf16.msra.mxu0 %v1080
          %2438 = vmatprep.subr.bf16.mxu0 %v1145
          %2439 = vmatpush1.bf16.msra.mxu0 %v1144
          %2440 = vmatprep.subr.bf16.mxu0 %v1209
          %2441 = vmatpush1.bf16.msra.mxu0 %v1208
          %2442 = vmatprep.subr.bf16.mxu0 %v1273
          %2443 = vmatpush1.bf16.msra.mxu0 %v1272
          %2444 = vmatprep.subr.bf16.mxu0 %v1337
          %2445 = vmatpush1.bf16.msra.mxu0 %v1336
          %2446 = vmatprep.subr.bf16.mxu0 %v1401
          %2447 = vmatpush1.bf16.msra.mxu0 %v1400
          %2448 = vmatprep.subr.bf16.mxu0 %v1465
          %2449 = vmatpush1.bf16.msra.mxu0 %v1464
          %2450 = vmatprep.subr.bf16.mxu0 %v1529
          %2451 = vmatpush1.bf16.msra.mxu0 %v1528
          %2452 = vmatprep.subr.bf16.mxu0 %v1593
          %2453 = vmatpush1.bf16.msra.mxu0 %v1592
          %2454 = vmatprep.subr.bf16.mxu0 %v1657
          %2455 = vmatpush1.bf16.msra.mxu0 %v1656
          %2456 = vmatprep.subr.bf16.mxu0 %v1721
          %2457 = vmatpush1.bf16.msra.mxu0 %v1720
          %2458 = vmatprep.subr.bf16.mxu0 %v1785
          %2459 = vmatpush1.bf16.msra.mxu0 %v1784
          %2460 = vmatprep.subr.bf16.mxu0 %v1849
          %2461 = vmatpush1.bf16.msra.mxu0 %v1848
          %2462 = vmatprep.mubr.bf16.mxu0 %v1894
          %2463 = vmatmul.mubr.bf16.gmra.mrb[0].mxu0 %v1893
          %v2464 = vpop.f32.mrb[0].mxu0
          %v2465 = vadd.f32 0.0, %v2464
          %v2466 = vpop.f32.mrb[0].mxu0
          %v2467 = vadd.f32 0.0, %v2466
          %v2468 = vpop.f32.mrb[0].mxu0
          %v2469 = vpop.f32.mrb[0].mxu0
          %2470 = vdwg.mxu0
          %2471 = vmatprep.subr.bf16.mxu0 %v891
          %2472 = vmatpush1.bf16.msra.mxu0 %v890
          %2473 = vmatprep.subr.bf16.mxu0 %v955
          %2474 = vmatpush1.bf16.msra.mxu0 %v954
          %2475 = vmatprep.subr.bf16.mxu0 %v1019
          %2476 = vmatpush1.bf16.msra.mxu0 %v1018
          %2477 = vmatprep.subr.bf16.mxu0 %v1083
          %2478 = vmatpush1.bf16.msra.mxu0 %v1082
          %2479 = vmatprep.subr.bf16.mxu0 %v1147
          %2480 = vmatpush1.bf16.msra.mxu0 %v1146
          %2481 = vmatprep.subr.bf16.mxu0 %v1211
          %2482 = vmatpush1.bf16.msra.mxu0 %v1210
          %2483 = vmatprep.subr.bf16.mxu0 %v1275
          %2484 = vmatpush1.bf16.msra.mxu0 %v1274
          %2485 = vmatprep.subr.bf16.mxu0 %v1339
          %2486 = vmatpush1.bf16.msra.mxu0 %v1338
          %2487 = vmatprep.subr.bf16.mxu0 %v1403
          %2488 = vmatpush1.bf16.msra.mxu0 %v1402
          %2489 = vmatprep.subr.bf16.mxu0 %v1467
          %2490 = vmatpush1.bf16.msra.mxu0 %v1466
          %2491 = vmatprep.subr.bf16.mxu0 %v1531
          %2492 = vmatpush1.bf16.msra.mxu0 %v1530
          %2493 = vmatprep.subr.bf16.mxu0 %v1595
          %2494 = vmatpush1.bf16.msra.mxu0 %v1594
          %2495 = vmatprep.subr.bf16.mxu0 %v1659
          %2496 = vmatpush1.bf16.msra.mxu0 %v1658
          %2497 = vmatprep.subr.bf16.mxu0 %v1723
          %2498 = vmatpush1.bf16.msra.mxu0 %v1722
          %2499 = vmatprep.subr.bf16.mxu0 %v1787
          %2500 = vmatpush1.bf16.msra.mxu0 %v1786
          %2501 = vmatprep.subr.bf16.mxu0 %v1851
          %2502 = vmatpush1.bf16.msra.mxu0 %v1850
          %2503 = vmatprep.mubr.bf16.mxu0 %v1894
          %2504 = vmatmul.mubr.bf16.gmra.mrb[0].mxu0 %v1893
          %v2505 = vpop.f32.mrb[0].mxu0
          %v2506 = vadd.f32 0.0, %v2505
          %v2507 = vpop.f32.mrb[0].mxu0
          %v2508 = vadd.f32 0.0, %v2507
          %v2509 = vpop.f32.mrb[0].mxu0
          %v2510 = vpop.f32.mrb[0].mxu0
          %2511 = vdwg.mxu0
          %2512 = vmatprep.subr.bf16.mxu0 %v893
          %2513 = vmatpush1.bf16.msra.mxu0 %v892
          %2514 = vmatprep.subr.bf16.mxu0 %v957
          %2515 = vmatpush1.bf16.msra.mxu0 %v956
          %2516 = vmatprep.subr.bf16.mxu0 %v1021
          %2517 = vmatpush1.bf16.msra.mxu0 %v1020
          %2518 = vmatprep.subr.bf16.mxu0 %v1085
          %2519 = vmatpush1.bf16.msra.mxu0 %v1084
          %2520 = vmatprep.subr.bf16.mxu0 %v1149
          %2521 = vmatpush1.bf16.msra.mxu0 %v1148
          %2522 = vmatprep.subr.bf16.mxu0 %v1213
          %2523 = vmatpush1.bf16.msra.mxu0 %v1212
          %2524 = vmatprep.subr.bf16.mxu0 %v1277
          %2525 = vmatpush1.bf16.msra.mxu0 %v1276
          %2526 = vmatprep.subr.bf16.mxu0 %v1341
          %2527 = vmatpush1.bf16.msra.mxu0 %v1340
          %2528 = vmatprep.subr.bf16.mxu0 %v1405
          %2529 = vmatpush1.bf16.msra.mxu0 %v1404
          %2530 = vmatprep.subr.bf16.mxu0 %v1469
          %2531 = vmatpush1.bf16.msra.mxu0 %v1468
          %2532 = vmatprep.subr.bf16.mxu0 %v1533
          %2533 = vmatpush1.bf16.msra.mxu0 %v1532
          %2534 = vmatprep.subr.bf16.mxu0 %v1597
          %2535 = vmatpush1.bf16.msra.mxu0 %v1596
          %2536 = vmatprep.subr.bf16.mxu0 %v1661
          %2537 = vmatpush1.bf16.msra.mxu0 %v1660
          %2538 = vmatprep.subr.bf16.mxu0 %v1725
          %2539 = vmatpush1.bf16.msra.mxu0 %v1724
          %2540 = vmatprep.subr.bf16.mxu0 %v1789
          %2541 = vmatpush1.bf16.msra.mxu0 %v1788
          %2542 = vmatprep.subr.bf16.mxu0 %v1853
          %2543 = vmatpush1.bf16.msra.mxu0 %v1852
          %2544 = vmatprep.mubr.bf16.mxu0 %v1894
          %2545 = vmatmul.mubr.bf16.gmra.mrb[0].mxu0 %v1893
          %v2546 = vpop.f32.mrb[0].mxu0
          %v2547 = vadd.f32 0.0, %v2546
          %v2548 = vpop.f32.mrb[0].mxu0
          %v2549 = vadd.f32 0.0, %v2548
          %v2550 = vpop.f32.mrb[0].mxu0
          %v2551 = vpop.f32.mrb[0].mxu0
          %2552 = vdwg.mxu0
          %2553 = vmatprep.subr.bf16.mxu0 %v895
          %2554 = vmatpush1.bf16.msra.mxu0 %v894
          %2555 = vmatprep.subr.bf16.mxu0 %v959
          %2556 = vmatpush1.bf16.msra.mxu0 %v958
          %2557 = vmatprep.subr.bf16.mxu0 %v1023
          %2558 = vmatpush1.bf16.msra.mxu0 %v1022
          %2559 = vmatprep.subr.bf16.mxu0 %v1087
          %2560 = vmatpush1.bf16.msra.mxu0 %v1086
          %2561 = vmatprep.subr.bf16.mxu0 %v1151
          %2562 = vmatpush1.bf16.msra.mxu0 %v1150
          %2563 = vmatprep.subr.bf16.mxu0 %v1215
          %2564 = vmatpush1.bf16.msra.mxu0 %v1214
          %2565 = vmatprep.subr.bf16.mxu0 %v1279
          %2566 = vmatpush1.bf16.msra.mxu0 %v1278
          %2567 = vmatprep.subr.bf16.mxu0 %v1343
          %2568 = vmatpush1.bf16.msra.mxu0 %v1342
          %2569 = vmatprep.subr.bf16.mxu0 %v1407
          %2570 = vmatpush1.bf16.msra.mxu0 %v1406
          %2571 = vmatprep.subr.bf16.mxu0 %v1471
          %2572 = vmatpush1.bf16.msra.mxu0 %v1470
          %2573 = vmatprep.subr.bf16.mxu0 %v1535
          %2574 = vmatpush1.bf16.msra.mxu0 %v1534
          %2575 = vmatprep.subr.bf16.mxu0 %v1599
          %2576 = vmatpush1.bf16.msra.mxu0 %v1598
          %2577 = vmatprep.subr.bf16.mxu0 %v1663
          %2578 = vmatpush1.bf16.msra.mxu0 %v1662
          %2579 = vmatprep.subr.bf16.mxu0 %v1727
          %2580 = vmatpush1.bf16.msra.mxu0 %v1726
          %2581 = vmatprep.subr.bf16.mxu0 %v1791
          %2582 = vmatpush1.bf16.msra.mxu0 %v1790
          %2583 = vmatprep.subr.bf16.mxu0 %v1855
          %2584 = vmatpush1.bf16.msra.mxu0 %v1854
          %2585 = vmatprep.mubr.bf16.mxu0 %v1894
          %2586 = vmatmul.mubr.bf16.gmra.mrb[0].mxu0 %v1893
          %v2587 = vpop.f32.mrb[0].mxu0
          %v2588 = vadd.f32 0.0, %v2587
          %v2589 = vpop.f32.mrb[0].mxu0
          %v2590 = vadd.f32 0.0, %v2589
          %v2591 = vpop.f32.mrb[0].mxu0
          %v2592 = vpop.f32.mrb[0].mxu0
          %2593 = vdwg.mxu0
          %2594 = vmatprep.subr.bf16.mxu0 %v897
          %2595 = vmatpush1.bf16.msra.mxu0 %v896
          %2596 = vmatprep.subr.bf16.mxu0 %v961
          %2597 = vmatpush1.bf16.msra.mxu0 %v960
          %2598 = vmatprep.subr.bf16.mxu0 %v1025
          %2599 = vmatpush1.bf16.msra.mxu0 %v1024
          %2600 = vmatprep.subr.bf16.mxu0 %v1089
          %2601 = vmatpush1.bf16.msra.mxu0 %v1088
          %2602 = vmatprep.subr.bf16.mxu0 %v1153
          %2603 = vmatpush1.bf16.msra.mxu0 %v1152
          %2604 = vmatprep.subr.bf16.mxu0 %v1217
          %2605 = vmatpush1.bf16.msra.mxu0 %v1216
          %2606 = vmatprep.subr.bf16.mxu0 %v1281
          %2607 = vmatpush1.bf16.msra.mxu0 %v1280
          %2608 = vmatprep.subr.bf16.mxu0 %v1345
          %2609 = vmatpush1.bf16.msra.mxu0 %v1344
          %2610 = vmatprep.subr.bf16.mxu0 %v1409
          %2611 = vmatpush1.bf16.msra.mxu0 %v1408
          %2612 = vmatprep.subr.bf16.mxu0 %v1473
          %2613 = vmatpush1.bf16.msra.mxu0 %v1472
          %2614 = vmatprep.subr.bf16.mxu0 %v1537
          %2615 = vmatpush1.bf16.msra.mxu0 %v1536
          %2616 = vmatprep.subr.bf16.mxu0 %v1601
          %2617 = vmatpush1.bf16.msra.mxu0 %v1600
          %2618 = vmatprep.subr.bf16.mxu0 %v1665
          %2619 = vmatpush1.bf16.msra.mxu0 %v1664
          %2620 = vmatprep.subr.bf16.mxu0 %v1729
          %2621 = vmatpush1.bf16.msra.mxu0 %v1728
          %2622 = vmatprep.subr.bf16.mxu0 %v1793
          %2623 = vmatpush1.bf16.msra.mxu0 %v1792
          %2624 = vmatprep.subr.bf16.mxu0 %v1857
          %2625 = vmatpush1.bf16.msra.mxu0 %v1856
          %2626 = vmatprep.mubr.bf16.mxu0 %v1894
          %2627 = vmatmul.mubr.bf16.gmra.mrb[0].mxu0 %v1893
          %v2628 = vpop.f32.mrb[0].mxu0
          %v2629 = vadd.f32 0.0, %v2628
          %v2630 = vpop.f32.mrb[0].mxu0
          %v2631 = vadd.f32 0.0, %v2630
          %v2632 = vpop.f32.mrb[0].mxu0
          %v2633 = vpop.f32.mrb[0].mxu0
          %2634 = vdwg.mxu0
          %2635 = vmatprep.subr.bf16.mxu0 %v899
          %2636 = vmatpush1.bf16.msra.mxu0 %v898
          %2637 = vmatprep.subr.bf16.mxu0 %v963
          %2638 = vmatpush1.bf16.msra.mxu0 %v962
          %2639 = vmatprep.subr.bf16.mxu0 %v1027
          %2640 = vmatpush1.bf16.msra.mxu0 %v1026
          %2641 = vmatprep.subr.bf16.mxu0 %v1091
          %2642 = vmatpush1.bf16.msra.mxu0 %v1090
          %2643 = vmatprep.subr.bf16.mxu0 %v1155
          %2644 = vmatpush1.bf16.msra.mxu0 %v1154
          %2645 = vmatprep.subr.bf16.mxu0 %v1219
          %2646 = vmatpush1.bf16.msra.mxu0 %v1218
          %2647 = vmatprep.subr.bf16.mxu0 %v1283
          %2648 = vmatpush1.bf16.msra.mxu0 %v1282
          %2649 = vmatprep.subr.bf16.mxu0 %v1347
          %2650 = vmatpush1.bf16.msra.mxu0 %v1346
          %2651 = vmatprep.subr.bf16.mxu0 %v1411
          %2652 = vmatpush1.bf16.msra.mxu0 %v1410
          %2653 = vmatprep.subr.bf16.mxu0 %v1475
          %2654 = vmatpush1.bf16.msra.mxu0 %v1474
          %2655 = vmatprep.subr.bf16.mxu0 %v1539
          %2656 = vmatpush1.bf16.msra.mxu0 %v1538
          %2657 = vmatprep.subr.bf16.mxu0 %v1603
          %2658 = vmatpush1.bf16.msra.mxu0 %v1602
          %2659 = vmatprep.subr.bf16.mxu0 %v1667
          %2660 = vmatpush1.bf16.msra.mxu0 %v1666
          %2661 = vmatprep.subr.bf16.mxu0 %v1731
          %2662 = vmatpush1.bf16.msra.mxu0 %v1730
          %2663 = vmatprep.subr.bf16.mxu0 %v1795
          %2664 = vmatpush1.bf16.msra.mxu0 %v1794
          %2665 = vmatprep.subr.bf16.mxu0 %v1859
          %2666 = vmatpush1.bf16.msra.mxu0 %v1858
          %2667 = vmatprep.mubr.bf16.mxu0 %v1894
          %2668 = vmatmul.mubr.bf16.gmra.mrb[0].mxu0 %v1893
          %v2669 = vpop.f32.mrb[0].mxu0
          %v2670 = vadd.f32 0.0, %v2669
          %v2671 = vpop.f32.mrb[0].mxu0
          %v2672 = vadd.f32 0.0, %v2671
          %v2673 = vpop.f32.mrb[0].mxu0
          %v2674 = vpop.f32.mrb[0].mxu0
          %2675 = vdwg.mxu0
          %2676 = vmatprep.subr.bf16.mxu0 %v901
          %2677 = vmatpush1.bf16.msra.mxu0 %v900
          %2678 = vmatprep.subr.bf16.mxu0 %v965
          %2679 = vmatpush1.bf16.msra.mxu0 %v964
          %2680 = vmatprep.subr.bf16.mxu0 %v1029
          %2681 = vmatpush1.bf16.msra.mxu0 %v1028
          %2682 = vmatprep.subr.bf16.mxu0 %v1093
          %2683 = vmatpush1.bf16.msra.mxu0 %v1092
          %2684 = vmatprep.subr.bf16.mxu0 %v1157
          %2685 = vmatpush1.bf16.msra.mxu0 %v1156
          %2686 = vmatprep.subr.bf16.mxu0 %v1221
          %2687 = vmatpush1.bf16.msra.mxu0 %v1220
          %2688 = vmatprep.subr.bf16.mxu0 %v1285
          %2689 = vmatpush1.bf16.msra.mxu0 %v1284
          %2690 = vmatprep.subr.bf16.mxu0 %v1349
          %2691 = vmatpush1.bf16.msra.mxu0 %v1348
          %2692 = vmatprep.subr.bf16.mxu0 %v1413
          %2693 = vmatpush1.bf16.msra.mxu0 %v1412
          %2694 = vmatprep.subr.bf16.mxu0 %v1477
          %2695 = vmatpush1.bf16.msra.mxu0 %v1476
          %2696 = vmatprep.subr.bf16.mxu0 %v1541
          %2697 = vmatpush1.bf16.msra.mxu0 %v1540
          %2698 = vmatprep.subr.bf16.mxu0 %v1605
          %2699 = vmatpush1.bf16.msra.mxu0 %v1604
          %2700 = vmatprep.subr.bf16.mxu0 %v1669
          %2701 = vmatpush1.bf16.msra.mxu0 %v1668
          %2702 = vmatprep.subr.bf16.mxu0 %v1733
          %2703 = vmatpush1.bf16.msra.mxu0 %v1732
          %2704 = vmatprep.subr.bf16.mxu0 %v1797
          %2705 = vmatpush1.bf16.msra.mxu0 %v1796
          %2706 = vmatprep.subr.bf16.mxu0 %v1861
          %2707 = vmatpush1.bf16.msra.mxu0 %v1860
          %2708 = vmatprep.mubr.bf16.mxu0 %v1894
          %2709 = vmatmul.mubr.bf16.gmra.mrb[0].mxu0 %v1893
          %v2710 = vpop.f32.mrb[0].mxu0
          %v2711 = vadd.f32 0.0, %v2710
          %v2712 = vpop.f32.mrb[0].mxu0
          %v2713 = vadd.f32 0.0, %v2712
          %v2714 = vpop.f32.mrb[0].mxu0
          %v2715 = vpop.f32.mrb[0].mxu0
          %2716 = vdwg.mxu0
          %2717 = vmatprep.subr.bf16.mxu0 %v903
          %2718 = vmatpush1.bf16.msra.mxu0 %v902
          %2719 = vmatprep.subr.bf16.mxu0 %v967
          %2720 = vmatpush1.bf16.msra.mxu0 %v966
          %2721 = vmatprep.subr.bf16.mxu0 %v1031
          %2722 = vmatpush1.bf16.msra.mxu0 %v1030
          %2723 = vmatprep.subr.bf16.mxu0 %v1095
          %2724 = vmatpush1.bf16.msra.mxu0 %v1094
          %2725 = vmatprep.subr.bf16.mxu0 %v1159
          %2726 = vmatpush1.bf16.msra.mxu0 %v1158
          %2727 = vmatprep.subr.bf16.mxu0 %v1223
          %2728 = vmatpush1.bf16.msra.mxu0 %v1222
          %2729 = vmatprep.subr.bf16.mxu0 %v1287
          %2730 = vmatpush1.bf16.msra.mxu0 %v1286
          %2731 = vmatprep.subr.bf16.mxu0 %v1351
          %2732 = vmatpush1.bf16.msra.mxu0 %v1350
          %2733 = vmatprep.subr.bf16.mxu0 %v1415
          %2734 = vmatpush1.bf16.msra.mxu0 %v1414
          %2735 = vmatprep.subr.bf16.mxu0 %v1479
          %2736 = vmatpush1.bf16.msra.mxu0 %v1478
          %2737 = vmatprep.subr.bf16.mxu0 %v1543
          %2738 = vmatpush1.bf16.msra.mxu0 %v1542
          %2739 = vmatprep.subr.bf16.mxu0 %v1607
          %2740 = vmatpush1.bf16.msra.mxu0 %v1606
          %2741 = vmatprep.subr.bf16.mxu0 %v1671
          %2742 = vmatpush1.bf16.msra.mxu0 %v1670
          %2743 = vmatprep.subr.bf16.mxu0 %v1735
          %2744 = vmatpush1.bf16.msra.mxu0 %v1734
          %2745 = vmatprep.subr.bf16.mxu0 %v1799
          %2746 = vmatpush1.bf16.msra.mxu0 %v1798
          %2747 = vmatprep.subr.bf16.mxu0 %v1863
          %2748 = vmatpush1.bf16.msra.mxu0 %v1862
          %2749 = vmatprep.mubr.bf16.mxu0 %v1894
          %2750 = vmatmul.mubr.bf16.gmra.mrb[0].mxu0 %v1893
          %v2751 = vpop.f32.mrb[0].mxu0
          %v2752 = vadd.f32 0.0, %v2751
          %v2753 = vpop.f32.mrb[0].mxu0
          %v2754 = vadd.f32 0.0, %v2753
          %v2755 = vpop.f32.mrb[0].mxu0
          %v2756 = vpop.f32.mrb[0].mxu0
          %2757 = vdwg.mxu0
          %2758 = vmatprep.subr.bf16.mxu0 %v905
          %2759 = vmatpush1.bf16.msra.mxu0 %v904
          %2760 = vmatprep.subr.bf16.mxu0 %v969
          %2761 = vmatpush1.bf16.msra.mxu0 %v968
          %2762 = vmatprep.subr.bf16.mxu0 %v1033
          %2763 = vmatpush1.bf16.msra.mxu0 %v1032
          %2764 = vmatprep.subr.bf16.mxu0 %v1097
          %2765 = vmatpush1.bf16.msra.mxu0 %v1096
          %2766 = vmatprep.subr.bf16.mxu0 %v1161
          %2767 = vmatpush1.bf16.msra.mxu0 %v1160
          %2768 = vmatprep.subr.bf16.mxu0 %v1225
          %2769 = vmatpush1.bf16.msra.mxu0 %v1224
          %2770 = vmatprep.subr.bf16.mxu0 %v1289
          %2771 = vmatpush1.bf16.msra.mxu0 %v1288
          %2772 = vmatprep.subr.bf16.mxu0 %v1353
          %2773 = vmatpush1.bf16.msra.mxu0 %v1352
          %2774 = vmatprep.subr.bf16.mxu0 %v1417
          %2775 = vmatpush1.bf16.msra.mxu0 %v1416
          %2776 = vmatprep.subr.bf16.mxu0 %v1481
          %2777 = vmatpush1.bf16.msra.mxu0 %v1480
          %2778 = vmatprep.subr.bf16.mxu0 %v1545
          %2779 = vmatpush1.bf16.msra.mxu0 %v1544
          %2780 = vmatprep.subr.bf16.mxu0 %v1609
          %2781 = vmatpush1.bf16.msra.mxu0 %v1608
          %2782 = vmatprep.subr.bf16.mxu0 %v1673
          %2783 = vmatpush1.bf16.msra.mxu0 %v1672
          %2784 = vmatprep.subr.bf16.mxu0 %v1737
          %2785 = vmatpush1.bf16.msra.mxu0 %v1736
          %2786 = vmatprep.subr.bf16.mxu0 %v1801
          %2787 = vmatpush1.bf16.msra.mxu0 %v1800
          %2788 = vmatprep.subr.bf16.mxu0 %v1865
          %2789 = vmatpush1.bf16.msra.mxu0 %v1864
          %2790 = vmatprep.mubr.bf16.mxu0 %v1894
          %2791 = vmatmul.mubr.bf16.gmra.mrb[0].mxu0 %v1893
          %v2792 = vpop.f32.mrb[0].mxu0
          %v2793 = vadd.f32 0.0, %v2792
          %v2794 = vpop.f32.mrb[0].mxu0
          %v2795 = vadd.f32 0.0, %v2794
          %v2796 = vpop.f32.mrb[0].mxu0
          %v2797 = vpop.f32.mrb[0].mxu0
          %2798 = vdwg.mxu0
          %2799 = vmatprep.subr.bf16.mxu0 %v907
          %2800 = vmatpush1.bf16.msra.mxu0 %v906
          %2801 = vmatprep.subr.bf16.mxu0 %v971
          %2802 = vmatpush1.bf16.msra.mxu0 %v970
          %2803 = vmatprep.subr.bf16.mxu0 %v1035
          %2804 = vmatpush1.bf16.msra.mxu0 %v1034
          %2805 = vmatprep.subr.bf16.mxu0 %v1099
          %2806 = vmatpush1.bf16.msra.mxu0 %v1098
          %2807 = vmatprep.subr.bf16.mxu0 %v1163
          %2808 = vmatpush1.bf16.msra.mxu0 %v1162
          %2809 = vmatprep.subr.bf16.mxu0 %v1227
          %2810 = vmatpush1.bf16.msra.mxu0 %v1226
          %2811 = vmatprep.subr.bf16.mxu0 %v1291
          %2812 = vmatpush1.bf16.msra.mxu0 %v1290
          %2813 = vmatprep.subr.bf16.mxu0 %v1355
          %2814 = vmatpush1.bf16.msra.mxu0 %v1354
          %2815 = vmatprep.subr.bf16.mxu0 %v1419
          %2816 = vmatpush1.bf16.msra.mxu0 %v1418
          %2817 = vmatprep.subr.bf16.mxu0 %v1483
          %2818 = vmatpush1.bf16.msra.mxu0 %v1482
          %2819 = vmatprep.subr.bf16.mxu0 %v1547
          %2820 = vmatpush1.bf16.msra.mxu0 %v1546
          %2821 = vmatprep.subr.bf16.mxu0 %v1611
          %2822 = vmatpush1.bf16.msra.mxu0 %v1610
          %2823 = vmatprep.subr.bf16.mxu0 %v1675
          %2824 = vmatpush1.bf16.msra.mxu0 %v1674
          %2825 = vmatprep.subr.bf16.mxu0 %v1739
          %2826 = vmatpush1.bf16.msra.mxu0 %v1738
          %2827 = vmatprep.subr.bf16.mxu0 %v1803
          %2828 = vmatpush1.bf16.msra.mxu0 %v1802
          %2829 = vmatprep.subr.bf16.mxu0 %v1867
          %2830 = vmatpush1.bf16.msra.mxu0 %v1866
          %2831 = vmatprep.mubr.bf16.mxu0 %v1894
          %2832 = vmatmul.mubr.bf16.gmra.mrb[0].mxu0 %v1893
          %v2833 = vpop.f32.mrb[0].mxu0
          %v2834 = vadd.f32 0.0, %v2833
          %v2835 = vpop.f32.mrb[0].mxu0
          %v2836 = vadd.f32 0.0, %v2835
          %v2837 = vpop.f32.mrb[0].mxu0
          %v2838 = vpop.f32.mrb[0].mxu0
          %2839 = vdwg.mxu0
          %2840 = vmatprep.subr.bf16.mxu0 %v909
          %2841 = vmatpush1.bf16.msra.mxu0 %v908
          %2842 = vmatprep.subr.bf16.mxu0 %v973
          %2843 = vmatpush1.bf16.msra.mxu0 %v972
          %2844 = vmatprep.subr.bf16.mxu0 %v1037
          %2845 = vmatpush1.bf16.msra.mxu0 %v1036
          %2846 = vmatprep.subr.bf16.mxu0 %v1101
          %2847 = vmatpush1.bf16.msra.mxu0 %v1100
          %2848 = vmatprep.subr.bf16.mxu0 %v1165
          %2849 = vmatpush1.bf16.msra.mxu0 %v1164
          %2850 = vmatprep.subr.bf16.mxu0 %v1229
          %2851 = vmatpush1.bf16.msra.mxu0 %v1228
          %2852 = vmatprep.subr.bf16.mxu0 %v1293
          %2853 = vmatpush1.bf16.msra.mxu0 %v1292
          %2854 = vmatprep.subr.bf16.mxu0 %v1357
          %2855 = vmatpush1.bf16.msra.mxu0 %v1356
          %2856 = vmatprep.subr.bf16.mxu0 %v1421
          %2857 = vmatpush1.bf16.msra.mxu0 %v1420
          %2858 = vmatprep.subr.bf16.mxu0 %v1485
          %2859 = vmatpush1.bf16.msra.mxu0 %v1484
          %2860 = vmatprep.subr.bf16.mxu0 %v1549
          %2861 = vmatpush1.bf16.msra.mxu0 %v1548
          %2862 = vmatprep.subr.bf16.mxu0 %v1613
          %2863 = vmatpush1.bf16.msra.mxu0 %v1612
          %2864 = vmatprep.subr.bf16.mxu0 %v1677
          %2865 = vmatpush1.bf16.msra.mxu0 %v1676
          %2866 = vmatprep.subr.bf16.mxu0 %v1741
          %2867 = vmatpush1.bf16.msra.mxu0 %v1740
          %2868 = vmatprep.subr.bf16.mxu0 %v1805
          %2869 = vmatpush1.bf16.msra.mxu0 %v1804
          %2870 = vmatprep.subr.bf16.mxu0 %v1869
          %2871 = vmatpush1.bf16.msra.mxu0 %v1868
          %2872 = vmatprep.mubr.bf16.mxu0 %v1894
          %2873 = vmatmul.mubr.bf16.gmra.mrb[0].mxu0 %v1893
          %v2874 = vpop.f32.mrb[0].mxu0
          %v2875 = vadd.f32 0.0, %v2874
          %v2876 = vpop.f32.mrb[0].mxu0
          %v2877 = vadd.f32 0.0, %v2876
          %v2878 = vpop.f32.mrb[0].mxu0
          %v2879 = vpop.f32.mrb[0].mxu0
          %2880 = vdwg.mxu0
          %2881 = vmatprep.subr.bf16.mxu0 %v911
          %2882 = vmatpush1.bf16.msra.mxu0 %v910
          %2883 = vmatprep.subr.bf16.mxu0 %v975
          %2884 = vmatpush1.bf16.msra.mxu0 %v974
          %2885 = vmatprep.subr.bf16.mxu0 %v1039
          %2886 = vmatpush1.bf16.msra.mxu0 %v1038
          %2887 = vmatprep.subr.bf16.mxu0 %v1103
          %2888 = vmatpush1.bf16.msra.mxu0 %v1102
          %2889 = vmatprep.subr.bf16.mxu0 %v1167
          %2890 = vmatpush1.bf16.msra.mxu0 %v1166
          %2891 = vmatprep.subr.bf16.mxu0 %v1231
          %2892 = vmatpush1.bf16.msra.mxu0 %v1230
          %2893 = vmatprep.subr.bf16.mxu0 %v1295
          %2894 = vmatpush1.bf16.msra.mxu0 %v1294
          %2895 = vmatprep.subr.bf16.mxu0 %v1359
          %2896 = vmatpush1.bf16.msra.mxu0 %v1358
          %2897 = vmatprep.subr.bf16.mxu0 %v1423
          %2898 = vmatpush1.bf16.msra.mxu0 %v1422
          %2899 = vmatprep.subr.bf16.mxu0 %v1487
          %2900 = vmatpush1.bf16.msra.mxu0 %v1486
          %2901 = vmatprep.subr.bf16.mxu0 %v1551
          %2902 = vmatpush1.bf16.msra.mxu0 %v1550
          %2903 = vmatprep.subr.bf16.mxu0 %v1615
          %2904 = vmatpush1.bf16.msra.mxu0 %v1614
          %2905 = vmatprep.subr.bf16.mxu0 %v1679
          %2906 = vmatpush1.bf16.msra.mxu0 %v1678
          %2907 = vmatprep.subr.bf16.mxu0 %v1743
          %2908 = vmatpush1.bf16.msra.mxu0 %v1742
          %2909 = vmatprep.subr.bf16.mxu0 %v1807
          %2910 = vmatpush1.bf16.msra.mxu0 %v1806
          %2911 = vmatprep.subr.bf16.mxu0 %v1871
          %2912 = vmatpush1.bf16.msra.mxu0 %v1870
          %2913 = vmatprep.mubr.bf16.mxu0 %v1894
          %2914 = vmatmul.mubr.bf16.gmra.mrb[0].mxu0 %v1893
          %v2915 = vpop.f32.mrb[0].mxu0
          %v2916 = vadd.f32 0.0, %v2915
          %v2917 = vpop.f32.mrb[0].mxu0
          %v2918 = vadd.f32 0.0, %v2917
          %v2919 = vpop.f32.mrb[0].mxu0
          %v2920 = vpop.f32.mrb[0].mxu0
          %2921 = vdwg.mxu0
          %2922 = vmatprep.subr.bf16.mxu0 %v913
          %2923 = vmatpush1.bf16.msra.mxu0 %v912
          %2924 = vmatprep.subr.bf16.mxu0 %v977
          %2925 = vmatpush1.bf16.msra.mxu0 %v976
          %2926 = vmatprep.subr.bf16.mxu0 %v1041
          %2927 = vmatpush1.bf16.msra.mxu0 %v1040
          %2928 = vmatprep.subr.bf16.mxu0 %v1105
          %2929 = vmatpush1.bf16.msra.mxu0 %v1104
          %2930 = vmatprep.subr.bf16.mxu0 %v1169
          %2931 = vmatpush1.bf16.msra.mxu0 %v1168
          %2932 = vmatprep.subr.bf16.mxu0 %v1233
          %2933 = vmatpush1.bf16.msra.mxu0 %v1232
          %2934 = vmatprep.subr.bf16.mxu0 %v1297
          %2935 = vmatpush1.bf16.msra.mxu0 %v1296
          %2936 = vmatprep.subr.bf16.mxu0 %v1361
          %2937 = vmatpush1.bf16.msra.mxu0 %v1360
          %2938 = vmatprep.subr.bf16.mxu0 %v1425
          %2939 = vmatpush1.bf16.msra.mxu0 %v1424
          %2940 = vmatprep.subr.bf16.mxu0 %v1489
          %2941 = vmatpush1.bf16.msra.mxu0 %v1488
          %2942 = vmatprep.subr.bf16.mxu0 %v1553
          %2943 = vmatpush1.bf16.msra.mxu0 %v1552
          %2944 = vmatprep.subr.bf16.mxu0 %v1617
          %2945 = vmatpush1.bf16.msra.mxu0 %v1616
          %2946 = vmatprep.subr.bf16.mxu0 %v1681
          %2947 = vmatpush1.bf16.msra.mxu0 %v1680
          %2948 = vmatprep.subr.bf16.mxu0 %v1745
          %2949 = vmatpush1.bf16.msra.mxu0 %v1744
          %2950 = vmatprep.subr.bf16.mxu0 %v1809
          %2951 = vmatpush1.bf16.msra.mxu0 %v1808
          %2952 = vmatprep.subr.bf16.mxu0 %v1873
          %2953 = vmatpush1.bf16.msra.mxu0 %v1872
          %2954 = vmatprep.mubr.bf16.mxu0 %v1894
          %2955 = vmatmul.mubr.bf16.gmra.mrb[0].mxu0 %v1893
          %v2956 = vpop.f32.mrb[0].mxu0
          %v2957 = vadd.f32 0.0, %v2956
          %v2958 = vpop.f32.mrb[0].mxu0
          %v2959 = vadd.f32 0.0, %v2958
          %v2960 = vpop.f32.mrb[0].mxu0
          %v2961 = vpop.f32.mrb[0].mxu0
          %2962 = vdwg.mxu0
          %2963 = vmatprep.subr.bf16.mxu0 %v915
          %2964 = vmatpush1.bf16.msra.mxu0 %v914
          %2965 = vmatprep.subr.bf16.mxu0 %v979
          %2966 = vmatpush1.bf16.msra.mxu0 %v978
          %2967 = vmatprep.subr.bf16.mxu0 %v1043
          %2968 = vmatpush1.bf16.msra.mxu0 %v1042
          %2969 = vmatprep.subr.bf16.mxu0 %v1107
          %2970 = vmatpush1.bf16.msra.mxu0 %v1106
          %2971 = vmatprep.subr.bf16.mxu0 %v1171
          %2972 = vmatpush1.bf16.msra.mxu0 %v1170
          %2973 = vmatprep.subr.bf16.mxu0 %v1235
          %2974 = vmatpush1.bf16.msra.mxu0 %v1234
          %2975 = vmatprep.subr.bf16.mxu0 %v1299
          %2976 = vmatpush1.bf16.msra.mxu0 %v1298
          %2977 = vmatprep.subr.bf16.mxu0 %v1363
          %2978 = vmatpush1.bf16.msra.mxu0 %v1362
          %2979 = vmatprep.subr.bf16.mxu0 %v1427
          %2980 = vmatpush1.bf16.msra.mxu0 %v1426
          %2981 = vmatprep.subr.bf16.mxu0 %v1491
          %2982 = vmatpush1.bf16.msra.mxu0 %v1490
          %2983 = vmatprep.subr.bf16.mxu0 %v1555
          %2984 = vmatpush1.bf16.msra.mxu0 %v1554
          %2985 = vmatprep.subr.bf16.mxu0 %v1619
          %2986 = vmatpush1.bf16.msra.mxu0 %v1618
          %2987 = vmatprep.subr.bf16.mxu0 %v1683
          %2988 = vmatpush1.bf16.msra.mxu0 %v1682
          %2989 = vmatprep.subr.bf16.mxu0 %v1747
          %2990 = vmatpush1.bf16.msra.mxu0 %v1746
          %2991 = vmatprep.subr.bf16.mxu0 %v1811
          %2992 = vmatpush1.bf16.msra.mxu0 %v1810
          %2993 = vmatprep.subr.bf16.mxu0 %v1875
          %2994 = vmatpush1.bf16.msra.mxu0 %v1874
          %2995 = vmatprep.mubr.bf16.mxu0 %v1894
          %2996 = vmatmul.mubr.bf16.gmra.mrb[0].mxu0 %v1893
          %v2997 = vpop.f32.mrb[0].mxu0
          %v2998 = vadd.f32 0.0, %v2997
          %v2999 = vpop.f32.mrb[0].mxu0
          %v3000 = vadd.f32 0.0, %v2999
          %v3001 = vpop.f32.mrb[0].mxu0
          %v3002 = vpop.f32.mrb[0].mxu0
          %3003 = vdwg.mxu0
          %3004 = vmatprep.subr.bf16.mxu0 %v917
          %3005 = vmatpush1.bf16.msra.mxu0 %v916
          %3006 = vmatprep.subr.bf16.mxu0 %v981
          %3007 = vmatpush1.bf16.msra.mxu0 %v980
          %3008 = vmatprep.subr.bf16.mxu0 %v1045
          %3009 = vmatpush1.bf16.msra.mxu0 %v1044
          %3010 = vmatprep.subr.bf16.mxu0 %v1109
          %3011 = vmatpush1.bf16.msra.mxu0 %v1108
          %3012 = vmatprep.subr.bf16.mxu0 %v1173
          %3013 = vmatpush1.bf16.msra.mxu0 %v1172
          %3014 = vmatprep.subr.bf16.mxu0 %v1237
          %3015 = vmatpush1.bf16.msra.mxu0 %v1236
          %3016 = vmatprep.subr.bf16.mxu0 %v1301
          %3017 = vmatpush1.bf16.msra.mxu0 %v1300
          %3018 = vmatprep.subr.bf16.mxu0 %v1365
          %3019 = vmatpush1.bf16.msra.mxu0 %v1364
          %3020 = vmatprep.subr.bf16.mxu0 %v1429
          %3021 = vmatpush1.bf16.msra.mxu0 %v1428
          %3022 = vmatprep.subr.bf16.mxu0 %v1493
          %3023 = vmatpush1.bf16.msra.mxu0 %v1492
          %3024 = vmatprep.subr.bf16.mxu0 %v1557
          %3025 = vmatpush1.bf16.msra.mxu0 %v1556
          %3026 = vmatprep.subr.bf16.mxu0 %v1621
          %3027 = vmatpush1.bf16.msra.mxu0 %v1620
          %3028 = vmatprep.subr.bf16.mxu0 %v1685
          %3029 = vmatpush1.bf16.msra.mxu0 %v1684
          %3030 = vmatprep.subr.bf16.mxu0 %v1749
          %3031 = vmatpush1.bf16.msra.mxu0 %v1748
          %3032 = vmatprep.subr.bf16.mxu0 %v1813
          %3033 = vmatpush1.bf16.msra.mxu0 %v1812
          %3034 = vmatprep.subr.bf16.mxu0 %v1877
          %3035 = vmatpush1.bf16.msra.mxu0 %v1876
          %3036 = vmatprep.mubr.bf16.mxu0 %v1894
          %3037 = vmatmul.mubr.bf16.gmra.mrb[0].mxu0 %v1893
          %v3038 = vpop.f32.mrb[0].mxu0
          %v3039 = vadd.f32 0.0, %v3038
          %v3040 = vpop.f32.mrb[0].mxu0
          %v3041 = vadd.f32 0.0, %v3040
          %v3042 = vpop.f32.mrb[0].mxu0
          %v3043 = vpop.f32.mrb[0].mxu0
          %3044 = vdwg.mxu0
          %3045 = vmatprep.subr.bf16.mxu0 %v919
          %3046 = vmatpush1.bf16.msra.mxu0 %v918
          %3047 = vmatprep.subr.bf16.mxu0 %v983
          %3048 = vmatpush1.bf16.msra.mxu0 %v982
          %3049 = vmatprep.subr.bf16.mxu0 %v1047
          %3050 = vmatpush1.bf16.msra.mxu0 %v1046
          %3051 = vmatprep.subr.bf16.mxu0 %v1111
          %3052 = vmatpush1.bf16.msra.mxu0 %v1110
          %3053 = vmatprep.subr.bf16.mxu0 %v1175
          %3054 = vmatpush1.bf16.msra.mxu0 %v1174
          %3055 = vmatprep.subr.bf16.mxu0 %v1239
          %3056 = vmatpush1.bf16.msra.mxu0 %v1238
          %3057 = vmatprep.subr.bf16.mxu0 %v1303
          %3058 = vmatpush1.bf16.msra.mxu0 %v1302
          %3059 = vmatprep.subr.bf16.mxu0 %v1367
          %3060 = vmatpush1.bf16.msra.mxu0 %v1366
          %3061 = vmatprep.subr.bf16.mxu0 %v1431
          %3062 = vmatpush1.bf16.msra.mxu0 %v1430
          %3063 = vmatprep.subr.bf16.mxu0 %v1495
          %3064 = vmatpush1.bf16.msra.mxu0 %v1494
          %3065 = vmatprep.subr.bf16.mxu0 %v1559
          %3066 = vmatpush1.bf16.msra.mxu0 %v1558
          %3067 = vmatprep.subr.bf16.mxu0 %v1623
          %3068 = vmatpush1.bf16.msra.mxu0 %v1622
          %3069 = vmatprep.subr.bf16.mxu0 %v1687
          %3070 = vmatpush1.bf16.msra.mxu0 %v1686
          %3071 = vmatprep.subr.bf16.mxu0 %v1751
          %3072 = vmatpush1.bf16.msra.mxu0 %v1750
          %3073 = vmatprep.subr.bf16.mxu0 %v1815
          %3074 = vmatpush1.bf16.msra.mxu0 %v1814
          %3075 = vmatprep.subr.bf16.mxu0 %v1879
          %3076 = vmatpush1.bf16.msra.mxu0 %v1878
          %3077 = vmatprep.mubr.bf16.mxu0 %v1894
          %3078 = vmatmul.mubr.bf16.gmra.mrb[0].mxu0 %v1893
          %v3079 = vpop.f32.mrb[0].mxu0
          %v3080 = vadd.f32 0.0, %v3079
          %v3081 = vpop.f32.mrb[0].mxu0
          %v3082 = vadd.f32 0.0, %v3081
          %v3083 = vpop.f32.mrb[0].mxu0
          %v3084 = vpop.f32.mrb[0].mxu0
          %3085 = vdwg.mxu0
          %3086 = vmatprep.subr.bf16.mxu0 %v921
          %3087 = vmatpush1.bf16.msra.mxu0 %v920
          %3088 = vmatprep.subr.bf16.mxu0 %v985
          %3089 = vmatpush1.bf16.msra.mxu0 %v984
          %3090 = vmatprep.subr.bf16.mxu0 %v1049
          %3091 = vmatpush1.bf16.msra.mxu0 %v1048
          %3092 = vmatprep.subr.bf16.mxu0 %v1113
          %3093 = vmatpush1.bf16.msra.mxu0 %v1112
          %3094 = vmatprep.subr.bf16.mxu0 %v1177
          %3095 = vmatpush1.bf16.msra.mxu0 %v1176
          %3096 = vmatprep.subr.bf16.mxu0 %v1241
          %3097 = vmatpush1.bf16.msra.mxu0 %v1240
          %3098 = vmatprep.subr.bf16.mxu0 %v1305
          %3099 = vmatpush1.bf16.msra.mxu0 %v1304
          %3100 = vmatprep.subr.bf16.mxu0 %v1369
          %3101 = vmatpush1.bf16.msra.mxu0 %v1368
          %3102 = vmatprep.subr.bf16.mxu0 %v1433
          %3103 = vmatpush1.bf16.msra.mxu0 %v1432
          %3104 = vmatprep.subr.bf16.mxu0 %v1497
          %3105 = vmatpush1.bf16.msra.mxu0 %v1496
          %3106 = vmatprep.subr.bf16.mxu0 %v1561
          %3107 = vmatpush1.bf16.msra.mxu0 %v1560
          %3108 = vmatprep.subr.bf16.mxu0 %v1625
          %3109 = vmatpush1.bf16.msra.mxu0 %v1624
          %3110 = vmatprep.subr.bf16.mxu0 %v1689
          %3111 = vmatpush1.bf16.msra.mxu0 %v1688
          %3112 = vmatprep.subr.bf16.mxu0 %v1753
          %3113 = vmatpush1.bf16.msra.mxu0 %v1752
          %3114 = vmatprep.subr.bf16.mxu0 %v1817
          %3115 = vmatpush1.bf16.msra.mxu0 %v1816
          %3116 = vmatprep.subr.bf16.mxu0 %v1881
          %3117 = vmatpush1.bf16.msra.mxu0 %v1880
          %3118 = vmatprep.mubr.bf16.mxu0 %v1894
          %3119 = vmatmul.mubr.bf16.gmra.mrb[0].mxu0 %v1893
          %v3120 = vpop.f32.mrb[0].mxu0
          %v3121 = vadd.f32 0.0, %v3120
          %v3122 = vpop.f32.mrb[0].mxu0
          %v3123 = vadd.f32 0.0, %v3122
          %v3124 = vpop.f32.mrb[0].mxu0
          %v3125 = vpop.f32.mrb[0].mxu0
          %3126 = vdwg.mxu0
          %3127 = vmatprep.subr.bf16.mxu0 %v923
          %3128 = vmatpush1.bf16.msra.mxu0 %v922
          %3129 = vmatprep.subr.bf16.mxu0 %v987
          %3130 = vmatpush1.bf16.msra.mxu0 %v986
          %3131 = vmatprep.subr.bf16.mxu0 %v1051
          %3132 = vmatpush1.bf16.msra.mxu0 %v1050
          %3133 = vmatprep.subr.bf16.mxu0 %v1115
          %3134 = vmatpush1.bf16.msra.mxu0 %v1114
          %3135 = vmatprep.subr.bf16.mxu0 %v1179
          %3136 = vmatpush1.bf16.msra.mxu0 %v1178
          %3137 = vmatprep.subr.bf16.mxu0 %v1243
          %3138 = vmatpush1.bf16.msra.mxu0 %v1242
          %3139 = vmatprep.subr.bf16.mxu0 %v1307
          %3140 = vmatpush1.bf16.msra.mxu0 %v1306
          %3141 = vmatprep.subr.bf16.mxu0 %v1371
          %3142 = vmatpush1.bf16.msra.mxu0 %v1370
          %3143 = vmatprep.subr.bf16.mxu0 %v1435
          %3144 = vmatpush1.bf16.msra.mxu0 %v1434
          %3145 = vmatprep.subr.bf16.mxu0 %v1499
          %3146 = vmatpush1.bf16.msra.mxu0 %v1498
          %3147 = vmatprep.subr.bf16.mxu0 %v1563
          %3148 = vmatpush1.bf16.msra.mxu0 %v1562
          %3149 = vmatprep.subr.bf16.mxu0 %v1627
          %3150 = vmatpush1.bf16.msra.mxu0 %v1626
          %3151 = vmatprep.subr.bf16.mxu0 %v1691
          %3152 = vmatpush1.bf16.msra.mxu0 %v1690
          %3153 = vmatprep.subr.bf16.mxu0 %v1755
          %3154 = vmatpush1.bf16.msra.mxu0 %v1754
          %3155 = vmatprep.subr.bf16.mxu0 %v1819
          %3156 = vmatpush1.bf16.msra.mxu0 %v1818
          %3157 = vmatprep.subr.bf16.mxu0 %v1883
          %3158 = vmatpush1.bf16.msra.mxu0 %v1882
          %3159 = vmatprep.mubr.bf16.mxu0 %v1894
          %3160 = vmatmul.mubr.bf16.gmra.mrb[0].mxu0 %v1893
          %v3161 = vpop.f32.mrb[0].mxu0
          %v3162 = vadd.f32 0.0, %v3161
          %v3163 = vpop.f32.mrb[0].mxu0
          %v3164 = vadd.f32 0.0, %v3163
          %v3165 = vpop.f32.mrb[0].mxu0
          %v3166 = vpop.f32.mrb[0].mxu0
          %3167 = vdwg.mxu0
          %3168 = vmatprep.subr.bf16.mxu0 %v925
          %3169 = vmatpush1.bf16.msra.mxu0 %v924
          %3170 = vmatprep.subr.bf16.mxu0 %v989
          %3171 = vmatpush1.bf16.msra.mxu0 %v988
          %3172 = vmatprep.subr.bf16.mxu0 %v1053
          %3173 = vmatpush1.bf16.msra.mxu0 %v1052
          %3174 = vmatprep.subr.bf16.mxu0 %v1117
          %3175 = vmatpush1.bf16.msra.mxu0 %v1116
          %3176 = vmatprep.subr.bf16.mxu0 %v1181
          %3177 = vmatpush1.bf16.msra.mxu0 %v1180
          %3178 = vmatprep.subr.bf16.mxu0 %v1245
          %3179 = vmatpush1.bf16.msra.mxu0 %v1244
          %3180 = vmatprep.subr.bf16.mxu0 %v1309
          %3181 = vmatpush1.bf16.msra.mxu0 %v1308
          %3182 = vmatprep.subr.bf16.mxu0 %v1373
          %3183 = vmatpush1.bf16.msra.mxu0 %v1372
          %3184 = vmatprep.subr.bf16.mxu0 %v1437
          %3185 = vmatpush1.bf16.msra.mxu0 %v1436
          %3186 = vmatprep.subr.bf16.mxu0 %v1501
          %3187 = vmatpush1.bf16.msra.mxu0 %v1500
          %3188 = vmatprep.subr.bf16.mxu0 %v1565
          %3189 = vmatpush1.bf16.msra.mxu0 %v1564
          %3190 = vmatprep.subr.bf16.mxu0 %v1629
          %3191 = vmatpush1.bf16.msra.mxu0 %v1628
          %3192 = vmatprep.subr.bf16.mxu0 %v1693
          %3193 = vmatpush1.bf16.msra.mxu0 %v1692
          %3194 = vmatprep.subr.bf16.mxu0 %v1757
          %3195 = vmatpush1.bf16.msra.mxu0 %v1756
          %3196 = vmatprep.subr.bf16.mxu0 %v1821
          %3197 = vmatpush1.bf16.msra.mxu0 %v1820
          %3198 = vmatprep.subr.bf16.mxu0 %v1885
          %3199 = vmatpush1.bf16.msra.mxu0 %v1884
          %3200 = vmatprep.mubr.bf16.mxu0 %v1894
          %3201 = vmatmul.mubr.bf16.gmra.mrb[0].mxu0 %v1893
          %v3202 = vpop.f32.mrb[0].mxu0
          %v3203 = vadd.f32 0.0, %v3202
          %v3204 = vpop.f32.mrb[0].mxu0
          %v3205 = vadd.f32 0.0, %v3204
          %v3206 = vpop.f32.mrb[0].mxu0
          %v3207 = vpop.f32.mrb[0].mxu0
          %3208 = vdwg.mxu0
          %v3209 = vadd.f32 %v283, %v1932
          %v3210 = vadd.f32 %v284, %v1934
          %v3211 = vadd.f32 %v285, %v1973
          %v3212 = vadd.f32 %v286, %v1975
          %v3213 = vadd.f32 %v287, %v2014
          %v3214 = vadd.f32 %v288, %v2016
          %v3215 = vadd.f32 %v289, %v2055
          %v3216 = vadd.f32 %v290, %v2057
          %v3217 = vadd.f32 %v291, %v2096
          %v3218 = vadd.f32 %v292, %v2098
          %v3219 = vadd.f32 %v293, %v2137
          %v3220 = vadd.f32 %v294, %v2139
          %v3221 = vadd.f32 %v295, %v2178
          %v3222 = vadd.f32 %v296, %v2180
          %v3223 = vadd.f32 %v297, %v2219
          %v3224 = vadd.f32 %v298, %v2221
          %v3225 = vadd.f32 %v299, %v2260
          %v3226 = vadd.f32 %v300, %v2262
          %v3227 = vadd.f32 %v301, %v2301
          %v3228 = vadd.f32 %v302, %v2303
          %v3229 = vadd.f32 %v303, %v2342
          %v3230 = vadd.f32 %v304, %v2344
          %v3231 = vadd.f32 %v305, %v2383
          %v3232 = vadd.f32 %v306, %v2385
          %v3233 = vadd.f32 %v307, %v2424
          %v3234 = vadd.f32 %v308, %v2426
          %v3235 = vadd.f32 %v309, %v2465
          %v3236 = vadd.f32 %v310, %v2467
          %v3237 = vadd.f32 %v311, %v2506
          %v3238 = vadd.f32 %v312, %v2508
          %v3239 = vadd.f32 %v313, %v2547
          %v3240 = vadd.f32 %v314, %v2549
          %v3241 = vadd.f32 %v315, %v2588
          %v3242 = vadd.f32 %v316, %v2590
          %v3243 = vadd.f32 %v317, %v2629
          %v3244 = vadd.f32 %v318, %v2631
          %v3245 = vadd.f32 %v319, %v2670
          %v3246 = vadd.f32 %v320, %v2672
          %v3247 = vadd.f32 %v321, %v2711
          %v3248 = vadd.f32 %v322, %v2713
          %v3249 = vadd.f32 %v323, %v2752
          %v3250 = vadd.f32 %v324, %v2754
          %v3251 = vadd.f32 %v325, %v2793
          %v3252 = vadd.f32 %v326, %v2795
          %v3253 = vadd.f32 %v327, %v2834
          %v3254 = vadd.f32 %v328, %v2836
          %v3255 = vadd.f32 %v329, %v2875
          %v3256 = vadd.f32 %v330, %v2877
          %v3257 = vadd.f32 %v331, %v2916
          %v3258 = vadd.f32 %v332, %v2918
          %v3259 = vadd.f32 %v333, %v2957
          %v3260 = vadd.f32 %v334, %v2959
          %v3261 = vadd.f32 %v335, %v2998
          %v3262 = vadd.f32 %v336, %v3000
          %v3263 = vadd.f32 %v337, %v3039
          %v3264 = vadd.f32 %v338, %v3041
          %v3265 = vadd.f32 %v339, %v3080
          %v3266 = vadd.f32 %v340, %v3082
          %v3267 = vadd.f32 %v341, %v3121
          %v3268 = vadd.f32 %v342, %v3123
          %v3269 = vadd.f32 %v343, %v3162
          %v3270 = vadd.f32 %v344, %v3164
          %v3271 = vadd.f32 %v345, %v3203
          %v3272 = vadd.f32 %v346, %v3205
        $region49: #{conditional_generator_forward.3} parent=35 // loop_footer
          %s282 = sadd.s32 1, %s278
        $region50: #{conditional_generator_forward.3} parent=35 // loop_footer_branch
          %277 = sbr.rel target = $region46
        $region51: #{conditional_generator_forward.3} parent=35 // loop_exit
          _
        %v3273 = vld [vmem:[%s268] sm:$0xff]
        %v3274 = vld [vmem:[%s268 + $0x8] sm:$0xff]
        %v3275 = vld [vmem:[%s268 + $0x10] sm:$0xff]
        %v3276 = vld [vmem:[%s268 + $0x18] sm:$0xff]
        %v3277 = vld [vmem:[%s268 + $0x20] sm:$0xff]
        %v3278 = vld [vmem:[%s268 + $0x28] sm:$0xff]
        %v3279 = vld [vmem:[%s268 + $0x30] sm:$0xff]
        %v3280 = vld [vmem:[%s268 + $0x38] sm:$0xff]
        %v3289 = vlaneseq
        %v3290 = vshrl.u32 %v3289, 7
        %v3291 = vsub.s32 0, %v3290
        %v3292 = vrot.slane %v3273, %v3291
        %v3293 = vlaneseq
        %v3294 = vshrl.u32 %v3293, 7
        %v3295 = vsub.s32 1, %v3294
        %v3296 = vrot.slane %v3273, %v3295
        %v3297 = vlaneseq
        %v3298 = vshrl.u32 %v3297, 7
        %v3299 = vsub.s32 2, %v3298
        %v3300 = vrot.slane %v3273, %v3299
        %v3301 = vlaneseq
        %v3302 = vshrl.u32 %v3301, 7
        %v3303 = vsub.s32 3, %v3302
        %v3304 = vrot.slane %v3273, %v3303
        %v3305 = vlaneseq
        %v3306 = vshrl.u32 %v3305, 7
        %v3307 = vsub.s32 4, %v3306
        %v3308 = vrot.slane %v3273, %v3307
        %v3309 = vlaneseq
        %v3310 = vshrl.u32 %v3309, 7
        %v3311 = vsub.s32 5, %v3310
        %v3312 = vrot.slane %v3273, %v3311
        %v3313 = vlaneseq
        %v3314 = vshrl.u32 %v3313, 7
        %v3315 = vsub.s32 6, %v3314
        %v3316 = vrot.slane %v3273, %v3315
        %v3317 = vlaneseq
        %v3318 = vshrl.u32 %v3317, 7
        %v3319 = vsub.s32 7, %v3318
        %v3320 = vrot.slane %v3273, %v3319
        %v3321 = vlaneseq
        %v3322 = vshrl.u32 %v3321, 7
        %v3323 = vsub.s32 0, %v3322
        %v3324 = vrot.slane %v3274, %v3323
        %v3325 = vlaneseq
        %v3326 = vshrl.u32 %v3325, 7
        %v3327 = vsub.s32 1, %v3326
        %v3328 = vrot.slane %v3274, %v3327
        %v3329 = vlaneseq
        %v3330 = vshrl.u32 %v3329, 7
        %v3331 = vsub.s32 2, %v3330
        %v3332 = vrot.slane %v3274, %v3331
        %v3333 = vlaneseq
        %v3334 = vshrl.u32 %v3333, 7
        %v3335 = vsub.s32 3, %v3334
        %v3336 = vrot.slane %v3274, %v3335
        %v3337 = vlaneseq
        %v3338 = vshrl.u32 %v3337, 7
        %v3339 = vsub.s32 4, %v3338
        %v3340 = vrot.slane %v3274, %v3339
        %v3341 = vlaneseq
        %v3342 = vshrl.u32 %v3341, 7
        %v3343 = vsub.s32 5, %v3342
        %v3344 = vrot.slane %v3274, %v3343
        %v3345 = vlaneseq
        %v3346 = vshrl.u32 %v3345, 7
        %v3347 = vsub.s32 6, %v3346
        %v3348 = vrot.slane %v3274, %v3347
        %v3349 = vlaneseq
        %v3350 = vshrl.u32 %v3349, 7
        %v3351 = vsub.s32 7, %v3350
        %v3352 = vrot.slane %v3274, %v3351
        %v3353 = vlaneseq
        %v3354 = vshrl.u32 %v3353, 7
        %v3355 = vsub.s32 0, %v3354
        %v3356 = vrot.slane %v3275, %v3355
        %v3357 = vlaneseq
        %v3358 = vshrl.u32 %v3357, 7
        %v3359 = vsub.s32 1, %v3358
        %v3360 = vrot.slane %v3275, %v3359
        %v3361 = vlaneseq
        %v3362 = vshrl.u32 %v3361, 7
        %v3363 = vsub.s32 2, %v3362
        %v3364 = vrot.slane %v3275, %v3363
        %v3365 = vlaneseq
        %v3366 = vshrl.u32 %v3365, 7
        %v3367 = vsub.s32 3, %v3366
        %v3368 = vrot.slane %v3275, %v3367
        %v3369 = vlaneseq
        %v3370 = vshrl.u32 %v3369, 7
        %v3371 = vsub.s32 4, %v3370
        %v3372 = vrot.slane %v3275, %v3371
        %v3373 = vlaneseq
        %v3374 = vshrl.u32 %v3373, 7
        %v3375 = vsub.s32 5, %v3374
        %v3376 = vrot.slane %v3275, %v3375
        %v3377 = vlaneseq
        %v3378 = vshrl.u32 %v3377, 7
        %v3379 = vsub.s32 6, %v3378
        %v3380 = vrot.slane %v3275, %v3379
        %v3381 = vlaneseq
        %v3382 = vshrl.u32 %v3381, 7
        %v3383 = vsub.s32 7, %v3382
        %v3384 = vrot.slane %v3275, %v3383
        %v3385 = vlaneseq
        %v3386 = vshrl.u32 %v3385, 7
        %v3387 = vsub.s32 0, %v3386
        %v3388 = vrot.slane %v3276, %v3387
        %v3389 = vlaneseq
        %v3390 = vshrl.u32 %v3389, 7
        %v3391 = vsub.s32 1, %v3390
        %v3392 = vrot.slane %v3276, %v3391
        %v3393 = vlaneseq
        %v3394 = vshrl.u32 %v3393, 7
        %v3395 = vsub.s32 2, %v3394
        %v3396 = vrot.slane %v3276, %v3395
        %v3397 = vlaneseq
        %v3398 = vshrl.u32 %v3397, 7
        %v3399 = vsub.s32 3, %v3398
        %v3400 = vrot.slane %v3276, %v3399
        %v3401 = vlaneseq
        %v3402 = vshrl.u32 %v3401, 7
        %v3403 = vsub.s32 4, %v3402
        %v3404 = vrot.slane %v3276, %v3403
        %v3405 = vlaneseq
        %v3406 = vshrl.u32 %v3405, 7
        %v3407 = vsub.s32 5, %v3406
        %v3408 = vrot.slane %v3276, %v3407
        %v3409 = vlaneseq
        %v3410 = vshrl.u32 %v3409, 7
        %v3411 = vsub.s32 6, %v3410
        %v3412 = vrot.slane %v3276, %v3411
        %v3413 = vlaneseq
        %v3414 = vshrl.u32 %v3413, 7
        %v3415 = vsub.s32 7, %v3414
        %v3416 = vrot.slane %v3276, %v3415
        %v3417 = vlaneseq
        %v3418 = vshrl.u32 %v3417, 7
        %v3419 = vsub.s32 0, %v3418
        %v3420 = vrot.slane %v3277, %v3419
        %v3421 = vlaneseq
        %v3422 = vshrl.u32 %v3421, 7
        %v3423 = vsub.s32 1, %v3422
        %v3424 = vrot.slane %v3277, %v3423
        %v3425 = vlaneseq
        %v3426 = vshrl.u32 %v3425, 7
        %v3427 = vsub.s32 2, %v3426
        %v3428 = vrot.slane %v3277, %v3427
        %v3429 = vlaneseq
        %v3430 = vshrl.u32 %v3429, 7
        %v3431 = vsub.s32 3, %v3430
        %v3432 = vrot.slane %v3277, %v3431
        %v3433 = vlaneseq
        %v3434 = vshrl.u32 %v3433, 7
        %v3435 = vsub.s32 4, %v3434
        %v3436 = vrot.slane %v3277, %v3435
        %v3437 = vlaneseq
        %v3438 = vshrl.u32 %v3437, 7
        %v3439 = vsub.s32 5, %v3438
        %v3440 = vrot.slane %v3277, %v3439
        %v3441 = vlaneseq
        %v3442 = vshrl.u32 %v3441, 7
        %v3443 = vsub.s32 6, %v3442
        %v3444 = vrot.slane %v3277, %v3443
        %v3445 = vlaneseq
        %v3446 = vshrl.u32 %v3445, 7
        %v3447 = vsub.s32 7, %v3446
        %v3448 = vrot.slane %v3277, %v3447
        %v3449 = vlaneseq
        %v3450 = vshrl.u32 %v3449, 7
        %v3451 = vsub.s32 0, %v3450
        %v3452 = vrot.slane %v3278, %v3451
        %v3453 = vlaneseq
        %v3454 = vshrl.u32 %v3453, 7
        %v3455 = vsub.s32 1, %v3454
        %v3456 = vrot.slane %v3278, %v3455
        %v3457 = vlaneseq
        %v3458 = vshrl.u32 %v3457, 7
        %v3459 = vsub.s32 2, %v3458
        %v3460 = vrot.slane %v3278, %v3459
        %v3461 = vlaneseq
        %v3462 = vshrl.u32 %v3461, 7
        %v3463 = vsub.s32 3, %v3462
        %v3464 = vrot.slane %v3278, %v3463
        %v3465 = vlaneseq
        %v3466 = vshrl.u32 %v3465, 7
        %v3467 = vsub.s32 4, %v3466
        %v3468 = vrot.slane %v3278, %v3467
        %v3469 = vlaneseq
        %v3470 = vshrl.u32 %v3469, 7
        %v3471 = vsub.s32 5, %v3470
        %v3472 = vrot.slane %v3278, %v3471
        %v3473 = vlaneseq
        %v3474 = vshrl.u32 %v3473, 7
        %v3475 = vsub.s32 6, %v3474
        %v3476 = vrot.slane %v3278, %v3475
        %v3477 = vlaneseq
        %v3478 = vshrl.u32 %v3477, 7
        %v3479 = vsub.s32 7, %v3478
        %v3480 = vrot.slane %v3278, %v3479
        %v3481 = vlaneseq
        %v3482 = vshrl.u32 %v3481, 7
        %v3483 = vsub.s32 0, %v3482
        %v3484 = vrot.slane %v3279, %v3483
        %v3485 = vlaneseq
        %v3486 = vshrl.u32 %v3485, 7
        %v3487 = vsub.s32 1, %v3486
        %v3488 = vrot.slane %v3279, %v3487
        %v3489 = vlaneseq
        %v3490 = vshrl.u32 %v3489, 7
        %v3491 = vsub.s32 2, %v3490
        %v3492 = vrot.slane %v3279, %v3491
        %v3493 = vlaneseq
        %v3494 = vshrl.u32 %v3493, 7
        %v3495 = vsub.s32 3, %v3494
        %v3496 = vrot.slane %v3279, %v3495
        %v3497 = vlaneseq
        %v3498 = vshrl.u32 %v3497, 7
        %v3499 = vsub.s32 4, %v3498
        %v3500 = vrot.slane %v3279, %v3499
        %v3501 = vlaneseq
        %v3502 = vshrl.u32 %v3501, 7
        %v3503 = vsub.s32 5, %v3502
        %v3504 = vrot.slane %v3279, %v3503
        %v3505 = vlaneseq
        %v3506 = vshrl.u32 %v3505, 7
        %v3507 = vsub.s32 6, %v3506
        %v3508 = vrot.slane %v3279, %v3507
        %v3509 = vlaneseq
        %v3510 = vshrl.u32 %v3509, 7
        %v3511 = vsub.s32 7, %v3510
        %v3512 = vrot.slane %v3279, %v3511
        %v3513 = vlaneseq
        %v3514 = vshrl.u32 %v3513, 7
        %v3515 = vsub.s32 0, %v3514
        %v3516 = vrot.slane %v3280, %v3515
        %v3517 = vlaneseq
        %v3518 = vshrl.u32 %v3517, 7
        %v3519 = vsub.s32 1, %v3518
        %v3520 = vrot.slane %v3280, %v3519
        %v3521 = vlaneseq
        %v3522 = vshrl.u32 %v3521, 7
        %v3523 = vsub.s32 2, %v3522
        %v3524 = vrot.slane %v3280, %v3523
        %v3525 = vlaneseq
        %v3526 = vshrl.u32 %v3525, 7
        %v3527 = vsub.s32 3, %v3526
        %v3528 = vrot.slane %v3280, %v3527
        %v3529 = vlaneseq
        %v3530 = vshrl.u32 %v3529, 7
        %v3531 = vsub.s32 4, %v3530
        %v3532 = vrot.slane %v3280, %v3531
        %v3533 = vlaneseq
        %v3534 = vshrl.u32 %v3533, 7
        %v3535 = vsub.s32 5, %v3534
        %v3536 = vrot.slane %v3280, %v3535
        %v3537 = vlaneseq
        %v3538 = vshrl.u32 %v3537, 7
        %v3539 = vsub.s32 6, %v3538
        %v3540 = vrot.slane %v3280, %v3539
        %v3541 = vlaneseq
        %v3542 = vshrl.u32 %v3541, 7
        %v3543 = vsub.s32 7, %v3542
        %v3544 = vrot.slane %v3280, %v3543
        %v3609 = vmul.f32 %v283, %v3292
        %v3610 = vmul.f32 %v284, %v3296
        %v3611 = vmul.f32 %v285, %v3300
        %v3612 = vmul.f32 %v286, %v3304
        %v3613 = vmul.f32 %v287, %v3308
        %v3614 = vmul.f32 %v288, %v3312
        %v3615 = vmul.f32 %v289, %v3316
        %v3616 = vmul.f32 %v290, %v3320
        %v3617 = vmul.f32 %v291, %v3324
        %v3618 = vmul.f32 %v292, %v3328
        %v3619 = vmul.f32 %v293, %v3332
        %v3620 = vmul.f32 %v294, %v3336
        %v3621 = vmul.f32 %v295, %v3340
        %v3622 = vmul.f32 %v296, %v3344
        %v3623 = vmul.f32 %v297, %v3348
        %v3624 = vmul.f32 %v298, %v3352
        %v3625 = vmul.f32 %v299, %v3356
        %v3626 = vmul.f32 %v300, %v3360
        %v3627 = vmul.f32 %v301, %v3364
        %v3628 = vmul.f32 %v302, %v3368
        %v3629 = vmul.f32 %v303, %v3372
        %v3630 = vmul.f32 %v304, %v3376
        %v3631 = vmul.f32 %v305, %v3380
        %v3632 = vmul.f32 %v306, %v3384
        %v3633 = vmul.f32 %v307, %v3388
        %v3634 = vmul.f32 %v308, %v3392
        %v3635 = vmul.f32 %v309, %v3396
        %v3636 = vmul.f32 %v310, %v3400
        %v3637 = vmul.f32 %v311, %v3404
        %v3638 = vmul.f32 %v312, %v3408
        %v3639 = vmul.f32 %v313, %v3412
        %v3640 = vmul.f32 %v314, %v3416
        %v3641 = vmul.f32 %v315, %v3420
        %v3642 = vmul.f32 %v316, %v3424
        %v3643 = vmul.f32 %v317, %v3428
        %v3644 = vmul.f32 %v318, %v3432
        %v3645 = vmul.f32 %v319, %v3436
        %v3646 = vmul.f32 %v320, %v3440
        %v3647 = vmul.f32 %v321, %v3444
        %v3648 = vmul.f32 %v322, %v3448
        %v3649 = vmul.f32 %v323, %v3452
        %v3650 = vmul.f32 %v324, %v3456
        %v3651 = vmul.f32 %v325, %v3460
        %v3652 = vmul.f32 %v326, %v3464
        %v3653 = vmul.f32 %v327, %v3468
        %v3654 = vmul.f32 %v328, %v3472
        %v3655 = vmul.f32 %v329, %v3476
        %v3656 = vmul.f32 %v330, %v3480
        %v3657 = vmul.f32 %v331, %v3484
        %v3658 = vmul.f32 %v332, %v3488
        %v3659 = vmul.f32 %v333, %v3492
        %v3660 = vmul.f32 %v334, %v3496
        %v3661 = vmul.f32 %v335, %v3500
        %v3662 = vmul.f32 %v336, %v3504
        %v3663 = vmul.f32 %v337, %v3508
        %v3664 = vmul.f32 %v338, %v3512
        %v3665 = vmul.f32 %v339, %v3516
        %v3666 = vmul.f32 %v340, %v3520
        %v3667 = vmul.f32 %v341, %v3524
        %v3668 = vmul.f32 %v342, %v3528
        %v3669 = vmul.f32 %v343, %v3532
        %v3670 = vmul.f32 %v344, %v3536
        %v3671 = vmul.f32 %v345, %v3540
        %v3672 = vmul.f32 %v346, %v3544
        %v3673 = vld [vmem:[%s231] sm:$0xff]
        %v3674 = vld [vmem:[%s231 + $0x8] sm:$0xff]
        %v3675 = vld [vmem:[%s231 + $0x10] sm:$0xff]
        %v3676 = vld [vmem:[%s231 + $0x18] sm:$0xff]
        %v3677 = vld [vmem:[%s231 + $0x20] sm:$0xff]
        %v3678 = vld [vmem:[%s231 + $0x28] sm:$0xff]
        %v3679 = vld [vmem:[%s231 + $0x30] sm:$0xff]
        %v3680 = vld [vmem:[%s231 + $0x38] sm:$0xff]
        %v3689 = vlaneseq
        %v3690 = vshrl.u32 %v3689, 7
        %v3691 = vsub.s32 0, %v3690
        %v3692 = vrot.slane %v3673, %v3691
        %v3693 = vlaneseq
        %v3694 = vshrl.u32 %v3693, 7
        %v3695 = vsub.s32 1, %v3694
        %v3696 = vrot.slane %v3673, %v3695
        %v3697 = vlaneseq
        %v3698 = vshrl.u32 %v3697, 7
        %v3699 = vsub.s32 2, %v3698
        %v3700 = vrot.slane %v3673, %v3699
        %v3701 = vlaneseq
        %v3702 = vshrl.u32 %v3701, 7
        %v3703 = vsub.s32 3, %v3702
        %v3704 = vrot.slane %v3673, %v3703
        %v3705 = vlaneseq
        %v3706 = vshrl.u32 %v3705, 7
        %v3707 = vsub.s32 4, %v3706
        %v3708 = vrot.slane %v3673, %v3707
        %v3709 = vlaneseq
        %v3710 = vshrl.u32 %v3709, 7
        %v3711 = vsub.s32 5, %v3710
        %v3712 = vrot.slane %v3673, %v3711
        %v3713 = vlaneseq
        %v3714 = vshrl.u32 %v3713, 7
        %v3715 = vsub.s32 6, %v3714
        %v3716 = vrot.slane %v3673, %v3715
        %v3717 = vlaneseq
        %v3718 = vshrl.u32 %v3717, 7
        %v3719 = vsub.s32 7, %v3718
        %v3720 = vrot.slane %v3673, %v3719
        %v3721 = vlaneseq
        %v3722 = vshrl.u32 %v3721, 7
        %v3723 = vsub.s32 0, %v3722
        %v3724 = vrot.slane %v3674, %v3723
        %v3725 = vlaneseq
        %v3726 = vshrl.u32 %v3725, 7
        %v3727 = vsub.s32 1, %v3726
        %v3728 = vrot.slane %v3674, %v3727
        %v3729 = vlaneseq
        %v3730 = vshrl.u32 %v3729, 7
        %v3731 = vsub.s32 2, %v3730
        %v3732 = vrot.slane %v3674, %v3731
        %v3733 = vlaneseq
        %v3734 = vshrl.u32 %v3733, 7
        %v3735 = vsub.s32 3, %v3734
        %v3736 = vrot.slane %v3674, %v3735
        %v3737 = vlaneseq
        %v3738 = vshrl.u32 %v3737, 7
        %v3739 = vsub.s32 4, %v3738
        %v3740 = vrot.slane %v3674, %v3739
        %v3741 = vlaneseq
        %v3742 = vshrl.u32 %v3741, 7
        %v3743 = vsub.s32 5, %v3742
        %v3744 = vrot.slane %v3674, %v3743
        %v3745 = vlaneseq
        %v3746 = vshrl.u32 %v3745, 7
        %v3747 = vsub.s32 6, %v3746
        %v3748 = vrot.slane %v3674, %v3747
        %v3749 = vlaneseq
        %v3750 = vshrl.u32 %v3749, 7
        %v3751 = vsub.s32 7, %v3750
        %v3752 = vrot.slane %v3674, %v3751
        %v3753 = vlaneseq
        %v3754 = vshrl.u32 %v3753, 7
        %v3755 = vsub.s32 0, %v3754
        %v3756 = vrot.slane %v3675, %v3755
        %v3757 = vlaneseq
        %v3758 = vshrl.u32 %v3757, 7
        %v3759 = vsub.s32 1, %v3758
        %v3760 = vrot.slane %v3675, %v3759
        %v3761 = vlaneseq
        %v3762 = vshrl.u32 %v3761, 7
        %v3763 = vsub.s32 2, %v3762
        %v3764 = vrot.slane %v3675, %v3763
        %v3765 = vlaneseq
        %v3766 = vshrl.u32 %v3765, 7
        %v3767 = vsub.s32 3, %v3766
        %v3768 = vrot.slane %v3675, %v3767
        %v3769 = vlaneseq
        %v3770 = vshrl.u32 %v3769, 7
        %v3771 = vsub.s32 4, %v3770
        %v3772 = vrot.slane %v3675, %v3771
        %v3773 = vlaneseq
        %v3774 = vshrl.u32 %v3773, 7
        %v3775 = vsub.s32 5, %v3774
        %v3776 = vrot.slane %v3675, %v3775
        %v3777 = vlaneseq
        %v3778 = vshrl.u32 %v3777, 7
        %v3779 = vsub.s32 6, %v3778
        %v3780 = vrot.slane %v3675, %v3779
        %v3781 = vlaneseq
        %v3782 = vshrl.u32 %v3781, 7
        %v3783 = vsub.s32 7, %v3782
        %v3784 = vrot.slane %v3675, %v3783
        %v3785 = vlaneseq
        %v3786 = vshrl.u32 %v3785, 7
        %v3787 = vsub.s32 0, %v3786
        %v3788 = vrot.slane %v3676, %v3787
        %v3789 = vlaneseq
        %v3790 = vshrl.u32 %v3789, 7
        %v3791 = vsub.s32 1, %v3790
        %v3792 = vrot.slane %v3676, %v3791
        %v3793 = vlaneseq
        %v3794 = vshrl.u32 %v3793, 7
        %v3795 = vsub.s32 2, %v3794
        %v3796 = vrot.slane %v3676, %v3795
        %v3797 = vlaneseq
        %v3798 = vshrl.u32 %v3797, 7
        %v3799 = vsub.s32 3, %v3798
        %v3800 = vrot.slane %v3676, %v3799
        %v3801 = vlaneseq
        %v3802 = vshrl.u32 %v3801, 7
        %v3803 = vsub.s32 4, %v3802
        %v3804 = vrot.slane %v3676, %v3803
        %v3805 = vlaneseq
        %v3806 = vshrl.u32 %v3805, 7
        %v3807 = vsub.s32 5, %v3806
        %v3808 = vrot.slane %v3676, %v3807
        %v3809 = vlaneseq
        %v3810 = vshrl.u32 %v3809, 7
        %v3811 = vsub.s32 6, %v3810
        %v3812 = vrot.slane %v3676, %v3811
        %v3813 = vlaneseq
        %v3814 = vshrl.u32 %v3813, 7
        %v3815 = vsub.s32 7, %v3814
        %v3816 = vrot.slane %v3676, %v3815
        %v3817 = vlaneseq
        %v3818 = vshrl.u32 %v3817, 7
        %v3819 = vsub.s32 0, %v3818
        %v3820 = vrot.slane %v3677, %v3819
        %v3821 = vlaneseq
        %v3822 = vshrl.u32 %v3821, 7
        %v3823 = vsub.s32 1, %v3822
        %v3824 = vrot.slane %v3677, %v3823
        %v3825 = vlaneseq
        %v3826 = vshrl.u32 %v3825, 7
        %v3827 = vsub.s32 2, %v3826
        %v3828 = vrot.slane %v3677, %v3827
        %v3829 = vlaneseq
        %v3830 = vshrl.u32 %v3829, 7
        %v3831 = vsub.s32 3, %v3830
        %v3832 = vrot.slane %v3677, %v3831
        %v3833 = vlaneseq
        %v3834 = vshrl.u32 %v3833, 7
        %v3835 = vsub.s32 4, %v3834
        %v3836 = vrot.slane %v3677, %v3835
        %v3837 = vlaneseq
        %v3838 = vshrl.u32 %v3837, 7
        %v3839 = vsub.s32 5, %v3838
        %v3840 = vrot.slane %v3677, %v3839
        %v3841 = vlaneseq
        %v3842 = vshrl.u32 %v3841, 7
        %v3843 = vsub.s32 6, %v3842
        %v3844 = vrot.slane %v3677, %v3843
        %v3845 = vlaneseq
        %v3846 = vshrl.u32 %v3845, 7
        %v3847 = vsub.s32 7, %v3846
        %v3848 = vrot.slane %v3677, %v3847
        %v3849 = vlaneseq
        %v3850 = vshrl.u32 %v3849, 7
        %v3851 = vsub.s32 0, %v3850
        %v3852 = vrot.slane %v3678, %v3851
        %v3853 = vlaneseq
        %v3854 = vshrl.u32 %v3853, 7
        %v3855 = vsub.s32 1, %v3854
        %v3856 = vrot.slane %v3678, %v3855
        %v3857 = vlaneseq
        %v3858 = vshrl.u32 %v3857, 7
        %v3859 = vsub.s32 2, %v3858
        %v3860 = vrot.slane %v3678, %v3859
        %v3861 = vlaneseq
        %v3862 = vshrl.u32 %v3861, 7
        %v3863 = vsub.s32 3, %v3862
        %v3864 = vrot.slane %v3678, %v3863
        %v3865 = vlaneseq
        %v3866 = vshrl.u32 %v3865, 7
        %v3867 = vsub.s32 4, %v3866
        %v3868 = vrot.slane %v3678, %v3867
        %v3869 = vlaneseq
        %v3870 = vshrl.u32 %v3869, 7
        %v3871 = vsub.s32 5, %v3870
        %v3872 = vrot.slane %v3678, %v3871
        %v3873 = vlaneseq
        %v3874 = vshrl.u32 %v3873, 7
        %v3875 = vsub.s32 6, %v3874
        %v3876 = vrot.slane %v3678, %v3875
        %v3877 = vlaneseq
        %v3878 = vshrl.u32 %v3877, 7
        %v3879 = vsub.s32 7, %v3878
        %v3880 = vrot.slane %v3678, %v3879
        %v3881 = vlaneseq
        %v3882 = vshrl.u32 %v3881, 7
        %v3883 = vsub.s32 0, %v3882
        %v3884 = vrot.slane %v3679, %v3883
        %v3885 = vlaneseq
        %v3886 = vshrl.u32 %v3885, 7
        %v3887 = vsub.s32 1, %v3886
        %v3888 = vrot.slane %v3679, %v3887
        %v3889 = vlaneseq
        %v3890 = vshrl.u32 %v3889, 7
        %v3891 = vsub.s32 2, %v3890
        %v3892 = vrot.slane %v3679, %v3891
        %v3893 = vlaneseq
        %v3894 = vshrl.u32 %v3893, 7
        %v3895 = vsub.s32 3, %v3894
        %v3896 = vrot.slane %v3679, %v3895
        %v3897 = vlaneseq
        %v3898 = vshrl.u32 %v3897, 7
        %v3899 = vsub.s32 4, %v3898
        %v3900 = vrot.slane %v3679, %v3899
        %v3901 = vlaneseq
        %v3902 = vshrl.u32 %v3901, 7
        %v3903 = vsub.s32 5, %v3902
        %v3904 = vrot.slane %v3679, %v3903
        %v3905 = vlaneseq
        %v3906 = vshrl.u32 %v3905, 7
        %v3907 = vsub.s32 6, %v3906
        %v3908 = vrot.slane %v3679, %v3907
        %v3909 = vlaneseq
        %v3910 = vshrl.u32 %v3909, 7
        %v3911 = vsub.s32 7, %v3910
        %v3912 = vrot.slane %v3679, %v3911
        %v3913 = vlaneseq
        %v3914 = vshrl.u32 %v3913, 7
        %v3915 = vsub.s32 0, %v3914
        %v3916 = vrot.slane %v3680, %v3915
        %v3917 = vlaneseq
        %v3918 = vshrl.u32 %v3917, 7
        %v3919 = vsub.s32 1, %v3918
        %v3920 = vrot.slane %v3680, %v3919
        %v3921 = vlaneseq
        %v3922 = vshrl.u32 %v3921, 7
        %v3923 = vsub.s32 2, %v3922
        %v3924 = vrot.slane %v3680, %v3923
        %v3925 = vlaneseq
        %v3926 = vshrl.u32 %v3925, 7
        %v3927 = vsub.s32 3, %v3926
        %v3928 = vrot.slane %v3680, %v3927
        %v3929 = vlaneseq
        %v3930 = vshrl.u32 %v3929, 7
        %v3931 = vsub.s32 4, %v3930
        %v3932 = vrot.slane %v3680, %v3931
        %v3933 = vlaneseq
        %v3934 = vshrl.u32 %v3933, 7
        %v3935 = vsub.s32 5, %v3934
        %v3936 = vrot.slane %v3680, %v3935
        %v3937 = vlaneseq
        %v3938 = vshrl.u32 %v3937, 7
        %v3939 = vsub.s32 6, %v3938
        %v3940 = vrot.slane %v3680, %v3939
        %v3941 = vlaneseq
        %v3942 = vshrl.u32 %v3941, 7
        %v3943 = vsub.s32 7, %v3942
        %v3944 = vrot.slane %v3680, %v3943
        %v4009 = vadd.f32 %v3609, %v3692
        %v4010 = vadd.f32 %v3610, %v3696
        %v4011 = vadd.f32 %v3611, %v3700
        %v4012 = vadd.f32 %v3612, %v3704
        %v4013 = vadd.f32 %v3613, %v3708
        %v4014 = vadd.f32 %v3614, %v3712
        %v4015 = vadd.f32 %v3615, %v3716
        %v4016 = vadd.f32 %v3616, %v3720
        %v4017 = vadd.f32 %v3617, %v3724
        %v4018 = vadd.f32 %v3618, %v3728
        %v4019 = vadd.f32 %v3619, %v3732
        %v4020 = vadd.f32 %v3620, %v3736
        %v4021 = vadd.f32 %v3621, %v3740
        %v4022 = vadd.f32 %v3622, %v3744
        %v4023 = vadd.f32 %v3623, %v3748
        %v4024 = vadd.f32 %v3624, %v3752
        %v4025 = vadd.f32 %v3625, %v3756
        %v4026 = vadd.f32 %v3626, %v3760
        %v4027 = vadd.f32 %v3627, %v3764
        %v4028 = vadd.f32 %v3628, %v3768
        %v4029 = vadd.f32 %v3629, %v3772
        %v4030 = vadd.f32 %v3630, %v3776
        %v4031 = vadd.f32 %v3631, %v3780
        %v4032 = vadd.f32 %v3632, %v3784
        %v4033 = vadd.f32 %v3633, %v3788
        %v4034 = vadd.f32 %v3634, %v3792
        %v4035 = vadd.f32 %v3635, %v3796
        %v4036 = vadd.f32 %v3636, %v3800
        %v4037 = vadd.f32 %v3637, %v3804
        %v4038 = vadd.f32 %v3638, %v3808
        %v4039 = vadd.f32 %v3639, %v3812
        %v4040 = vadd.f32 %v3640, %v3816
        %v4041 = vadd.f32 %v3641, %v3820
        %v4042 = vadd.f32 %v3642, %v3824
        %v4043 = vadd.f32 %v3643, %v3828
        %v4044 = vadd.f32 %v3644, %v3832
        %v4045 = vadd.f32 %v3645, %v3836
        %v4046 = vadd.f32 %v3646, %v3840
        %v4047 = vadd.f32 %v3647, %v3844
        %v4048 = vadd.f32 %v3648, %v3848
        %v4049 = vadd.f32 %v3649, %v3852
        %v4050 = vadd.f32 %v3650, %v3856
        %v4051 = vadd.f32 %v3651, %v3860
        %v4052 = vadd.f32 %v3652, %v3864
        %v4053 = vadd.f32 %v3653, %v3868
        %v4054 = vadd.f32 %v3654, %v3872
        %v4055 = vadd.f32 %v3655, %v3876
        %v4056 = vadd.f32 %v3656, %v3880
        %v4057 = vadd.f32 %v3657, %v3884
        %v4058 = vadd.f32 %v3658, %v3888
        %v4059 = vadd.f32 %v3659, %v3892
        %v4060 = vadd.f32 %v3660, %v3896
        %v4061 = vadd.f32 %v3661, %v3900
        %v4062 = vadd.f32 %v3662, %v3904
        %v4063 = vadd.f32 %v3663, %v3908
        %v4064 = vadd.f32 %v3664, %v3912
        %v4065 = vadd.f32 %v3665, %v3916
        %v4066 = vadd.f32 %v3666, %v3920
        %v4067 = vadd.f32 %v3667, %v3924
        %v4068 = vadd.f32 %v3668, %v3928
        %v4069 = vadd.f32 %v3669, %v3932
        %v4070 = vadd.f32 %v3670, %v3936
        %v4071 = vadd.f32 %v3671, %v3940
        %v4072 = vadd.f32 %v3672, %v3944
        %v4073 = vtanh.pop %v4009
        %v4074 = vtanh.pop %v4010
        %v4075 = vtanh.pop %v4011
        %v4076 = vtanh.pop %v4012
        %v4077 = vtanh.pop %v4013
        %v4078 = vtanh.pop %v4014
        %v4079 = vtanh.pop %v4015
        %v4080 = vtanh.pop %v4016
        %v4081 = vtanh.pop %v4017
        %v4082 = vtanh.pop %v4018
        %v4083 = vtanh.pop %v4019
        %v4084 = vtanh.pop %v4020
        %v4085 = vtanh.pop %v4021
        %v4086 = vtanh.pop %v4022
        %v4087 = vtanh.pop %v4023
        %v4088 = vtanh.pop %v4024
        %v4089 = vtanh.pop %v4025
        %v4090 = vtanh.pop %v4026
        %v4091 = vtanh.pop %v4027
        %v4092 = vtanh.pop %v4028
        %v4093 = vtanh.pop %v4029
        %v4094 = vtanh.pop %v4030
        %v4095 = vtanh.pop %v4031
        %v4096 = vtanh.pop %v4032
        %v4097 = vtanh.pop %v4033
        %v4098 = vtanh.pop %v4034
        %v4099 = vtanh.pop %v4035
        %v4100 = vtanh.pop %v4036
        %v4101 = vtanh.pop %v4037
        %v4102 = vtanh.pop %v4038
        %v4103 = vtanh.pop %v4039
        %v4104 = vtanh.pop %v4040
        %v4105 = vtanh.pop %v4041
        %v4106 = vtanh.pop %v4042
        %v4107 = vtanh.pop %v4043
        %v4108 = vtanh.pop %v4044
        %v4109 = vtanh.pop %v4045
        %v4110 = vtanh.pop %v4046
        %v4111 = vtanh.pop %v4047
        %v4112 = vtanh.pop %v4048
        %v4113 = vtanh.pop %v4049
        %v4114 = vtanh.pop %v4050
        %v4115 = vtanh.pop %v4051
        %v4116 = vtanh.pop %v4052
        %v4117 = vtanh.pop %v4053
        %v4118 = vtanh.pop %v4054
        %v4119 = vtanh.pop %v4055
        %v4120 = vtanh.pop %v4056
        %v4121 = vtanh.pop %v4057
        %v4122 = vtanh.pop %v4058
        %v4123 = vtanh.pop %v4059
        %v4124 = vtanh.pop %v4060
        %v4125 = vtanh.pop %v4061
        %v4126 = vtanh.pop %v4062
        %v4127 = vtanh.pop %v4063
        %v4128 = vtanh.pop %v4064
        %v4129 = vtanh.pop %v4065
        %v4130 = vtanh.pop %v4066
        %v4131 = vtanh.pop %v4067
        %v4132 = vtanh.pop %v4068
        %v4133 = vtanh.pop %v4069
        %v4134 = vtanh.pop %v4070
        %v4135 = vtanh.pop %v4071
        %v4136 = vtanh.pop %v4072
        %4137 = vst [vmem:[%s275] sm:$0xff] %v4073
        %4138 = vst [vmem:[%s275 + $0x8] sm:$0xff] %v4074
        %4139 = vst [vmem:[%s275 + $0x10] sm:$0xff] %v4075
        %4140 = vst [vmem:[%s275 + $0x18] sm:$0xff] %v4076
        %4141 = vst [vmem:[%s275 + $0x20] sm:$0xff] %v4077
        %4142 = vst [vmem:[%s275 + $0x28] sm:$0xff] %v4078
        %4143 = vst [vmem:[%s275 + $0x30] sm:$0xff] %v4079
        %4144 = vst [vmem:[%s275 + $0x38] sm:$0xff] %v4080
        %4145 = vst [vmem:[%s275 + $0x40] sm:$0xff] %v4081
        %4146 = vst [vmem:[%s275 + $0x48] sm:$0xff] %v4082
        %4147 = vst [vmem:[%s275 + $0x50] sm:$0xff] %v4083
        %4148 = vst [vmem:[%s275 + $0x58] sm:$0xff] %v4084
        %4149 = vst [vmem:[%s275 + $0x60] sm:$0xff] %v4085
        %4150 = vst [vmem:[%s275 + $0x68] sm:$0xff] %v4086
        %4151 = vst [vmem:[%s275 + $0x70] sm:$0xff] %v4087
        %4152 = vst [vmem:[%s275 + $0x78] sm:$0xff] %v4088
        %4153 = vst [vmem:[%s275 + $0x80] sm:$0xff] %v4089
        %4154 = vst [vmem:[%s275 + $0x88] sm:$0xff] %v4090
        %4155 = vst [vmem:[%s275 + $0x90] sm:$0xff] %v4091
        %4156 = vst [vmem:[%s275 + $0x98] sm:$0xff] %v4092
        %4157 = vst [vmem:[%s275 + $0xa0] sm:$0xff] %v4093
        %4158 = vst [vmem:[%s275 + $0xa8] sm:$0xff] %v4094
        %4159 = vst [vmem:[%s275 + $0xb0] sm:$0xff] %v4095
        %4160 = vst [vmem:[%s275 + $0xb8] sm:$0xff] %v4096
        %4161 = vst [vmem:[%s275 + $0xc0] sm:$0xff] %v4097
        %4162 = vst [vmem:[%s275 + $0xc8] sm:$0xff] %v4098
        %4163 = vst [vmem:[%s275 + $0xd0] sm:$0xff] %v4099
        %4164 = vst [vmem:[%s275 + $0xd8] sm:$0xff] %v4100
        %4165 = vst [vmem:[%s275 + $0xe0] sm:$0xff] %v4101
        %4166 = vst [vmem:[%s275 + $0xe8] sm:$0xff] %v4102
        %4167 = vst [vmem:[%s275 + $0xf0] sm:$0xff] %v4103
        %4168 = vst [vmem:[%s275 + $0xf8] sm:$0xff] %v4104
        %4169 = vst [vmem:[%s275 + $0x100] sm:$0xff] %v4105
        %4170 = vst [vmem:[%s275 + $0x108] sm:$0xff] %v4106
        %4171 = vst [vmem:[%s275 + $0x110] sm:$0xff] %v4107
        %4172 = vst [vmem:[%s275 + $0x118] sm:$0xff] %v4108
        %4173 = vst [vmem:[%s275 + $0x120] sm:$0xff] %v4109
        %4174 = vst [vmem:[%s275 + $0x128] sm:$0xff] %v4110
        %4175 = vst [vmem:[%s275 + $0x130] sm:$0xff] %v4111
        %4176 = vst [vmem:[%s275 + $0x138] sm:$0xff] %v4112
        %4177 = vst [vmem:[%s275 + $0x140] sm:$0xff] %v4113
        %4178 = vst [vmem:[%s275 + $0x148] sm:$0xff] %v4114
        %4179 = vst [vmem:[%s275 + $0x150] sm:$0xff] %v4115
        %4180 = vst [vmem:[%s275 + $0x158] sm:$0xff] %v4116
        %4181 = vst [vmem:[%s275 + $0x160] sm:$0xff] %v4117
        %4182 = vst [vmem:[%s275 + $0x168] sm:$0xff] %v4118
        %4183 = vst [vmem:[%s275 + $0x170] sm:$0xff] %v4119
        %4184 = vst [vmem:[%s275 + $0x178] sm:$0xff] %v4120
        %4185 = vst [vmem:[%s275 + $0x180] sm:$0xff] %v4121
        %4186 = vst [vmem:[%s275 + $0x188] sm:$0xff] %v4122
        %4187 = vst [vmem:[%s275 + $0x190] sm:$0xff] %v4123
        %4188 = vst [vmem:[%s275 + $0x198] sm:$0xff] %v4124
        %4189 = vst [vmem:[%s275 + $0x1a0] sm:$0xff] %v4125
        %4190 = vst [vmem:[%s275 + $0x1a8] sm:$0xff] %v4126
        %4191 = vst [vmem:[%s275 + $0x1b0] sm:$0xff] %v4127
        %4192 = vst [vmem:[%s275 + $0x1b8] sm:$0xff] %v4128
        %4193 = vst [vmem:[%s275 + $0x1c0] sm:$0xff] %v4129
        %4194 = vst [vmem:[%s275 + $0x1c8] sm:$0xff] %v4130
        %4195 = vst [vmem:[%s275 + $0x1d0] sm:$0xff] %v4131
        %4196 = vst [vmem:[%s275 + $0x1d8] sm:$0xff] %v4132
        %4197 = vst [vmem:[%s275 + $0x1e0] sm:$0xff] %v4133
        %4198 = vst [vmem:[%s275 + $0x1e8] sm:$0xff] %v4134
        %4199 = vst [vmem:[%s275 + $0x1f0] sm:$0xff] %v4135
        %4200 = vst [vmem:[%s275 + $0x1f8] sm:$0xff] %v4136
        %s4201 = smul.u32 64, %s21
        %p4202 = scmp.lt.s32.totalorder %s4201, 3455
        %s4203 = scalar_select %p4202, %s4201, 3455
        %s4204 = smul.addr %s4203, 8
        %s4205 = scalar_lea.vmem %s4, %s4204
        // Predicated region
        $region52: #{conditional_generator_forward.3} parent=35 // pred_check
          %p4206 = pneg %p138
        $region53: #{conditional_generator_forward.3} parent=35 // pred_check_branch
          %4208 = sbr.rel (%p4206) target = $region55
        $region54: #{conditional_generator_forward.3} parent=35 // pred_region
          %s4209 = smul.u32 64, %s21
        $region55: #{conditional_generator_forward.3} parent=35 // pred_fallthru
          _
      $region36: #{conditional_generator_forward.3} parent=5 // pred_fallthru
        _
      %p4210 = scmp.le.s32.totalorder 2, %s16
      // Predicated region
      $region56: #{conditional_generator_forward.3} parent=5 // pred_check
        %p4211 = pneg %p4210
      $region57: #{conditional_generator_forward.3} parent=5 // pred_check_branch
        %4213 = sbr.rel (%p4211) target = $region59
      $region58: #{conditional_generator_forward.3} parent=5 // pred_region
        %s4214 = ssub.s32 %s16, 2
        // Predicated region
        $region60: #{conditional_generator_forward.3} parent=58 // pred_check
          %p4215 = pneg %p144
        $region61: #{conditional_generator_forward.3} parent=58 // pred_check_branch
          %4217 = sbr.rel (%p4215) target = $region63
        $region62: #{conditional_generator_forward.3} parent=58 // pred_region
          %s4218 = smul.u32 64, %s22
          %p4219 = scmp.lt.s32.totalorder %s4218, 3455
          %s4220 = scalar_select %p4219, %s4218, 3455
          %s4221 = smul.addr %s4220, 8
          %s4222 = scalar_lea.vmem %s4, %s4221
        $region63: #{conditional_generator_forward.3} parent=58 // pred_fallthru
          _
      $region59: #{conditional_generator_forward.3} parent=5 // pred_fallthru
        _
    $region6: #{conditional_generator_forward.3} parent=1 // loop_footer
      %s20 = sadd.s32 1, %s16
    $region7: #{conditional_generator_forward.3} parent=1 // loop_footer_branch
      %15 = sbr.rel target = $region3
    $region8: #{conditional_generator_forward.3} parent=1 // loop_exit
      _
    %4223 = vsyncpa [#allocation3], 1
    %s4224 = scalar_lea.sflag [#allocation3], 1
    %4225 = vsyncpa %s4224, 1
    %4226 = vsyncpa [#allocation5], 1
    %s4227 = scalar_lea.sflag [#allocation5], 1
    %4228 = vsyncpa %s4227, 1

</llo_original>
